<compile_context>
chip_gen: v7x
topology: tpu7x:2x2x1
jax: 0.10.0
libtpu: 0.0.40
codegen_flags: <defaults>
</compile_context>

<pallas_src>
import jax
import jax.numpy as jnp
from jax import lax
from jax.experimental import pallas as pl
from jax.experimental.pallas import tpu as pltpu

# ---- small config (head_dim = dim / n_heads, consistent with ModelArgs) ----
T = 512            # seqlen_sum
TT = 256           # token tile (M=256 fills v6e/v7x MXU; use 128 on v5e)
D = 512            # dim
H = 4              # n_heads
KV = 2             # n_kv_heads
REPS = H // KV     # GQA repeat factor
HD = D // H        # head_dim = 128 (lane-dense)
F_HID = 512        # expert hidden_dim
E = 4              # num_experts
TOPK = 2           # num_experts_per_tok
EPS = 1e-5         # norm_eps
ROPE_THETA = 10000.0
SCALE = HD ** -0.5


def _rmsnorm(x, w):
    var = jnp.mean(x * x, axis=-1, keepdims=True)
    return x * lax.rsqrt(var + EPS) * w


def _rope_head(t, cos, sin_e, sin_o):
    # Interleaved-pair rotary on one (TT, HD) head slice (HD = 128 lanes = one vreg row):
    #   out[2i]   = t[2i]*cos_i - t[2i+1]*sin_i
    #   out[2i+1] = t[2i+1]*cos_i + t[2i]*sin_i
    # Two XLU lane rotations gated by parity-masked sin tables. sin_e is zero on odd lanes
    # and sin_o is zero on even lanes; that invariant (asserted host-side next to the table
    # construction) also nulls the roll wrap-around contribution at lanes 0 / HD-1.
    t_next = pltpu.roll(t, shift=HD - 1, axis=1)   # y[j] = t[j+1] (used at even j only)
    t_prev = pltpu.roll(t, shift=1, axis=1)        # y[j] = t[j-1] (used at odd  j only)
    return t * cos - t_next * sin_e + t_prev * sin_o


# --------------------------- Kernel 1: RMSNorm + QKV + RoPE ---------------------------
def qkv_rope_kernel(x_ref, anw_ref, wq_ref, wk_ref, wv_ref,
                    cos_ref, sine_ref, sino_ref, q_ref, k_ref, v_ref):
    xn = _rmsnorm(x_ref[...], anw_ref[...])                  # attention_norm (f32 VPU)
    xn_bf = xn.astype(jnp.bfloat16)                          # bf16 MXU operands, f32 accum
    q = jnp.dot(xn_bf, wq_ref[...], preferred_element_type=jnp.float32)   # (TT, H*HD)
    k = jnp.dot(xn_bf, wk_ref[...], preferred_element_type=jnp.float32)   # (TT, KV*HD)
    v = jnp.dot(xn_bf, wv_ref[...], preferred_element_type=jnp.float32)   # (TT, KV*HD)
    cos, sin_e, sin_o = cos_ref[...], sine_ref[...], sino_ref[...]
    # Per-head RoPE on (TT, HD) slices; store head-major in bf16 so the attention kernel
    # slices heads purely through BlockSpec (no in-kernel head slicing of q/k/v).
    for h in range(H):
        q_ref[h] = _rope_head(q[:, h * HD:(h + 1) * HD], cos, sin_e, sin_o).astype(jnp.bfloat16)
    for g in range(KV):
        k_ref[g] = _rope_head(k[:, g * HD:(g + 1) * HD], cos, sin_e, sin_o).astype(jnp.bfloat16)
        v_ref[g] = v[:, g * HD:(g + 1) * HD].astype(jnp.bfloat16)


# -------- Kernel 2: GQA-paired attention + wo + residual + fused MoE epilogue --------
def attn_moe_kernel(x_ref, q_ref, k_ref, v_ref, wo_ref, fnw_ref, gate_ref,
                    w1_ref, w3_ref, w2_ref, out_ref, hacc_ref):
    g_idx = pl.program_id(1)                 # KV-group axis ("arbitrary", accumulated)

    @pl.when(g_idx == 0)
    def _():
        hacc_ref[...] = x_ref[...]           # start accumulator from the residual stream

    # GQA pair fusion: both query heads of this KV group in one step.
    q = q_ref[...].reshape(REPS * TT, HD)    # (REPS*TT, HD) bf16 (free leading-dim merge)
    k = k_ref[0]                             # (T, HD) bf16  shared keys of the group
    v = v_ref[0]                             # (T, HD) bf16
    # scores = q @ k^T without materializing the transpose (M = REPS*TT = 512)
    s = lax.dot_general(q, k, (((1,), (1,)), ((), ())),
                        preferred_element_type=jnp.float32) * SCALE       # (REPS*TT, T) f32
    # cache=None -> attn_bias=None -> full, unmasked softmax over all packed tokens
    m = jnp.max(s, axis=-1, keepdims=True)
    p = jnp.exp(s - m)
    denom = jnp.sum(p, axis=-1, keepdims=True)
    r = pl.reciprocal(denom, approx=True)                                  # EUP recip
    r = r * (2.0 - denom * r)                                              # 1 Newton step
    p = (p * r).astype(jnp.bfloat16)
    o = jnp.dot(p, v, preferred_element_type=jnp.float32)                  # (REPS*TT, HD)
    o = o.reshape(REPS, TT, HD)
    # fold the head concat into lanes: (TT, REPS*HD) so the wo matmul runs with K = REPS*HD
    o_cat = jnp.concatenate([o[rr] for rr in range(REPS)], axis=-1).astype(jnp.bfloat16)
    hacc_ref[...] += jnp.dot(o_cat, wo_ref[...], preferred_element_type=jnp.float32)

    @pl.when(g_idx == KV - 1)
    def _():
        hid = hacc_ref[...]                                                # h = x + attn_out
        hn = _rmsnorm(hid, fnw_ref[...])                                   # ffn_norm (f32)
        hn_bf = hn.astype(jnp.bfloat16)
        logits = jnp.dot(hn_bf, gate_ref[...],
                         preferred_element_type=jnp.float32)               # (TT, E) f32

        # top-2 routing (first-occurrence tie-break, like torch.topk); comparisons in f32.
        iota = lax.broadcasted_iota(jnp.int32, logits.shape, 1)
        m1 = jnp.max(logits, axis=-1, keepdims=True)
        idx1 = jnp.min(jnp.where(logits == m1, iota, E), axis=-1, keepdims=True)
        masked = jnp.where(iota == idx1, -jnp.inf, logits)
        m2 = jnp.max(masked, axis=-1, keepdims=True)
        idx2 = jnp.min(jnp.where(masked == m2, iota, E), axis=-1, keepdims=True)
        b = jnp.exp(m2 - m1)
        wt1 = 1.0 / (1.0 + b)                 # exact division for router weights
        wt2 = b * wt1

        # Accumulate the MoE sweep in VMEM (output block), not in registers.
        out_ref[...] = hid                    # second residual seeds the accumulation
        def expert_body(e, carry):
            g_ = jnp.dot(hn_bf, w1_ref[e], preferred_element_type=jnp.float32)   # (TT, F)
            u_ = jnp.dot(hn_bf, w3_ref[e], preferred_element_type=jnp.float32)   # (TT, F)
            a_ = (jax.nn.silu(g_) * u_).astype(jnp.bfloat16)
            y_ = jnp.dot(a_, w2_ref[e], preferred_element_type=jnp.float32)      # (TT, D)
            coeff = (jnp.where(idx1 == e, wt1, 0.0) +
                     jnp.where(idx2 == e, wt2, 0.0))                             # (TT, 1)
            out_ref[...] += coeff * y_
            return carry
        lax.fori_loop(0, E, expert_body, 0, unroll=True)


def transformer_block(x, p, cos_tab, sin_e_tab, sin_o_tab):
    nqt = T // TT

    q, k, v = pl.pallas_call(
        qkv_rope_kernel,
        out_shape=(jax.ShapeDtypeStruct((H, T, HD), jnp.bfloat16),
                   jax.ShapeDtypeStruct((KV, T, HD), jnp.bfloat16),
                   jax.ShapeDtypeStruct((KV, T, HD), jnp.bfloat16)),
        grid=(nqt,),
        in_specs=[
            pl.BlockSpec((TT, D), lambda i: (i, 0)),            # x token tile (f32)
            pl.BlockSpec((1, D), lambda i: (0, 0)),             # attention_norm weight (f32)
            pl.BlockSpec((D, H * HD), lambda i: (0, 0)),        # wq (bf16)
            pl.BlockSpec((D, KV * HD), lambda i: (0, 0)),       # wk (bf16)
            pl.BlockSpec((D, KV * HD), lambda i: (0, 0)),       # wv (bf16)
            pl.BlockSpec((TT, HD), lambda i: (i, 0)),           # cos table (per-pair, HD wide)
            pl.BlockSpec((TT, HD), lambda i: (i, 0)),           # sin (even lanes)
            pl.BlockSpec((TT, HD), lambda i: (i, 0)),           # sin (odd lanes)
        ],
        out_specs=[
            pl.BlockSpec((H, TT, HD), lambda i: (0, i, 0)),     # q head-major (bf16)
            pl.BlockSpec((KV, TT, HD), lambda i: (0, i, 0)),    # k head-major (bf16)
            pl.BlockSpec((KV, TT, HD), lambda i: (0, i, 0)),    # v head-major (bf16)
        ],
        compiler_params=pltpu.CompilerParams(
            dimension_semantics=("parallel",),
            vmem_limit_bytes=32 * 1024 * 1024),
    )(x, p['attn_norm'], p['wq'], p['wk'], p['wv'], cos_tab, sin_e_tab, sin_o_tab)

    out = pl.pallas_call(
        attn_moe_kernel,
        out_shape=jax.ShapeDtypeStruct((T, D), jnp.float32),
        grid=(nqt, KV),                                          # (token tiles, KV groups)
        in_specs=[
            pl.BlockSpec((TT, D), lambda i, g: (i, 0)),                  # x (residual, f32)
            pl.BlockSpec((REPS, TT, HD), lambda i, g: (g, i, 0)),        # q heads of group g
            pl.BlockSpec((1, T, HD), lambda i, g: (g, 0, 0)),            # k[group]
            pl.BlockSpec((1, T, HD), lambda i, g: (g, 0, 0)),            # v[group]
            pl.BlockSpec((REPS * HD, D), lambda i, g: (g, 0)),           # wo row block (group)
            pl.BlockSpec((1, D), lambda i, g: (0, 0)),                   # ffn_norm weight
            pl.BlockSpec((D, E), lambda i, g: (0, 0)),                   # gate (bf16)
            pl.BlockSpec((E, D, F_HID), lambda i, g: (0, 0, 0)),         # w1 (all experts, bf16)
            pl.BlockSpec((E, D, F_HID), lambda i, g: (0, 0, 0)),         # w3
            pl.BlockSpec((E, F_HID, D), lambda i, g: (0, 0, 0)),         # w2
        ],
        out_specs=pl.BlockSpec((TT, D), lambda i, g: (i, 0)),            # written at last group
        scratch_shapes=[pltpu.VMEM((TT, D), jnp.float32)],               # h accumulator
        compiler_params=pltpu.CompilerParams(
            dimension_semantics=("parallel", "arbitrary"),
            vmem_limit_bytes=48 * 1024 * 1024),
    )(x, q, k, v, p['wo'], p['ffn_norm'], p['gate'], p['w1'], p['w3'], p['w2'])
    return out


# ---------------- pure-JAX reference (PyTorch semantics, cache=None, bf16 matmuls) ----------------
def reference(x, p, cos_half, sin_half):
    bf = jnp.bfloat16

    def rms(v, w):
        return v * lax.rsqrt(jnp.mean(v * v, -1, keepdims=True) + EPS) * w

    xn = rms(x, p['attn_norm']).astype(bf)
    q = jnp.dot(xn, p['wq'], preferred_element_type=jnp.float32).reshape(T, H, HD)
    k = jnp.dot(xn, p['wk'], preferred_element_type=jnp.float32).reshape(T, KV, HD)
    v = jnp.dot(xn, p['wv'], preferred_element_type=jnp.float32).reshape(T, KV, HD)

    def rope(t):
        t2 = t.reshape(t.shape[0], t.shape[1], HD // 2, 2)
        c = cos_half[:, None, :]
        s = sin_half[:, None, :]
        o0 = t2[..., 0] * c - t2[..., 1] * s
        o1 = t2[..., 0] * s + t2[..., 1] * c
        return jnp.stack([o0, o1], axis=-1).reshape(t.shape)

    q, k = rope(q).astype(bf), rope(k).astype(bf)
    v = v.astype(bf)
    kr = jnp.repeat(k, REPS, axis=1)
    vr = jnp.repeat(v, REPS, axis=1)
    s = jnp.einsum('qhd,khd->hqk', q, kr, preferred_element_type=jnp.float32) * SCALE
    pa = jax.nn.softmax(s, axis=-1).astype(bf)
    o = jnp.einsum('hqk,khd->qhd', pa, vr,
                   preferred_element_type=jnp.float32).reshape(T, H * HD).astype(bf)
    h = x + jnp.dot(o, p['wo'], preferred_element_type=jnp.float32)

    hn = rms(h, p['ffn_norm']).astype(bf)
    logits = jnp.dot(hn, p['gate'], preferred_element_type=jnp.float32)
    wts, sel = lax.top_k(logits, TOPK)
    wts = jax.nn.softmax(wts, axis=-1)
    res = jnp.zeros_like(h)
    for e in range(E):
        g_ = jnp.dot(hn, p['w1'][e], preferred_element_type=jnp.float32)
        u_ = jnp.dot(hn, p['w3'][e], preferred_element_type=jnp.float32)
        y = jnp.dot((jax.nn.silu(g_) * u_).astype(bf), p['w2'][e],
                    preferred_element_type=jnp.float32)
        coeff = jnp.sum(jnp.where(sel == e, wts, 0.0), axis=-1, keepdims=True)
        res = res + coeff * y
    return h + res


if __name__ == "__main__":
    key = jax.random.PRNGKey(0)
    ks = jax.random.split(key, 12)
    s = 0.05
    bf = jnp.bfloat16
    params = {
        'attn_norm': 1.0 + 0.1 * jax.random.normal(ks[0], (1, D), jnp.float32),
        'ffn_norm':  1.0 + 0.1 * jax.random.normal(ks[1], (1, D), jnp.float32),
        'wq':   (s * jax.random.normal(ks[2], (D, H * HD), jnp.float32)).astype(bf),
        'wk':   (s * jax.random.normal(ks[3], (D, KV * HD), jnp.float32)).astype(bf),
        'wv':   (s * jax.random.normal(ks[4], (D, KV * HD), jnp.float32)).astype(bf),
        'wo':   (s * jax.random.normal(ks[5], (H * HD, D), jnp.float32)).astype(bf),
        'gate': (s * jax.random.normal(ks[6], (D, E), jnp.float32)).astype(bf),
        'w1':   (s * jax.random.normal(ks[7], (E, D, F_HID), jnp.float32)).astype(bf),
        'w3':   (s * jax.random.normal(ks[8], (E, D, F_HID), jnp.float32)).astype(bf),
        'w2':   (s * jax.random.normal(ks[9], (E, F_HID, D), jnp.float32)).astype(bf),
    }
    x = jax.random.normal(ks[10], (T, D), jnp.float32)

    # rotary tables (glue, plain JAX).  Only (T, HD)-wide f32 tables ship to the kernel.
    pos = jnp.arange(T, dtype=jnp.float32)
    inv_freq = ROPE_THETA ** (-jnp.arange(0, HD, 2, dtype=jnp.float32) / HD)
    freqs = pos[:, None] * inv_freq[None, :]               # (T, HD//2)
    cos_half, sin_half = jnp.cos(freqs), jnp.sin(freqs)
    cos_tab = jnp.repeat(cos_half, 2, axis=-1)              # (T, HD) pair-interleaved
    sin_rep = jnp.repeat(sin_half, 2, axis=-1)
    lane_par = jnp.arange(HD) % 2
    sin_e_tab = jnp.where(lane_par == 0, sin_rep, 0.0)       # sin on even lanes only
    sin_o_tab = jnp.where(lane_par == 1, sin_rep, 0.0)       # sin on odd lanes only
    # _rope_head relies on these parity masks (they also null the roll wrap-around).
    assert bool(jnp.all(sin_e_tab[:, 1::2] == 0.0)), "sin_e must be zero on odd lanes"
    assert bool(jnp.all(sin_o_tab[:, 0::2] == 0.0)), "sin_o must be zero on even lanes"

    out = jax.block_until_ready(transformer_block(x, params, cos_tab, sin_e_tab, sin_o_tab))

    ref = reference(x, params, cos_half, sin_half)
    err = float(jnp.max(jnp.abs(out - ref)))
    # Tolerance re-baselined against the bf16-matmul reference; residual error comes from
    # bf16 rounding / accumulation-order differences (softmax + router use ~exact division).
    assert err < 2e-2, f"mismatch vs bf16-matmul reference: max abs err = {err}"
    print("KERNEL_OK")
</pallas_src>

<mosaic_0001>
module attributes {stable_mosaic.version = 11 : i64} {
  func.func @qkv_rope_kernel(%arg0: i32, %arg1: memref<256x512xf32, #tpu.memory_space<vmem>>, %arg2: memref<1x512xf32, #tpu.memory_space<vmem>>, %arg3: memref<512x512xbf16, #tpu.memory_space<vmem>>, %arg4: memref<512x256xbf16, #tpu.memory_space<vmem>>, %arg5: memref<512x256xbf16, #tpu.memory_space<vmem>>, %arg6: memref<256x128xf32, #tpu.memory_space<vmem>>, %arg7: memref<256x128xf32, #tpu.memory_space<vmem>>, %arg8: memref<256x128xf32, #tpu.memory_space<vmem>>, %arg9: memref<4x256x128xbf16, #tpu.memory_space<vmem>>, %arg10: memref<2x256x128xbf16, #tpu.memory_space<vmem>>, %arg11: memref<2x256x128xbf16, #tpu.memory_space<vmem>>) attributes {dimension_semantics = [#tpu.dimension_semantics<parallel>], iteration_bounds = array<i64: 2>, scalar_prefetch = 0 : i64, scratch_operands = 0 : i64, tpu.core_type = #tpu.core_type<tc>, window_params = [{transform_indices = @transform_0, window_bounds = array<i64: 256, 512>}, {pipeline_mode = #tpu.pipeline_mode<synchronous>, transform_indices = @transform_1, window_bounds = array<i64: 1, 512>}, {pipeline_mode = #tpu.pipeline_mode<synchronous>, transform_indices = @transform_2, window_bounds = array<i64: 512, 512>}, {pipeline_mode = #tpu.pipeline_mode<synchronous>, transform_indices = @transform_3, window_bounds = array<i64: 512, 256>}, {pipeline_mode = #tpu.pipeline_mode<synchronous>, transform_indices = @transform_4, window_bounds = array<i64: 512, 256>}, {transform_indices = @transform_5, window_bounds = array<i64: 256, 128>}, {transform_indices = @transform_6, window_bounds = array<i64: 256, 128>}, {transform_indices = @transform_7, window_bounds = array<i64: 256, 128>}, {transform_indices = @transform_8, window_bounds = array<i64: 4, 256, 128>}, {transform_indices = @transform_9, window_bounds = array<i64: 2, 256, 128>}, {transform_indices = @transform_10, window_bounds = array<i64: 2, 256, 128>}]} {
    %c0 = arith.constant 0 : index
    %c0_0 = arith.constant 0 : index
    %0 = vector.load %arg1[%c0, %c0_0] : memref<256x512xf32, #tpu.memory_space<vmem>>, vector<256x512xf32>
    %c0_1 = arith.constant 0 : index
    %c0_2 = arith.constant 0 : index
    %1 = vector.load %arg2[%c0_1, %c0_2] : memref<1x512xf32, #tpu.memory_space<vmem>>, vector<1x512xf32>
    %2 = arith.mulf %0, %0 : vector<256x512xf32>
    %cst = arith.constant dense<0.000000e+00> : vector<256xf32>
    %3 = vector.multi_reduction <add>, %2, %cst [1] : vector<256x512xf32> to vector<256xf32>
    %4 = vector.shape_cast %3 : vector<256xf32> to vector<256x1xf32>
    %cst_3 = arith.constant 5.120000e+02 : f32
    %5 = vector.broadcast %cst_3 : f32 to vector<256x1xf32>
    %6 = arith.divf %4, %5 : vector<256x1xf32>
    %cst_4 = arith.constant 9.99999974E-6 : f32
    %7 = vector.broadcast %cst_4 : f32 to vector<256x1xf32>
    %8 = arith.addf %6, %7 : vector<256x1xf32>
    %9 = math.rsqrt %8 : vector<256x1xf32>
    %10 = vector.broadcast %9 : vector<256x1xf32> to vector<256x512xf32>
    %11 = arith.mulf %0, %10 : vector<256x512xf32>
    %12 = vector.broadcast %1 : vector<1x512xf32> to vector<256x512xf32>
    %13 = arith.mulf %11, %12 : vector<256x512xf32>
    %14 = arith.truncf %13 : vector<256x512xf32> to vector<256x512xbf16>
    %c0_5 = arith.constant 0 : index
    %c0_6 = arith.constant 0 : index
    %15 = vector.load %arg3[%c0_5, %c0_6] : memref<512x512xbf16, #tpu.memory_space<vmem>>, vector<512x512xbf16>
    %cst_7 = arith.constant dense<0.000000e+00> : vector<256x512xf32>
    %16 = tpu.matmul %14, %15, %cst_7 {dimension_numbers = #tpu.dot_dimension_numbers<[1], [0], [0], [1], [0, 0, 1, 1], [], []>} : vector<256x512xbf16>, vector<512x512xbf16>, vector<256x512xf32> -> vector<256x512xf32>
    %c0_8 = arith.constant 0 : index
    %c0_9 = arith.constant 0 : index
    %17 = vector.load %arg4[%c0_8, %c0_9] : memref<512x256xbf16, #tpu.memory_space<vmem>>, vector<512x256xbf16>
    %cst_10 = arith.constant dense<0.000000e+00> : vector<256x256xf32>
    %18 = tpu.matmul %14, %17, %cst_10 {dimension_numbers = #tpu.dot_dimension_numbers<[1], [0], [0], [1], [0, 0, 1, 1], [], []>} : vector<256x512xbf16>, vector<512x256xbf16>, vector<256x256xf32> -> vector<256x256xf32>
    %c0_11 = arith.constant 0 : index
    %c0_12 = arith.constant 0 : index
    %19 = vector.load %arg5[%c0_11, %c0_12] : memref<512x256xbf16, #tpu.memory_space<vmem>>, vector<512x256xbf16>
    %cst_13 = arith.constant dense<0.000000e+00> : vector<256x256xf32>
    %20 = tpu.matmul %14, %19, %cst_13 {dimension_numbers = #tpu.dot_dimension_numbers<[1], [0], [0], [1], [0, 0, 1, 1], [], []>} : vector<256x512xbf16>, vector<512x256xbf16>, vector<256x256xf32> -> vector<256x256xf32>
    %c0_14 = arith.constant 0 : index
    %c0_15 = arith.constant 0 : index
    %21 = vector.load %arg6[%c0_14, %c0_15] : memref<256x128xf32, #tpu.memory_space<vmem>>, vector<256x128xf32>
    %c0_16 = arith.constant 0 : index
    %c0_17 = arith.constant 0 : index
    %22 = vector.load %arg7[%c0_16, %c0_17] : memref<256x128xf32, #tpu.memory_space<vmem>>, vector<256x128xf32>
    %c0_18 = arith.constant 0 : index
    %c0_19 = arith.constant 0 : index
    %23 = vector.load %arg8[%c0_18, %c0_19] : memref<256x128xf32, #tpu.memory_space<vmem>>, vector<256x128xf32>
    %24 = vector.extract_strided_slice %16 {offsets = [0, 0], sizes = [256, 128], strides = [1, 1]} : vector<256x512xf32> to vector<256x128xf32>
    %c127_i32 = arith.constant 127 : i32
    %25 = tpu.dynamic_rotate %24 by %c127_i32 dim 1 : vector<256x128xf32>, i32 -> vector<256x128xf32>
    %c1_i32 = arith.constant 1 : i32
    %26 = tpu.dynamic_rotate %24 by %c1_i32 dim 1 : vector<256x128xf32>, i32 -> vector<256x128xf32>
    %27 = arith.mulf %24, %21 : vector<256x128xf32>
    %28 = arith.mulf %25, %22 : vector<256x128xf32>
    %29 = arith.subf %27, %28 : vector<256x128xf32>
    %30 = arith.mulf %26, %23 : vector<256x128xf32>
    %31 = arith.addf %29, %30 : vector<256x128xf32>
    %32 = arith.truncf %31 : vector<256x128xf32> to vector<256x128xbf16>
    %c0_20 = arith.constant 0 : index
    %c0_21 = arith.constant 0 : index
    %c0_22 = arith.constant 0 : index
    %33 = vector.load %arg9[%c0_20, %c0_21, %c0_22] : memref<4x256x128xbf16, #tpu.memory_space<vmem>>, vector<1x256x128xbf16>
    %34 = vector.shape_cast %33 : vector<1x256x128xbf16> to vector<256x128xbf16>
    %35 = vector.shape_cast %32 : vector<256x128xbf16> to vector<1x256x128xbf16>
    tpu.vector_store %arg9[%c0_20, %c0_21, %c0_22], %35 {strides = array<i32>} : memref<4x256x128xbf16, #tpu.memory_space<vmem>>, vector<1x256x128xbf16>,
    %36 = vector.extract_strided_slice %16 {offsets = [0, 128], sizes = [256, 128], strides = [1, 1]} : vector<256x512xf32> to vector<256x128xf32>
    %c127_i32_23 = arith.constant 127 : i32
    %37 = tpu.dynamic_rotate %36 by %c127_i32_23 dim 1 : vector<256x128xf32>, i32 -> vector<256x128xf32>
    %c1_i32_24 = arith.constant 1 : i32
    %38 = tpu.dynamic_rotate %36 by %c1_i32_24 dim 1 : vector<256x128xf32>, i32 -> vector<256x128xf32>
    %39 = arith.mulf %36, %21 : vector<256x128xf32>
    %40 = arith.mulf %37, %22 : vector<256x128xf32>
    %41 = arith.subf %39, %40 : vector<256x128xf32>
    %42 = arith.mulf %38, %23 : vector<256x128xf32>
    %43 = arith.addf %41, %42 : vector<256x128xf32>
    %44 = arith.truncf %43 : vector<256x128xf32> to vector<256x128xbf16>
    %c1 = arith.constant 1 : index
    %c0_25 = arith.constant 0 : index
    %c0_26 = arith.constant 0 : index
    %45 = vector.load %arg9[%c1, %c0_25, %c0_26] : memref<4x256x128xbf16, #tpu.memory_space<vmem>>, vector<1x256x128xbf16>
    %46 = vector.shape_cast %45 : vector<1x256x128xbf16> to vector<256x128xbf16>
    %47 = vector.shape_cast %44 : vector<256x128xbf16> to vector<1x256x128xbf16>
    tpu.vector_store %arg9[%c1, %c0_25, %c0_26], %47 {strides = array<i32>} : memref<4x256x128xbf16, #tpu.memory_space<vmem>>, vector<1x256x128xbf16>,
    %48 = vector.extract_strided_slice %16 {offsets = [0, 256], sizes = [256, 128], strides = [1, 1]} : vector<256x512xf32> to vector<256x128xf32>
    %c127_i32_27 = arith.constant 127 : i32
    %49 = tpu.dynamic_rotate %48 by %c127_i32_27 dim 1 : vector<256x128xf32>, i32 -> vector<256x128xf32>
    %c1_i32_28 = arith.constant 1 : i32
    %50 = tpu.dynamic_rotate %48 by %c1_i32_28 dim 1 : vector<256x128xf32>, i32 -> vector<256x128xf32>
    %51 = arith.mulf %48, %21 : vector<256x128xf32>
    %52 = arith.mulf %49, %22 : vector<256x128xf32>
    %53 = arith.subf %51, %52 : vector<256x128xf32>
    %54 = arith.mulf %50, %23 : vector<256x128xf32>
    %55 = arith.addf %53, %54 : vector<256x128xf32>
    %56 = arith.truncf %55 : vector<256x128xf32> to vector<256x128xbf16>
    %c2 = arith.constant 2 : index
    %c0_29 = arith.constant 0 : index
    %c0_30 = arith.constant 0 : index
    %57 = vector.load %arg9[%c2, %c0_29, %c0_30] : memref<4x256x128xbf16, #tpu.memory_space<vmem>>, vector<1x256x128xbf16>
    %58 = vector.shape_cast %57 : vector<1x256x128xbf16> to vector<256x128xbf16>
    %59 = vector.shape_cast %56 : vector<256x128xbf16> to vector<1x256x128xbf16>
    tpu.vector_store %arg9[%c2, %c0_29, %c0_30], %59 {strides = array<i32>} : memref<4x256x128xbf16, #tpu.memory_space<vmem>>, vector<1x256x128xbf16>,
    %60 = vector.extract_strided_slice %16 {offsets = [0, 384], sizes = [256, 128], strides = [1, 1]} : vector<256x512xf32> to vector<256x128xf32>
    %c127_i32_31 = arith.constant 127 : i32
    %61 = tpu.dynamic_rotate %60 by %c127_i32_31 dim 1 : vector<256x128xf32>, i32 -> vector<256x128xf32>
    %c1_i32_32 = arith.constant 1 : i32
    %62 = tpu.dynamic_rotate %60 by %c1_i32_32 dim 1 : vector<256x128xf32>, i32 -> vector<256x128xf32>
    %63 = arith.mulf %60, %21 : vector<256x128xf32>
    %64 = arith.mulf %61, %22 : vector<256x128xf32>
    %65 = arith.subf %63, %64 : vector<256x128xf32>
    %66 = arith.mulf %62, %23 : vector<256x128xf32>
    %67 = arith.addf %65, %66 : vector<256x128xf32>
    %68 = arith.truncf %67 : vector<256x128xf32> to vector<256x128xbf16>
    %c3 = arith.constant 3 : index
    %c0_33 = arith.constant 0 : index
    %c0_34 = arith.constant 0 : index
    %69 = vector.load %arg9[%c3, %c0_33, %c0_34] : memref<4x256x128xbf16, #tpu.memory_space<vmem>>, vector<1x256x128xbf16>
    %70 = vector.shape_cast %69 : vector<1x256x128xbf16> to vector<256x128xbf16>
    %71 = vector.shape_cast %68 : vector<256x128xbf16> to vector<1x256x128xbf16>
    tpu.vector_store %arg9[%c3, %c0_33, %c0_34], %71 {strides = array<i32>} : memref<4x256x128xbf16, #tpu.memory_space<vmem>>, vector<1x256x128xbf16>,
    %72 = vector.extract_strided_slice %18 {offsets = [0, 0], sizes = [256, 128], strides = [1, 1]} : vector<256x256xf32> to vector<256x128xf32>
    %c127_i32_35 = arith.constant 127 : i32
    %73 = tpu.dynamic_rotate %72 by %c127_i32_35 dim 1 : vector<256x128xf32>, i32 -> vector<256x128xf32>
    %c1_i32_36 = arith.constant 1 : i32
    %74 = tpu.dynamic_rotate %72 by %c1_i32_36 dim 1 : vector<256x128xf32>, i32 -> vector<256x128xf32>
    %75 = arith.mulf %72, %21 : vector<256x128xf32>
    %76 = arith.mulf %73, %22 : vector<256x128xf32>
    %77 = arith.subf %75, %76 : vector<256x128xf32>
    %78 = arith.mulf %74, %23 : vector<256x128xf32>
    %79 = arith.addf %77, %78 : vector<256x128xf32>
    %80 = arith.truncf %79 : vector<256x128xf32> to vector<256x128xbf16>
    %c0_37 = arith.constant 0 : index
    %c0_38 = arith.constant 0 : index
    %c0_39 = arith.constant 0 : index
    %81 = vector.load %arg10[%c0_37, %c0_38, %c0_39] : memref<2x256x128xbf16, #tpu.memory_space<vmem>>, vector<1x256x128xbf16>
    %82 = vector.shape_cast %81 : vector<1x256x128xbf16> to vector<256x128xbf16>
    %83 = vector.shape_cast %80 : vector<256x128xbf16> to vector<1x256x128xbf16>
    tpu.vector_store %arg10[%c0_37, %c0_38, %c0_39], %83 {strides = array<i32>} : memref<2x256x128xbf16, #tpu.memory_space<vmem>>, vector<1x256x128xbf16>,
    %84 = vector.extract_strided_slice %20 {offsets = [0, 0], sizes = [256, 128], strides = [1, 1]} : vector<256x256xf32> to vector<256x128xf32>
    %85 = arith.truncf %84 : vector<256x128xf32> to vector<256x128xbf16>
    %c0_40 = arith.constant 0 : index
    %c0_41 = arith.constant 0 : index
    %c0_42 = arith.constant 0 : index
    %86 = vector.load %arg11[%c0_40, %c0_41, %c0_42] : memref<2x256x128xbf16, #tpu.memory_space<vmem>>, vector<1x256x128xbf16>
    %87 = vector.shape_cast %86 : vector<1x256x128xbf16> to vector<256x128xbf16>
    %88 = vector.shape_cast %85 : vector<256x128xbf16> to vector<1x256x128xbf16>
    tpu.vector_store %arg11[%c0_40, %c0_41, %c0_42], %88 {strides = array<i32>} : memref<2x256x128xbf16, #tpu.memory_space<vmem>>, vector<1x256x128xbf16>,
    %89 = vector.extract_strided_slice %18 {offsets = [0, 128], sizes = [256, 128], strides = [1, 1]} : vector<256x256xf32> to vector<256x128xf32>
    %c127_i32_43 = arith.constant 127 : i32
    %90 = tpu.dynamic_rotate %89 by %c127_i32_43 dim 1 : vector<256x128xf32>, i32 -> vector<256x128xf32>
    %c1_i32_44 = arith.constant 1 : i32
    %91 = tpu.dynamic_rotate %89 by %c1_i32_44 dim 1 : vector<256x128xf32>, i32 -> vector<256x128xf32>
    %92 = arith.mulf %89, %21 : vector<256x128xf32>
    %93 = arith.mulf %90, %22 : vector<256x128xf32>
    %94 = arith.subf %92, %93 : vector<256x128xf32>
    %95 = arith.mulf %91, %23 : vector<256x128xf32>
    %96 = arith.addf %94, %95 : vector<256x128xf32>
    %97 = arith.truncf %96 : vector<256x128xf32> to vector<256x128xbf16>
    %c1_45 = arith.constant 1 : index
    %c0_46 = arith.constant 0 : index
    %c0_47 = arith.constant 0 : index
    %98 = vector.load %arg10[%c1_45, %c0_46, %c0_47] : memref<2x256x128xbf16, #tpu.memory_space<vmem>>, vector<1x256x128xbf16>
    %99 = vector.shape_cast %98 : vector<1x256x128xbf16> to vector<256x128xbf16>
    %100 = vector.shape_cast %97 : vector<256x128xbf16> to vector<1x256x128xbf16>
    tpu.vector_store %arg10[%c1_45, %c0_46, %c0_47], %100 {strides = array<i32>} : memref<2x256x128xbf16, #tpu.memory_space<vmem>>, vector<1x256x128xbf16>,
    %101 = vector.extract_strided_slice %20 {offsets = [0, 128], sizes = [256, 128], strides = [1, 1]} : vector<256x256xf32> to vector<256x128xf32>
    %102 = arith.truncf %101 : vector<256x128xf32> to vector<256x128xbf16>
    %c1_48 = arith.constant 1 : index
    %c0_49 = arith.constant 0 : index
    %c0_50 = arith.constant 0 : index
    %103 = vector.load %arg11[%c1_48, %c0_49, %c0_50] : memref<2x256x128xbf16, #tpu.memory_space<vmem>>, vector<1x256x128xbf16>
    %104 = vector.shape_cast %103 : vector<1x256x128xbf16> to vector<256x128xbf16>
    %105 = vector.shape_cast %102 : vector<256x128xbf16> to vector<1x256x128xbf16>
    tpu.vector_store %arg11[%c1_48, %c0_49, %c0_50], %105 {strides = array<i32>} : memref<2x256x128xbf16, #tpu.memory_space<vmem>>, vector<1x256x128xbf16>,
    return
  }
  func.func @transform_0(%arg0: i32) -> (i32, i32) {
    %c0_i32 = arith.constant 0 : i32
    %c0_i32_0 = arith.constant 0 : i32
    return %arg0, %c0_i32 : i32, i32
  }
  func.func @transform_1(%arg0: i32) -> (i32, i32) {
    %c0_i32 = arith.constant 0 : i32
    %c0_i32_0 = arith.constant 0 : i32
    %c0_i32_1 = arith.constant 0 : i32
    return %c0_i32, %c0_i32_0 : i32, i32
  }
  func.func @transform_2(%arg0: i32) -> (i32, i32) {
    %c0_i32 = arith.constant 0 : i32
    %c0_i32_0 = arith.constant 0 : i32
    %c0_i32_1 = arith.constant 0 : i32
    return %c0_i32, %c0_i32_0 : i32, i32
  }
  func.func @transform_3(%arg0: i32) -> (i32, i32) {
    %c0_i32 = arith.constant 0 : i32
    %c0_i32_0 = arith.constant 0 : i32
    %c0_i32_1 = arith.constant 0 : i32
    return %c0_i32, %c0_i32_0 : i32, i32
  }
  func.func @transform_4(%arg0: i32) -> (i32, i32) {
    %c0_i32 = arith.constant 0 : i32
    %c0_i32_0 = arith.constant 0 : i32
    %c0_i32_1 = arith.constant 0 : i32
    return %c0_i32, %c0_i32_0 : i32, i32
  }
  func.func @transform_5(%arg0: i32) -> (i32, i32) {
    %c0_i32 = arith.constant 0 : i32
    %c0_i32_0 = arith.constant 0 : i32
    return %arg0, %c0_i32 : i32, i32
  }
  func.func @transform_6(%arg0: i32) -> (i32, i32) {
    %c0_i32 = arith.constant 0 : i32
    %c0_i32_0 = arith.constant 0 : i32
    return %arg0, %c0_i32 : i32, i32
  }
  func.func @transform_7(%arg0: i32) -> (i32, i32) {
    %c0_i32 = arith.constant 0 : i32
    %c0_i32_0 = arith.constant 0 : i32
    return %arg0, %c0_i32 : i32, i32
  }
  func.func @transform_8(%arg0: i32) -> (i32, i32, i32) {
    %c0_i32 = arith.constant 0 : i32
    %c0_i32_0 = arith.constant 0 : i32
    %c0_i32_1 = arith.constant 0 : i32
    return %c0_i32, %arg0, %c0_i32_0 : i32, i32, i32
  }
  func.func @transform_9(%arg0: i32) -> (i32, i32, i32) {
    %c0_i32 = arith.constant 0 : i32
    %c0_i32_0 = arith.constant 0 : i32
    %c0_i32_1 = arith.constant 0 : i32
    return %c0_i32, %arg0, %c0_i32_0 : i32, i32, i32
  }
  func.func @transform_10(%arg0: i32) -> (i32, i32, i32) {
    %c0_i32 = arith.constant 0 : i32
    %c0_i32_0 = arith.constant 0 : i32
    %c0_i32_1 = arith.constant 0 : i32
    return %c0_i32, %arg0, %c0_i32_0 : i32, i32, i32
  }
}

</mosaic_0001>

<llo_original>
// kernel: tpu_custom_call.1
$region0: #{tpu_custom_call.1}
  #allocation0 [shape = 'u32[]', space=smem, size = 0x4, offset = 0x4, fixed_abs, tag = 'smem constant byte address 0x4 - core index']
  #allocation1 [shape = 'u32[144,128]{1,0:T(1,128)}', space=vmem, size = 0x12000, scoped, tag = 'internal scratch']
  #allocation20 [shape = 's32[]', space=sflag, size = 0x4, offset = 0, fixed_abs, tag = 'sflag constant byte address 0x0 - dummy sync flag']
  #allocation22 [shape = 's32[]', space=sflag, size = 0x4, offset = 0, fixed_abs, tag = 'sflag constant byte address 0x0 - dummy sync flag']
  #allocation24 [shape = 's32[]', space=sflag, size = 0x4, offset = 0, fixed_abs, tag = 'sflag constant byte address 0x0 - dummy sync flag']
  %s0 = inlined_call_operand.hbm [shape: f32[512,512], index: 0, kind: input, shape index: {}]
  %s1 = inlined_call_operand.hbm [shape: f32[1,512], index: 1, kind: input, shape index: {}]
  %s2 = inlined_call_operand.hbm [shape: bf16[512,512], index: 2, kind: input, shape index: {}]
  %s3 = inlined_call_operand.hbm [shape: bf16[512,256], index: 3, kind: input, shape index: {}]
  %s4 = inlined_call_operand.hbm [shape: bf16[512,256], index: 4, kind: input, shape index: {}]
  %s5 = inlined_call_operand.hbm [shape: f32[512,128], index: 5, kind: input, shape index: {}]
  %s6 = inlined_call_operand.hbm [shape: f32[512,128], index: 6, kind: input, shape index: {}]
  %s7 = inlined_call_operand.hbm [shape: f32[512,128], index: 7, kind: input, shape index: {}]
  %s8 = inlined_call_operand.hbm [shape: bf16[4,512,128], index: 8, kind: output, shape index: {0}]
  %s9 = inlined_call_operand.hbm [shape: bf16[2,512,128], index: 9, kind: output, shape index: {1}]
  %s10 = inlined_call_operand.hbm [shape: bf16[2,512,128], index: 10, kind: output, shape index: {2}]
  %11 = xla_tuple %s8, %s9, %s10
  %s12 = sld [smem:[#allocation0]]
  $region113: #{tpu_custom_call.1} parent=0
    _
  %s14 = ssub.s32 1, %s12
  %s15 = scalar_select 0, %s14, %s12
  $region1: #{tpu_custom_call.1} parent=0
    #allocation2 [shape = 'u8[1048576]{0}', space=vmem, size = 0x100000, scoped, tag = 'input window, operand 0']
    #allocation3 [shape = 's32[2]{0}', space=sflag, size = 0x8, scoped, tag = 'scoped memory for tpu_custom_call.1']
    #allocation4 [shape = 's32[2]{0}', space=sflag, size = 0x8, scoped, tag = 'scoped memory for tpu_custom_call.1']
    #allocation5 [shape = 'u8[2048]{0}', space=vmem, size = 0x800, scoped, tag = 'input window, operand 1, single buffered']
    #allocation6 [shape = 's32[1]{0}', space=sflag, size = 0x4, scoped, tag = 'scoped memory for tpu_custom_call.1']
    #allocation7 [shape = 'u8[524288]{0}', space=vmem, size = 0x80000, scoped, tag = 'input window, operand 2, single buffered']
    #allocation8 [shape = 'u8[262144]{0}', space=vmem, size = 0x40000, scoped, tag = 'input window, operand 3, single buffered']
    #allocation9 [shape = 's32[1]{0}', space=sflag, size = 0x4, scoped, tag = 'scoped memory for tpu_custom_call.1']
    #allocation10 [shape = 'u8[262144]{0}', space=vmem, size = 0x40000, scoped, tag = 'input window, operand 4, single buffered']
    #allocation11 [shape = 'u8[262144]{0}', space=vmem, size = 0x40000, scoped, tag = 'input window, operand 5']
    #allocation12 [shape = 's32[2]{0}', space=sflag, size = 0x8, scoped, tag = 'scoped memory for tpu_custom_call.1']
    #allocation13 [shape = 'u8[262144]{0}', space=vmem, size = 0x40000, scoped, tag = 'input window, operand 6']
    #allocation14 [shape = 'u8[262144]{0}', space=vmem, size = 0x40000, scoped, tag = 'input window, operand 7']
    #allocation15 [shape = 's32[2]{0}', space=sflag, size = 0x8, scoped, tag = 'scoped memory for tpu_custom_call.1']
    #allocation16 [shape = 'u8[524288]{0}', space=vmem, size = 0x80000, scoped, tag = 'output window, operand 0']
    #allocation17 [shape = 'u8[262144]{0}', space=vmem, size = 0x40000, scoped, tag = 'output window, operand 1']
    #allocation18 [shape = 's32[2]{0}', space=sflag, size = 0x8, scoped, tag = 'scoped memory for tpu_custom_call.1']
    #allocation19 [shape = 'u8[262144]{0}', space=vmem, size = 0x40000, scoped, tag = 'output window, operand 2']
    %16 = vsyncpa [#allocation3], 0
    %s17 = scalar_lea.sflag [#allocation3], 1
    %18 = vsyncpa %s17, 0
    %19 = vsyncpa [#allocation6], 0
    %20 = vsyncpa [#allocation9], 0
    %21 = vsyncpa [#allocation12], 0
    %s22 = scalar_lea.sflag [#allocation12], 1
    %23 = vsyncpa %s22, 0
    %24 = vsyncpa [#allocation15], 0
    %s25 = scalar_lea.sflag [#allocation15], 1
    %26 = vsyncpa %s25, 0
    %27 = vsyncpa [#allocation4], 0
    %s28 = scalar_lea.sflag [#allocation4], 1
    %29 = vsyncpa %s28, 0
    %30 = vsyncpa [#allocation18], 0
    %s31 = scalar_lea.sflag [#allocation18], 1
    %32 = vsyncpa %s31, 0
    loop: start=0, step=1, limit=4
    $region2: #{tpu_custom_call.1} parent=1 // loop_pre_header
      _
    $region3: #{tpu_custom_call.1} parent=1 // loop_header
      %s34 = sphi 0, %s38
      %p35 = scmp.ge.s32.totalorder %s34, 4
      %s44 = sphi 0, %s46
      %s47 = sphi 0, %s44
      %s48 = sphi 0, %s47
      %s64 = sphi 0, %s48
      %s68 = sphi 0, %s68
      %s70 = sphi 0, %s68
      %s71 = sphi 0, %s70
      %s85 = sphi 0, %s71
      %s89 = sphi 0, %s89
      %s91 = sphi 0, %s89
      %s92 = sphi 0, %s91
      %s106 = sphi 0, %s92
      %s110 = sphi 0, %s110
      %s112 = sphi 0, %s110
      %s113 = sphi 0, %s112
      %s127 = sphi 0, %s113
      %s131 = sphi 0, %s131
      %s133 = sphi 0, %s131
      %s134 = sphi 0, %s133
      %s148 = sphi 0, %s134
      %s154 = sphi 0, %s156
      %s157 = sphi 0, %s154
      %s158 = sphi 0, %s157
      %s174 = sphi 0, %s158
      %s180 = sphi 0, %s182
      %s183 = sphi 0, %s180
      %s184 = sphi 0, %s183
      %s200 = sphi 0, %s184
      %s206 = sphi 0, %s208
      %s209 = sphi 0, %s206
      %s210 = sphi 0, %s209
      %s226 = sphi 0, %s210
      %s232 = sphi 0, %s234
      %s235 = sphi 0, %s232
      %s236 = sphi 0, %s235
      %s252 = sphi 0, %s236
      %s258 = sphi 0, %s260
      %s261 = sphi 0, %s258
      %s262 = sphi 0, %s261
      %s278 = sphi 0, %s262
      %s284 = sphi 0, %s286
      %s287 = sphi 0, %s284
      %s288 = sphi 0, %s287
      %s304 = sphi 0, %s288
    $region4: #{tpu_custom_call.1} parent=1 // loop_header_branch
      %37 = sbr.rel (%p35) target = $region8
    $region5: #{tpu_custom_call.1} parent=1 // loop_body
      %s39 = ssub.s32 %s34, 1
      %s40 = ssub.s32 %s34, 2
      %s41 = sadd.s32 %s34, 1
      %s42 = ssub.s32 %s34, %s41
      %p43 = scmp.eq.s32.totalorder %s42, 0
      %s45 = sadd.s32 %s44, 1
      %s46 = scalar_select %p43, %s44, %s45
      %p49 = pneg %p43
      %p50 = scmp.eq.s32.totalorder %s34, 1
      %p51 = por %p49, %p50
      %p52 = scmp.ne.s32.totalorder %s44, %s47
      %p53 = scmp.eq.s32.totalorder %s34, 0
      %p54 = por %p52, %p53
      %p55 = scmp.ne.s32.totalorder %s44, %s47
      %p56 = scmp.eq.s32.totalorder %s39, 1
      %p57 = por %p55, %p56
      %p58 = scmp.ne.s32.totalorder %s47, %s48
      %p59 = scmp.eq.s32.totalorder %s39, 0
      %p60 = por %p58, %p59
      %p61 = scmp.ne.s32.totalorder %s47, %s48
      %p62 = scmp.eq.s32.totalorder %s40, 1
      %p63 = por %p61, %p62
      %p65 = scmp.ne.s32.totalorder %s48, %s64
      %p66 = scmp.eq.s32.totalorder %s40, 0
      %p67 = por %p65, %p66
      %s69 = sadd.s32 %s68, 1
      %p72 = scmp.eq.s32.totalorder %s34, 1
      %p73 = scmp.ne.s32.totalorder %s68, %s70
      %p74 = scmp.eq.s32.totalorder %s34, 0
      %p75 = por %p73, %p74
      %p76 = scmp.ne.s32.totalorder %s68, %s70
      %p77 = scmp.eq.s32.totalorder %s39, 1
      %p78 = por %p76, %p77
      %p79 = scmp.ne.s32.totalorder %s70, %s71
      %p80 = scmp.eq.s32.totalorder %s39, 0
      %p81 = por %p79, %p80
      %p82 = scmp.ne.s32.totalorder %s70, %s71
      %p83 = scmp.eq.s32.totalorder %s40, 1
      %p84 = por %p82, %p83
      %p86 = scmp.ne.s32.totalorder %s71, %s85
      %p87 = scmp.eq.s32.totalorder %s40, 0
      %p88 = por %p86, %p87
      %s90 = sadd.s32 %s89, 1
      %p93 = scmp.eq.s32.totalorder %s34, 1
      %p94 = scmp.ne.s32.totalorder %s89, %s91
      %p95 = scmp.eq.s32.totalorder %s34, 0
      %p96 = por %p94, %p95
      %p97 = scmp.ne.s32.totalorder %s89, %s91
      %p98 = scmp.eq.s32.totalorder %s39, 1
      %p99 = por %p97, %p98
      %p100 = scmp.ne.s32.totalorder %s91, %s92
      %p101 = scmp.eq.s32.totalorder %s39, 0
      %p102 = por %p100, %p101
      %p103 = scmp.ne.s32.totalorder %s91, %s92
      %p104 = scmp.eq.s32.totalorder %s40, 1
      %p105 = por %p103, %p104
      %p107 = scmp.ne.s32.totalorder %s92, %s106
      %p108 = scmp.eq.s32.totalorder %s40, 0
      %p109 = por %p107, %p108
      %s111 = sadd.s32 %s110, 1
      %p114 = scmp.eq.s32.totalorder %s34, 1
      %p115 = scmp.ne.s32.totalorder %s110, %s112
      %p116 = scmp.eq.s32.totalorder %s34, 0
      %p117 = por %p115, %p116
      %p118 = scmp.ne.s32.totalorder %s110, %s112
      %p119 = scmp.eq.s32.totalorder %s39, 1
      %p120 = por %p118, %p119
      %p121 = scmp.ne.s32.totalorder %s112, %s113
      %p122 = scmp.eq.s32.totalorder %s39, 0
      %p123 = por %p121, %p122
      %p124 = scmp.ne.s32.totalorder %s112, %s113
      %p125 = scmp.eq.s32.totalorder %s40, 1
      %p126 = por %p124, %p125
      %p128 = scmp.ne.s32.totalorder %s113, %s127
      %p129 = scmp.eq.s32.totalorder %s40, 0
      %p130 = por %p128, %p129
      %s132 = sadd.s32 %s131, 1
      %p135 = scmp.eq.s32.totalorder %s34, 1
      %p136 = scmp.ne.s32.totalorder %s131, %s133
      %p137 = scmp.eq.s32.totalorder %s34, 0
      %p138 = por %p136, %p137
      %p139 = scmp.ne.s32.totalorder %s131, %s133
      %p140 = scmp.eq.s32.totalorder %s39, 1
      %p141 = por %p139, %p140
      %p142 = scmp.ne.s32.totalorder %s133, %s134
      %p143 = scmp.eq.s32.totalorder %s39, 0
      %p144 = por %p142, %p143
      %p145 = scmp.ne.s32.totalorder %s133, %s134
      %p146 = scmp.eq.s32.totalorder %s40, 1
      %p147 = por %p145, %p146
      %p149 = scmp.ne.s32.totalorder %s134, %s148
      %p150 = scmp.eq.s32.totalorder %s40, 0
      %p151 = por %p149, %p150
      %s152 = ssub.s32 %s34, %s41
      %p153 = scmp.eq.s32.totalorder %s152, 0
      %s155 = sadd.s32 %s154, 1
      %s156 = scalar_select %p153, %s154, %s155
      %p159 = pneg %p153
      %p160 = scmp.eq.s32.totalorder %s34, 1
      %p161 = por %p159, %p160
      %p162 = scmp.ne.s32.totalorder %s154, %s157
      %p163 = scmp.eq.s32.totalorder %s34, 0
      %p164 = por %p162, %p163
      %p165 = scmp.ne.s32.totalorder %s154, %s157
      %p166 = scmp.eq.s32.totalorder %s39, 1
      %p167 = por %p165, %p166
      %p168 = scmp.ne.s32.totalorder %s157, %s158
      %p169 = scmp.eq.s32.totalorder %s39, 0
      %p170 = por %p168, %p169
      %p171 = scmp.ne.s32.totalorder %s157, %s158
      %p172 = scmp.eq.s32.totalorder %s40, 1
      %p173 = por %p171, %p172
      %p175 = scmp.ne.s32.totalorder %s158, %s174
      %p176 = scmp.eq.s32.totalorder %s40, 0
      %p177 = por %p175, %p176
      %s178 = ssub.s32 %s34, %s41
      %p179 = scmp.eq.s32.totalorder %s178, 0
      %s181 = sadd.s32 %s180, 1
      %s182 = scalar_select %p179, %s180, %s181
      %p185 = pneg %p179
      %p186 = scmp.eq.s32.totalorder %s34, 1
      %p187 = por %p185, %p186
      %p188 = scmp.ne.s32.totalorder %s180, %s183
      %p189 = scmp.eq.s32.totalorder %s34, 0
      %p190 = por %p188, %p189
      %p191 = scmp.ne.s32.totalorder %s180, %s183
      %p192 = scmp.eq.s32.totalorder %s39, 1
      %p193 = por %p191, %p192
      %p194 = scmp.ne.s32.totalorder %s183, %s184
      %p195 = scmp.eq.s32.totalorder %s39, 0
      %p196 = por %p194, %p195
      %p197 = scmp.ne.s32.totalorder %s183, %s184
      %p198 = scmp.eq.s32.totalorder %s40, 1
      %p199 = por %p197, %p198
      %p201 = scmp.ne.s32.totalorder %s184, %s200
      %p202 = scmp.eq.s32.totalorder %s40, 0
      %p203 = por %p201, %p202
      %s204 = ssub.s32 %s34, %s41
      %p205 = scmp.eq.s32.totalorder %s204, 0
      %s207 = sadd.s32 %s206, 1
      %s208 = scalar_select %p205, %s206, %s207
      %p211 = pneg %p205
      %p212 = scmp.eq.s32.totalorder %s34, 1
      %p213 = por %p211, %p212
      %p214 = scmp.ne.s32.totalorder %s206, %s209
      %p215 = scmp.eq.s32.totalorder %s34, 0
      %p216 = por %p214, %p215
      %p217 = scmp.ne.s32.totalorder %s206, %s209
      %p218 = scmp.eq.s32.totalorder %s39, 1
      %p219 = por %p217, %p218
      %p220 = scmp.ne.s32.totalorder %s209, %s210
      %p221 = scmp.eq.s32.totalorder %s39, 0
      %p222 = por %p220, %p221
      %p223 = scmp.ne.s32.totalorder %s209, %s210
      %p224 = scmp.eq.s32.totalorder %s40, 1
      %p225 = por %p223, %p224
      %p227 = scmp.ne.s32.totalorder %s210, %s226
      %p228 = scmp.eq.s32.totalorder %s40, 0
      %p229 = por %p227, %p228
      %s230 = ssub.s32 %s34, %s41
      %p231 = scmp.eq.s32.totalorder %s230, 0
      %s233 = sadd.s32 %s232, 1
      %s234 = scalar_select %p231, %s232, %s233
      %p237 = pneg %p231
      %p238 = scmp.eq.s32.totalorder %s34, 1
      %p239 = por %p237, %p238
      %p240 = scmp.ne.s32.totalorder %s232, %s235
      %p241 = scmp.eq.s32.totalorder %s34, 0
      %p242 = por %p240, %p241
      %p243 = scmp.ne.s32.totalorder %s232, %s235
      %p244 = scmp.eq.s32.totalorder %s39, 1
      %p245 = por %p243, %p244
      %p246 = scmp.ne.s32.totalorder %s235, %s236
      %p247 = scmp.eq.s32.totalorder %s39, 0
      %p248 = por %p246, %p247
      %p249 = scmp.ne.s32.totalorder %s235, %s236
      %p250 = scmp.eq.s32.totalorder %s40, 1
      %p251 = por %p249, %p250
      %p253 = scmp.ne.s32.totalorder %s236, %s252
      %p254 = scmp.eq.s32.totalorder %s40, 0
      %p255 = por %p253, %p254
      %s256 = ssub.s32 %s34, %s41
      %p257 = scmp.eq.s32.totalorder %s256, 0
      %s259 = sadd.s32 %s258, 1
      %s260 = scalar_select %p257, %s258, %s259
      %p263 = pneg %p257
      %p264 = scmp.eq.s32.totalorder %s34, 1
      %p265 = por %p263, %p264
      %p266 = scmp.ne.s32.totalorder %s258, %s261
      %p267 = scmp.eq.s32.totalorder %s34, 0
      %p268 = por %p266, %p267
      %p269 = scmp.ne.s32.totalorder %s258, %s261
      %p270 = scmp.eq.s32.totalorder %s39, 1
      %p271 = por %p269, %p270
      %p272 = scmp.ne.s32.totalorder %s261, %s262
      %p273 = scmp.eq.s32.totalorder %s39, 0
      %p274 = por %p272, %p273
      %p275 = scmp.ne.s32.totalorder %s261, %s262
      %p276 = scmp.eq.s32.totalorder %s40, 1
      %p277 = por %p275, %p276
      %p279 = scmp.ne.s32.totalorder %s262, %s278
      %p280 = scmp.eq.s32.totalorder %s40, 0
      %p281 = por %p279, %p280
      %s282 = ssub.s32 %s34, %s41
      %p283 = scmp.eq.s32.totalorder %s282, 0
      %s285 = sadd.s32 %s284, 1
      %s286 = scalar_select %p283, %s284, %s285
      %p289 = pneg %p283
      %p290 = scmp.eq.s32.totalorder %s34, 1
      %p291 = por %p289, %p290
      %p292 = scmp.ne.s32.totalorder %s284, %s287
      %p293 = scmp.eq.s32.totalorder %s34, 0
      %p294 = por %p292, %p293
      %p295 = scmp.ne.s32.totalorder %s284, %s287
      %p296 = scmp.eq.s32.totalorder %s39, 1
      %p297 = por %p295, %p296
      %p298 = scmp.ne.s32.totalorder %s287, %s288
      %p299 = scmp.eq.s32.totalorder %s39, 0
      %p300 = por %p298, %p299
      %p301 = scmp.ne.s32.totalorder %s287, %s288
      %p302 = scmp.eq.s32.totalorder %s40, 1
      %p303 = por %p301, %p302
      %p305 = scmp.ne.s32.totalorder %s288, %s304
      %p306 = scmp.eq.s32.totalorder %s40, 0
      %p307 = por %p305, %p306
      %p308 = scmp.le.s32.totalorder 1, %s34
      %p309 = scmp.lt.s32.totalorder %s34, 3
      %p310 = pnand %p308, %p309
      %p311 = pneg %p310
      // Predicated region
      $region9: #{tpu_custom_call.1} parent=5 // pred_check
        _
      $region10: #{tpu_custom_call.1} parent=5 // pred_check_branch
        %313 = sbr.rel (%p310) target = $region12
      $region11: #{tpu_custom_call.1} parent=5 // pred_region
        %s314 = ssub.s32 %s34, 1
        // Predicated region
        $region13: #{tpu_custom_call.1} parent=11 // pred_check
          %p315 = pneg %p81
        $region14: #{tpu_custom_call.1} parent=11 // pred_check_branch
          %317 = sbr.rel (%p315) target = $region16
        $region15: #{tpu_custom_call.1} parent=11 // pred_region
          %s319 = ssub.s32 64, 64
          %320 = vsyncadd [#allocation6], %s319
          %s322 = sshll.u32 [#allocation5], 4
          %s323 = int_to_ptr.vmem [resolvable:$true] %s322
          %325 = dma.hbm_to_vmem [thread:$0]  %s1, 64, %s323, [#allocation6]
        $region16: #{tpu_custom_call.1} parent=11 // pred_fallthru
          _
        // Predicated region
        $region17: #{tpu_custom_call.1} parent=11 // pred_check
          %p326 = pneg %p102
        $region18: #{tpu_custom_call.1} parent=11 // pred_check_branch
          %328 = sbr.rel (%p326) target = $region20
        $region19: #{tpu_custom_call.1} parent=11 // pred_region
          %s330 = ssub.s32 16384, 16384
          %331 = vsyncadd [#allocation6], %s330
          %s332 = sshll.u32 [#allocation7], 4
          %s333 = int_to_ptr.vmem [resolvable:$true] %s332
          %338 = dma.hbm_to_vmem [thread:$0]  %s2, 16384, %s333, [#allocation6], 256, 256, 16
        $region20: #{tpu_custom_call.1} parent=11 // pred_fallthru
          _
        // Predicated region
        $region21: #{tpu_custom_call.1} parent=11 // pred_check
          %p339 = pneg %p123
        $region22: #{tpu_custom_call.1} parent=11 // pred_check_branch
          %341 = sbr.rel (%p339) target = $region24
        $region23: #{tpu_custom_call.1} parent=11 // pred_region
          %s343 = ssub.s32 8192, 8192
          %344 = vsyncadd [#allocation9], %s343
          %s345 = sshll.u32 [#allocation8], 4
          %s346 = int_to_ptr.vmem [resolvable:$true] %s345
          %351 = dma.hbm_to_vmem [thread:$0]  %s3, 8192, %s346, [#allocation9], 128, 128, 8
        $region24: #{tpu_custom_call.1} parent=11 // pred_fallthru
          _
        // Predicated region
        $region25: #{tpu_custom_call.1} parent=11 // pred_check
          %p352 = pneg %p144
        $region26: #{tpu_custom_call.1} parent=11 // pred_check_branch
          %354 = sbr.rel (%p352) target = $region28
        $region27: #{tpu_custom_call.1} parent=11 // pred_region
          %s356 = ssub.s32 8192, 8192
          %357 = vsyncadd [#allocation9], %s356
          %s358 = sshll.u32 [#allocation10], 4
          %s359 = int_to_ptr.vmem [resolvable:$true] %s358
          %364 = dma.hbm_to_vmem [thread:$0]  %s4, 8192, %s359, [#allocation9], 128, 128, 8
        $region28: #{tpu_custom_call.1} parent=11 // pred_fallthru
          _
      $region12: #{tpu_custom_call.1} parent=5 // pred_fallthru
        _
      %p365 = scmp.lt.s32.totalorder %s34, 2
      // Predicated region
      $region29: #{tpu_custom_call.1} parent=5 // pred_check
        %p366 = pneg %p365
      $region30: #{tpu_custom_call.1} parent=5 // pred_check_branch
        %368 = sbr.rel (%p366) target = $region32
      $region31: #{tpu_custom_call.1} parent=5 // pred_region
        // Predicated region
        $region33: #{tpu_custom_call.1} parent=31 // pred_check
          %p369 = pneg %p54
        $region34: #{tpu_custom_call.1} parent=31 // pred_check_branch
          %371 = sbr.rel (%p369) target = $region36
        $region35: #{tpu_custom_call.1} parent=31 // pred_region
          %s372 = sand.u32 %s44, 1
          %s373 = scalar_lea.sflag [#allocation3], %s372
          %s374 = sand.u32 %s44, 1
          %s375 = smul.addr %s374, 1024
          %s376 = scalar_lea.vmem [#allocation2], %s375
          %s377 = smul.u32 32, %s34
          %s379 = ssub.s32 16384, 16384
          %380 = vsyncadd %s373, %s379
          %s381 = smul.addr %s377, 4
          %s382 = smul.addr %s381, 128
          %s383 = scalar_lea.hbm %s0, %s382
          %s384 = sshll.u32 %s376, 4
          %s385 = int_to_ptr.vmem [resolvable:$true] %s384
          %390 = dma.hbm_to_vmem [thread:$0]  %s383, 16384, %s385, %s373, 512, 512, 32
        $region36: #{tpu_custom_call.1} parent=31 // pred_fallthru
          _
        // Predicated region
        $region37: #{tpu_custom_call.1} parent=31 // pred_check
          %p391 = pneg %p164
        $region38: #{tpu_custom_call.1} parent=31 // pred_check_branch
          %393 = sbr.rel (%p391) target = $region40
        $region39: #{tpu_custom_call.1} parent=31 // pred_region
          %s394 = sand.u32 %s34, 1
          %s395 = scalar_lea.sflag [#allocation12], %s394
          %s396 = sand.u32 %s154, 1
          %s397 = smul.addr %s396, 256
          %s398 = scalar_lea.vmem [#allocation11], %s397
          %s399 = smul.u32 32, %s34
          %s401 = ssub.s32 4096, 4096
          %402 = vsyncadd %s395, %s401
          %s403 = smul.addr %s399, 128
          %s404 = scalar_lea.hbm %s5, %s403
          %s405 = sshll.u32 %s398, 4
          %s406 = int_to_ptr.vmem [resolvable:$true] %s405
          %411 = dma.hbm_to_vmem [thread:$0]  %s404, 4096, %s406, %s395, 128, 128, 8
        $region40: #{tpu_custom_call.1} parent=31 // pred_fallthru
          _
        // Predicated region
        $region41: #{tpu_custom_call.1} parent=31 // pred_check
          %p412 = pneg %p190
        $region42: #{tpu_custom_call.1} parent=31 // pred_check_branch
          %414 = sbr.rel (%p412) target = $region44
        $region43: #{tpu_custom_call.1} parent=31 // pred_region
          %s415 = sand.u32 %s34, 1
          %s416 = scalar_lea.sflag [#allocation12], %s415
          %s417 = sand.u32 %s180, 1
          %s418 = smul.addr %s417, 256
          %s419 = scalar_lea.vmem [#allocation13], %s418
          %s420 = smul.u32 32, %s34
          %s422 = ssub.s32 4096, 4096
          %423 = vsyncadd %s416, %s422
          %s424 = smul.addr %s420, 128
          %s425 = scalar_lea.hbm %s6, %s424
          %s426 = sshll.u32 %s419, 4
          %s427 = int_to_ptr.vmem [resolvable:$true] %s426
          %432 = dma.hbm_to_vmem [thread:$0]  %s425, 4096, %s427, %s416, 128, 128, 8
        $region44: #{tpu_custom_call.1} parent=31 // pred_fallthru
          _
        // Predicated region
        $region45: #{tpu_custom_call.1} parent=31 // pred_check
          %p433 = pneg %p216
        $region46: #{tpu_custom_call.1} parent=31 // pred_check_branch
          %435 = sbr.rel (%p433) target = $region48
        $region47: #{tpu_custom_call.1} parent=31 // pred_region
          %s436 = sand.u32 %s206, 1
          %s437 = scalar_lea.sflag [#allocation15], %s436
          %s438 = sand.u32 %s206, 1
          %s439 = smul.addr %s438, 256
          %s440 = scalar_lea.vmem [#allocation14], %s439
          %s441 = smul.u32 32, %s34
          %s443 = ssub.s32 4096, 4096
          %444 = vsyncadd %s437, %s443
          %s445 = smul.addr %s441, 128
          %s446 = scalar_lea.hbm %s7, %s445
          %s447 = sshll.u32 %s440, 4
          %s448 = int_to_ptr.vmem [resolvable:$true] %s447
          %453 = dma.hbm_to_vmem [thread:$0]  %s446, 4096, %s448, %s437, 128, 128, 8
        $region48: #{tpu_custom_call.1} parent=31 // pred_fallthru
          _
      $region32: #{tpu_custom_call.1} parent=5 // pred_fallthru
        _
      %p454 = scmp.le.s32.totalorder 1, %s34
      %p455 = scmp.lt.s32.totalorder %s34, 3
      %p456 = pnand %p454, %p455
      %p457 = pneg %p456
      // Predicated region
      $region49: #{tpu_custom_call.1} parent=5 // pred_check
        _
      $region50: #{tpu_custom_call.1} parent=5 // pred_check_branch
        %459 = sbr.rel (%p456) target = $region52
      $region51: #{tpu_custom_call.1} parent=5 // pred_region
        %s460 = ssub.s32 %s34, 1
        %s461 = sand.u32 %s47, 1
        %s462 = scalar_lea.sflag [#allocation3], %s461
        %s463 = sand.u32 %s47, 1
        %s464 = smul.addr %s463, 1024
        %s465 = scalar_lea.vmem [#allocation2], %s464
        // Predicated region
        $region53: #{tpu_custom_call.1} parent=51 // pred_check
          %p466 = pneg %p60
        $region54: #{tpu_custom_call.1} parent=51 // pred_check_branch
          %468 = sbr.rel (%p466) target = $region56
        $region55: #{tpu_custom_call.1} parent=51 // pred_region
          %469 = dma.done %s462, 16384
        $region56: #{tpu_custom_call.1} parent=51 // pred_fallthru
          _
        // Predicated region
        $region57: #{tpu_custom_call.1} parent=51 // pred_check
          %p470 = pneg %p81
        $region58: #{tpu_custom_call.1} parent=51 // pred_check_branch
          %472 = sbr.rel (%p470) target = $region60
        $region59: #{tpu_custom_call.1} parent=51 // pred_region
          %473 = dma.done [#allocation6], 64
        $region60: #{tpu_custom_call.1} parent=51 // pred_fallthru
          _
        // Predicated region
        $region61: #{tpu_custom_call.1} parent=51 // pred_check
          %p474 = pneg %p102
        $region62: #{tpu_custom_call.1} parent=51 // pred_check_branch
          %476 = sbr.rel (%p474) target = $region64
        $region63: #{tpu_custom_call.1} parent=51 // pred_region
          %477 = dma.done [#allocation6], 16384
        $region64: #{tpu_custom_call.1} parent=51 // pred_fallthru
          _
        // Predicated region
        $region65: #{tpu_custom_call.1} parent=51 // pred_check
          %p478 = pneg %p123
        $region66: #{tpu_custom_call.1} parent=51 // pred_check_branch
          %480 = sbr.rel (%p478) target = $region68
        $region67: #{tpu_custom_call.1} parent=51 // pred_region
          %481 = dma.done [#allocation9], 8192
        $region68: #{tpu_custom_call.1} parent=51 // pred_fallthru
          _
        // Predicated region
        $region69: #{tpu_custom_call.1} parent=51 // pred_check
          %p482 = pneg %p144
        $region70: #{tpu_custom_call.1} parent=51 // pred_check_branch
          %484 = sbr.rel (%p482) target = $region72
        $region71: #{tpu_custom_call.1} parent=51 // pred_region
          %485 = dma.done [#allocation9], 8192
        $region72: #{tpu_custom_call.1} parent=51 // pred_fallthru
          _
        %s486 = sand.u32 %s39, 1
        %s487 = scalar_lea.sflag [#allocation12], %s486
        %s488 = sand.u32 %s157, 1
        %s489 = smul.addr %s488, 256
        %s490 = scalar_lea.vmem [#allocation11], %s489
        // Predicated region
        $region73: #{tpu_custom_call.1} parent=51 // pred_check
          %p491 = pneg %p170
        $region74: #{tpu_custom_call.1} parent=51 // pred_check_branch
          %493 = sbr.rel (%p491) target = $region76
        $region75: #{tpu_custom_call.1} parent=51 // pred_region
          %494 = dma.done %s487, 4096
        $region76: #{tpu_custom_call.1} parent=51 // pred_fallthru
          _
        %s495 = sand.u32 %s39, 1
        %s496 = scalar_lea.sflag [#allocation12], %s495
        %s497 = sand.u32 %s183, 1
        %s498 = smul.addr %s497, 256
        %s499 = scalar_lea.vmem [#allocation13], %s498
        // Predicated region
        $region77: #{tpu_custom_call.1} parent=51 // pred_check
          %p500 = pneg %p196
        $region78: #{tpu_custom_call.1} parent=51 // pred_check_branch
          %502 = sbr.rel (%p500) target = $region80
        $region79: #{tpu_custom_call.1} parent=51 // pred_region
          %503 = dma.done %s496, 4096
        $region80: #{tpu_custom_call.1} parent=51 // pred_fallthru
          _
        %s504 = sand.u32 %s209, 1
        %s505 = scalar_lea.sflag [#allocation15], %s504
        %s506 = sand.u32 %s209, 1
        %s507 = smul.addr %s506, 256
        %s508 = scalar_lea.vmem [#allocation14], %s507
        // Predicated region
        $region81: #{tpu_custom_call.1} parent=51 // pred_check
          %p509 = pneg %p222
        $region82: #{tpu_custom_call.1} parent=51 // pred_check_branch
          %511 = sbr.rel (%p509) target = $region84
        $region83: #{tpu_custom_call.1} parent=51 // pred_region
          %512 = dma.done %s505, 4096
        $region84: #{tpu_custom_call.1} parent=51 // pred_fallthru
          _
        %s513 = sand.u32 %s47, 1
        %s514 = scalar_lea.sflag [#allocation3], %s513
        %s515 = sand.u32 %s47, 1
        %s516 = smul.addr %s515, 1024
        %s517 = scalar_lea.vmem [#allocation2], %s516
        %p518 = pneg %p60
        %p519 = pneg %p57
        %p520 = pneg %p81
        %p521 = pneg %p78
        %p522 = pneg %p102
        %p523 = pneg %p99
        %p524 = pneg %p123
        %p525 = pneg %p120
        %p526 = pneg %p144
        %p527 = pneg %p141
        %s528 = sand.u32 %s39, 1
        %s529 = scalar_lea.sflag [#allocation12], %s528
        %s530 = sand.u32 %s157, 1
        %s531 = smul.addr %s530, 256
        %s532 = scalar_lea.vmem [#allocation11], %s531
        %p533 = pneg %p170
        %p534 = pneg %p167
        %s535 = sand.u32 %s39, 1
        %s536 = scalar_lea.sflag [#allocation12], %s535
        %s537 = sand.u32 %s183, 1
        %s538 = smul.addr %s537, 256
        %s539 = scalar_lea.vmem [#allocation13], %s538
        %p540 = pneg %p196
        %p541 = pneg %p193
        %s542 = sand.u32 %s209, 1
        %s543 = scalar_lea.sflag [#allocation15], %s542
        %s544 = sand.u32 %s209, 1
        %s545 = smul.addr %s544, 256
        %s546 = scalar_lea.vmem [#allocation14], %s545
        %p547 = pneg %p222
        %p548 = pneg %p219
        %p549 = pneg %p248
        %p550 = pneg %p245
        %s551 = sand.u32 %s235, 1
        %s552 = scalar_lea.sflag [#allocation4], %s551
        %s553 = sand.u32 %s235, 1
        %s554 = smul.addr %s553, 512
        %s555 = scalar_lea.vmem [#allocation16], %s554
        %p556 = pneg %p274
        %p557 = pneg %p271
        %s558 = sand.u32 %s39, 1
        %s559 = scalar_lea.sflag [#allocation18], %s558
        %s560 = sand.u32 %s261, 1
        %s561 = smul.addr %s560, 256
        %s562 = scalar_lea.vmem [#allocation17], %s561
        %p563 = pneg %p300
        %p564 = pneg %p297
        %s565 = sand.u32 %s39, 1
        %s566 = scalar_lea.sflag [#allocation18], %s565
        %s567 = sand.u32 %s287, 1
        %s568 = smul.addr %s567, 256
        %s569 = scalar_lea.vmem [#allocation19], %s568
        %s570 = smul.u32 32, %s39
        %s571 = smul.u32 32, %s39
        %s572 = smul.u32 32, %s39
        %s573 = smul.u32 32, %s39
        %s574 = smul.u32 32, %s39
        %s575 = smul.u32 32, %s39
        %s576 = smul.u32 32, %s39
        %v577 = vld [vmem:[%s465] sm:$0xff]
        %v578 = vld [vmem:[%s465 + $0x8] sm:$0xff]
        %v579 = vld [vmem:[%s465 + $0x10] sm:$0xff]
        %v580 = vld [vmem:[%s465 + $0x18] sm:$0xff]
        %v581 = vld [vmem:[%s465 + $0x20] sm:$0xff]
        %v582 = vld [vmem:[%s465 + $0x28] sm:$0xff]
        %v583 = vld [vmem:[%s465 + $0x30] sm:$0xff]
        %v584 = vld [vmem:[%s465 + $0x38] sm:$0xff]
        %v585 = vld [vmem:[%s465 + $0x40] sm:$0xff]
        %v586 = vld [vmem:[%s465 + $0x48] sm:$0xff]
        %v587 = vld [vmem:[%s465 + $0x50] sm:$0xff]
        %v588 = vld [vmem:[%s465 + $0x58] sm:$0xff]
        %v589 = vld [vmem:[%s465 + $0x60] sm:$0xff]
        %v590 = vld [vmem:[%s465 + $0x68] sm:$0xff]
        %v591 = vld [vmem:[%s465 + $0x70] sm:$0xff]
        %v592 = vld [vmem:[%s465 + $0x78] sm:$0xff]
        %v593 = vld [vmem:[%s465 + $0x80] sm:$0xff]
        %v594 = vld [vmem:[%s465 + $0x88] sm:$0xff]
        %v595 = vld [vmem:[%s465 + $0x90] sm:$0xff]
        %v596 = vld [vmem:[%s465 + $0x98] sm:$0xff]
        %v597 = vld [vmem:[%s465 + $0xa0] sm:$0xff]
        %v598 = vld [vmem:[%s465 + $0xa8] sm:$0xff]
        %v599 = vld [vmem:[%s465 + $0xb0] sm:$0xff]
        %v600 = vld [vmem:[%s465 + $0xb8] sm:$0xff]
        %v601 = vld [vmem:[%s465 + $0xc0] sm:$0xff]
        %v602 = vld [vmem:[%s465 + $0xc8] sm:$0xff]
        %v603 = vld [vmem:[%s465 + $0xd0] sm:$0xff]
        %v604 = vld [vmem:[%s465 + $0xd8] sm:$0xff]
        %v605 = vld [vmem:[%s465 + $0xe0] sm:$0xff]
        %v606 = vld [vmem:[%s465 + $0xe8] sm:$0xff]
        %v607 = vld [vmem:[%s465 + $0xf0] sm:$0xff]
        %v608 = vld [vmem:[%s465 + $0xf8] sm:$0xff]
        %v609 = vld [vmem:[%s465 + $0x100] sm:$0xff]
        %v610 = vld [vmem:[%s465 + $0x108] sm:$0xff]
        %v611 = vld [vmem:[%s465 + $0x110] sm:$0xff]
        %v612 = vld [vmem:[%s465 + $0x118] sm:$0xff]
        %v613 = vld [vmem:[%s465 + $0x120] sm:$0xff]
        %v614 = vld [vmem:[%s465 + $0x128] sm:$0xff]
        %v615 = vld [vmem:[%s465 + $0x130] sm:$0xff]
        %v616 = vld [vmem:[%s465 + $0x138] sm:$0xff]
        %v617 = vld [vmem:[%s465 + $0x140] sm:$0xff]
        %v618 = vld [vmem:[%s465 + $0x148] sm:$0xff]
        %v619 = vld [vmem:[%s465 + $0x150] sm:$0xff]
        %v620 = vld [vmem:[%s465 + $0x158] sm:$0xff]
        %v621 = vld [vmem:[%s465 + $0x160] sm:$0xff]
        %v622 = vld [vmem:[%s465 + $0x168] sm:$0xff]
        %v623 = vld [vmem:[%s465 + $0x170] sm:$0xff]
        %v624 = vld [vmem:[%s465 + $0x178] sm:$0xff]
        %v625 = vld [vmem:[%s465 + $0x180] sm:$0xff]
        %v626 = vld [vmem:[%s465 + $0x188] sm:$0xff]
        %v627 = vld [vmem:[%s465 + $0x190] sm:$0xff]
        %v628 = vld [vmem:[%s465 + $0x198] sm:$0xff]
        %v629 = vld [vmem:[%s465 + $0x1a0] sm:$0xff]
        %v630 = vld [vmem:[%s465 + $0x1a8] sm:$0xff]
        %v631 = vld [vmem:[%s465 + $0x1b0] sm:$0xff]
        %v632 = vld [vmem:[%s465 + $0x1b8] sm:$0xff]
        %v633 = vld [vmem:[%s465 + $0x1c0] sm:$0xff]
        %v634 = vld [vmem:[%s465 + $0x1c8] sm:$0xff]
        %v635 = vld [vmem:[%s465 + $0x1d0] sm:$0xff]
        %v636 = vld [vmem:[%s465 + $0x1d8] sm:$0xff]
        %v637 = vld [vmem:[%s465 + $0x1e0] sm:$0xff]
        %v638 = vld [vmem:[%s465 + $0x1e8] sm:$0xff]
        %v639 = vld [vmem:[%s465 + $0x1f0] sm:$0xff]
        %v640 = vld [vmem:[%s465 + $0x1f8] sm:$0xff]
        %v641 = vld [vmem:[%s465 + $0x200] sm:$0xff]
        %v642 = vld [vmem:[%s465 + $0x208] sm:$0xff]
        %v643 = vld [vmem:[%s465 + $0x210] sm:$0xff]
        %v644 = vld [vmem:[%s465 + $0x218] sm:$0xff]
        %v645 = vld [vmem:[%s465 + $0x220] sm:$0xff]
        %v646 = vld [vmem:[%s465 + $0x228] sm:$0xff]
        %v647 = vld [vmem:[%s465 + $0x230] sm:$0xff]
        %v648 = vld [vmem:[%s465 + $0x238] sm:$0xff]
        %v649 = vld [vmem:[%s465 + $0x240] sm:$0xff]
        %v650 = vld [vmem:[%s465 + $0x248] sm:$0xff]
        %v651 = vld [vmem:[%s465 + $0x250] sm:$0xff]
        %v652 = vld [vmem:[%s465 + $0x258] sm:$0xff]
        %v653 = vld [vmem:[%s465 + $0x260] sm:$0xff]
        %v654 = vld [vmem:[%s465 + $0x268] sm:$0xff]
        %v655 = vld [vmem:[%s465 + $0x270] sm:$0xff]
        %v656 = vld [vmem:[%s465 + $0x278] sm:$0xff]
        %v657 = vld [vmem:[%s465 + $0x280] sm:$0xff]
        %v658 = vld [vmem:[%s465 + $0x288] sm:$0xff]
        %v659 = vld [vmem:[%s465 + $0x290] sm:$0xff]
        %v660 = vld [vmem:[%s465 + $0x298] sm:$0xff]
        %v661 = vld [vmem:[%s465 + $0x2a0] sm:$0xff]
        %v662 = vld [vmem:[%s465 + $0x2a8] sm:$0xff]
        %v663 = vld [vmem:[%s465 + $0x2b0] sm:$0xff]
        %v664 = vld [vmem:[%s465 + $0x2b8] sm:$0xff]
        %v665 = vld [vmem:[%s465 + $0x2c0] sm:$0xff]
        %v666 = vld [vmem:[%s465 + $0x2c8] sm:$0xff]
        %v667 = vld [vmem:[%s465 + $0x2d0] sm:$0xff]
        %v668 = vld [vmem:[%s465 + $0x2d8] sm:$0xff]
        %v669 = vld [vmem:[%s465 + $0x2e0] sm:$0xff]
        %v670 = vld [vmem:[%s465 + $0x2e8] sm:$0xff]
        %v671 = vld [vmem:[%s465 + $0x2f0] sm:$0xff]
        %v672 = vld [vmem:[%s465 + $0x2f8] sm:$0xff]
        %v673 = vld [vmem:[%s465 + $0x300] sm:$0xff]
        %v674 = vld [vmem:[%s465 + $0x308] sm:$0xff]
        %v675 = vld [vmem:[%s465 + $0x310] sm:$0xff]
        %v676 = vld [vmem:[%s465 + $0x318] sm:$0xff]
        %v677 = vld [vmem:[%s465 + $0x320] sm:$0xff]
        %v678 = vld [vmem:[%s465 + $0x328] sm:$0xff]
        %v679 = vld [vmem:[%s465 + $0x330] sm:$0xff]
        %v680 = vld [vmem:[%s465 + $0x338] sm:$0xff]
        %v681 = vld [vmem:[%s465 + $0x340] sm:$0xff]
        %v682 = vld [vmem:[%s465 + $0x348] sm:$0xff]
        %v683 = vld [vmem:[%s465 + $0x350] sm:$0xff]
        %v684 = vld [vmem:[%s465 + $0x358] sm:$0xff]
        %v685 = vld [vmem:[%s465 + $0x360] sm:$0xff]
        %v686 = vld [vmem:[%s465 + $0x368] sm:$0xff]
        %v687 = vld [vmem:[%s465 + $0x370] sm:$0xff]
        %v688 = vld [vmem:[%s465 + $0x378] sm:$0xff]
        %v689 = vld [vmem:[%s465 + $0x380] sm:$0xff]
        %v690 = vld [vmem:[%s465 + $0x388] sm:$0xff]
        %v691 = vld [vmem:[%s465 + $0x390] sm:$0xff]
        %v692 = vld [vmem:[%s465 + $0x398] sm:$0xff]
        %v693 = vld [vmem:[%s465 + $0x3a0] sm:$0xff]
        %v694 = vld [vmem:[%s465 + $0x3a8] sm:$0xff]
        %v695 = vld [vmem:[%s465 + $0x3b0] sm:$0xff]
        %v696 = vld [vmem:[%s465 + $0x3b8] sm:$0xff]
        %v697 = vld [vmem:[%s465 + $0x3c0] sm:$0xff]
        %v698 = vld [vmem:[%s465 + $0x3c8] sm:$0xff]
        %v699 = vld [vmem:[%s465 + $0x3d0] sm:$0xff]
        %v700 = vld [vmem:[%s465 + $0x3d8] sm:$0xff]
        %v701 = vld [vmem:[%s465 + $0x3e0] sm:$0xff]
        %v702 = vld [vmem:[%s465 + $0x3e8] sm:$0xff]
        %v703 = vld [vmem:[%s465 + $0x3f0] sm:$0xff]
        %v704 = vld [vmem:[%s465 + $0x3f8] sm:$0xff]
        %v705 = vld [vmem:[#allocation5] sm:$0xf]
        %v706 = vmul.f32 %v577, %v577
        %v707 = vmul.f32 %v578, %v578
        %v708 = vmul.f32 %v579, %v579
        %v709 = vmul.f32 %v580, %v580
        %v710 = vmul.f32 %v581, %v581
        %v711 = vmul.f32 %v582, %v582
        %v712 = vmul.f32 %v583, %v583
        %v713 = vmul.f32 %v584, %v584
        %v714 = vmul.f32 %v585, %v585
        %v715 = vmul.f32 %v586, %v586
        %v716 = vmul.f32 %v587, %v587
        %v717 = vmul.f32 %v588, %v588
        %v718 = vmul.f32 %v589, %v589
        %v719 = vmul.f32 %v590, %v590
        %v720 = vmul.f32 %v591, %v591
        %v721 = vmul.f32 %v592, %v592
        %v722 = vmul.f32 %v593, %v593
        %v723 = vmul.f32 %v594, %v594
        %v724 = vmul.f32 %v595, %v595
        %v725 = vmul.f32 %v596, %v596
        %v726 = vmul.f32 %v597, %v597
        %v727 = vmul.f32 %v598, %v598
        %v728 = vmul.f32 %v599, %v599
        %v729 = vmul.f32 %v600, %v600
        %v730 = vmul.f32 %v601, %v601
        %v731 = vmul.f32 %v602, %v602
        %v732 = vmul.f32 %v603, %v603
        %v733 = vmul.f32 %v604, %v604
        %v734 = vmul.f32 %v605, %v605
        %v735 = vmul.f32 %v606, %v606
        %v736 = vmul.f32 %v607, %v607
        %v737 = vmul.f32 %v608, %v608
        %v738 = vmul.f32 %v609, %v609
        %v739 = vmul.f32 %v610, %v610
        %v740 = vmul.f32 %v611, %v611
        %v741 = vmul.f32 %v612, %v612
        %v742 = vmul.f32 %v613, %v613
        %v743 = vmul.f32 %v614, %v614
        %v744 = vmul.f32 %v615, %v615
        %v745 = vmul.f32 %v616, %v616
        %v746 = vmul.f32 %v617, %v617
        %v747 = vmul.f32 %v618, %v618
        %v748 = vmul.f32 %v619, %v619
        %v749 = vmul.f32 %v620, %v620
        %v750 = vmul.f32 %v621, %v621
        %v751 = vmul.f32 %v622, %v622
        %v752 = vmul.f32 %v623, %v623
        %v753 = vmul.f32 %v624, %v624
        %v754 = vmul.f32 %v625, %v625
        %v755 = vmul.f32 %v626, %v626
        %v756 = vmul.f32 %v627, %v627
        %v757 = vmul.f32 %v628, %v628
        %v758 = vmul.f32 %v629, %v629
        %v759 = vmul.f32 %v630, %v630
        %v760 = vmul.f32 %v631, %v631
        %v761 = vmul.f32 %v632, %v632
        %v762 = vmul.f32 %v633, %v633
        %v763 = vmul.f32 %v634, %v634
        %v764 = vmul.f32 %v635, %v635
        %v765 = vmul.f32 %v636, %v636
        %v766 = vmul.f32 %v637, %v637
        %v767 = vmul.f32 %v638, %v638
        %v768 = vmul.f32 %v639, %v639
        %v769 = vmul.f32 %v640, %v640
        %v770 = vmul.f32 %v641, %v641
        %v771 = vmul.f32 %v642, %v642
        %v772 = vmul.f32 %v643, %v643
        %v773 = vmul.f32 %v644, %v644
        %v774 = vmul.f32 %v645, %v645
        %v775 = vmul.f32 %v646, %v646
        %v776 = vmul.f32 %v647, %v647
        %v777 = vmul.f32 %v648, %v648
        %v778 = vmul.f32 %v649, %v649
        %v779 = vmul.f32 %v650, %v650
        %v780 = vmul.f32 %v651, %v651
        %v781 = vmul.f32 %v652, %v652
        %v782 = vmul.f32 %v653, %v653
        %v783 = vmul.f32 %v654, %v654
        %v784 = vmul.f32 %v655, %v655
        %v785 = vmul.f32 %v656, %v656
        %v786 = vmul.f32 %v657, %v657
        %v787 = vmul.f32 %v658, %v658
        %v788 = vmul.f32 %v659, %v659
        %v789 = vmul.f32 %v660, %v660
        %v790 = vmul.f32 %v661, %v661
        %v791 = vmul.f32 %v662, %v662
        %v792 = vmul.f32 %v663, %v663
        %v793 = vmul.f32 %v664, %v664
        %v794 = vmul.f32 %v665, %v665
        %v795 = vmul.f32 %v666, %v666
        %v796 = vmul.f32 %v667, %v667
        %v797 = vmul.f32 %v668, %v668
        %v798 = vmul.f32 %v669, %v669
        %v799 = vmul.f32 %v670, %v670
        %v800 = vmul.f32 %v671, %v671
        %v801 = vmul.f32 %v672, %v672
        %v802 = vmul.f32 %v673, %v673
        %v803 = vmul.f32 %v674, %v674
        %v804 = vmul.f32 %v675, %v675
        %v805 = vmul.f32 %v676, %v676
        %v806 = vmul.f32 %v677, %v677
        %v807 = vmul.f32 %v678, %v678
        %v808 = vmul.f32 %v679, %v679
        %v809 = vmul.f32 %v680, %v680
        %v810 = vmul.f32 %v681, %v681
        %v811 = vmul.f32 %v682, %v682
        %v812 = vmul.f32 %v683, %v683
        %v813 = vmul.f32 %v684, %v684
        %v814 = vmul.f32 %v685, %v685
        %v815 = vmul.f32 %v686, %v686
        %v816 = vmul.f32 %v687, %v687
        %v817 = vmul.f32 %v688, %v688
        %v818 = vmul.f32 %v689, %v689
        %v819 = vmul.f32 %v690, %v690
        %v820 = vmul.f32 %v691, %v691
        %v821 = vmul.f32 %v692, %v692
        %v822 = vmul.f32 %v693, %v693
        %v823 = vmul.f32 %v694, %v694
        %v824 = vmul.f32 %v695, %v695
        %v825 = vmul.f32 %v696, %v696
        %v826 = vmul.f32 %v697, %v697
        %v827 = vmul.f32 %v698, %v698
        %v828 = vmul.f32 %v699, %v699
        %v829 = vmul.f32 %v700, %v700
        %v830 = vmul.f32 %v701, %v701
        %v831 = vmul.f32 %v702, %v702
        %v832 = vmul.f32 %v703, %v703
        %v833 = vmul.f32 %v704, %v704
        %v834 = vadd.f32 %v706, %v707
        %v835 = vadd.f32 %v834, %v708
        %v836 = vadd.f32 %v835, %v709
        %837 = vadd.xlane.f32.xlu0 %v836
        %v838 = vpop.xlane.xlu0 %837
        %v839 = vadd.f32 %v710, %v711
        %v840 = vadd.f32 %v839, %v712
        %v841 = vadd.f32 %v840, %v713
        %842 = vadd.xlane.f32.xlu0 %v841
        %v843 = vpop.xlane.xlu0 %842
        %v844 = vadd.f32 %v714, %v715
        %v845 = vadd.f32 %v844, %v716
        %v846 = vadd.f32 %v845, %v717
        %847 = vadd.xlane.f32.xlu0 %v846
        %v848 = vpop.xlane.xlu0 %847
        %v849 = vadd.f32 %v718, %v719
        %v850 = vadd.f32 %v849, %v720
        %v851 = vadd.f32 %v850, %v721
        %852 = vadd.xlane.f32.xlu0 %v851
        %v853 = vpop.xlane.xlu0 %852
        %v854 = vadd.f32 %v722, %v723
        %v855 = vadd.f32 %v854, %v724
        %v856 = vadd.f32 %v855, %v725
        %857 = vadd.xlane.f32.xlu0 %v856
        %v858 = vpop.xlane.xlu0 %857
        %v859 = vadd.f32 %v726, %v727
        %v860 = vadd.f32 %v859, %v728
        %v861 = vadd.f32 %v860, %v729
        %862 = vadd.xlane.f32.xlu0 %v861
        %v863 = vpop.xlane.xlu0 %862
        %v864 = vadd.f32 %v730, %v731
        %v865 = vadd.f32 %v864, %v732
        %v866 = vadd.f32 %v865, %v733
        %867 = vadd.xlane.f32.xlu0 %v866
        %v868 = vpop.xlane.xlu0 %867
        %v869 = vadd.f32 %v734, %v735
        %v870 = vadd.f32 %v869, %v736
        %v871 = vadd.f32 %v870, %v737
        %872 = vadd.xlane.f32.xlu0 %v871
        %v873 = vpop.xlane.xlu0 %872
        %v874 = vadd.f32 %v738, %v739
        %v875 = vadd.f32 %v874, %v740
        %v876 = vadd.f32 %v875, %v741
        %877 = vadd.xlane.f32.xlu0 %v876
        %v878 = vpop.xlane.xlu0 %877
        %v879 = vadd.f32 %v742, %v743
        %v880 = vadd.f32 %v879, %v744
        %v881 = vadd.f32 %v880, %v745
        %882 = vadd.xlane.f32.xlu0 %v881
        %v883 = vpop.xlane.xlu0 %882
        %v884 = vadd.f32 %v746, %v747
        %v885 = vadd.f32 %v884, %v748
        %v886 = vadd.f32 %v885, %v749
        %887 = vadd.xlane.f32.xlu0 %v886
        %v888 = vpop.xlane.xlu0 %887
        %v889 = vadd.f32 %v750, %v751
        %v890 = vadd.f32 %v889, %v752
        %v891 = vadd.f32 %v890, %v753
        %892 = vadd.xlane.f32.xlu0 %v891
        %v893 = vpop.xlane.xlu0 %892
        %v894 = vadd.f32 %v754, %v755
        %v895 = vadd.f32 %v894, %v756
        %v896 = vadd.f32 %v895, %v757
        %897 = vadd.xlane.f32.xlu0 %v896
        %v898 = vpop.xlane.xlu0 %897
        %v899 = vadd.f32 %v758, %v759
        %v900 = vadd.f32 %v899, %v760
        %v901 = vadd.f32 %v900, %v761
        %902 = vadd.xlane.f32.xlu0 %v901
        %v903 = vpop.xlane.xlu0 %902
        %v904 = vadd.f32 %v762, %v763
        %v905 = vadd.f32 %v904, %v764
        %v906 = vadd.f32 %v905, %v765
        %907 = vadd.xlane.f32.xlu0 %v906
        %v908 = vpop.xlane.xlu0 %907
        %v909 = vadd.f32 %v766, %v767
        %v910 = vadd.f32 %v909, %v768
        %v911 = vadd.f32 %v910, %v769
        %912 = vadd.xlane.f32.xlu0 %v911
        %v913 = vpop.xlane.xlu0 %912
        %v914 = vadd.f32 %v770, %v771
        %v915 = vadd.f32 %v914, %v772
        %v916 = vadd.f32 %v915, %v773
        %917 = vadd.xlane.f32.xlu0 %v916
        %v918 = vpop.xlane.xlu0 %917
        %v919 = vadd.f32 %v774, %v775
        %v920 = vadd.f32 %v919, %v776
        %v921 = vadd.f32 %v920, %v777
        %922 = vadd.xlane.f32.xlu0 %v921
        %v923 = vpop.xlane.xlu0 %922
        %v924 = vadd.f32 %v778, %v779
        %v925 = vadd.f32 %v924, %v780
        %v926 = vadd.f32 %v925, %v781
        %927 = vadd.xlane.f32.xlu0 %v926
        %v928 = vpop.xlane.xlu0 %927
        %v929 = vadd.f32 %v782, %v783
        %v930 = vadd.f32 %v929, %v784
        %v931 = vadd.f32 %v930, %v785
        %932 = vadd.xlane.f32.xlu0 %v931
        %v933 = vpop.xlane.xlu0 %932
        %v934 = vadd.f32 %v786, %v787
        %v935 = vadd.f32 %v934, %v788
        %v936 = vadd.f32 %v935, %v789
        %937 = vadd.xlane.f32.xlu0 %v936
        %v938 = vpop.xlane.xlu0 %937
        %v939 = vadd.f32 %v790, %v791
        %v940 = vadd.f32 %v939, %v792
        %v941 = vadd.f32 %v940, %v793
        %942 = vadd.xlane.f32.xlu0 %v941
        %v943 = vpop.xlane.xlu0 %942
        %v944 = vadd.f32 %v794, %v795
        %v945 = vadd.f32 %v944, %v796
        %v946 = vadd.f32 %v945, %v797
        %947 = vadd.xlane.f32.xlu0 %v946
        %v948 = vpop.xlane.xlu0 %947
        %v949 = vadd.f32 %v798, %v799
        %v950 = vadd.f32 %v949, %v800
        %v951 = vadd.f32 %v950, %v801
        %952 = vadd.xlane.f32.xlu0 %v951
        %v953 = vpop.xlane.xlu0 %952
        %v954 = vadd.f32 %v802, %v803
        %v955 = vadd.f32 %v954, %v804
        %v956 = vadd.f32 %v955, %v805
        %957 = vadd.xlane.f32.xlu0 %v956
        %v958 = vpop.xlane.xlu0 %957
        %v959 = vadd.f32 %v806, %v807
        %v960 = vadd.f32 %v959, %v808
        %v961 = vadd.f32 %v960, %v809
        %962 = vadd.xlane.f32.xlu0 %v961
        %v963 = vpop.xlane.xlu0 %962
        %v964 = vadd.f32 %v810, %v811
        %v965 = vadd.f32 %v964, %v812
        %v966 = vadd.f32 %v965, %v813
        %967 = vadd.xlane.f32.xlu0 %v966
        %v968 = vpop.xlane.xlu0 %967
        %v969 = vadd.f32 %v814, %v815
        %v970 = vadd.f32 %v969, %v816
        %v971 = vadd.f32 %v970, %v817
        %972 = vadd.xlane.f32.xlu0 %v971
        %v973 = vpop.xlane.xlu0 %972
        %v974 = vadd.f32 %v818, %v819
        %v975 = vadd.f32 %v974, %v820
        %v976 = vadd.f32 %v975, %v821
        %977 = vadd.xlane.f32.xlu0 %v976
        %v978 = vpop.xlane.xlu0 %977
        %v979 = vadd.f32 %v822, %v823
        %v980 = vadd.f32 %v979, %v824
        %v981 = vadd.f32 %v980, %v825
        %982 = vadd.xlane.f32.xlu0 %v981
        %v983 = vpop.xlane.xlu0 %982
        %v984 = vadd.f32 %v826, %v827
        %v985 = vadd.f32 %v984, %v828
        %v986 = vadd.f32 %v985, %v829
        %987 = vadd.xlane.f32.xlu0 %v986
        %v988 = vpop.xlane.xlu0 %987
        %v989 = vadd.f32 %v830, %v831
        %v990 = vadd.f32 %v989, %v832
        %v991 = vadd.f32 %v990, %v833
        %992 = vadd.xlane.f32.xlu0 %v991
        %v993 = vpop.xlane.xlu0 %992
        %v994 = vrcp.pop 512.0
        %v995 = vmul.f32 %v838, %v994
        %v996 = vmul.f32 %v843, %v994
        %v997 = vmul.f32 %v848, %v994
        %v998 = vmul.f32 %v853, %v994
        %v999 = vmul.f32 %v858, %v994
        %v1000 = vmul.f32 %v863, %v994
        %v1001 = vmul.f32 %v868, %v994
        %v1002 = vmul.f32 %v873, %v994
        %v1003 = vmul.f32 %v878, %v994
        %v1004 = vmul.f32 %v883, %v994
        %v1005 = vmul.f32 %v888, %v994
        %v1006 = vmul.f32 %v893, %v994
        %v1007 = vmul.f32 %v898, %v994
        %v1008 = vmul.f32 %v903, %v994
        %v1009 = vmul.f32 %v908, %v994
        %v1010 = vmul.f32 %v913, %v994
        %v1011 = vmul.f32 %v918, %v994
        %v1012 = vmul.f32 %v923, %v994
        %v1013 = vmul.f32 %v928, %v994
        %v1014 = vmul.f32 %v933, %v994
        %v1015 = vmul.f32 %v938, %v994
        %v1016 = vmul.f32 %v943, %v994
        %v1017 = vmul.f32 %v948, %v994
        %v1018 = vmul.f32 %v953, %v994
        %v1019 = vmul.f32 %v958, %v994
        %v1020 = vmul.f32 %v963, %v994
        %v1021 = vmul.f32 %v968, %v994
        %v1022 = vmul.f32 %v973, %v994
        %v1023 = vmul.f32 %v978, %v994
        %v1024 = vmul.f32 %v983, %v994
        %v1025 = vmul.f32 %v988, %v994
        %v1026 = vmul.f32 %v993, %v994
        %v1027 = vadd.f32 %v995, 1e-05
        %v1028 = vadd.f32 %v996, 1e-05
        %v1029 = vadd.f32 %v997, 1e-05
        %v1030 = vadd.f32 %v998, 1e-05
        %v1031 = vadd.f32 %v999, 1e-05
        %v1032 = vadd.f32 %v1000, 1e-05
        %v1033 = vadd.f32 %v1001, 1e-05
        %v1034 = vadd.f32 %v1002, 1e-05
        %v1035 = vadd.f32 %v1003, 1e-05
        %v1036 = vadd.f32 %v1004, 1e-05
        %v1037 = vadd.f32 %v1005, 1e-05
        %v1038 = vadd.f32 %v1006, 1e-05
        %v1039 = vadd.f32 %v1007, 1e-05
        %v1040 = vadd.f32 %v1008, 1e-05
        %v1041 = vadd.f32 %v1009, 1e-05
        %v1042 = vadd.f32 %v1010, 1e-05
        %v1043 = vadd.f32 %v1011, 1e-05
        %v1044 = vadd.f32 %v1012, 1e-05
        %v1045 = vadd.f32 %v1013, 1e-05
        %v1046 = vadd.f32 %v1014, 1e-05
        %v1047 = vadd.f32 %v1015, 1e-05
        %v1048 = vadd.f32 %v1016, 1e-05
        %v1049 = vadd.f32 %v1017, 1e-05
        %v1050 = vadd.f32 %v1018, 1e-05
        %v1051 = vadd.f32 %v1019, 1e-05
        %v1052 = vadd.f32 %v1020, 1e-05
        %v1053 = vadd.f32 %v1021, 1e-05
        %v1054 = vadd.f32 %v1022, 1e-05
        %v1055 = vadd.f32 %v1023, 1e-05
        %v1056 = vadd.f32 %v1024, 1e-05
        %v1057 = vadd.f32 %v1025, 1e-05
        %v1058 = vadd.f32 %v1026, 1e-05
        %v1059 = vrsqrt.pop %v1027
        %v1060 = vrsqrt.pop %v1028
        %v1061 = vrsqrt.pop %v1029
        %v1062 = vrsqrt.pop %v1030
        %v1063 = vrsqrt.pop %v1031
        %v1064 = vrsqrt.pop %v1032
        %v1065 = vrsqrt.pop %v1033
        %v1066 = vrsqrt.pop %v1034
        %v1067 = vrsqrt.pop %v1035
        %v1068 = vrsqrt.pop %v1036
        %v1069 = vrsqrt.pop %v1037
        %v1070 = vrsqrt.pop %v1038
        %v1071 = vrsqrt.pop %v1039
        %v1072 = vrsqrt.pop %v1040
        %v1073 = vrsqrt.pop %v1041
        %v1074 = vrsqrt.pop %v1042
        %v1075 = vrsqrt.pop %v1043
        %v1076 = vrsqrt.pop %v1044
        %v1077 = vrsqrt.pop %v1045
        %v1078 = vrsqrt.pop %v1046
        %v1079 = vrsqrt.pop %v1047
        %v1080 = vrsqrt.pop %v1048
        %v1081 = vrsqrt.pop %v1049
        %v1082 = vrsqrt.pop %v1050
        %v1083 = vrsqrt.pop %v1051
        %v1084 = vrsqrt.pop %v1052
        %v1085 = vrsqrt.pop %v1053
        %v1086 = vrsqrt.pop %v1054
        %v1087 = vrsqrt.pop %v1055
        %v1088 = vrsqrt.pop %v1056
        %v1089 = vrsqrt.pop %v1057
        %v1090 = vrsqrt.pop %v1058
        %v1091 = vmul.f32 %v577, %v1059
        %v1092 = vmul.f32 %v578, %v1059
        %v1093 = vmul.f32 %v579, %v1059
        %v1094 = vmul.f32 %v580, %v1059
        %v1095 = vmul.f32 %v581, %v1060
        %v1096 = vmul.f32 %v582, %v1060
        %v1097 = vmul.f32 %v583, %v1060
        %v1098 = vmul.f32 %v584, %v1060
        %v1099 = vmul.f32 %v585, %v1061
        %v1100 = vmul.f32 %v586, %v1061
        %v1101 = vmul.f32 %v587, %v1061
        %v1102 = vmul.f32 %v588, %v1061
        %v1103 = vmul.f32 %v589, %v1062
        %v1104 = vmul.f32 %v590, %v1062
        %v1105 = vmul.f32 %v591, %v1062
        %v1106 = vmul.f32 %v592, %v1062
        %v1107 = vmul.f32 %v593, %v1063
        %v1108 = vmul.f32 %v594, %v1063
        %v1109 = vmul.f32 %v595, %v1063
        %v1110 = vmul.f32 %v596, %v1063
        %v1111 = vmul.f32 %v597, %v1064
        %v1112 = vmul.f32 %v598, %v1064
        %v1113 = vmul.f32 %v599, %v1064
        %v1114 = vmul.f32 %v600, %v1064
        %v1115 = vmul.f32 %v601, %v1065
        %v1116 = vmul.f32 %v602, %v1065
        %v1117 = vmul.f32 %v603, %v1065
        %v1118 = vmul.f32 %v604, %v1065
        %v1119 = vmul.f32 %v605, %v1066
        %v1120 = vmul.f32 %v606, %v1066
        %v1121 = vmul.f32 %v607, %v1066
        %v1122 = vmul.f32 %v608, %v1066
        %v1123 = vmul.f32 %v609, %v1067
        %v1124 = vmul.f32 %v610, %v1067
        %v1125 = vmul.f32 %v611, %v1067
        %v1126 = vmul.f32 %v612, %v1067
        %v1127 = vmul.f32 %v613, %v1068
        %v1128 = vmul.f32 %v614, %v1068
        %v1129 = vmul.f32 %v615, %v1068
        %v1130 = vmul.f32 %v616, %v1068
        %v1131 = vmul.f32 %v617, %v1069
        %v1132 = vmul.f32 %v618, %v1069
        %v1133 = vmul.f32 %v619, %v1069
        %v1134 = vmul.f32 %v620, %v1069
        %v1135 = vmul.f32 %v621, %v1070
        %v1136 = vmul.f32 %v622, %v1070
        %v1137 = vmul.f32 %v623, %v1070
        %v1138 = vmul.f32 %v624, %v1070
        %v1139 = vmul.f32 %v625, %v1071
        %v1140 = vmul.f32 %v626, %v1071
        %v1141 = vmul.f32 %v627, %v1071
        %v1142 = vmul.f32 %v628, %v1071
        %v1143 = vmul.f32 %v629, %v1072
        %v1144 = vmul.f32 %v630, %v1072
        %v1145 = vmul.f32 %v631, %v1072
        %v1146 = vmul.f32 %v632, %v1072
        %v1147 = vmul.f32 %v633, %v1073
        %v1148 = vmul.f32 %v634, %v1073
        %v1149 = vmul.f32 %v635, %v1073
        %v1150 = vmul.f32 %v636, %v1073
        %v1151 = vmul.f32 %v637, %v1074
        %v1152 = vmul.f32 %v638, %v1074
        %v1153 = vmul.f32 %v639, %v1074
        %v1154 = vmul.f32 %v640, %v1074
        %v1155 = vmul.f32 %v641, %v1075
        %v1156 = vmul.f32 %v642, %v1075
        %v1157 = vmul.f32 %v643, %v1075
        %v1158 = vmul.f32 %v644, %v1075
        %v1159 = vmul.f32 %v645, %v1076
        %v1160 = vmul.f32 %v646, %v1076
        %v1161 = vmul.f32 %v647, %v1076
        %v1162 = vmul.f32 %v648, %v1076
        %v1163 = vmul.f32 %v649, %v1077
        %v1164 = vmul.f32 %v650, %v1077
        %v1165 = vmul.f32 %v651, %v1077
        %v1166 = vmul.f32 %v652, %v1077
        %v1167 = vmul.f32 %v653, %v1078
        %v1168 = vmul.f32 %v654, %v1078
        %v1169 = vmul.f32 %v655, %v1078
        %v1170 = vmul.f32 %v656, %v1078
        %v1171 = vmul.f32 %v657, %v1079
        %v1172 = vmul.f32 %v658, %v1079
        %v1173 = vmul.f32 %v659, %v1079
        %v1174 = vmul.f32 %v660, %v1079
        %v1175 = vmul.f32 %v661, %v1080
        %v1176 = vmul.f32 %v662, %v1080
        %v1177 = vmul.f32 %v663, %v1080
        %v1178 = vmul.f32 %v664, %v1080
        %v1179 = vmul.f32 %v665, %v1081
        %v1180 = vmul.f32 %v666, %v1081
        %v1181 = vmul.f32 %v667, %v1081
        %v1182 = vmul.f32 %v668, %v1081
        %v1183 = vmul.f32 %v669, %v1082
        %v1184 = vmul.f32 %v670, %v1082
        %v1185 = vmul.f32 %v671, %v1082
        %v1186 = vmul.f32 %v672, %v1082
        %v1187 = vmul.f32 %v673, %v1083
        %v1188 = vmul.f32 %v674, %v1083
        %v1189 = vmul.f32 %v675, %v1083
        %v1190 = vmul.f32 %v676, %v1083
        %v1191 = vmul.f32 %v677, %v1084
        %v1192 = vmul.f32 %v678, %v1084
        %v1193 = vmul.f32 %v679, %v1084
        %v1194 = vmul.f32 %v680, %v1084
        %v1195 = vmul.f32 %v681, %v1085
        %v1196 = vmul.f32 %v682, %v1085
        %v1197 = vmul.f32 %v683, %v1085
        %v1198 = vmul.f32 %v684, %v1085
        %v1199 = vmul.f32 %v685, %v1086
        %v1200 = vmul.f32 %v686, %v1086
        %v1201 = vmul.f32 %v687, %v1086
        %v1202 = vmul.f32 %v688, %v1086
        %v1203 = vmul.f32 %v689, %v1087
        %v1204 = vmul.f32 %v690, %v1087
        %v1205 = vmul.f32 %v691, %v1087
        %v1206 = vmul.f32 %v692, %v1087
        %v1207 = vmul.f32 %v693, %v1088
        %v1208 = vmul.f32 %v694, %v1088
        %v1209 = vmul.f32 %v695, %v1088
        %v1210 = vmul.f32 %v696, %v1088
        %v1211 = vmul.f32 %v697, %v1089
        %v1212 = vmul.f32 %v698, %v1089
        %v1213 = vmul.f32 %v699, %v1089
        %v1214 = vmul.f32 %v700, %v1089
        %v1215 = vmul.f32 %v701, %v1090
        %v1216 = vmul.f32 %v702, %v1090
        %v1217 = vmul.f32 %v703, %v1090
        %v1218 = vmul.f32 %v704, %v1090
        %v1220 = vlaneseq
        %v1221 = vshrl.u32 %v1220, 7
        %v1222 = vsub.s32 0, %v1221
        %v1223 = vrot.slane %v705, %v1222
        %v1224 = vlaneseq
        %v1225 = vshrl.u32 %v1224, 7
        %v1226 = vsub.s32 1, %v1225
        %v1227 = vrot.slane %v705, %v1226
        %v1228 = vlaneseq
        %v1229 = vshrl.u32 %v1228, 7
        %v1230 = vsub.s32 2, %v1229
        %v1231 = vrot.slane %v705, %v1230
        %v1232 = vlaneseq
        %v1233 = vshrl.u32 %v1232, 7
        %v1234 = vsub.s32 3, %v1233
        %v1235 = vrot.slane %v705, %v1234
        %v1240 = vmul.f32 %v1091, %v1223
        %v1241 = vmul.f32 %v1092, %v1227
        %v1242 = vmul.f32 %v1093, %v1231
        %v1243 = vmul.f32 %v1094, %v1235
        %v1244 = vmul.f32 %v1095, %v1223
        %v1245 = vmul.f32 %v1096, %v1227
        %v1246 = vmul.f32 %v1097, %v1231
        %v1247 = vmul.f32 %v1098, %v1235
        %v1248 = vmul.f32 %v1099, %v1223
        %v1249 = vmul.f32 %v1100, %v1227
        %v1250 = vmul.f32 %v1101, %v1231
        %v1251 = vmul.f32 %v1102, %v1235
        %v1252 = vmul.f32 %v1103, %v1223
        %v1253 = vmul.f32 %v1104, %v1227
        %v1254 = vmul.f32 %v1105, %v1231
        %v1255 = vmul.f32 %v1106, %v1235
        %v1256 = vmul.f32 %v1107, %v1223
        %v1257 = vmul.f32 %v1108, %v1227
        %v1258 = vmul.f32 %v1109, %v1231
        %v1259 = vmul.f32 %v1110, %v1235
        %v1260 = vmul.f32 %v1111, %v1223
        %v1261 = vmul.f32 %v1112, %v1227
        %v1262 = vmul.f32 %v1113, %v1231
        %v1263 = vmul.f32 %v1114, %v1235
        %v1264 = vmul.f32 %v1115, %v1223
        %v1265 = vmul.f32 %v1116, %v1227
        %v1266 = vmul.f32 %v1117, %v1231
        %v1267 = vmul.f32 %v1118, %v1235
        %v1268 = vmul.f32 %v1119, %v1223
        %v1269 = vmul.f32 %v1120, %v1227
        %v1270 = vmul.f32 %v1121, %v1231
        %v1271 = vmul.f32 %v1122, %v1235
        %v1272 = vmul.f32 %v1123, %v1223
        %v1273 = vmul.f32 %v1124, %v1227
        %v1274 = vmul.f32 %v1125, %v1231
        %v1275 = vmul.f32 %v1126, %v1235
        %v1276 = vmul.f32 %v1127, %v1223
        %v1277 = vmul.f32 %v1128, %v1227
        %v1278 = vmul.f32 %v1129, %v1231
        %v1279 = vmul.f32 %v1130, %v1235
        %v1280 = vmul.f32 %v1131, %v1223
        %v1281 = vmul.f32 %v1132, %v1227
        %v1282 = vmul.f32 %v1133, %v1231
        %v1283 = vmul.f32 %v1134, %v1235
        %v1284 = vmul.f32 %v1135, %v1223
        %v1285 = vmul.f32 %v1136, %v1227
        %v1286 = vmul.f32 %v1137, %v1231
        %v1287 = vmul.f32 %v1138, %v1235
        %v1288 = vmul.f32 %v1139, %v1223
        %v1289 = vmul.f32 %v1140, %v1227
        %v1290 = vmul.f32 %v1141, %v1231
        %v1291 = vmul.f32 %v1142, %v1235
        %v1292 = vmul.f32 %v1143, %v1223
        %v1293 = vmul.f32 %v1144, %v1227
        %v1294 = vmul.f32 %v1145, %v1231
        %v1295 = vmul.f32 %v1146, %v1235
        %v1296 = vmul.f32 %v1147, %v1223
        %v1297 = vmul.f32 %v1148, %v1227
        %v1298 = vmul.f32 %v1149, %v1231
        %v1299 = vmul.f32 %v1150, %v1235
        %v1300 = vmul.f32 %v1151, %v1223
        %v1301 = vmul.f32 %v1152, %v1227
        %v1302 = vmul.f32 %v1153, %v1231
        %v1303 = vmul.f32 %v1154, %v1235
        %v1304 = vmul.f32 %v1155, %v1223
        %v1305 = vmul.f32 %v1156, %v1227
        %v1306 = vmul.f32 %v1157, %v1231
        %v1307 = vmul.f32 %v1158, %v1235
        %v1308 = vmul.f32 %v1159, %v1223
        %v1309 = vmul.f32 %v1160, %v1227
        %v1310 = vmul.f32 %v1161, %v1231
        %v1311 = vmul.f32 %v1162, %v1235
        %v1312 = vmul.f32 %v1163, %v1223
        %v1313 = vmul.f32 %v1164, %v1227
        %v1314 = vmul.f32 %v1165, %v1231
        %v1315 = vmul.f32 %v1166, %v1235
        %v1316 = vmul.f32 %v1167, %v1223
        %v1317 = vmul.f32 %v1168, %v1227
        %v1318 = vmul.f32 %v1169, %v1231
        %v1319 = vmul.f32 %v1170, %v1235
        %v1320 = vmul.f32 %v1171, %v1223
        %v1321 = vmul.f32 %v1172, %v1227
        %v1322 = vmul.f32 %v1173, %v1231
        %v1323 = vmul.f32 %v1174, %v1235
        %v1324 = vmul.f32 %v1175, %v1223
        %v1325 = vmul.f32 %v1176, %v1227
        %v1326 = vmul.f32 %v1177, %v1231
        %v1327 = vmul.f32 %v1178, %v1235
        %v1328 = vmul.f32 %v1179, %v1223
        %v1329 = vmul.f32 %v1180, %v1227
        %v1330 = vmul.f32 %v1181, %v1231
        %v1331 = vmul.f32 %v1182, %v1235
        %v1332 = vmul.f32 %v1183, %v1223
        %v1333 = vmul.f32 %v1184, %v1227
        %v1334 = vmul.f32 %v1185, %v1231
        %v1335 = vmul.f32 %v1186, %v1235
        %v1336 = vmul.f32 %v1187, %v1223
        %v1337 = vmul.f32 %v1188, %v1227
        %v1338 = vmul.f32 %v1189, %v1231
        %v1339 = vmul.f32 %v1190, %v1235
        %v1340 = vmul.f32 %v1191, %v1223
        %v1341 = vmul.f32 %v1192, %v1227
        %v1342 = vmul.f32 %v1193, %v1231
        %v1343 = vmul.f32 %v1194, %v1235
        %v1344 = vmul.f32 %v1195, %v1223
        %v1345 = vmul.f32 %v1196, %v1227
        %v1346 = vmul.f32 %v1197, %v1231
        %v1347 = vmul.f32 %v1198, %v1235
        %v1348 = vmul.f32 %v1199, %v1223
        %v1349 = vmul.f32 %v1200, %v1227
        %v1350 = vmul.f32 %v1201, %v1231
        %v1351 = vmul.f32 %v1202, %v1235
        %v1352 = vmul.f32 %v1203, %v1223
        %v1353 = vmul.f32 %v1204, %v1227
        %v1354 = vmul.f32 %v1205, %v1231
        %v1355 = vmul.f32 %v1206, %v1235
        %v1356 = vmul.f32 %v1207, %v1223
        %v1357 = vmul.f32 %v1208, %v1227
        %v1358 = vmul.f32 %v1209, %v1231
        %v1359 = vmul.f32 %v1210, %v1235
        %v1360 = vmul.f32 %v1211, %v1223
        %v1361 = vmul.f32 %v1212, %v1227
        %v1362 = vmul.f32 %v1213, %v1231
        %v1363 = vmul.f32 %v1214, %v1235
        %v1364 = vmul.f32 %v1215, %v1223
        %v1365 = vmul.f32 %v1216, %v1227
        %v1366 = vmul.f32 %v1217, %v1231
        %v1367 = vmul.f32 %v1218, %v1235
        %v1368 = vpack.c.bf16 %v1244, %v1240
        %v1369 = vpack.c.bf16 %v1245, %v1241
        %v1370 = vpack.c.bf16 %v1246, %v1242
        %v1371 = vpack.c.bf16 %v1247, %v1243
        %v1372 = vpack.c.bf16 %v1252, %v1248
        %v1373 = vpack.c.bf16 %v1253, %v1249
        %v1374 = vpack.c.bf16 %v1254, %v1250
        %v1375 = vpack.c.bf16 %v1255, %v1251
        %v1376 = vpack.c.bf16 %v1260, %v1256
        %v1377 = vpack.c.bf16 %v1261, %v1257
        %v1378 = vpack.c.bf16 %v1262, %v1258
        %v1379 = vpack.c.bf16 %v1263, %v1259
        %v1380 = vpack.c.bf16 %v1268, %v1264
        %v1381 = vpack.c.bf16 %v1269, %v1265
        %v1382 = vpack.c.bf16 %v1270, %v1266
        %v1383 = vpack.c.bf16 %v1271, %v1267
        %v1384 = vpack.c.bf16 %v1276, %v1272
        %v1385 = vpack.c.bf16 %v1277, %v1273
        %v1386 = vpack.c.bf16 %v1278, %v1274
        %v1387 = vpack.c.bf16 %v1279, %v1275
        %v1388 = vpack.c.bf16 %v1284, %v1280
        %v1389 = vpack.c.bf16 %v1285, %v1281
        %v1390 = vpack.c.bf16 %v1286, %v1282
        %v1391 = vpack.c.bf16 %v1287, %v1283
        %v1392 = vpack.c.bf16 %v1292, %v1288
        %v1393 = vpack.c.bf16 %v1293, %v1289
        %v1394 = vpack.c.bf16 %v1294, %v1290
        %v1395 = vpack.c.bf16 %v1295, %v1291
        %v1396 = vpack.c.bf16 %v1300, %v1296
        %v1397 = vpack.c.bf16 %v1301, %v1297
        %v1398 = vpack.c.bf16 %v1302, %v1298
        %v1399 = vpack.c.bf16 %v1303, %v1299
        %v1400 = vpack.c.bf16 %v1308, %v1304
        %v1401 = vpack.c.bf16 %v1309, %v1305
        %v1402 = vpack.c.bf16 %v1310, %v1306
        %v1403 = vpack.c.bf16 %v1311, %v1307
        %v1404 = vpack.c.bf16 %v1316, %v1312
        %v1405 = vpack.c.bf16 %v1317, %v1313
        %v1406 = vpack.c.bf16 %v1318, %v1314
        %v1407 = vpack.c.bf16 %v1319, %v1315
        %v1408 = vpack.c.bf16 %v1324, %v1320
        %v1409 = vpack.c.bf16 %v1325, %v1321
        %v1410 = vpack.c.bf16 %v1326, %v1322
        %v1411 = vpack.c.bf16 %v1327, %v1323
        %v1412 = vpack.c.bf16 %v1332, %v1328
        %v1413 = vpack.c.bf16 %v1333, %v1329
        %v1414 = vpack.c.bf16 %v1334, %v1330
        %v1415 = vpack.c.bf16 %v1335, %v1331
        %v1416 = vpack.c.bf16 %v1340, %v1336
        %v1417 = vpack.c.bf16 %v1341, %v1337
        %v1418 = vpack.c.bf16 %v1342, %v1338
        %v1419 = vpack.c.bf16 %v1343, %v1339
        %v1420 = vpack.c.bf16 %v1348, %v1344
        %v1421 = vpack.c.bf16 %v1349, %v1345
        %v1422 = vpack.c.bf16 %v1350, %v1346
        %v1423 = vpack.c.bf16 %v1351, %v1347
        %v1424 = vpack.c.bf16 %v1356, %v1352
        %v1425 = vpack.c.bf16 %v1357, %v1353
        %v1426 = vpack.c.bf16 %v1358, %v1354
        %v1427 = vpack.c.bf16 %v1359, %v1355
        %v1428 = vpack.c.bf16 %v1364, %v1360
        %v1429 = vpack.c.bf16 %v1365, %v1361
        %v1430 = vpack.c.bf16 %v1366, %v1362
        %v1431 = vpack.c.bf16 %v1367, %v1363
        %v1432 = vld [vmem:[#allocation7] sm:$0xff]
        %v1433 = vld [vmem:[#allocation7 + $0x8] sm:$0xff]
        %v1434 = vld [vmem:[#allocation7 + $0x10] sm:$0xff]
        %v1435 = vld [vmem:[#allocation7 + $0x18] sm:$0xff]
        %v1436 = vld [vmem:[#allocation7 + $0x20] sm:$0xff]
        %v1437 = vld [vmem:[#allocation7 + $0x28] sm:$0xff]
        %v1438 = vld [vmem:[#allocation7 + $0x30] sm:$0xff]
        %v1439 = vld [vmem:[#allocation7 + $0x38] sm:$0xff]
        %v1440 = vld [vmem:[#allocation7 + $0x40] sm:$0xff]
        %v1441 = vld [vmem:[#allocation7 + $0x48] sm:$0xff]
        %v1442 = vld [vmem:[#allocation7 + $0x50] sm:$0xff]
        %v1443 = vld [vmem:[#allocation7 + $0x58] sm:$0xff]
        %v1444 = vld [vmem:[#allocation7 + $0x60] sm:$0xff]
        %v1445 = vld [vmem:[#allocation7 + $0x68] sm:$0xff]
        %v1446 = vld [vmem:[#allocation7 + $0x70] sm:$0xff]
        %v1447 = vld [vmem:[#allocation7 + $0x78] sm:$0xff]
        %v1448 = vld [vmem:[#allocation7 + $0x80] sm:$0xff]
        %v1449 = vld [vmem:[#allocation7 + $0x88] sm:$0xff]
        %v1450 = vld [vmem:[#allocation7 + $0x90] sm:$0xff]
        %v1451 = vld [vmem:[#allocation7 + $0x98] sm:$0xff]
        %v1452 = vld [vmem:[#allocation7 + $0xa0] sm:$0xff]
        %v1453 = vld [vmem:[#allocation7 + $0xa8] sm:$0xff]
        %v1454 = vld [vmem:[#allocation7 + $0xb0] sm:$0xff]
        %v1455 = vld [vmem:[#allocation7 + $0xb8] sm:$0xff]
        %v1456 = vld [vmem:[#allocation7 + $0xc0] sm:$0xff]
        %v1457 = vld [vmem:[#allocation7 + $0xc8] sm:$0xff]
        %v1458 = vld [vmem:[#allocation7 + $0xd0] sm:$0xff]
        %v1459 = vld [vmem:[#allocation7 + $0xd8] sm:$0xff]
        %v1460 = vld [vmem:[#allocation7 + $0xe0] sm:$0xff]
        %v1461 = vld [vmem:[#allocation7 + $0xe8] sm:$0xff]
        %v1462 = vld [vmem:[#allocation7 + $0xf0] sm:$0xff]
        %v1463 = vld [vmem:[#allocation7 + $0xf8] sm:$0xff]
        %v1464 = vld [vmem:[#allocation7 + $0x100] sm:$0xff]
        %v1465 = vld [vmem:[#allocation7 + $0x108] sm:$0xff]
        %v1466 = vld [vmem:[#allocation7 + $0x110] sm:$0xff]
        %v1467 = vld [vmem:[#allocation7 + $0x118] sm:$0xff]
        %v1468 = vld [vmem:[#allocation7 + $0x120] sm:$0xff]
        %v1469 = vld [vmem:[#allocation7 + $0x128] sm:$0xff]
        %v1470 = vld [vmem:[#allocation7 + $0x130] sm:$0xff]
        %v1471 = vld [vmem:[#allocation7 + $0x138] sm:$0xff]
        %v1472 = vld [vmem:[#allocation7 + $0x140] sm:$0xff]
        %v1473 = vld [vmem:[#allocation7 + $0x148] sm:$0xff]
        %v1474 = vld [vmem:[#allocation7 + $0x150] sm:$0xff]
        %v1475 = vld [vmem:[#allocation7 + $0x158] sm:$0xff]
        %v1476 = vld [vmem:[#allocation7 + $0x160] sm:$0xff]
        %v1477 = vld [vmem:[#allocation7 + $0x168] sm:$0xff]
        %v1478 = vld [vmem:[#allocation7 + $0x170] sm:$0xff]
        %v1479 = vld [vmem:[#allocation7 + $0x178] sm:$0xff]
        %v1480 = vld [vmem:[#allocation7 + $0x180] sm:$0xff]
        %v1481 = vld [vmem:[#allocation7 + $0x188] sm:$0xff]
        %v1482 = vld [vmem:[#allocation7 + $0x190] sm:$0xff]
        %v1483 = vld [vmem:[#allocation7 + $0x198] sm:$0xff]
        %v1484 = vld [vmem:[#allocation7 + $0x1a0] sm:$0xff]
        %v1485 = vld [vmem:[#allocation7 + $0x1a8] sm:$0xff]
        %v1486 = vld [vmem:[#allocation7 + $0x1b0] sm:$0xff]
        %v1487 = vld [vmem:[#allocation7 + $0x1b8] sm:$0xff]
        %v1488 = vld [vmem:[#allocation7 + $0x1c0] sm:$0xff]
        %v1489 = vld [vmem:[#allocation7 + $0x1c8] sm:$0xff]
        %v1490 = vld [vmem:[#allocation7 + $0x1d0] sm:$0xff]
        %v1491 = vld [vmem:[#allocation7 + $0x1d8] sm:$0xff]
        %v1492 = vld [vmem:[#allocation7 + $0x1e0] sm:$0xff]
        %v1493 = vld [vmem:[#allocation7 + $0x1e8] sm:$0xff]
        %v1494 = vld [vmem:[#allocation7 + $0x1f0] sm:$0xff]
        %v1495 = vld [vmem:[#allocation7 + $0x1f8] sm:$0xff]
        %v1496 = vld [vmem:[#allocation7 + $0x200] sm:$0xff]
        %v1497 = vld [vmem:[#allocation7 + $0x208] sm:$0xff]
        %v1498 = vld [vmem:[#allocation7 + $0x210] sm:$0xff]
        %v1499 = vld [vmem:[#allocation7 + $0x218] sm:$0xff]
        %v1500 = vld [vmem:[#allocation7 + $0x220] sm:$0xff]
        %v1501 = vld [vmem:[#allocation7 + $0x228] sm:$0xff]
        %v1502 = vld [vmem:[#allocation7 + $0x230] sm:$0xff]
        %v1503 = vld [vmem:[#allocation7 + $0x238] sm:$0xff]
        %v1504 = vld [vmem:[#allocation7 + $0x240] sm:$0xff]
        %v1505 = vld [vmem:[#allocation7 + $0x248] sm:$0xff]
        %v1506 = vld [vmem:[#allocation7 + $0x250] sm:$0xff]
        %v1507 = vld [vmem:[#allocation7 + $0x258] sm:$0xff]
        %v1508 = vld [vmem:[#allocation7 + $0x260] sm:$0xff]
        %v1509 = vld [vmem:[#allocation7 + $0x268] sm:$0xff]
        %v1510 = vld [vmem:[#allocation7 + $0x270] sm:$0xff]
        %v1511 = vld [vmem:[#allocation7 + $0x278] sm:$0xff]
        %v1512 = vld [vmem:[#allocation7 + $0x280] sm:$0xff]
        %v1513 = vld [vmem:[#allocation7 + $0x288] sm:$0xff]
        %v1514 = vld [vmem:[#allocation7 + $0x290] sm:$0xff]
        %v1515 = vld [vmem:[#allocation7 + $0x298] sm:$0xff]
        %v1516 = vld [vmem:[#allocation7 + $0x2a0] sm:$0xff]
        %v1517 = vld [vmem:[#allocation7 + $0x2a8] sm:$0xff]
        %v1518 = vld [vmem:[#allocation7 + $0x2b0] sm:$0xff]
        %v1519 = vld [vmem:[#allocation7 + $0x2b8] sm:$0xff]
        %v1520 = vld [vmem:[#allocation7 + $0x2c0] sm:$0xff]
        %v1521 = vld [vmem:[#allocation7 + $0x2c8] sm:$0xff]
        %v1522 = vld [vmem:[#allocation7 + $0x2d0] sm:$0xff]
        %v1523 = vld [vmem:[#allocation7 + $0x2d8] sm:$0xff]
        %v1524 = vld [vmem:[#allocation7 + $0x2e0] sm:$0xff]
        %v1525 = vld [vmem:[#allocation7 + $0x2e8] sm:$0xff]
        %v1526 = vld [vmem:[#allocation7 + $0x2f0] sm:$0xff]
        %v1527 = vld [vmem:[#allocation7 + $0x2f8] sm:$0xff]
        %v1528 = vld [vmem:[#allocation7 + $0x300] sm:$0xff]
        %v1529 = vld [vmem:[#allocation7 + $0x308] sm:$0xff]
        %v1530 = vld [vmem:[#allocation7 + $0x310] sm:$0xff]
        %v1531 = vld [vmem:[#allocation7 + $0x318] sm:$0xff]
        %v1532 = vld [vmem:[#allocation7 + $0x320] sm:$0xff]
        %v1533 = vld [vmem:[#allocation7 + $0x328] sm:$0xff]
        %v1534 = vld [vmem:[#allocation7 + $0x330] sm:$0xff]
        %v1535 = vld [vmem:[#allocation7 + $0x338] sm:$0xff]
        %v1536 = vld [vmem:[#allocation7 + $0x340] sm:$0xff]
        %v1537 = vld [vmem:[#allocation7 + $0x348] sm:$0xff]
        %v1538 = vld [vmem:[#allocation7 + $0x350] sm:$0xff]
        %v1539 = vld [vmem:[#allocation7 + $0x358] sm:$0xff]
        %v1540 = vld [vmem:[#allocation7 + $0x360] sm:$0xff]
        %v1541 = vld [vmem:[#allocation7 + $0x368] sm:$0xff]
        %v1542 = vld [vmem:[#allocation7 + $0x370] sm:$0xff]
        %v1543 = vld [vmem:[#allocation7 + $0x378] sm:$0xff]
        %v1544 = vld [vmem:[#allocation7 + $0x380] sm:$0xff]
        %v1545 = vld [vmem:[#allocation7 + $0x388] sm:$0xff]
        %v1546 = vld [vmem:[#allocation7 + $0x390] sm:$0xff]
        %v1547 = vld [vmem:[#allocation7 + $0x398] sm:$0xff]
        %v1548 = vld [vmem:[#allocation7 + $0x3a0] sm:$0xff]
        %v1549 = vld [vmem:[#allocation7 + $0x3a8] sm:$0xff]
        %v1550 = vld [vmem:[#allocation7 + $0x3b0] sm:$0xff]
        %v1551 = vld [vmem:[#allocation7 + $0x3b8] sm:$0xff]
        %v1552 = vld [vmem:[#allocation7 + $0x3c0] sm:$0xff]
        %v1553 = vld [vmem:[#allocation7 + $0x3c8] sm:$0xff]
        %v1554 = vld [vmem:[#allocation7 + $0x3d0] sm:$0xff]
        %v1555 = vld [vmem:[#allocation7 + $0x3d8] sm:$0xff]
        %v1556 = vld [vmem:[#allocation7 + $0x3e0] sm:$0xff]
        %v1557 = vld [vmem:[#allocation7 + $0x3e8] sm:$0xff]
        %v1558 = vld [vmem:[#allocation7 + $0x3f0] sm:$0xff]
        %v1559 = vld [vmem:[#allocation7 + $0x3f8] sm:$0xff]
        %v1688 = vunpack.c.l.b16 %v1432
        %v1689 = vunpack.c.h.b16 %v1432
        %v1690 = vunpack.c.l.b16 %v1433
        %v1691 = vunpack.c.h.b16 %v1433
        %v1692 = vunpack.c.l.b16 %v1434
        %v1693 = vunpack.c.h.b16 %v1434
        %v1694 = vunpack.c.l.b16 %v1435
        %v1695 = vunpack.c.h.b16 %v1435
        %v1696 = vunpack.c.l.b16 %v1436
        %v1697 = vunpack.c.h.b16 %v1436
        %v1698 = vunpack.c.l.b16 %v1437
        %v1699 = vunpack.c.h.b16 %v1437
        %v1700 = vunpack.c.l.b16 %v1438
        %v1701 = vunpack.c.h.b16 %v1438
        %v1702 = vunpack.c.l.b16 %v1439
        %v1703 = vunpack.c.h.b16 %v1439
        %v1704 = vunpack.c.l.b16 %v1440
        %v1705 = vunpack.c.h.b16 %v1440
        %v1706 = vunpack.c.l.b16 %v1441
        %v1707 = vunpack.c.h.b16 %v1441
        %v1708 = vunpack.c.l.b16 %v1442
        %v1709 = vunpack.c.h.b16 %v1442
        %v1710 = vunpack.c.l.b16 %v1443
        %v1711 = vunpack.c.h.b16 %v1443
        %v1712 = vunpack.c.l.b16 %v1444
        %v1713 = vunpack.c.h.b16 %v1444
        %v1714 = vunpack.c.l.b16 %v1445
        %v1715 = vunpack.c.h.b16 %v1445
        %v1716 = vunpack.c.l.b16 %v1446
        %v1717 = vunpack.c.h.b16 %v1446
        %v1718 = vunpack.c.l.b16 %v1447
        %v1719 = vunpack.c.h.b16 %v1447
        %v1720 = vunpack.c.l.b16 %v1448
        %v1721 = vunpack.c.h.b16 %v1448
        %v1722 = vunpack.c.l.b16 %v1449
        %v1723 = vunpack.c.h.b16 %v1449
        %v1724 = vunpack.c.l.b16 %v1450
        %v1725 = vunpack.c.h.b16 %v1450
        %v1726 = vunpack.c.l.b16 %v1451
        %v1727 = vunpack.c.h.b16 %v1451
        %v1728 = vunpack.c.l.b16 %v1452
        %v1729 = vunpack.c.h.b16 %v1452
        %v1730 = vunpack.c.l.b16 %v1453
        %v1731 = vunpack.c.h.b16 %v1453
        %v1732 = vunpack.c.l.b16 %v1454
        %v1733 = vunpack.c.h.b16 %v1454
        %v1734 = vunpack.c.l.b16 %v1455
        %v1735 = vunpack.c.h.b16 %v1455
        %v1736 = vunpack.c.l.b16 %v1456
        %v1737 = vunpack.c.h.b16 %v1456
        %v1738 = vunpack.c.l.b16 %v1457
        %v1739 = vunpack.c.h.b16 %v1457
        %v1740 = vunpack.c.l.b16 %v1458
        %v1741 = vunpack.c.h.b16 %v1458
        %v1742 = vunpack.c.l.b16 %v1459
        %v1743 = vunpack.c.h.b16 %v1459
        %v1744 = vunpack.c.l.b16 %v1460
        %v1745 = vunpack.c.h.b16 %v1460
        %v1746 = vunpack.c.l.b16 %v1461
        %v1747 = vunpack.c.h.b16 %v1461
        %v1748 = vunpack.c.l.b16 %v1462
        %v1749 = vunpack.c.h.b16 %v1462
        %v1750 = vunpack.c.l.b16 %v1463
        %v1751 = vunpack.c.h.b16 %v1463
        %v1752 = vunpack.c.l.b16 %v1464
        %v1753 = vunpack.c.h.b16 %v1464
        %v1754 = vunpack.c.l.b16 %v1465
        %v1755 = vunpack.c.h.b16 %v1465
        %v1756 = vunpack.c.l.b16 %v1466
        %v1757 = vunpack.c.h.b16 %v1466
        %v1758 = vunpack.c.l.b16 %v1467
        %v1759 = vunpack.c.h.b16 %v1467
        %v1760 = vunpack.c.l.b16 %v1468
        %v1761 = vunpack.c.h.b16 %v1468
        %v1762 = vunpack.c.l.b16 %v1469
        %v1763 = vunpack.c.h.b16 %v1469
        %v1764 = vunpack.c.l.b16 %v1470
        %v1765 = vunpack.c.h.b16 %v1470
        %v1766 = vunpack.c.l.b16 %v1471
        %v1767 = vunpack.c.h.b16 %v1471
        %v1768 = vunpack.c.l.b16 %v1472
        %v1769 = vunpack.c.h.b16 %v1472
        %v1770 = vunpack.c.l.b16 %v1473
        %v1771 = vunpack.c.h.b16 %v1473
        %v1772 = vunpack.c.l.b16 %v1474
        %v1773 = vunpack.c.h.b16 %v1474
        %v1774 = vunpack.c.l.b16 %v1475
        %v1775 = vunpack.c.h.b16 %v1475
        %v1776 = vunpack.c.l.b16 %v1476
        %v1777 = vunpack.c.h.b16 %v1476
        %v1778 = vunpack.c.l.b16 %v1477
        %v1779 = vunpack.c.h.b16 %v1477
        %v1780 = vunpack.c.l.b16 %v1478
        %v1781 = vunpack.c.h.b16 %v1478
        %v1782 = vunpack.c.l.b16 %v1479
        %v1783 = vunpack.c.h.b16 %v1479
        %v1784 = vunpack.c.l.b16 %v1480
        %v1785 = vunpack.c.h.b16 %v1480
        %v1786 = vunpack.c.l.b16 %v1481
        %v1787 = vunpack.c.h.b16 %v1481
        %v1788 = vunpack.c.l.b16 %v1482
        %v1789 = vunpack.c.h.b16 %v1482
        %v1790 = vunpack.c.l.b16 %v1483
        %v1791 = vunpack.c.h.b16 %v1483
        %v1792 = vunpack.c.l.b16 %v1484
        %v1793 = vunpack.c.h.b16 %v1484
        %v1794 = vunpack.c.l.b16 %v1485
        %v1795 = vunpack.c.h.b16 %v1485
        %v1796 = vunpack.c.l.b16 %v1486
        %v1797 = vunpack.c.h.b16 %v1486
        %v1798 = vunpack.c.l.b16 %v1487
        %v1799 = vunpack.c.h.b16 %v1487
        %v1800 = vunpack.c.l.b16 %v1488
        %v1801 = vunpack.c.h.b16 %v1488
        %v1802 = vunpack.c.l.b16 %v1489
        %v1803 = vunpack.c.h.b16 %v1489
        %v1804 = vunpack.c.l.b16 %v1490
        %v1805 = vunpack.c.h.b16 %v1490
        %v1806 = vunpack.c.l.b16 %v1491
        %v1807 = vunpack.c.h.b16 %v1491
        %v1808 = vunpack.c.l.b16 %v1492
        %v1809 = vunpack.c.h.b16 %v1492
        %v1810 = vunpack.c.l.b16 %v1493
        %v1811 = vunpack.c.h.b16 %v1493
        %v1812 = vunpack.c.l.b16 %v1494
        %v1813 = vunpack.c.h.b16 %v1494
        %v1814 = vunpack.c.l.b16 %v1495
        %v1815 = vunpack.c.h.b16 %v1495
        %v1816 = vunpack.c.l.b16 %v1496
        %v1817 = vunpack.c.h.b16 %v1496
        %v1818 = vunpack.c.l.b16 %v1497
        %v1819 = vunpack.c.h.b16 %v1497
        %v1820 = vunpack.c.l.b16 %v1498
        %v1821 = vunpack.c.h.b16 %v1498
        %v1822 = vunpack.c.l.b16 %v1499
        %v1823 = vunpack.c.h.b16 %v1499
        %v1824 = vunpack.c.l.b16 %v1500
        %v1825 = vunpack.c.h.b16 %v1500
        %v1826 = vunpack.c.l.b16 %v1501
        %v1827 = vunpack.c.h.b16 %v1501
        %v1828 = vunpack.c.l.b16 %v1502
        %v1829 = vunpack.c.h.b16 %v1502
        %v1830 = vunpack.c.l.b16 %v1503
        %v1831 = vunpack.c.h.b16 %v1503
        %v1832 = vunpack.c.l.b16 %v1504
        %v1833 = vunpack.c.h.b16 %v1504
        %v1834 = vunpack.c.l.b16 %v1505
        %v1835 = vunpack.c.h.b16 %v1505
        %v1836 = vunpack.c.l.b16 %v1506
        %v1837 = vunpack.c.h.b16 %v1506
        %v1838 = vunpack.c.l.b16 %v1507
        %v1839 = vunpack.c.h.b16 %v1507
        %v1840 = vunpack.c.l.b16 %v1508
        %v1841 = vunpack.c.h.b16 %v1508
        %v1842 = vunpack.c.l.b16 %v1509
        %v1843 = vunpack.c.h.b16 %v1509
        %v1844 = vunpack.c.l.b16 %v1510
        %v1845 = vunpack.c.h.b16 %v1510
        %v1846 = vunpack.c.l.b16 %v1511
        %v1847 = vunpack.c.h.b16 %v1511
        %v1848 = vunpack.c.l.b16 %v1512
        %v1849 = vunpack.c.h.b16 %v1512
        %v1850 = vunpack.c.l.b16 %v1513
        %v1851 = vunpack.c.h.b16 %v1513
        %v1852 = vunpack.c.l.b16 %v1514
        %v1853 = vunpack.c.h.b16 %v1514
        %v1854 = vunpack.c.l.b16 %v1515
        %v1855 = vunpack.c.h.b16 %v1515
        %v1856 = vunpack.c.l.b16 %v1516
        %v1857 = vunpack.c.h.b16 %v1516
        %v1858 = vunpack.c.l.b16 %v1517
        %v1859 = vunpack.c.h.b16 %v1517
        %v1860 = vunpack.c.l.b16 %v1518
        %v1861 = vunpack.c.h.b16 %v1518
        %v1862 = vunpack.c.l.b16 %v1519
        %v1863 = vunpack.c.h.b16 %v1519
        %v1864 = vunpack.c.l.b16 %v1520
        %v1865 = vunpack.c.h.b16 %v1520
        %v1866 = vunpack.c.l.b16 %v1521
        %v1867 = vunpack.c.h.b16 %v1521
        %v1868 = vunpack.c.l.b16 %v1522
        %v1869 = vunpack.c.h.b16 %v1522
        %v1870 = vunpack.c.l.b16 %v1523
        %v1871 = vunpack.c.h.b16 %v1523
        %v1872 = vunpack.c.l.b16 %v1524
        %v1873 = vunpack.c.h.b16 %v1524
        %v1874 = vunpack.c.l.b16 %v1525
        %v1875 = vunpack.c.h.b16 %v1525
        %v1876 = vunpack.c.l.b16 %v1526
        %v1877 = vunpack.c.h.b16 %v1526
        %v1878 = vunpack.c.l.b16 %v1527
        %v1879 = vunpack.c.h.b16 %v1527
        %v1880 = vunpack.c.l.b16 %v1528
        %v1881 = vunpack.c.h.b16 %v1528
        %v1882 = vunpack.c.l.b16 %v1529
        %v1883 = vunpack.c.h.b16 %v1529
        %v1884 = vunpack.c.l.b16 %v1530
        %v1885 = vunpack.c.h.b16 %v1530
        %v1886 = vunpack.c.l.b16 %v1531
        %v1887 = vunpack.c.h.b16 %v1531
        %v1888 = vunpack.c.l.b16 %v1532
        %v1889 = vunpack.c.h.b16 %v1532
        %v1890 = vunpack.c.l.b16 %v1533
        %v1891 = vunpack.c.h.b16 %v1533
        %v1892 = vunpack.c.l.b16 %v1534
        %v1893 = vunpack.c.h.b16 %v1534
        %v1894 = vunpack.c.l.b16 %v1535
        %v1895 = vunpack.c.h.b16 %v1535
        %v1896 = vunpack.c.l.b16 %v1536
        %v1897 = vunpack.c.h.b16 %v1536
        %v1898 = vunpack.c.l.b16 %v1537
        %v1899 = vunpack.c.h.b16 %v1537
        %v1900 = vunpack.c.l.b16 %v1538
        %v1901 = vunpack.c.h.b16 %v1538
        %v1902 = vunpack.c.l.b16 %v1539
        %v1903 = vunpack.c.h.b16 %v1539
        %v1904 = vunpack.c.l.b16 %v1540
        %v1905 = vunpack.c.h.b16 %v1540
        %v1906 = vunpack.c.l.b16 %v1541
        %v1907 = vunpack.c.h.b16 %v1541
        %v1908 = vunpack.c.l.b16 %v1542
        %v1909 = vunpack.c.h.b16 %v1542
        %v1910 = vunpack.c.l.b16 %v1543
        %v1911 = vunpack.c.h.b16 %v1543
        %v1912 = vunpack.c.l.b16 %v1544
        %v1913 = vunpack.c.h.b16 %v1544
        %v1914 = vunpack.c.l.b16 %v1545
        %v1915 = vunpack.c.h.b16 %v1545
        %v1916 = vunpack.c.l.b16 %v1546
        %v1917 = vunpack.c.h.b16 %v1546
        %v1918 = vunpack.c.l.b16 %v1547
        %v1919 = vunpack.c.h.b16 %v1547
        %v1920 = vunpack.c.l.b16 %v1548
        %v1921 = vunpack.c.h.b16 %v1548
        %v1922 = vunpack.c.l.b16 %v1549
        %v1923 = vunpack.c.h.b16 %v1549
        %v1924 = vunpack.c.l.b16 %v1550
        %v1925 = vunpack.c.h.b16 %v1550
        %v1926 = vunpack.c.l.b16 %v1551
        %v1927 = vunpack.c.h.b16 %v1551
        %v1928 = vunpack.c.l.b16 %v1552
        %v1929 = vunpack.c.h.b16 %v1552
        %v1930 = vunpack.c.l.b16 %v1553
        %v1931 = vunpack.c.h.b16 %v1553
        %v1932 = vunpack.c.l.b16 %v1554
        %v1933 = vunpack.c.h.b16 %v1554
        %v1934 = vunpack.c.l.b16 %v1555
        %v1935 = vunpack.c.h.b16 %v1555
        %v1936 = vunpack.c.l.b16 %v1556
        %v1937 = vunpack.c.h.b16 %v1556
        %v1938 = vunpack.c.l.b16 %v1557
        %v1939 = vunpack.c.h.b16 %v1557
        %v1940 = vunpack.c.l.b16 %v1558
        %v1941 = vunpack.c.h.b16 %v1558
        %v1942 = vunpack.c.l.b16 %v1559
        %v1943 = vunpack.c.h.b16 %v1559
        %v1944 = vpack.c.b16 %v1692, %v1688
        %v1945 = vpack.c.b16 %v1693, %v1689
        %v1946 = vpack.c.b16 %v1694, %v1690
        %v1947 = vpack.c.b16 %v1695, %v1691
        %v1948 = vpack.c.b16 %v1700, %v1696
        %v1949 = vpack.c.b16 %v1701, %v1697
        %v1950 = vpack.c.b16 %v1702, %v1698
        %v1951 = vpack.c.b16 %v1703, %v1699
        %v1952 = vpack.c.b16 %v1708, %v1704
        %v1953 = vpack.c.b16 %v1709, %v1705
        %v1954 = vpack.c.b16 %v1710, %v1706
        %v1955 = vpack.c.b16 %v1711, %v1707
        %v1956 = vpack.c.b16 %v1716, %v1712
        %v1957 = vpack.c.b16 %v1717, %v1713
        %v1958 = vpack.c.b16 %v1718, %v1714
        %v1959 = vpack.c.b16 %v1719, %v1715
        %v1960 = vpack.c.b16 %v1724, %v1720
        %v1961 = vpack.c.b16 %v1725, %v1721
        %v1962 = vpack.c.b16 %v1726, %v1722
        %v1963 = vpack.c.b16 %v1727, %v1723
        %v1964 = vpack.c.b16 %v1732, %v1728
        %v1965 = vpack.c.b16 %v1733, %v1729
        %v1966 = vpack.c.b16 %v1734, %v1730
        %v1967 = vpack.c.b16 %v1735, %v1731
        %v1968 = vpack.c.b16 %v1740, %v1736
        %v1969 = vpack.c.b16 %v1741, %v1737
        %v1970 = vpack.c.b16 %v1742, %v1738
        %v1971 = vpack.c.b16 %v1743, %v1739
        %v1972 = vpack.c.b16 %v1748, %v1744
        %v1973 = vpack.c.b16 %v1749, %v1745
        %v1974 = vpack.c.b16 %v1750, %v1746
        %v1975 = vpack.c.b16 %v1751, %v1747
        %v1976 = vpack.c.b16 %v1756, %v1752
        %v1977 = vpack.c.b16 %v1757, %v1753
        %v1978 = vpack.c.b16 %v1758, %v1754
        %v1979 = vpack.c.b16 %v1759, %v1755
        %v1980 = vpack.c.b16 %v1764, %v1760
        %v1981 = vpack.c.b16 %v1765, %v1761
        %v1982 = vpack.c.b16 %v1766, %v1762
        %v1983 = vpack.c.b16 %v1767, %v1763
        %v1984 = vpack.c.b16 %v1772, %v1768
        %v1985 = vpack.c.b16 %v1773, %v1769
        %v1986 = vpack.c.b16 %v1774, %v1770
        %v1987 = vpack.c.b16 %v1775, %v1771
        %v1988 = vpack.c.b16 %v1780, %v1776
        %v1989 = vpack.c.b16 %v1781, %v1777
        %v1990 = vpack.c.b16 %v1782, %v1778
        %v1991 = vpack.c.b16 %v1783, %v1779
        %v1992 = vpack.c.b16 %v1788, %v1784
        %v1993 = vpack.c.b16 %v1789, %v1785
        %v1994 = vpack.c.b16 %v1790, %v1786
        %v1995 = vpack.c.b16 %v1791, %v1787
        %v1996 = vpack.c.b16 %v1796, %v1792
        %v1997 = vpack.c.b16 %v1797, %v1793
        %v1998 = vpack.c.b16 %v1798, %v1794
        %v1999 = vpack.c.b16 %v1799, %v1795
        %v2000 = vpack.c.b16 %v1804, %v1800
        %v2001 = vpack.c.b16 %v1805, %v1801
        %v2002 = vpack.c.b16 %v1806, %v1802
        %v2003 = vpack.c.b16 %v1807, %v1803
        %v2004 = vpack.c.b16 %v1812, %v1808
        %v2005 = vpack.c.b16 %v1813, %v1809
        %v2006 = vpack.c.b16 %v1814, %v1810
        %v2007 = vpack.c.b16 %v1815, %v1811
        %v2008 = vpack.c.b16 %v1820, %v1816
        %v2009 = vpack.c.b16 %v1821, %v1817
        %v2010 = vpack.c.b16 %v1822, %v1818
        %v2011 = vpack.c.b16 %v1823, %v1819
        %v2012 = vpack.c.b16 %v1828, %v1824
        %v2013 = vpack.c.b16 %v1829, %v1825
        %v2014 = vpack.c.b16 %v1830, %v1826
        %v2015 = vpack.c.b16 %v1831, %v1827
        %v2016 = vpack.c.b16 %v1836, %v1832
        %v2017 = vpack.c.b16 %v1837, %v1833
        %v2018 = vpack.c.b16 %v1838, %v1834
        %v2019 = vpack.c.b16 %v1839, %v1835
        %v2020 = vpack.c.b16 %v1844, %v1840
        %v2021 = vpack.c.b16 %v1845, %v1841
        %v2022 = vpack.c.b16 %v1846, %v1842
        %v2023 = vpack.c.b16 %v1847, %v1843
        %v2024 = vpack.c.b16 %v1852, %v1848
        %v2025 = vpack.c.b16 %v1853, %v1849
        %v2026 = vpack.c.b16 %v1854, %v1850
        %v2027 = vpack.c.b16 %v1855, %v1851
        %v2028 = vpack.c.b16 %v1860, %v1856
        %v2029 = vpack.c.b16 %v1861, %v1857
        %v2030 = vpack.c.b16 %v1862, %v1858
        %v2031 = vpack.c.b16 %v1863, %v1859
        %v2032 = vpack.c.b16 %v1868, %v1864
        %v2033 = vpack.c.b16 %v1869, %v1865
        %v2034 = vpack.c.b16 %v1870, %v1866
        %v2035 = vpack.c.b16 %v1871, %v1867
        %v2036 = vpack.c.b16 %v1876, %v1872
        %v2037 = vpack.c.b16 %v1877, %v1873
        %v2038 = vpack.c.b16 %v1878, %v1874
        %v2039 = vpack.c.b16 %v1879, %v1875
        %v2040 = vpack.c.b16 %v1884, %v1880
        %v2041 = vpack.c.b16 %v1885, %v1881
        %v2042 = vpack.c.b16 %v1886, %v1882
        %v2043 = vpack.c.b16 %v1887, %v1883
        %v2044 = vpack.c.b16 %v1892, %v1888
        %v2045 = vpack.c.b16 %v1893, %v1889
        %v2046 = vpack.c.b16 %v1894, %v1890
        %v2047 = vpack.c.b16 %v1895, %v1891
        %v2048 = vpack.c.b16 %v1900, %v1896
        %v2049 = vpack.c.b16 %v1901, %v1897
        %v2050 = vpack.c.b16 %v1902, %v1898
        %v2051 = vpack.c.b16 %v1903, %v1899
        %v2052 = vpack.c.b16 %v1908, %v1904
        %v2053 = vpack.c.b16 %v1909, %v1905
        %v2054 = vpack.c.b16 %v1910, %v1906
        %v2055 = vpack.c.b16 %v1911, %v1907
        %v2056 = vpack.c.b16 %v1916, %v1912
        %v2057 = vpack.c.b16 %v1917, %v1913
        %v2058 = vpack.c.b16 %v1918, %v1914
        %v2059 = vpack.c.b16 %v1919, %v1915
        %v2060 = vpack.c.b16 %v1924, %v1920
        %v2061 = vpack.c.b16 %v1925, %v1921
        %v2062 = vpack.c.b16 %v1926, %v1922
        %v2063 = vpack.c.b16 %v1927, %v1923
        %v2064 = vpack.c.b16 %v1932, %v1928
        %v2065 = vpack.c.b16 %v1933, %v1929
        %v2066 = vpack.c.b16 %v1934, %v1930
        %v2067 = vpack.c.b16 %v1935, %v1931
        %v2068 = vpack.c.b16 %v1940, %v1936
        %v2069 = vpack.c.b16 %v1941, %v1937
        %v2070 = vpack.c.b16 %v1942, %v1938
        %v2071 = vpack.c.b16 %v1943, %v1939
        %2200 = vmatprep.subr.bf16.mxu0 %v1945
        %2201 = vmatpush1.bf16.msra.mxu0 %v1944
        %2202 = vmatprep.subr.bf16.mxu0 %v1949
        %2203 = vmatpush1.bf16.msra.mxu0 %v1948
        %2204 = vmatprep.subr.bf16.mxu0 %v1953
        %2205 = vmatpush1.bf16.msra.mxu0 %v1952
        %2206 = vmatprep.subr.bf16.mxu0 %v1957
        %2207 = vmatpush1.bf16.msra.mxu0 %v1956
        %2208 = vmatprep.subr.bf16.mxu0 %v1961
        %2209 = vmatpush1.bf16.msra.mxu0 %v1960
        %2210 = vmatprep.subr.bf16.mxu0 %v1965
        %2211 = vmatpush1.bf16.msra.mxu0 %v1964
        %2212 = vmatprep.subr.bf16.mxu0 %v1969
        %2213 = vmatpush1.bf16.msra.mxu0 %v1968
        %2214 = vmatprep.subr.bf16.mxu0 %v1973
        %2215 = vmatpush1.bf16.msra.mxu0 %v1972
        %2216 = vmatprep.subr.bf16.mxu0 %v1977
        %2217 = vmatpush1.bf16.msra.mxu0 %v1976
        %2218 = vmatprep.subr.bf16.mxu0 %v1981
        %2219 = vmatpush1.bf16.msra.mxu0 %v1980
        %2220 = vmatprep.subr.bf16.mxu0 %v1985
        %2221 = vmatpush1.bf16.msra.mxu0 %v1984
        %2222 = vmatprep.subr.bf16.mxu0 %v1989
        %2223 = vmatpush1.bf16.msra.mxu0 %v1988
        %2224 = vmatprep.subr.bf16.mxu0 %v1993
        %2225 = vmatpush1.bf16.msra.mxu0 %v1992
        %2226 = vmatprep.subr.bf16.mxu0 %v1997
        %2227 = vmatpush1.bf16.msra.mxu0 %v1996
        %2228 = vmatprep.subr.bf16.mxu0 %v2001
        %2229 = vmatpush1.bf16.msra.mxu0 %v2000
        %2230 = vmatprep.subr.bf16.mxu0 %v2005
        %2231 = vmatpush1.bf16.msra.mxu0 %v2004
        %2232 = vmatprep.mubr.bf16.mxu0 %v1369
        %2233 = vmatmul.mubr.bf16.gmra.mrb[0].mxu0 %v1368
        %v2234 = vpop.f32.mrb[0].mxu0
        %v2235 = vadd.f32 0.0, %v2234
        %v2236 = vpop.f32.mrb[0].mxu0
        %v2237 = vadd.f32 0.0, %v2236
        %v2238 = vpop.f32.mrb[0].mxu0
        %v2239 = vadd.f32 0.0, %v2238
        %v2240 = vpop.f32.mrb[0].mxu0
        %v2241 = vadd.f32 0.0, %v2240
        %2242 = vmatprep.mubr.bf16.mxu0 %v1373
        %2243 = vmatmul.mubr.bf16.gmra.mrb[0].mxu0 %v1372
        %v2244 = vpop.f32.mrb[0].mxu0
        %v2245 = vadd.f32 0.0, %v2244
        %v2246 = vpop.f32.mrb[0].mxu0
        %v2247 = vadd.f32 0.0, %v2246
        %v2248 = vpop.f32.mrb[0].mxu0
        %v2249 = vadd.f32 0.0, %v2248
        %v2250 = vpop.f32.mrb[0].mxu0
        %v2251 = vadd.f32 0.0, %v2250
        %2252 = vmatprep.mubr.bf16.mxu0 %v1377
        %2253 = vmatmul.mubr.bf16.gmra.mrb[0].mxu0 %v1376
        %v2254 = vpop.f32.mrb[0].mxu0
        %v2255 = vadd.f32 0.0, %v2254
        %v2256 = vpop.f32.mrb[0].mxu0
        %v2257 = vadd.f32 0.0, %v2256
        %v2258 = vpop.f32.mrb[0].mxu0
        %v2259 = vadd.f32 0.0, %v2258
        %v2260 = vpop.f32.mrb[0].mxu0
        %v2261 = vadd.f32 0.0, %v2260
        %2262 = vmatprep.mubr.bf16.mxu0 %v1381
        %2263 = vmatmul.mubr.bf16.gmra.mrb[0].mxu0 %v1380
        %v2264 = vpop.f32.mrb[0].mxu0
        %v2265 = vadd.f32 0.0, %v2264
        %v2266 = vpop.f32.mrb[0].mxu0
        %v2267 = vadd.f32 0.0, %v2266
        %v2268 = vpop.f32.mrb[0].mxu0
        %v2269 = vadd.f32 0.0, %v2268
        %v2270 = vpop.f32.mrb[0].mxu0
        %v2271 = vadd.f32 0.0, %v2270
        %2272 = vmatprep.mubr.bf16.mxu0 %v1385
        %2273 = vmatmul.mubr.bf16.gmra.mrb[0].mxu0 %v1384
        %v2274 = vpop.f32.mrb[0].mxu0
        %v2275 = vadd.f32 0.0, %v2274
        %v2276 = vpop.f32.mrb[0].mxu0
        %v2277 = vadd.f32 0.0, %v2276
        %v2278 = vpop.f32.mrb[0].mxu0
        %v2279 = vadd.f32 0.0, %v2278
        %v2280 = vpop.f32.mrb[0].mxu0
        %v2281 = vadd.f32 0.0, %v2280
        %2282 = vmatprep.mubr.bf16.mxu0 %v1389
        %2283 = vmatmul.mubr.bf16.gmra.mrb[0].mxu0 %v1388
        %v2284 = vpop.f32.mrb[0].mxu0
        %v2285 = vadd.f32 0.0, %v2284
        %v2286 = vpop.f32.mrb[0].mxu0
        %v2287 = vadd.f32 0.0, %v2286
        %v2288 = vpop.f32.mrb[0].mxu0
        %v2289 = vadd.f32 0.0, %v2288
        %v2290 = vpop.f32.mrb[0].mxu0
        %v2291 = vadd.f32 0.0, %v2290
        %2292 = vmatprep.mubr.bf16.mxu0 %v1393
        %2293 = vmatmul.mubr.bf16.gmra.mrb[0].mxu0 %v1392
        %v2294 = vpop.f32.mrb[0].mxu0
        %v2295 = vadd.f32 0.0, %v2294
        %v2296 = vpop.f32.mrb[0].mxu0
        %v2297 = vadd.f32 0.0, %v2296
        %v2298 = vpop.f32.mrb[0].mxu0
        %v2299 = vadd.f32 0.0, %v2298
        %v2300 = vpop.f32.mrb[0].mxu0
        %v2301 = vadd.f32 0.0, %v2300
        %2302 = vmatprep.mubr.bf16.mxu0 %v1397
        %2303 = vmatmul.mubr.bf16.gmra.mrb[0].mxu0 %v1396
        %v2304 = vpop.f32.mrb[0].mxu0
        %v2305 = vadd.f32 0.0, %v2304
        %v2306 = vpop.f32.mrb[0].mxu0
        %v2307 = vadd.f32 0.0, %v2306
        %v2308 = vpop.f32.mrb[0].mxu0
        %v2309 = vadd.f32 0.0, %v2308
        %v2310 = vpop.f32.mrb[0].mxu0
        %v2311 = vadd.f32 0.0, %v2310
        %2312 = vmatprep.mubr.bf16.mxu0 %v1401
        %2313 = vmatmul.mubr.bf16.gmra.mrb[0].mxu0 %v1400
        %v2314 = vpop.f32.mrb[0].mxu0
        %v2315 = vadd.f32 0.0, %v2314
        %v2316 = vpop.f32.mrb[0].mxu0
        %v2317 = vadd.f32 0.0, %v2316
        %v2318 = vpop.f32.mrb[0].mxu0
        %v2319 = vadd.f32 0.0, %v2318
        %v2320 = vpop.f32.mrb[0].mxu0
        %v2321 = vadd.f32 0.0, %v2320
        %2322 = vmatprep.mubr.bf16.mxu0 %v1405
        %2323 = vmatmul.mubr.bf16.gmra.mrb[0].mxu0 %v1404
        %v2324 = vpop.f32.mrb[0].mxu0
        %v2325 = vadd.f32 0.0, %v2324
        %v2326 = vpop.f32.mrb[0].mxu0
        %v2327 = vadd.f32 0.0, %v2326
        %v2328 = vpop.f32.mrb[0].mxu0
        %v2329 = vadd.f32 0.0, %v2328
        %v2330 = vpop.f32.mrb[0].mxu0
        %v2331 = vadd.f32 0.0, %v2330
        %2332 = vmatprep.mubr.bf16.mxu0 %v1409
        %2333 = vmatmul.mubr.bf16.gmra.mrb[0].mxu0 %v1408
        %v2334 = vpop.f32.mrb[0].mxu0
        %v2335 = vadd.f32 0.0, %v2334
        %v2336 = vpop.f32.mrb[0].mxu0
        %v2337 = vadd.f32 0.0, %v2336
        %v2338 = vpop.f32.mrb[0].mxu0
        %v2339 = vadd.f32 0.0, %v2338
        %v2340 = vpop.f32.mrb[0].mxu0
        %v2341 = vadd.f32 0.0, %v2340
        %2342 = vmatprep.mubr.bf16.mxu0 %v1413
        %2343 = vmatmul.mubr.bf16.gmra.mrb[0].mxu0 %v1412
        %v2344 = vpop.f32.mrb[0].mxu0
        %v2345 = vadd.f32 0.0, %v2344
        %v2346 = vpop.f32.mrb[0].mxu0
        %v2347 = vadd.f32 0.0, %v2346
        %v2348 = vpop.f32.mrb[0].mxu0
        %v2349 = vadd.f32 0.0, %v2348
        %v2350 = vpop.f32.mrb[0].mxu0
        %v2351 = vadd.f32 0.0, %v2350
        %2352 = vmatprep.mubr.bf16.mxu0 %v1417
        %2353 = vmatmul.mubr.bf16.gmra.mrb[0].mxu0 %v1416
        %v2354 = vpop.f32.mrb[0].mxu0
        %v2355 = vadd.f32 0.0, %v2354
        %v2356 = vpop.f32.mrb[0].mxu0
        %v2357 = vadd.f32 0.0, %v2356
        %v2358 = vpop.f32.mrb[0].mxu0
        %v2359 = vadd.f32 0.0, %v2358
        %v2360 = vpop.f32.mrb[0].mxu0
        %v2361 = vadd.f32 0.0, %v2360
        %2362 = vmatprep.mubr.bf16.mxu0 %v1421
        %2363 = vmatmul.mubr.bf16.gmra.mrb[0].mxu0 %v1420
        %v2364 = vpop.f32.mrb[0].mxu0
        %v2365 = vadd.f32 0.0, %v2364
        %v2366 = vpop.f32.mrb[0].mxu0
        %v2367 = vadd.f32 0.0, %v2366
        %v2368 = vpop.f32.mrb[0].mxu0
        %v2369 = vadd.f32 0.0, %v2368
        %v2370 = vpop.f32.mrb[0].mxu0
        %v2371 = vadd.f32 0.0, %v2370
        %2372 = vmatprep.mubr.bf16.mxu0 %v1425
        %2373 = vmatmul.mubr.bf16.gmra.mrb[0].mxu0 %v1424
        %v2374 = vpop.f32.mrb[0].mxu0
        %v2375 = vadd.f32 0.0, %v2374
        %v2376 = vpop.f32.mrb[0].mxu0
        %v2377 = vadd.f32 0.0, %v2376
        %v2378 = vpop.f32.mrb[0].mxu0
        %v2379 = vadd.f32 0.0, %v2378
        %v2380 = vpop.f32.mrb[0].mxu0
        %v2381 = vadd.f32 0.0, %v2380
        %2382 = vmatprep.mubr.bf16.mxu0 %v1429
        %2383 = vmatmul.mubr.bf16.gmra.mrb[0].mxu0 %v1428
        %v2384 = vpop.f32.mrb[0].mxu0
        %v2385 = vadd.f32 0.0, %v2384
        %v2386 = vpop.f32.mrb[0].mxu0
        %v2387 = vadd.f32 0.0, %v2386
        %v2388 = vpop.f32.mrb[0].mxu0
        %v2389 = vadd.f32 0.0, %v2388
        %v2390 = vpop.f32.mrb[0].mxu0
        %v2391 = vadd.f32 0.0, %v2390
        %2392 = vdwg.mxu0
        %2393 = vmatprep.subr.bf16.mxu0 %v2009
        %2394 = vmatpush1.bf16.msra.mxu0 %v2008
        %2395 = vmatprep.subr.bf16.mxu0 %v2013
        %2396 = vmatpush1.bf16.msra.mxu0 %v2012
        %2397 = vmatprep.subr.bf16.mxu0 %v2017
        %2398 = vmatpush1.bf16.msra.mxu0 %v2016
        %2399 = vmatprep.subr.bf16.mxu0 %v2021
        %2400 = vmatpush1.bf16.msra.mxu0 %v2020
        %2401 = vmatprep.subr.bf16.mxu0 %v2025
        %2402 = vmatpush1.bf16.msra.mxu0 %v2024
        %2403 = vmatprep.subr.bf16.mxu0 %v2029
        %2404 = vmatpush1.bf16.msra.mxu0 %v2028
        %2405 = vmatprep.subr.bf16.mxu0 %v2033
        %2406 = vmatpush1.bf16.msra.mxu0 %v2032
        %2407 = vmatprep.subr.bf16.mxu0 %v2037
        %2408 = vmatpush1.bf16.msra.mxu0 %v2036
        %2409 = vmatprep.subr.bf16.mxu0 %v2041
        %2410 = vmatpush1.bf16.msra.mxu0 %v2040
        %2411 = vmatprep.subr.bf16.mxu0 %v2045
        %2412 = vmatpush1.bf16.msra.mxu0 %v2044
        %2413 = vmatprep.subr.bf16.mxu0 %v2049
        %2414 = vmatpush1.bf16.msra.mxu0 %v2048
        %2415 = vmatprep.subr.bf16.mxu0 %v2053
        %2416 = vmatpush1.bf16.msra.mxu0 %v2052
        %2417 = vmatprep.subr.bf16.mxu0 %v2057
        %2418 = vmatpush1.bf16.msra.mxu0 %v2056
        %2419 = vmatprep.subr.bf16.mxu0 %v2061
        %2420 = vmatpush1.bf16.msra.mxu0 %v2060
        %2421 = vmatprep.subr.bf16.mxu0 %v2065
        %2422 = vmatpush1.bf16.msra.mxu0 %v2064
        %2423 = vmatprep.subr.bf16.mxu0 %v2069
        %2424 = vmatpush1.bf16.msra.mxu0 %v2068
        %2425 = vmatprep.mubr.bf16.mxu0 %v1371
        %2426 = vmatmul.mubr.bf16.gmra.mrb[0].mxu0 %v1370
        %v2427 = vpop.f32.mrb[0].mxu0
        %v2428 = vadd.f32 %v2235, %v2427
        %v2429 = vpop.f32.mrb[0].mxu0
        %v2430 = vadd.f32 %v2237, %v2429
        %v2431 = vpop.f32.mrb[0].mxu0
        %v2432 = vadd.f32 %v2239, %v2431
        %v2433 = vpop.f32.mrb[0].mxu0
        %v2434 = vadd.f32 %v2241, %v2433
        %2435 = vmatprep.mubr.bf16.mxu0 %v1375
        %2436 = vmatmul.mubr.bf16.gmra.mrb[0].mxu0 %v1374
        %v2437 = vpop.f32.mrb[0].mxu0
        %v2438 = vadd.f32 %v2245, %v2437
        %v2439 = vpop.f32.mrb[0].mxu0
        %v2440 = vadd.f32 %v2247, %v2439
        %v2441 = vpop.f32.mrb[0].mxu0
        %v2442 = vadd.f32 %v2249, %v2441
        %v2443 = vpop.f32.mrb[0].mxu0
        %v2444 = vadd.f32 %v2251, %v2443
        %2445 = vmatprep.mubr.bf16.mxu0 %v1379
        %2446 = vmatmul.mubr.bf16.gmra.mrb[0].mxu0 %v1378
        %v2447 = vpop.f32.mrb[0].mxu0
        %v2448 = vadd.f32 %v2255, %v2447
        %v2449 = vpop.f32.mrb[0].mxu0
        %v2450 = vadd.f32 %v2257, %v2449
        %v2451 = vpop.f32.mrb[0].mxu0
        %v2452 = vadd.f32 %v2259, %v2451
        %v2453 = vpop.f32.mrb[0].mxu0
        %v2454 = vadd.f32 %v2261, %v2453
        %2455 = vmatprep.mubr.bf16.mxu0 %v1383
        %2456 = vmatmul.mubr.bf16.gmra.mrb[0].mxu0 %v1382
        %v2457 = vpop.f32.mrb[0].mxu0
        %v2458 = vadd.f32 %v2265, %v2457
        %v2459 = vpop.f32.mrb[0].mxu0
        %v2460 = vadd.f32 %v2267, %v2459
        %v2461 = vpop.f32.mrb[0].mxu0
        %v2462 = vadd.f32 %v2269, %v2461
        %v2463 = vpop.f32.mrb[0].mxu0
        %v2464 = vadd.f32 %v2271, %v2463
        %2465 = vmatprep.mubr.bf16.mxu0 %v1387
        %2466 = vmatmul.mubr.bf16.gmra.mrb[0].mxu0 %v1386
        %v2467 = vpop.f32.mrb[0].mxu0
        %v2468 = vadd.f32 %v2275, %v2467
        %v2469 = vpop.f32.mrb[0].mxu0
        %v2470 = vadd.f32 %v2277, %v2469
        %v2471 = vpop.f32.mrb[0].mxu0
        %v2472 = vadd.f32 %v2279, %v2471
        %v2473 = vpop.f32.mrb[0].mxu0
        %v2474 = vadd.f32 %v2281, %v2473
        %2475 = vmatprep.mubr.bf16.mxu0 %v1391
        %2476 = vmatmul.mubr.bf16.gmra.mrb[0].mxu0 %v1390
        %v2477 = vpop.f32.mrb[0].mxu0
        %v2478 = vadd.f32 %v2285, %v2477
        %v2479 = vpop.f32.mrb[0].mxu0
        %v2480 = vadd.f32 %v2287, %v2479
        %v2481 = vpop.f32.mrb[0].mxu0
        %v2482 = vadd.f32 %v2289, %v2481
        %v2483 = vpop.f32.mrb[0].mxu0
        %v2484 = vadd.f32 %v2291, %v2483
        %2485 = vmatprep.mubr.bf16.mxu0 %v1395
        %2486 = vmatmul.mubr.bf16.gmra.mrb[0].mxu0 %v1394
        %v2487 = vpop.f32.mrb[0].mxu0
        %v2488 = vadd.f32 %v2295, %v2487
        %v2489 = vpop.f32.mrb[0].mxu0
        %v2490 = vadd.f32 %v2297, %v2489
        %v2491 = vpop.f32.mrb[0].mxu0
        %v2492 = vadd.f32 %v2299, %v2491
        %v2493 = vpop.f32.mrb[0].mxu0
        %v2494 = vadd.f32 %v2301, %v2493
        %2495 = vmatprep.mubr.bf16.mxu0 %v1399
        %2496 = vmatmul.mubr.bf16.gmra.mrb[0].mxu0 %v1398
        %v2497 = vpop.f32.mrb[0].mxu0
        %v2498 = vadd.f32 %v2305, %v2497
        %v2499 = vpop.f32.mrb[0].mxu0
        %v2500 = vadd.f32 %v2307, %v2499
        %v2501 = vpop.f32.mrb[0].mxu0
        %v2502 = vadd.f32 %v2309, %v2501
        %v2503 = vpop.f32.mrb[0].mxu0
        %v2504 = vadd.f32 %v2311, %v2503
        %2505 = vmatprep.mubr.bf16.mxu0 %v1403
        %2506 = vmatmul.mubr.bf16.gmra.mrb[0].mxu0 %v1402
        %v2507 = vpop.f32.mrb[0].mxu0
        %v2508 = vadd.f32 %v2315, %v2507
        %v2509 = vpop.f32.mrb[0].mxu0
        %v2510 = vadd.f32 %v2317, %v2509
        %v2511 = vpop.f32.mrb[0].mxu0
        %v2512 = vadd.f32 %v2319, %v2511
        %v2513 = vpop.f32.mrb[0].mxu0
        %v2514 = vadd.f32 %v2321, %v2513
        %2515 = vmatprep.mubr.bf16.mxu0 %v1407
        %2516 = vmatmul.mubr.bf16.gmra.mrb[0].mxu0 %v1406
        %v2517 = vpop.f32.mrb[0].mxu0
        %v2518 = vadd.f32 %v2325, %v2517
        %v2519 = vpop.f32.mrb[0].mxu0
        %v2520 = vadd.f32 %v2327, %v2519
        %v2521 = vpop.f32.mrb[0].mxu0
        %v2522 = vadd.f32 %v2329, %v2521
        %v2523 = vpop.f32.mrb[0].mxu0
        %v2524 = vadd.f32 %v2331, %v2523
        %2525 = vmatprep.mubr.bf16.mxu0 %v1411
        %2526 = vmatmul.mubr.bf16.gmra.mrb[0].mxu0 %v1410
        %v2527 = vpop.f32.mrb[0].mxu0
        %v2528 = vadd.f32 %v2335, %v2527
        %v2529 = vpop.f32.mrb[0].mxu0
        %v2530 = vadd.f32 %v2337, %v2529
        %v2531 = vpop.f32.mrb[0].mxu0
        %v2532 = vadd.f32 %v2339, %v2531
        %v2533 = vpop.f32.mrb[0].mxu0
        %v2534 = vadd.f32 %v2341, %v2533
        %2535 = vmatprep.mubr.bf16.mxu0 %v1415
        %2536 = vmatmul.mubr.bf16.gmra.mrb[0].mxu0 %v1414
        %v2537 = vpop.f32.mrb[0].mxu0
        %v2538 = vadd.f32 %v2345, %v2537
        %v2539 = vpop.f32.mrb[0].mxu0
        %v2540 = vadd.f32 %v2347, %v2539
        %v2541 = vpop.f32.mrb[0].mxu0
        %v2542 = vadd.f32 %v2349, %v2541
        %v2543 = vpop.f32.mrb[0].mxu0
        %v2544 = vadd.f32 %v2351, %v2543
        %2545 = vmatprep.mubr.bf16.mxu0 %v1419
        %2546 = vmatmul.mubr.bf16.gmra.mrb[0].mxu0 %v1418
        %v2547 = vpop.f32.mrb[0].mxu0
        %v2548 = vadd.f32 %v2355, %v2547
        %v2549 = vpop.f32.mrb[0].mxu0
        %v2550 = vadd.f32 %v2357, %v2549
        %v2551 = vpop.f32.mrb[0].mxu0
        %v2552 = vadd.f32 %v2359, %v2551
        %v2553 = vpop.f32.mrb[0].mxu0
        %v2554 = vadd.f32 %v2361, %v2553
        %2555 = vmatprep.mubr.bf16.mxu0 %v1423
        %2556 = vmatmul.mubr.bf16.gmra.mrb[0].mxu0 %v1422
        %v2557 = vpop.f32.mrb[0].mxu0
        %v2558 = vadd.f32 %v2365, %v2557
        %v2559 = vpop.f32.mrb[0].mxu0
        %v2560 = vadd.f32 %v2367, %v2559
        %v2561 = vpop.f32.mrb[0].mxu0
        %v2562 = vadd.f32 %v2369, %v2561
        %v2563 = vpop.f32.mrb[0].mxu0
        %v2564 = vadd.f32 %v2371, %v2563
        %2565 = vmatprep.mubr.bf16.mxu0 %v1427
        %2566 = vmatmul.mubr.bf16.gmra.mrb[0].mxu0 %v1426
        %v2567 = vpop.f32.mrb[0].mxu0
        %v2568 = vadd.f32 %v2375, %v2567
        %v2569 = vpop.f32.mrb[0].mxu0
        %v2570 = vadd.f32 %v2377, %v2569
        %v2571 = vpop.f32.mrb[0].mxu0
        %v2572 = vadd.f32 %v2379, %v2571
        %v2573 = vpop.f32.mrb[0].mxu0
        %v2574 = vadd.f32 %v2381, %v2573
        %2575 = vmatprep.mubr.bf16.mxu0 %v1431
        %2576 = vmatmul.mubr.bf16.gmra.mrb[0].mxu0 %v1430
        %v2577 = vpop.f32.mrb[0].mxu0
        %v2578 = vadd.f32 %v2385, %v2577
        %v2579 = vpop.f32.mrb[0].mxu0
        %v2580 = vadd.f32 %v2387, %v2579
        %v2581 = vpop.f32.mrb[0].mxu0
        %v2582 = vadd.f32 %v2389, %v2581
        %v2583 = vpop.f32.mrb[0].mxu0
        %v2584 = vadd.f32 %v2391, %v2583
        %2585 = vdwg.mxu0
        %2586 = vmatprep.subr.bf16.mxu0 %v1947
        %2587 = vmatpush1.bf16.msra.mxu0 %v1946
        %2588 = vmatprep.subr.bf16.mxu0 %v1951
        %2589 = vmatpush1.bf16.msra.mxu0 %v1950
        %2590 = vmatprep.subr.bf16.mxu0 %v1955
        %2591 = vmatpush1.bf16.msra.mxu0 %v1954
        %2592 = vmatprep.subr.bf16.mxu0 %v1959
        %2593 = vmatpush1.bf16.msra.mxu0 %v1958
        %2594 = vmatprep.subr.bf16.mxu0 %v1963
        %2595 = vmatpush1.bf16.msra.mxu0 %v1962
        %2596 = vmatprep.subr.bf16.mxu0 %v1967
        %2597 = vmatpush1.bf16.msra.mxu0 %v1966
        %2598 = vmatprep.subr.bf16.mxu0 %v1971
        %2599 = vmatpush1.bf16.msra.mxu0 %v1970
        %2600 = vmatprep.subr.bf16.mxu0 %v1975
        %2601 = vmatpush1.bf16.msra.mxu0 %v1974
        %2602 = vmatprep.subr.bf16.mxu0 %v1979
        %2603 = vmatpush1.bf16.msra.mxu0 %v1978
        %2604 = vmatprep.subr.bf16.mxu0 %v1983
        %2605 = vmatpush1.bf16.msra.mxu0 %v1982
        %2606 = vmatprep.subr.bf16.mxu0 %v1987
        %2607 = vmatpush1.bf16.msra.mxu0 %v1986
        %2608 = vmatprep.subr.bf16.mxu0 %v1991
        %2609 = vmatpush1.bf16.msra.mxu0 %v1990
        %2610 = vmatprep.subr.bf16.mxu0 %v1995
        %2611 = vmatpush1.bf16.msra.mxu0 %v1994
        %2612 = vmatprep.subr.bf16.mxu0 %v1999
        %2613 = vmatpush1.bf16.msra.mxu0 %v1998
        %2614 = vmatprep.subr.bf16.mxu0 %v2003
        %2615 = vmatpush1.bf16.msra.mxu0 %v2002
        %2616 = vmatprep.subr.bf16.mxu0 %v2007
        %2617 = vmatpush1.bf16.msra.mxu0 %v2006
        %2618 = vmatprep.mubr.bf16.mxu0 %v1369
        %2619 = vmatmul.mubr.bf16.gmra.mrb[0].mxu0 %v1368
        %v2620 = vpop.f32.mrb[0].mxu0
        %v2621 = vadd.f32 0.0, %v2620
        %v2622 = vpop.f32.mrb[0].mxu0
        %v2623 = vadd.f32 0.0, %v2622
        %v2624 = vpop.f32.mrb[0].mxu0
        %v2625 = vadd.f32 0.0, %v2624
        %v2626 = vpop.f32.mrb[0].mxu0
        %v2627 = vadd.f32 0.0, %v2626
        %2628 = vmatprep.mubr.bf16.mxu0 %v1373
        %2629 = vmatmul.mubr.bf16.gmra.mrb[0].mxu0 %v1372
        %v2630 = vpop.f32.mrb[0].mxu0
        %v2631 = vadd.f32 0.0, %v2630
        %v2632 = vpop.f32.mrb[0].mxu0
        %v2633 = vadd.f32 0.0, %v2632
        %v2634 = vpop.f32.mrb[0].mxu0
        %v2635 = vadd.f32 0.0, %v2634
        %v2636 = vpop.f32.mrb[0].mxu0
        %v2637 = vadd.f32 0.0, %v2636
        %2638 = vmatprep.mubr.bf16.mxu0 %v1377
        %2639 = vmatmul.mubr.bf16.gmra.mrb[0].mxu0 %v1376
        %v2640 = vpop.f32.mrb[0].mxu0
        %v2641 = vadd.f32 0.0, %v2640
        %v2642 = vpop.f32.mrb[0].mxu0
        %v2643 = vadd.f32 0.0, %v2642
        %v2644 = vpop.f32.mrb[0].mxu0
        %v2645 = vadd.f32 0.0, %v2644
        %v2646 = vpop.f32.mrb[0].mxu0
        %v2647 = vadd.f32 0.0, %v2646
        %2648 = vmatprep.mubr.bf16.mxu0 %v1381
        %2649 = vmatmul.mubr.bf16.gmra.mrb[0].mxu0 %v1380
        %v2650 = vpop.f32.mrb[0].mxu0
        %v2651 = vadd.f32 0.0, %v2650
        %v2652 = vpop.f32.mrb[0].mxu0
        %v2653 = vadd.f32 0.0, %v2652
        %v2654 = vpop.f32.mrb[0].mxu0
        %v2655 = vadd.f32 0.0, %v2654
        %v2656 = vpop.f32.mrb[0].mxu0
        %v2657 = vadd.f32 0.0, %v2656
        %2658 = vmatprep.mubr.bf16.mxu0 %v1385
        %2659 = vmatmul.mubr.bf16.gmra.mrb[0].mxu0 %v1384
        %v2660 = vpop.f32.mrb[0].mxu0
        %v2661 = vadd.f32 0.0, %v2660
        %v2662 = vpop.f32.mrb[0].mxu0
        %v2663 = vadd.f32 0.0, %v2662
        %v2664 = vpop.f32.mrb[0].mxu0
        %v2665 = vadd.f32 0.0, %v2664
        %v2666 = vpop.f32.mrb[0].mxu0
        %v2667 = vadd.f32 0.0, %v2666
        %2668 = vmatprep.mubr.bf16.mxu0 %v1389
        %2669 = vmatmul.mubr.bf16.gmra.mrb[0].mxu0 %v1388
        %v2670 = vpop.f32.mrb[0].mxu0
        %v2671 = vadd.f32 0.0, %v2670
        %v2672 = vpop.f32.mrb[0].mxu0
        %v2673 = vadd.f32 0.0, %v2672
        %v2674 = vpop.f32.mrb[0].mxu0
        %v2675 = vadd.f32 0.0, %v2674
        %v2676 = vpop.f32.mrb[0].mxu0
        %v2677 = vadd.f32 0.0, %v2676
        %2678 = vmatprep.mubr.bf16.mxu0 %v1393
        %2679 = vmatmul.mubr.bf16.gmra.mrb[0].mxu0 %v1392
        %v2680 = vpop.f32.mrb[0].mxu0
        %v2681 = vadd.f32 0.0, %v2680
        %v2682 = vpop.f32.mrb[0].mxu0
        %v2683 = vadd.f32 0.0, %v2682
        %v2684 = vpop.f32.mrb[0].mxu0
        %v2685 = vadd.f32 0.0, %v2684
        %v2686 = vpop.f32.mrb[0].mxu0
        %v2687 = vadd.f32 0.0, %v2686
        %2688 = vmatprep.mubr.bf16.mxu0 %v1397
        %2689 = vmatmul.mubr.bf16.gmra.mrb[0].mxu0 %v1396
        %v2690 = vpop.f32.mrb[0].mxu0
        %v2691 = vadd.f32 0.0, %v2690
        %v2692 = vpop.f32.mrb[0].mxu0
        %v2693 = vadd.f32 0.0, %v2692
        %v2694 = vpop.f32.mrb[0].mxu0
        %v2695 = vadd.f32 0.0, %v2694
        %v2696 = vpop.f32.mrb[0].mxu0
        %v2697 = vadd.f32 0.0, %v2696
        %2698 = vmatprep.mubr.bf16.mxu0 %v1401
        %2699 = vmatmul.mubr.bf16.gmra.mrb[0].mxu0 %v1400
        %v2700 = vpop.f32.mrb[0].mxu0
        %v2701 = vadd.f32 0.0, %v2700
        %v2702 = vpop.f32.mrb[0].mxu0
        %v2703 = vadd.f32 0.0, %v2702
        %v2704 = vpop.f32.mrb[0].mxu0
        %v2705 = vadd.f32 0.0, %v2704
        %v2706 = vpop.f32.mrb[0].mxu0
        %v2707 = vadd.f32 0.0, %v2706
        %2708 = vmatprep.mubr.bf16.mxu0 %v1405
        %2709 = vmatmul.mubr.bf16.gmra.mrb[0].mxu0 %v1404
        %v2710 = vpop.f32.mrb[0].mxu0
        %v2711 = vadd.f32 0.0, %v2710
        %v2712 = vpop.f32.mrb[0].mxu0
        %v2713 = vadd.f32 0.0, %v2712
        %v2714 = vpop.f32.mrb[0].mxu0
        %v2715 = vadd.f32 0.0, %v2714
        %v2716 = vpop.f32.mrb[0].mxu0
        %v2717 = vadd.f32 0.0, %v2716
        %2718 = vmatprep.mubr.bf16.mxu0 %v1409
        %2719 = vmatmul.mubr.bf16.gmra.mrb[0].mxu0 %v1408
        %v2720 = vpop.f32.mrb[0].mxu0
        %v2721 = vadd.f32 0.0, %v2720
        %v2722 = vpop.f32.mrb[0].mxu0
        %v2723 = vadd.f32 0.0, %v2722
        %v2724 = vpop.f32.mrb[0].mxu0
        %v2725 = vadd.f32 0.0, %v2724
        %v2726 = vpop.f32.mrb[0].mxu0
        %v2727 = vadd.f32 0.0, %v2726
        %2728 = vmatprep.mubr.bf16.mxu0 %v1413
        %2729 = vmatmul.mubr.bf16.gmra.mrb[0].mxu0 %v1412
        %v2730 = vpop.f32.mrb[0].mxu0
        %v2731 = vadd.f32 0.0, %v2730
        %v2732 = vpop.f32.mrb[0].mxu0
        %v2733 = vadd.f32 0.0, %v2732
        %v2734 = vpop.f32.mrb[0].mxu0
        %v2735 = vadd.f32 0.0, %v2734
        %v2736 = vpop.f32.mrb[0].mxu0
        %v2737 = vadd.f32 0.0, %v2736
        %2738 = vmatprep.mubr.bf16.mxu0 %v1417
        %2739 = vmatmul.mubr.bf16.gmra.mrb[0].mxu0 %v1416
        %v2740 = vpop.f32.mrb[0].mxu0
        %v2741 = vadd.f32 0.0, %v2740
        %v2742 = vpop.f32.mrb[0].mxu0
        %v2743 = vadd.f32 0.0, %v2742
        %v2744 = vpop.f32.mrb[0].mxu0
        %v2745 = vadd.f32 0.0, %v2744
        %v2746 = vpop.f32.mrb[0].mxu0
        %v2747 = vadd.f32 0.0, %v2746
        %2748 = vmatprep.mubr.bf16.mxu0 %v1421
        %2749 = vmatmul.mubr.bf16.gmra.mrb[0].mxu0 %v1420
        %v2750 = vpop.f32.mrb[0].mxu0
        %v2751 = vadd.f32 0.0, %v2750
        %v2752 = vpop.f32.mrb[0].mxu0
        %v2753 = vadd.f32 0.0, %v2752
        %v2754 = vpop.f32.mrb[0].mxu0
        %v2755 = vadd.f32 0.0, %v2754
        %v2756 = vpop.f32.mrb[0].mxu0
        %v2757 = vadd.f32 0.0, %v2756
        %2758 = vmatprep.mubr.bf16.mxu0 %v1425
        %2759 = vmatmul.mubr.bf16.gmra.mrb[0].mxu0 %v1424
        %v2760 = vpop.f32.mrb[0].mxu0
        %v2761 = vadd.f32 0.0, %v2760
        %v2762 = vpop.f32.mrb[0].mxu0
        %v2763 = vadd.f32 0.0, %v2762
        %v2764 = vpop.f32.mrb[0].mxu0
        %v2765 = vadd.f32 0.0, %v2764
        %v2766 = vpop.f32.mrb[0].mxu0
        %v2767 = vadd.f32 0.0, %v2766
        %2768 = vmatprep.mubr.bf16.mxu0 %v1429
        %2769 = vmatmul.mubr.bf16.gmra.mrb[0].mxu0 %v1428
        %v2770 = vpop.f32.mrb[0].mxu0
        %v2771 = vadd.f32 0.0, %v2770
        %v2772 = vpop.f32.mrb[0].mxu0
        %v2773 = vadd.f32 0.0, %v2772
        %v2774 = vpop.f32.mrb[0].mxu0
        %v2775 = vadd.f32 0.0, %v2774
        %v2776 = vpop.f32.mrb[0].mxu0
        %v2777 = vadd.f32 0.0, %v2776
        %2778 = vdwg.mxu0
        %2779 = vmatprep.subr.bf16.mxu0 %v2011
        %2780 = vmatpush1.bf16.msra.mxu0 %v2010
        %2781 = vmatprep.subr.bf16.mxu0 %v2015
        %2782 = vmatpush1.bf16.msra.mxu0 %v2014
        %2783 = vmatprep.subr.bf16.mxu0 %v2019
        %2784 = vmatpush1.bf16.msra.mxu0 %v2018
        %2785 = vmatprep.subr.bf16.mxu0 %v2023
        %2786 = vmatpush1.bf16.msra.mxu0 %v2022
        %2787 = vmatprep.subr.bf16.mxu0 %v2027
        %2788 = vmatpush1.bf16.msra.mxu0 %v2026
        %2789 = vmatprep.subr.bf16.mxu0 %v2031
        %2790 = vmatpush1.bf16.msra.mxu0 %v2030
        %2791 = vmatprep.subr.bf16.mxu0 %v2035
        %2792 = vmatpush1.bf16.msra.mxu0 %v2034
        %2793 = vmatprep.subr.bf16.mxu0 %v2039
        %2794 = vmatpush1.bf16.msra.mxu0 %v2038
        %2795 = vmatprep.subr.bf16.mxu0 %v2043
        %2796 = vmatpush1.bf16.msra.mxu0 %v2042
        %2797 = vmatprep.subr.bf16.mxu0 %v2047
        %2798 = vmatpush1.bf16.msra.mxu0 %v2046
        %2799 = vmatprep.subr.bf16.mxu0 %v2051
        %2800 = vmatpush1.bf16.msra.mxu0 %v2050
        %2801 = vmatprep.subr.bf16.mxu0 %v2055
        %2802 = vmatpush1.bf16.msra.mxu0 %v2054
        %2803 = vmatprep.subr.bf16.mxu0 %v2059
        %2804 = vmatpush1.bf16.msra.mxu0 %v2058
        %2805 = vmatprep.subr.bf16.mxu0 %v2063
        %2806 = vmatpush1.bf16.msra.mxu0 %v2062
        %2807 = vmatprep.subr.bf16.mxu0 %v2067
        %2808 = vmatpush1.bf16.msra.mxu0 %v2066
        %2809 = vmatprep.subr.bf16.mxu0 %v2071
        %2810 = vmatpush1.bf16.msra.mxu0 %v2070
        %2811 = vmatprep.mubr.bf16.mxu0 %v1371
        %2812 = vmatmul.mubr.bf16.gmra.mrb[0].mxu0 %v1370
        %v2813 = vpop.f32.mrb[0].mxu0
        %v2814 = vadd.f32 %v2621, %v2813
        %v2815 = vpop.f32.mrb[0].mxu0
        %v2816 = vadd.f32 %v2623, %v2815
        %v2817 = vpop.f32.mrb[0].mxu0
        %v2818 = vadd.f32 %v2625, %v2817
        %v2819 = vpop.f32.mrb[0].mxu0
        %v2820 = vadd.f32 %v2627, %v2819
        %2821 = vmatprep.mubr.bf16.mxu0 %v1375
        %2822 = vmatmul.mubr.bf16.gmra.mrb[0].mxu0 %v1374
        %v2823 = vpop.f32.mrb[0].mxu0
        %v2824 = vadd.f32 %v2631, %v2823
        %v2825 = vpop.f32.mrb[0].mxu0
        %v2826 = vadd.f32 %v2633, %v2825
        %v2827 = vpop.f32.mrb[0].mxu0
        %v2828 = vadd.f32 %v2635, %v2827
        %v2829 = vpop.f32.mrb[0].mxu0
        %v2830 = vadd.f32 %v2637, %v2829
        %2831 = vmatprep.mubr.bf16.mxu0 %v1379
        %2832 = vmatmul.mubr.bf16.gmra.mrb[0].mxu0 %v1378
        %v2833 = vpop.f32.mrb[0].mxu0
        %v2834 = vadd.f32 %v2641, %v2833
        %v2835 = vpop.f32.mrb[0].mxu0
        %v2836 = vadd.f32 %v2643, %v2835
        %v2837 = vpop.f32.mrb[0].mxu0
        %v2838 = vadd.f32 %v2645, %v2837
        %v2839 = vpop.f32.mrb[0].mxu0
        %v2840 = vadd.f32 %v2647, %v2839
        %2841 = vmatprep.mubr.bf16.mxu0 %v1383
        %2842 = vmatmul.mubr.bf16.gmra.mrb[0].mxu0 %v1382
        %v2843 = vpop.f32.mrb[0].mxu0
        %v2844 = vadd.f32 %v2651, %v2843
        %v2845 = vpop.f32.mrb[0].mxu0
        %v2846 = vadd.f32 %v2653, %v2845
        %v2847 = vpop.f32.mrb[0].mxu0
        %v2848 = vadd.f32 %v2655, %v2847
        %v2849 = vpop.f32.mrb[0].mxu0
        %v2850 = vadd.f32 %v2657, %v2849
        %2851 = vmatprep.mubr.bf16.mxu0 %v1387
        %2852 = vmatmul.mubr.bf16.gmra.mrb[0].mxu0 %v1386
        %v2853 = vpop.f32.mrb[0].mxu0
        %v2854 = vadd.f32 %v2661, %v2853
        %v2855 = vpop.f32.mrb[0].mxu0
        %v2856 = vadd.f32 %v2663, %v2855
        %v2857 = vpop.f32.mrb[0].mxu0
        %v2858 = vadd.f32 %v2665, %v2857
        %v2859 = vpop.f32.mrb[0].mxu0
        %v2860 = vadd.f32 %v2667, %v2859
        %2861 = vmatprep.mubr.bf16.mxu0 %v1391
        %2862 = vmatmul.mubr.bf16.gmra.mrb[0].mxu0 %v1390
        %v2863 = vpop.f32.mrb[0].mxu0
        %v2864 = vadd.f32 %v2671, %v2863
        %v2865 = vpop.f32.mrb[0].mxu0
        %v2866 = vadd.f32 %v2673, %v2865
        %v2867 = vpop.f32.mrb[0].mxu0
        %v2868 = vadd.f32 %v2675, %v2867
        %v2869 = vpop.f32.mrb[0].mxu0
        %v2870 = vadd.f32 %v2677, %v2869
        %2871 = vmatprep.mubr.bf16.mxu0 %v1395
        %2872 = vmatmul.mubr.bf16.gmra.mrb[0].mxu0 %v1394
        %v2873 = vpop.f32.mrb[0].mxu0
        %v2874 = vadd.f32 %v2681, %v2873
        %v2875 = vpop.f32.mrb[0].mxu0
        %v2876 = vadd.f32 %v2683, %v2875
        %v2877 = vpop.f32.mrb[0].mxu0
        %v2878 = vadd.f32 %v2685, %v2877
        %v2879 = vpop.f32.mrb[0].mxu0
        %v2880 = vadd.f32 %v2687, %v2879
        %2881 = vmatprep.mubr.bf16.mxu0 %v1399
        %2882 = vmatmul.mubr.bf16.gmra.mrb[0].mxu0 %v1398
        %v2883 = vpop.f32.mrb[0].mxu0
        %v2884 = vadd.f32 %v2691, %v2883
        %v2885 = vpop.f32.mrb[0].mxu0
        %v2886 = vadd.f32 %v2693, %v2885
        %v2887 = vpop.f32.mrb[0].mxu0
        %v2888 = vadd.f32 %v2695, %v2887
        %v2889 = vpop.f32.mrb[0].mxu0
        %v2890 = vadd.f32 %v2697, %v2889
        %2891 = vmatprep.mubr.bf16.mxu0 %v1403
        %2892 = vmatmul.mubr.bf16.gmra.mrb[0].mxu0 %v1402
        %v2893 = vpop.f32.mrb[0].mxu0
        %v2894 = vadd.f32 %v2701, %v2893
        %v2895 = vpop.f32.mrb[0].mxu0
        %v2896 = vadd.f32 %v2703, %v2895
        %v2897 = vpop.f32.mrb[0].mxu0
        %v2898 = vadd.f32 %v2705, %v2897
        %v2899 = vpop.f32.mrb[0].mxu0
        %v2900 = vadd.f32 %v2707, %v2899
        %2901 = vmatprep.mubr.bf16.mxu0 %v1407
        %2902 = vmatmul.mubr.bf16.gmra.mrb[0].mxu0 %v1406
        %v2903 = vpop.f32.mrb[0].mxu0
        %v2904 = vadd.f32 %v2711, %v2903
        %v2905 = vpop.f32.mrb[0].mxu0
        %v2906 = vadd.f32 %v2713, %v2905
        %v2907 = vpop.f32.mrb[0].mxu0
        %v2908 = vadd.f32 %v2715, %v2907
        %v2909 = vpop.f32.mrb[0].mxu0
        %v2910 = vadd.f32 %v2717, %v2909
        %2911 = vmatprep.mubr.bf16.mxu0 %v1411
        %2912 = vmatmul.mubr.bf16.gmra.mrb[0].mxu0 %v1410
        %v2913 = vpop.f32.mrb[0].mxu0
        %v2914 = vadd.f32 %v2721, %v2913
        %v2915 = vpop.f32.mrb[0].mxu0
        %v2916 = vadd.f32 %v2723, %v2915
        %v2917 = vpop.f32.mrb[0].mxu0
        %v2918 = vadd.f32 %v2725, %v2917
        %v2919 = vpop.f32.mrb[0].mxu0
        %v2920 = vadd.f32 %v2727, %v2919
        %2921 = vmatprep.mubr.bf16.mxu0 %v1415
        %2922 = vmatmul.mubr.bf16.gmra.mrb[0].mxu0 %v1414
        %v2923 = vpop.f32.mrb[0].mxu0
        %v2924 = vadd.f32 %v2731, %v2923
        %v2925 = vpop.f32.mrb[0].mxu0
        %v2926 = vadd.f32 %v2733, %v2925
        %v2927 = vpop.f32.mrb[0].mxu0
        %v2928 = vadd.f32 %v2735, %v2927
        %v2929 = vpop.f32.mrb[0].mxu0
        %v2930 = vadd.f32 %v2737, %v2929
        %2931 = vmatprep.mubr.bf16.mxu0 %v1419
        %2932 = vmatmul.mubr.bf16.gmra.mrb[0].mxu0 %v1418
        %v2933 = vpop.f32.mrb[0].mxu0
        %v2934 = vadd.f32 %v2741, %v2933
        %v2935 = vpop.f32.mrb[0].mxu0
        %v2936 = vadd.f32 %v2743, %v2935
        %v2937 = vpop.f32.mrb[0].mxu0
        %v2938 = vadd.f32 %v2745, %v2937
        %v2939 = vpop.f32.mrb[0].mxu0
        %v2940 = vadd.f32 %v2747, %v2939
        %2941 = vmatprep.mubr.bf16.mxu0 %v1423
        %2942 = vmatmul.mubr.bf16.gmra.mrb[0].mxu0 %v1422
        %v2943 = vpop.f32.mrb[0].mxu0
        %v2944 = vadd.f32 %v2751, %v2943
        %v2945 = vpop.f32.mrb[0].mxu0
        %v2946 = vadd.f32 %v2753, %v2945
        %v2947 = vpop.f32.mrb[0].mxu0
        %v2948 = vadd.f32 %v2755, %v2947
        %v2949 = vpop.f32.mrb[0].mxu0
        %v2950 = vadd.f32 %v2757, %v2949
        %2951 = vmatprep.mubr.bf16.mxu0 %v1427
        %2952 = vmatmul.mubr.bf16.gmra.mrb[0].mxu0 %v1426
        %v2953 = vpop.f32.mrb[0].mxu0
        %v2954 = vadd.f32 %v2761, %v2953
        %v2955 = vpop.f32.mrb[0].mxu0
        %v2956 = vadd.f32 %v2763, %v2955
        %v2957 = vpop.f32.mrb[0].mxu0
        %v2958 = vadd.f32 %v2765, %v2957
        %v2959 = vpop.f32.mrb[0].mxu0
        %v2960 = vadd.f32 %v2767, %v2959
        %2961 = vmatprep.mubr.bf16.mxu0 %v1431
        %2962 = vmatmul.mubr.bf16.gmra.mrb[0].mxu0 %v1430
        %v2963 = vpop.f32.mrb[0].mxu0
        %v2964 = vadd.f32 %v2771, %v2963
        %v2965 = vpop.f32.mrb[0].mxu0
        %v2966 = vadd.f32 %v2773, %v2965
        %v2967 = vpop.f32.mrb[0].mxu0
        %v2968 = vadd.f32 %v2775, %v2967
        %v2969 = vpop.f32.mrb[0].mxu0
        %v2970 = vadd.f32 %v2777, %v2969
        %2971 = vdwg.mxu0
        %v2972 = vld [vmem:[#allocation8] sm:$0xff]
        %v2973 = vld [vmem:[#allocation8 + $0x8] sm:$0xff]
        %v2974 = vld [vmem:[#allocation8 + $0x10] sm:$0xff]
        %v2975 = vld [vmem:[#allocation8 + $0x18] sm:$0xff]
        %v2976 = vld [vmem:[#allocation8 + $0x20] sm:$0xff]
        %v2977 = vld [vmem:[#allocation8 + $0x28] sm:$0xff]
        %v2978 = vld [vmem:[#allocation8 + $0x30] sm:$0xff]
        %v2979 = vld [vmem:[#allocation8 + $0x38] sm:$0xff]
        %v2980 = vld [vmem:[#allocation8 + $0x40] sm:$0xff]
        %v2981 = vld [vmem:[#allocation8 + $0x48] sm:$0xff]
        %v2982 = vld [vmem:[#allocation8 + $0x50] sm:$0xff]
        %v2983 = vld [vmem:[#allocation8 + $0x58] sm:$0xff]
        %v2984 = vld [vmem:[#allocation8 + $0x60] sm:$0xff]
        %v2985 = vld [vmem:[#allocation8 + $0x68] sm:$0xff]
        %v2986 = vld [vmem:[#allocation8 + $0x70] sm:$0xff]
        %v2987 = vld [vmem:[#allocation8 + $0x78] sm:$0xff]
        %v2988 = vld [vmem:[#allocation8 + $0x80] sm:$0xff]
        %v2989 = vld [vmem:[#allocation8 + $0x88] sm:$0xff]
        %v2990 = vld [vmem:[#allocation8 + $0x90] sm:$0xff]
        %v2991 = vld [vmem:[#allocation8 + $0x98] sm:$0xff]
        %v2992 = vld [vmem:[#allocation8 + $0xa0] sm:$0xff]
        %v2993 = vld [vmem:[#allocation8 + $0xa8] sm:$0xff]
        %v2994 = vld [vmem:[#allocation8 + $0xb0] sm:$0xff]
        %v2995 = vld [vmem:[#allocation8 + $0xb8] sm:$0xff]
        %v2996 = vld [vmem:[#allocation8 + $0xc0] sm:$0xff]
        %v2997 = vld [vmem:[#allocation8 + $0xc8] sm:$0xff]
        %v2998 = vld [vmem:[#allocation8 + $0xd0] sm:$0xff]
        %v2999 = vld [vmem:[#allocation8 + $0xd8] sm:$0xff]
        %v3000 = vld [vmem:[#allocation8 + $0xe0] sm:$0xff]
        %v3001 = vld [vmem:[#allocation8 + $0xe8] sm:$0xff]
        %v3002 = vld [vmem:[#allocation8 + $0xf0] sm:$0xff]
        %v3003 = vld [vmem:[#allocation8 + $0xf8] sm:$0xff]
        %v3004 = vld [vmem:[#allocation8 + $0x100] sm:$0xff]
        %v3005 = vld [vmem:[#allocation8 + $0x108] sm:$0xff]
        %v3006 = vld [vmem:[#allocation8 + $0x110] sm:$0xff]
        %v3007 = vld [vmem:[#allocation8 + $0x118] sm:$0xff]
        %v3008 = vld [vmem:[#allocation8 + $0x120] sm:$0xff]
        %v3009 = vld [vmem:[#allocation8 + $0x128] sm:$0xff]
        %v3010 = vld [vmem:[#allocation8 + $0x130] sm:$0xff]
        %v3011 = vld [vmem:[#allocation8 + $0x138] sm:$0xff]
        %v3012 = vld [vmem:[#allocation8 + $0x140] sm:$0xff]
        %v3013 = vld [vmem:[#allocation8 + $0x148] sm:$0xff]
        %v3014 = vld [vmem:[#allocation8 + $0x150] sm:$0xff]
        %v3015 = vld [vmem:[#allocation8 + $0x158] sm:$0xff]
        %v3016 = vld [vmem:[#allocation8 + $0x160] sm:$0xff]
        %v3017 = vld [vmem:[#allocation8 + $0x168] sm:$0xff]
        %v3018 = vld [vmem:[#allocation8 + $0x170] sm:$0xff]
        %v3019 = vld [vmem:[#allocation8 + $0x178] sm:$0xff]
        %v3020 = vld [vmem:[#allocation8 + $0x180] sm:$0xff]
        %v3021 = vld [vmem:[#allocation8 + $0x188] sm:$0xff]
        %v3022 = vld [vmem:[#allocation8 + $0x190] sm:$0xff]
        %v3023 = vld [vmem:[#allocation8 + $0x198] sm:$0xff]
        %v3024 = vld [vmem:[#allocation8 + $0x1a0] sm:$0xff]
        %v3025 = vld [vmem:[#allocation8 + $0x1a8] sm:$0xff]
        %v3026 = vld [vmem:[#allocation8 + $0x1b0] sm:$0xff]
        %v3027 = vld [vmem:[#allocation8 + $0x1b8] sm:$0xff]
        %v3028 = vld [vmem:[#allocation8 + $0x1c0] sm:$0xff]
        %v3029 = vld [vmem:[#allocation8 + $0x1c8] sm:$0xff]
        %v3030 = vld [vmem:[#allocation8 + $0x1d0] sm:$0xff]
        %v3031 = vld [vmem:[#allocation8 + $0x1d8] sm:$0xff]
        %v3032 = vld [vmem:[#allocation8 + $0x1e0] sm:$0xff]
        %v3033 = vld [vmem:[#allocation8 + $0x1e8] sm:$0xff]
        %v3034 = vld [vmem:[#allocation8 + $0x1f0] sm:$0xff]
        %v3035 = vld [vmem:[#allocation8 + $0x1f8] sm:$0xff]
        %v3100 = vunpack.c.l.b16 %v2972
        %v3101 = vunpack.c.h.b16 %v2972
        %v3102 = vunpack.c.l.b16 %v2973
        %v3103 = vunpack.c.h.b16 %v2973
        %v3104 = vunpack.c.l.b16 %v2974
        %v3105 = vunpack.c.h.b16 %v2974
        %v3106 = vunpack.c.l.b16 %v2975
        %v3107 = vunpack.c.h.b16 %v2975
        %v3108 = vunpack.c.l.b16 %v2976
        %v3109 = vunpack.c.h.b16 %v2976
        %v3110 = vunpack.c.l.b16 %v2977
        %v3111 = vunpack.c.h.b16 %v2977
        %v3112 = vunpack.c.l.b16 %v2978
        %v3113 = vunpack.c.h.b16 %v2978
        %v3114 = vunpack.c.l.b16 %v2979
        %v3115 = vunpack.c.h.b16 %v2979
        %v3116 = vunpack.c.l.b16 %v2980
        %v3117 = vunpack.c.h.b16 %v2980
        %v3118 = vunpack.c.l.b16 %v2981
        %v3119 = vunpack.c.h.b16 %v2981
        %v3120 = vunpack.c.l.b16 %v2982
        %v3121 = vunpack.c.h.b16 %v2982
        %v3122 = vunpack.c.l.b16 %v2983
        %v3123 = vunpack.c.h.b16 %v2983
        %v3124 = vunpack.c.l.b16 %v2984
        %v3125 = vunpack.c.h.b16 %v2984
        %v3126 = vunpack.c.l.b16 %v2985
        %v3127 = vunpack.c.h.b16 %v2985
        %v3128 = vunpack.c.l.b16 %v2986
        %v3129 = vunpack.c.h.b16 %v2986
        %v3130 = vunpack.c.l.b16 %v2987
        %v3131 = vunpack.c.h.b16 %v2987
        %v3132 = vunpack.c.l.b16 %v2988
        %v3133 = vunpack.c.h.b16 %v2988
        %v3134 = vunpack.c.l.b16 %v2989
        %v3135 = vunpack.c.h.b16 %v2989
        %v3136 = vunpack.c.l.b16 %v2990
        %v3137 = vunpack.c.h.b16 %v2990
        %v3138 = vunpack.c.l.b16 %v2991
        %v3139 = vunpack.c.h.b16 %v2991
        %v3140 = vunpack.c.l.b16 %v2992
        %v3141 = vunpack.c.h.b16 %v2992
        %v3142 = vunpack.c.l.b16 %v2993
        %v3143 = vunpack.c.h.b16 %v2993
        %v3144 = vunpack.c.l.b16 %v2994
        %v3145 = vunpack.c.h.b16 %v2994
        %v3146 = vunpack.c.l.b16 %v2995
        %v3147 = vunpack.c.h.b16 %v2995
        %v3148 = vunpack.c.l.b16 %v2996
        %v3149 = vunpack.c.h.b16 %v2996
        %v3150 = vunpack.c.l.b16 %v2997
        %v3151 = vunpack.c.h.b16 %v2997
        %v3152 = vunpack.c.l.b16 %v2998
        %v3153 = vunpack.c.h.b16 %v2998
        %v3154 = vunpack.c.l.b16 %v2999
        %v3155 = vunpack.c.h.b16 %v2999
        %v3156 = vunpack.c.l.b16 %v3000
        %v3157 = vunpack.c.h.b16 %v3000
        %v3158 = vunpack.c.l.b16 %v3001
        %v3159 = vunpack.c.h.b16 %v3001
        %v3160 = vunpack.c.l.b16 %v3002
        %v3161 = vunpack.c.h.b16 %v3002
        %v3162 = vunpack.c.l.b16 %v3003
        %v3163 = vunpack.c.h.b16 %v3003
        %v3164 = vunpack.c.l.b16 %v3004
        %v3165 = vunpack.c.h.b16 %v3004
        %v3166 = vunpack.c.l.b16 %v3005
        %v3167 = vunpack.c.h.b16 %v3005
        %v3168 = vunpack.c.l.b16 %v3006
        %v3169 = vunpack.c.h.b16 %v3006
        %v3170 = vunpack.c.l.b16 %v3007
        %v3171 = vunpack.c.h.b16 %v3007
        %v3172 = vunpack.c.l.b16 %v3008
        %v3173 = vunpack.c.h.b16 %v3008
        %v3174 = vunpack.c.l.b16 %v3009
        %v3175 = vunpack.c.h.b16 %v3009
        %v3176 = vunpack.c.l.b16 %v3010
        %v3177 = vunpack.c.h.b16 %v3010
        %v3178 = vunpack.c.l.b16 %v3011
        %v3179 = vunpack.c.h.b16 %v3011
        %v3180 = vunpack.c.l.b16 %v3012
        %v3181 = vunpack.c.h.b16 %v3012
        %v3182 = vunpack.c.l.b16 %v3013
        %v3183 = vunpack.c.h.b16 %v3013
        %v3184 = vunpack.c.l.b16 %v3014
        %v3185 = vunpack.c.h.b16 %v3014
        %v3186 = vunpack.c.l.b16 %v3015
        %v3187 = vunpack.c.h.b16 %v3015
        %v3188 = vunpack.c.l.b16 %v3016
        %v3189 = vunpack.c.h.b16 %v3016
        %v3190 = vunpack.c.l.b16 %v3017
        %v3191 = vunpack.c.h.b16 %v3017
        %v3192 = vunpack.c.l.b16 %v3018
        %v3193 = vunpack.c.h.b16 %v3018
        %v3194 = vunpack.c.l.b16 %v3019
        %v3195 = vunpack.c.h.b16 %v3019
        %v3196 = vunpack.c.l.b16 %v3020
        %v3197 = vunpack.c.h.b16 %v3020
        %v3198 = vunpack.c.l.b16 %v3021
        %v3199 = vunpack.c.h.b16 %v3021
        %v3200 = vunpack.c.l.b16 %v3022
        %v3201 = vunpack.c.h.b16 %v3022
        %v3202 = vunpack.c.l.b16 %v3023
        %v3203 = vunpack.c.h.b16 %v3023
        %v3204 = vunpack.c.l.b16 %v3024
        %v3205 = vunpack.c.h.b16 %v3024
        %v3206 = vunpack.c.l.b16 %v3025
        %v3207 = vunpack.c.h.b16 %v3025
        %v3208 = vunpack.c.l.b16 %v3026
        %v3209 = vunpack.c.h.b16 %v3026
        %v3210 = vunpack.c.l.b16 %v3027
        %v3211 = vunpack.c.h.b16 %v3027
        %v3212 = vunpack.c.l.b16 %v3028
        %v3213 = vunpack.c.h.b16 %v3028
        %v3214 = vunpack.c.l.b16 %v3029
        %v3215 = vunpack.c.h.b16 %v3029
        %v3216 = vunpack.c.l.b16 %v3030
        %v3217 = vunpack.c.h.b16 %v3030
        %v3218 = vunpack.c.l.b16 %v3031
        %v3219 = vunpack.c.h.b16 %v3031
        %v3220 = vunpack.c.l.b16 %v3032
        %v3221 = vunpack.c.h.b16 %v3032
        %v3222 = vunpack.c.l.b16 %v3033
        %v3223 = vunpack.c.h.b16 %v3033
        %v3224 = vunpack.c.l.b16 %v3034
        %v3225 = vunpack.c.h.b16 %v3034
        %v3226 = vunpack.c.l.b16 %v3035
        %v3227 = vunpack.c.h.b16 %v3035
        %v3228 = vpack.c.b16 %v3102, %v3100
        %v3229 = vpack.c.b16 %v3103, %v3101
        %v3230 = vpack.c.b16 %v3106, %v3104
        %v3231 = vpack.c.b16 %v3107, %v3105
        %v3232 = vpack.c.b16 %v3110, %v3108
        %v3233 = vpack.c.b16 %v3111, %v3109
        %v3234 = vpack.c.b16 %v3114, %v3112
        %v3235 = vpack.c.b16 %v3115, %v3113
        %v3236 = vpack.c.b16 %v3118, %v3116
        %v3237 = vpack.c.b16 %v3119, %v3117
        %v3238 = vpack.c.b16 %v3122, %v3120
        %v3239 = vpack.c.b16 %v3123, %v3121
        %v3240 = vpack.c.b16 %v3126, %v3124
        %v3241 = vpack.c.b16 %v3127, %v3125
        %v3242 = vpack.c.b16 %v3130, %v3128
        %v3243 = vpack.c.b16 %v3131, %v3129
        %v3244 = vpack.c.b16 %v3134, %v3132
        %v3245 = vpack.c.b16 %v3135, %v3133
        %v3246 = vpack.c.b16 %v3138, %v3136
        %v3247 = vpack.c.b16 %v3139, %v3137
        %v3248 = vpack.c.b16 %v3142, %v3140
        %v3249 = vpack.c.b16 %v3143, %v3141
        %v3250 = vpack.c.b16 %v3146, %v3144
        %v3251 = vpack.c.b16 %v3147, %v3145
        %v3252 = vpack.c.b16 %v3150, %v3148
        %v3253 = vpack.c.b16 %v3151, %v3149
        %v3254 = vpack.c.b16 %v3154, %v3152
        %v3255 = vpack.c.b16 %v3155, %v3153
        %v3256 = vpack.c.b16 %v3158, %v3156
        %v3257 = vpack.c.b16 %v3159, %v3157
        %v3258 = vpack.c.b16 %v3162, %v3160
        %v3259 = vpack.c.b16 %v3163, %v3161
        %v3260 = vpack.c.b16 %v3166, %v3164
        %v3261 = vpack.c.b16 %v3167, %v3165
        %v3262 = vpack.c.b16 %v3170, %v3168
        %v3263 = vpack.c.b16 %v3171, %v3169
        %v3264 = vpack.c.b16 %v3174, %v3172
        %v3265 = vpack.c.b16 %v3175, %v3173
        %v3266 = vpack.c.b16 %v3178, %v3176
        %v3267 = vpack.c.b16 %v3179, %v3177
        %v3268 = vpack.c.b16 %v3182, %v3180
        %v3269 = vpack.c.b16 %v3183, %v3181
        %v3270 = vpack.c.b16 %v3186, %v3184
        %v3271 = vpack.c.b16 %v3187, %v3185
        %v3272 = vpack.c.b16 %v3190, %v3188
        %v3273 = vpack.c.b16 %v3191, %v3189
        %v3274 = vpack.c.b16 %v3194, %v3192
        %v3275 = vpack.c.b16 %v3195, %v3193
        %v3276 = vpack.c.b16 %v3198, %v3196
        %v3277 = vpack.c.b16 %v3199, %v3197
        %v3278 = vpack.c.b16 %v3202, %v3200
        %v3279 = vpack.c.b16 %v3203, %v3201
        %v3280 = vpack.c.b16 %v3206, %v3204
        %v3281 = vpack.c.b16 %v3207, %v3205
        %v3282 = vpack.c.b16 %v3210, %v3208
        %v3283 = vpack.c.b16 %v3211, %v3209
        %v3284 = vpack.c.b16 %v3214, %v3212
        %v3285 = vpack.c.b16 %v3215, %v3213
        %v3286 = vpack.c.b16 %v3218, %v3216
        %v3287 = vpack.c.b16 %v3219, %v3217
        %v3288 = vpack.c.b16 %v3222, %v3220
        %v3289 = vpack.c.b16 %v3223, %v3221
        %v3290 = vpack.c.b16 %v3226, %v3224
        %v3291 = vpack.c.b16 %v3227, %v3225
        %3356 = vmatprep.subr.bf16.mxu0 %v3229
        %3357 = vmatpush1.bf16.msra.mxu0 %v3228
        %3358 = vmatprep.subr.bf16.mxu0 %v3231
        %3359 = vmatpush1.bf16.msra.mxu0 %v3230
        %3360 = vmatprep.subr.bf16.mxu0 %v3233
        %3361 = vmatpush1.bf16.msra.mxu0 %v3232
        %3362 = vmatprep.subr.bf16.mxu0 %v3235
        %3363 = vmatpush1.bf16.msra.mxu0 %v3234
        %3364 = vmatprep.subr.bf16.mxu0 %v3237
        %3365 = vmatpush1.bf16.msra.mxu0 %v3236
        %3366 = vmatprep.subr.bf16.mxu0 %v3239
        %3367 = vmatpush1.bf16.msra.mxu0 %v3238
        %3368 = vmatprep.subr.bf16.mxu0 %v3241
        %3369 = vmatpush1.bf16.msra.mxu0 %v3240
        %3370 = vmatprep.subr.bf16.mxu0 %v3243
        %3371 = vmatpush1.bf16.msra.mxu0 %v3242
        %3372 = vmatprep.subr.bf16.mxu0 %v3245
        %3373 = vmatpush1.bf16.msra.mxu0 %v3244
        %3374 = vmatprep.subr.bf16.mxu0 %v3247
        %3375 = vmatpush1.bf16.msra.mxu0 %v3246
        %3376 = vmatprep.subr.bf16.mxu0 %v3249
        %3377 = vmatpush1.bf16.msra.mxu0 %v3248
        %3378 = vmatprep.subr.bf16.mxu0 %v3251
        %3379 = vmatpush1.bf16.msra.mxu0 %v3250
        %3380 = vmatprep.subr.bf16.mxu0 %v3253
        %3381 = vmatpush1.bf16.msra.mxu0 %v3252
        %3382 = vmatprep.subr.bf16.mxu0 %v3255
        %3383 = vmatpush1.bf16.msra.mxu0 %v3254
        %3384 = vmatprep.subr.bf16.mxu0 %v3257
        %3385 = vmatpush1.bf16.msra.mxu0 %v3256
        %3386 = vmatprep.subr.bf16.mxu0 %v3259
        %3387 = vmatpush1.bf16.msra.mxu0 %v3258
        %3388 = vmatprep.mubr.bf16.mxu0 %v1369
        %3389 = vmatmul.mubr.bf16.gmra.mrb[0].mxu0 %v1368
        %v3390 = vpop.f32.mrb[0].mxu0
        %v3391 = vadd.f32 0.0, %v3390
        %v3392 = vpop.f32.mrb[0].mxu0
        %v3393 = vadd.f32 0.0, %v3392
        %v3394 = vpop.f32.mrb[0].mxu0
        %v3395 = vadd.f32 0.0, %v3394
        %v3396 = vpop.f32.mrb[0].mxu0
        %v3397 = vadd.f32 0.0, %v3396
        %3398 = vmatprep.mubr.bf16.mxu0 %v1373
        %3399 = vmatmul.mubr.bf16.gmra.mrb[0].mxu0 %v1372
        %v3400 = vpop.f32.mrb[0].mxu0
        %v3401 = vadd.f32 0.0, %v3400
        %v3402 = vpop.f32.mrb[0].mxu0
        %v3403 = vadd.f32 0.0, %v3402
        %v3404 = vpop.f32.mrb[0].mxu0
        %v3405 = vadd.f32 0.0, %v3404
        %v3406 = vpop.f32.mrb[0].mxu0
        %v3407 = vadd.f32 0.0, %v3406
        %3408 = vmatprep.mubr.bf16.mxu0 %v1377
        %3409 = vmatmul.mubr.bf16.gmra.mrb[0].mxu0 %v1376
        %v3410 = vpop.f32.mrb[0].mxu0
        %v3411 = vadd.f32 0.0, %v3410
        %v3412 = vpop.f32.mrb[0].mxu0
        %v3413 = vadd.f32 0.0, %v3412
        %v3414 = vpop.f32.mrb[0].mxu0
        %v3415 = vadd.f32 0.0, %v3414
        %v3416 = vpop.f32.mrb[0].mxu0
        %v3417 = vadd.f32 0.0, %v3416
        %3418 = vmatprep.mubr.bf16.mxu0 %v1381
        %3419 = vmatmul.mubr.bf16.gmra.mrb[0].mxu0 %v1380
        %v3420 = vpop.f32.mrb[0].mxu0
        %v3421 = vadd.f32 0.0, %v3420
        %v3422 = vpop.f32.mrb[0].mxu0
        %v3423 = vadd.f32 0.0, %v3422
        %v3424 = vpop.f32.mrb[0].mxu0
        %v3425 = vadd.f32 0.0, %v3424
        %v3426 = vpop.f32.mrb[0].mxu0
        %v3427 = vadd.f32 0.0, %v3426
        %3428 = vmatprep.mubr.bf16.mxu0 %v1385
        %3429 = vmatmul.mubr.bf16.gmra.mrb[0].mxu0 %v1384
        %v3430 = vpop.f32.mrb[0].mxu0
        %v3431 = vadd.f32 0.0, %v3430
        %v3432 = vpop.f32.mrb[0].mxu0
        %v3433 = vadd.f32 0.0, %v3432
        %v3434 = vpop.f32.mrb[0].mxu0
        %v3435 = vadd.f32 0.0, %v3434
        %v3436 = vpop.f32.mrb[0].mxu0
        %v3437 = vadd.f32 0.0, %v3436
        %3438 = vmatprep.mubr.bf16.mxu0 %v1389
        %3439 = vmatmul.mubr.bf16.gmra.mrb[0].mxu0 %v1388
        %v3440 = vpop.f32.mrb[0].mxu0
        %v3441 = vadd.f32 0.0, %v3440
        %v3442 = vpop.f32.mrb[0].mxu0
        %v3443 = vadd.f32 0.0, %v3442
        %v3444 = vpop.f32.mrb[0].mxu0
        %v3445 = vadd.f32 0.0, %v3444
        %v3446 = vpop.f32.mrb[0].mxu0
        %v3447 = vadd.f32 0.0, %v3446
        %3448 = vmatprep.mubr.bf16.mxu0 %v1393
        %3449 = vmatmul.mubr.bf16.gmra.mrb[0].mxu0 %v1392
        %v3450 = vpop.f32.mrb[0].mxu0
        %v3451 = vadd.f32 0.0, %v3450
        %v3452 = vpop.f32.mrb[0].mxu0
        %v3453 = vadd.f32 0.0, %v3452
        %v3454 = vpop.f32.mrb[0].mxu0
        %v3455 = vadd.f32 0.0, %v3454
        %v3456 = vpop.f32.mrb[0].mxu0
        %v3457 = vadd.f32 0.0, %v3456
        %3458 = vmatprep.mubr.bf16.mxu0 %v1397
        %3459 = vmatmul.mubr.bf16.gmra.mrb[0].mxu0 %v1396
        %v3460 = vpop.f32.mrb[0].mxu0
        %v3461 = vadd.f32 0.0, %v3460
        %v3462 = vpop.f32.mrb[0].mxu0
        %v3463 = vadd.f32 0.0, %v3462
        %v3464 = vpop.f32.mrb[0].mxu0
        %v3465 = vadd.f32 0.0, %v3464
        %v3466 = vpop.f32.mrb[0].mxu0
        %v3467 = vadd.f32 0.0, %v3466
        %3468 = vmatprep.mubr.bf16.mxu0 %v1401
        %3469 = vmatmul.mubr.bf16.gmra.mrb[0].mxu0 %v1400
        %v3470 = vpop.f32.mrb[0].mxu0
        %v3471 = vadd.f32 0.0, %v3470
        %v3472 = vpop.f32.mrb[0].mxu0
        %v3473 = vadd.f32 0.0, %v3472
        %v3474 = vpop.f32.mrb[0].mxu0
        %v3475 = vadd.f32 0.0, %v3474
        %v3476 = vpop.f32.mrb[0].mxu0
        %v3477 = vadd.f32 0.0, %v3476
        %3478 = vmatprep.mubr.bf16.mxu0 %v1405
        %3479 = vmatmul.mubr.bf16.gmra.mrb[0].mxu0 %v1404
        %v3480 = vpop.f32.mrb[0].mxu0
        %v3481 = vadd.f32 0.0, %v3480
        %v3482 = vpop.f32.mrb[0].mxu0
        %v3483 = vadd.f32 0.0, %v3482
        %v3484 = vpop.f32.mrb[0].mxu0
        %v3485 = vadd.f32 0.0, %v3484
        %v3486 = vpop.f32.mrb[0].mxu0
        %v3487 = vadd.f32 0.0, %v3486
        %3488 = vmatprep.mubr.bf16.mxu0 %v1409
        %3489 = vmatmul.mubr.bf16.gmra.mrb[0].mxu0 %v1408
        %v3490 = vpop.f32.mrb[0].mxu0
        %v3491 = vadd.f32 0.0, %v3490
        %v3492 = vpop.f32.mrb[0].mxu0
        %v3493 = vadd.f32 0.0, %v3492
        %v3494 = vpop.f32.mrb[0].mxu0
        %v3495 = vadd.f32 0.0, %v3494
        %v3496 = vpop.f32.mrb[0].mxu0
        %v3497 = vadd.f32 0.0, %v3496
        %3498 = vmatprep.mubr.bf16.mxu0 %v1413
        %3499 = vmatmul.mubr.bf16.gmra.mrb[0].mxu0 %v1412
        %v3500 = vpop.f32.mrb[0].mxu0
        %v3501 = vadd.f32 0.0, %v3500
        %v3502 = vpop.f32.mrb[0].mxu0
        %v3503 = vadd.f32 0.0, %v3502
        %v3504 = vpop.f32.mrb[0].mxu0
        %v3505 = vadd.f32 0.0, %v3504
        %v3506 = vpop.f32.mrb[0].mxu0
        %v3507 = vadd.f32 0.0, %v3506
        %3508 = vmatprep.mubr.bf16.mxu0 %v1417
        %3509 = vmatmul.mubr.bf16.gmra.mrb[0].mxu0 %v1416
        %v3510 = vpop.f32.mrb[0].mxu0
        %v3511 = vadd.f32 0.0, %v3510
        %v3512 = vpop.f32.mrb[0].mxu0
        %v3513 = vadd.f32 0.0, %v3512
        %v3514 = vpop.f32.mrb[0].mxu0
        %v3515 = vadd.f32 0.0, %v3514
        %v3516 = vpop.f32.mrb[0].mxu0
        %v3517 = vadd.f32 0.0, %v3516
        %3518 = vmatprep.mubr.bf16.mxu0 %v1421
        %3519 = vmatmul.mubr.bf16.gmra.mrb[0].mxu0 %v1420
        %v3520 = vpop.f32.mrb[0].mxu0
        %v3521 = vadd.f32 0.0, %v3520
        %v3522 = vpop.f32.mrb[0].mxu0
        %v3523 = vadd.f32 0.0, %v3522
        %v3524 = vpop.f32.mrb[0].mxu0
        %v3525 = vadd.f32 0.0, %v3524
        %v3526 = vpop.f32.mrb[0].mxu0
        %v3527 = vadd.f32 0.0, %v3526
        %3528 = vmatprep.mubr.bf16.mxu0 %v1425
        %3529 = vmatmul.mubr.bf16.gmra.mrb[0].mxu0 %v1424
        %v3530 = vpop.f32.mrb[0].mxu0
        %v3531 = vadd.f32 0.0, %v3530
        %v3532 = vpop.f32.mrb[0].mxu0
        %v3533 = vadd.f32 0.0, %v3532
        %v3534 = vpop.f32.mrb[0].mxu0
        %v3535 = vadd.f32 0.0, %v3534
        %v3536 = vpop.f32.mrb[0].mxu0
        %v3537 = vadd.f32 0.0, %v3536
        %3538 = vmatprep.mubr.bf16.mxu0 %v1429
        %3539 = vmatmul.mubr.bf16.gmra.mrb[0].mxu0 %v1428
        %v3540 = vpop.f32.mrb[0].mxu0
        %v3541 = vadd.f32 0.0, %v3540
        %v3542 = vpop.f32.mrb[0].mxu0
        %v3543 = vadd.f32 0.0, %v3542
        %v3544 = vpop.f32.mrb[0].mxu0
        %v3545 = vadd.f32 0.0, %v3544
        %v3546 = vpop.f32.mrb[0].mxu0
        %v3547 = vadd.f32 0.0, %v3546
        %3548 = vdwg.mxu0
        %3549 = vmatprep.subr.bf16.mxu0 %v3261
        %3550 = vmatpush1.bf16.msra.mxu0 %v3260
        %3551 = vmatprep.subr.bf16.mxu0 %v3263
        %3552 = vmatpush1.bf16.msra.mxu0 %v3262
        %3553 = vmatprep.subr.bf16.mxu0 %v3265
        %3554 = vmatpush1.bf16.msra.mxu0 %v3264
        %3555 = vmatprep.subr.bf16.mxu0 %v3267
        %3556 = vmatpush1.bf16.msra.mxu0 %v3266
        %3557 = vmatprep.subr.bf16.mxu0 %v3269
        %3558 = vmatpush1.bf16.msra.mxu0 %v3268
        %3559 = vmatprep.subr.bf16.mxu0 %v3271
        %3560 = vmatpush1.bf16.msra.mxu0 %v3270
        %3561 = vmatprep.subr.bf16.mxu0 %v3273
        %3562 = vmatpush1.bf16.msra.mxu0 %v3272
        %3563 = vmatprep.subr.bf16.mxu0 %v3275
        %3564 = vmatpush1.bf16.msra.mxu0 %v3274
        %3565 = vmatprep.subr.bf16.mxu0 %v3277
        %3566 = vmatpush1.bf16.msra.mxu0 %v3276
        %3567 = vmatprep.subr.bf16.mxu0 %v3279
        %3568 = vmatpush1.bf16.msra.mxu0 %v3278
        %3569 = vmatprep.subr.bf16.mxu0 %v3281
        %3570 = vmatpush1.bf16.msra.mxu0 %v3280
        %3571 = vmatprep.subr.bf16.mxu0 %v3283
        %3572 = vmatpush1.bf16.msra.mxu0 %v3282
        %3573 = vmatprep.subr.bf16.mxu0 %v3285
        %3574 = vmatpush1.bf16.msra.mxu0 %v3284
        %3575 = vmatprep.subr.bf16.mxu0 %v3287
        %3576 = vmatpush1.bf16.msra.mxu0 %v3286
        %3577 = vmatprep.subr.bf16.mxu0 %v3289
        %3578 = vmatpush1.bf16.msra.mxu0 %v3288
        %3579 = vmatprep.subr.bf16.mxu0 %v3291
        %3580 = vmatpush1.bf16.msra.mxu0 %v3290
        %3581 = vmatprep.mubr.bf16.mxu0 %v1371
        %3582 = vmatmul.mubr.bf16.gmra.mrb[0].mxu0 %v1370
        %v3583 = vpop.f32.mrb[0].mxu0
        %v3584 = vadd.f32 %v3391, %v3583
        %v3585 = vpop.f32.mrb[0].mxu0
        %v3586 = vadd.f32 %v3393, %v3585
        %v3587 = vpop.f32.mrb[0].mxu0
        %v3588 = vadd.f32 %v3395, %v3587
        %v3589 = vpop.f32.mrb[0].mxu0
        %v3590 = vadd.f32 %v3397, %v3589
        %3591 = vmatprep.mubr.bf16.mxu0 %v1375
        %3592 = vmatmul.mubr.bf16.gmra.mrb[0].mxu0 %v1374
        %v3593 = vpop.f32.mrb[0].mxu0
        %v3594 = vadd.f32 %v3401, %v3593
        %v3595 = vpop.f32.mrb[0].mxu0
        %v3596 = vadd.f32 %v3403, %v3595
        %v3597 = vpop.f32.mrb[0].mxu0
        %v3598 = vadd.f32 %v3405, %v3597
        %v3599 = vpop.f32.mrb[0].mxu0
        %v3600 = vadd.f32 %v3407, %v3599
        %3601 = vmatprep.mubr.bf16.mxu0 %v1379
        %3602 = vmatmul.mubr.bf16.gmra.mrb[0].mxu0 %v1378
        %v3603 = vpop.f32.mrb[0].mxu0
        %v3604 = vadd.f32 %v3411, %v3603
        %v3605 = vpop.f32.mrb[0].mxu0
        %v3606 = vadd.f32 %v3413, %v3605
        %v3607 = vpop.f32.mrb[0].mxu0
        %v3608 = vadd.f32 %v3415, %v3607
        %v3609 = vpop.f32.mrb[0].mxu0
        %v3610 = vadd.f32 %v3417, %v3609
        %3611 = vmatprep.mubr.bf16.mxu0 %v1383
        %3612 = vmatmul.mubr.bf16.gmra.mrb[0].mxu0 %v1382
        %v3613 = vpop.f32.mrb[0].mxu0
        %v3614 = vadd.f32 %v3421, %v3613
        %v3615 = vpop.f32.mrb[0].mxu0
        %v3616 = vadd.f32 %v3423, %v3615
        %v3617 = vpop.f32.mrb[0].mxu0
        %v3618 = vadd.f32 %v3425, %v3617
        %v3619 = vpop.f32.mrb[0].mxu0
        %v3620 = vadd.f32 %v3427, %v3619
        %3621 = vmatprep.mubr.bf16.mxu0 %v1387
        %3622 = vmatmul.mubr.bf16.gmra.mrb[0].mxu0 %v1386
        %v3623 = vpop.f32.mrb[0].mxu0
        %v3624 = vadd.f32 %v3431, %v3623
        %v3625 = vpop.f32.mrb[0].mxu0
        %v3626 = vadd.f32 %v3433, %v3625
        %v3627 = vpop.f32.mrb[0].mxu0
        %v3628 = vadd.f32 %v3435, %v3627
        %v3629 = vpop.f32.mrb[0].mxu0
        %v3630 = vadd.f32 %v3437, %v3629
        %3631 = vmatprep.mubr.bf16.mxu0 %v1391
        %3632 = vmatmul.mubr.bf16.gmra.mrb[0].mxu0 %v1390
        %v3633 = vpop.f32.mrb[0].mxu0
        %v3634 = vadd.f32 %v3441, %v3633
        %v3635 = vpop.f32.mrb[0].mxu0
        %v3636 = vadd.f32 %v3443, %v3635
        %v3637 = vpop.f32.mrb[0].mxu0
        %v3638 = vadd.f32 %v3445, %v3637
        %v3639 = vpop.f32.mrb[0].mxu0
        %v3640 = vadd.f32 %v3447, %v3639
        %3641 = vmatprep.mubr.bf16.mxu0 %v1395
        %3642 = vmatmul.mubr.bf16.gmra.mrb[0].mxu0 %v1394
        %v3643 = vpop.f32.mrb[0].mxu0
        %v3644 = vadd.f32 %v3451, %v3643
        %v3645 = vpop.f32.mrb[0].mxu0
        %v3646 = vadd.f32 %v3453, %v3645
        %v3647 = vpop.f32.mrb[0].mxu0
        %v3648 = vadd.f32 %v3455, %v3647
        %v3649 = vpop.f32.mrb[0].mxu0
        %v3650 = vadd.f32 %v3457, %v3649
        %3651 = vmatprep.mubr.bf16.mxu0 %v1399
        %3652 = vmatmul.mubr.bf16.gmra.mrb[0].mxu0 %v1398
        %v3653 = vpop.f32.mrb[0].mxu0
        %v3654 = vadd.f32 %v3461, %v3653
        %v3655 = vpop.f32.mrb[0].mxu0
        %v3656 = vadd.f32 %v3463, %v3655
        %v3657 = vpop.f32.mrb[0].mxu0
        %v3658 = vadd.f32 %v3465, %v3657
        %v3659 = vpop.f32.mrb[0].mxu0
        %v3660 = vadd.f32 %v3467, %v3659
        %3661 = vmatprep.mubr.bf16.mxu0 %v1403
        %3662 = vmatmul.mubr.bf16.gmra.mrb[0].mxu0 %v1402
        %v3663 = vpop.f32.mrb[0].mxu0
        %v3664 = vadd.f32 %v3471, %v3663
        %v3665 = vpop.f32.mrb[0].mxu0
        %v3666 = vadd.f32 %v3473, %v3665
        %v3667 = vpop.f32.mrb[0].mxu0
        %v3668 = vadd.f32 %v3475, %v3667
        %v3669 = vpop.f32.mrb[0].mxu0
        %v3670 = vadd.f32 %v3477, %v3669
        %3671 = vmatprep.mubr.bf16.mxu0 %v1407
        %3672 = vmatmul.mubr.bf16.gmra.mrb[0].mxu0 %v1406
        %v3673 = vpop.f32.mrb[0].mxu0
        %v3674 = vadd.f32 %v3481, %v3673
        %v3675 = vpop.f32.mrb[0].mxu0
        %v3676 = vadd.f32 %v3483, %v3675
        %v3677 = vpop.f32.mrb[0].mxu0
        %v3678 = vadd.f32 %v3485, %v3677
        %v3679 = vpop.f32.mrb[0].mxu0
        %v3680 = vadd.f32 %v3487, %v3679
        %3681 = vmatprep.mubr.bf16.mxu0 %v1411
        %3682 = vmatmul.mubr.bf16.gmra.mrb[0].mxu0 %v1410
        %v3683 = vpop.f32.mrb[0].mxu0
        %v3684 = vadd.f32 %v3491, %v3683
        %v3685 = vpop.f32.mrb[0].mxu0
        %v3686 = vadd.f32 %v3493, %v3685
        %v3687 = vpop.f32.mrb[0].mxu0
        %v3688 = vadd.f32 %v3495, %v3687
        %v3689 = vpop.f32.mrb[0].mxu0
        %v3690 = vadd.f32 %v3497, %v3689
        %3691 = vmatprep.mubr.bf16.mxu0 %v1415
        %3692 = vmatmul.mubr.bf16.gmra.mrb[0].mxu0 %v1414
        %v3693 = vpop.f32.mrb[0].mxu0
        %v3694 = vadd.f32 %v3501, %v3693
        %v3695 = vpop.f32.mrb[0].mxu0
        %v3696 = vadd.f32 %v3503, %v3695
        %v3697 = vpop.f32.mrb[0].mxu0
        %v3698 = vadd.f32 %v3505, %v3697
        %v3699 = vpop.f32.mrb[0].mxu0
        %v3700 = vadd.f32 %v3507, %v3699
        %3701 = vmatprep.mubr.bf16.mxu0 %v1419
        %3702 = vmatmul.mubr.bf16.gmra.mrb[0].mxu0 %v1418
        %v3703 = vpop.f32.mrb[0].mxu0
        %v3704 = vadd.f32 %v3511, %v3703
        %v3705 = vpop.f32.mrb[0].mxu0
        %v3706 = vadd.f32 %v3513, %v3705
        %v3707 = vpop.f32.mrb[0].mxu0
        %v3708 = vadd.f32 %v3515, %v3707
        %v3709 = vpop.f32.mrb[0].mxu0
        %v3710 = vadd.f32 %v3517, %v3709
        %3711 = vmatprep.mubr.bf16.mxu0 %v1423
        %3712 = vmatmul.mubr.bf16.gmra.mrb[0].mxu0 %v1422
        %v3713 = vpop.f32.mrb[0].mxu0
        %v3714 = vadd.f32 %v3521, %v3713
        %v3715 = vpop.f32.mrb[0].mxu0
        %v3716 = vadd.f32 %v3523, %v3715
        %v3717 = vpop.f32.mrb[0].mxu0
        %v3718 = vadd.f32 %v3525, %v3717
        %v3719 = vpop.f32.mrb[0].mxu0
        %v3720 = vadd.f32 %v3527, %v3719
        %3721 = vmatprep.mubr.bf16.mxu0 %v1427
        %3722 = vmatmul.mubr.bf16.gmra.mrb[0].mxu0 %v1426
        %v3723 = vpop.f32.mrb[0].mxu0
        %v3724 = vadd.f32 %v3531, %v3723
        %v3725 = vpop.f32.mrb[0].mxu0
        %v3726 = vadd.f32 %v3533, %v3725
        %v3727 = vpop.f32.mrb[0].mxu0
        %v3728 = vadd.f32 %v3535, %v3727
        %v3729 = vpop.f32.mrb[0].mxu0
        %v3730 = vadd.f32 %v3537, %v3729
        %3731 = vmatprep.mubr.bf16.mxu0 %v1431
        %3732 = vmatmul.mubr.bf16.gmra.mrb[0].mxu0 %v1430
        %v3733 = vpop.f32.mrb[0].mxu0
        %v3734 = vadd.f32 %v3541, %v3733
        %v3735 = vpop.f32.mrb[0].mxu0
        %v3736 = vadd.f32 %v3543, %v3735
        %v3737 = vpop.f32.mrb[0].mxu0
        %v3738 = vadd.f32 %v3545, %v3737
        %v3739 = vpop.f32.mrb[0].mxu0
        %v3740 = vadd.f32 %v3547, %v3739
        %3741 = vdwg.mxu0
        %v3742 = vld [vmem:[#allocation10] sm:$0xff]
        %v3743 = vld [vmem:[#allocation10 + $0x8] sm:$0xff]
        %v3744 = vld [vmem:[#allocation10 + $0x10] sm:$0xff]
        %v3745 = vld [vmem:[#allocation10 + $0x18] sm:$0xff]
        %v3746 = vld [vmem:[#allocation10 + $0x20] sm:$0xff]
        %v3747 = vld [vmem:[#allocation10 + $0x28] sm:$0xff]
        %v3748 = vld [vmem:[#allocation10 + $0x30] sm:$0xff]
        %v3749 = vld [vmem:[#allocation10 + $0x38] sm:$0xff]
        %v3750 = vld [vmem:[#allocation10 + $0x40] sm:$0xff]
        %v3751 = vld [vmem:[#allocation10 + $0x48] sm:$0xff]
        %v3752 = vld [vmem:[#allocation10 + $0x50] sm:$0xff]
        %v3753 = vld [vmem:[#allocation10 + $0x58] sm:$0xff]
        %v3754 = vld [vmem:[#allocation10 + $0x60] sm:$0xff]
        %v3755 = vld [vmem:[#allocation10 + $0x68] sm:$0xff]
        %v3756 = vld [vmem:[#allocation10 + $0x70] sm:$0xff]
        %v3757 = vld [vmem:[#allocation10 + $0x78] sm:$0xff]
        %v3758 = vld [vmem:[#allocation10 + $0x80] sm:$0xff]
        %v3759 = vld [vmem:[#allocation10 + $0x88] sm:$0xff]
        %v3760 = vld [vmem:[#allocation10 + $0x90] sm:$0xff]
        %v3761 = vld [vmem:[#allocation10 + $0x98] sm:$0xff]
        %v3762 = vld [vmem:[#allocation10 + $0xa0] sm:$0xff]
        %v3763 = vld [vmem:[#allocation10 + $0xa8] sm:$0xff]
        %v3764 = vld [vmem:[#allocation10 + $0xb0] sm:$0xff]
        %v3765 = vld [vmem:[#allocation10 + $0xb8] sm:$0xff]
        %v3766 = vld [vmem:[#allocation10 + $0xc0] sm:$0xff]
        %v3767 = vld [vmem:[#allocation10 + $0xc8] sm:$0xff]
        %v3768 = vld [vmem:[#allocation10 + $0xd0] sm:$0xff]
        %v3769 = vld [vmem:[#allocation10 + $0xd8] sm:$0xff]
        %v3770 = vld [vmem:[#allocation10 + $0xe0] sm:$0xff]
        %v3771 = vld [vmem:[#allocation10 + $0xe8] sm:$0xff]
        %v3772 = vld [vmem:[#allocation10 + $0xf0] sm:$0xff]
        %v3773 = vld [vmem:[#allocation10 + $0xf8] sm:$0xff]
        %v3774 = vld [vmem:[#allocation10 + $0x100] sm:$0xff]
        %v3775 = vld [vmem:[#allocation10 + $0x108] sm:$0xff]
        %v3776 = vld [vmem:[#allocation10 + $0x110] sm:$0xff]
        %v3777 = vld [vmem:[#allocation10 + $0x118] sm:$0xff]
        %v3778 = vld [vmem:[#allocation10 + $0x120] sm:$0xff]
        %v3779 = vld [vmem:[#allocation10 + $0x128] sm:$0xff]
        %v3780 = vld [vmem:[#allocation10 + $0x130] sm:$0xff]
        %v3781 = vld [vmem:[#allocation10 + $0x138] sm:$0xff]
        %v3782 = vld [vmem:[#allocation10 + $0x140] sm:$0xff]
        %v3783 = vld [vmem:[#allocation10 + $0x148] sm:$0xff]
        %v3784 = vld [vmem:[#allocation10 + $0x150] sm:$0xff]
        %v3785 = vld [vmem:[#allocation10 + $0x158] sm:$0xff]
        %v3786 = vld [vmem:[#allocation10 + $0x160] sm:$0xff]
        %v3787 = vld [vmem:[#allocation10 + $0x168] sm:$0xff]
        %v3788 = vld [vmem:[#allocation10 + $0x170] sm:$0xff]
        %v3789 = vld [vmem:[#allocation10 + $0x178] sm:$0xff]
        %v3790 = vld [vmem:[#allocation10 + $0x180] sm:$0xff]
        %v3791 = vld [vmem:[#allocation10 + $0x188] sm:$0xff]
        %v3792 = vld [vmem:[#allocation10 + $0x190] sm:$0xff]
        %v3793 = vld [vmem:[#allocation10 + $0x198] sm:$0xff]
        %v3794 = vld [vmem:[#allocation10 + $0x1a0] sm:$0xff]
        %v3795 = vld [vmem:[#allocation10 + $0x1a8] sm:$0xff]
        %v3796 = vld [vmem:[#allocation10 + $0x1b0] sm:$0xff]
        %v3797 = vld [vmem:[#allocation10 + $0x1b8] sm:$0xff]
        %v3798 = vld [vmem:[#allocation10 + $0x1c0] sm:$0xff]
        %v3799 = vld [vmem:[#allocation10 + $0x1c8] sm:$0xff]
        %v3800 = vld [vmem:[#allocation10 + $0x1d0] sm:$0xff]
        %v3801 = vld [vmem:[#allocation10 + $0x1d8] sm:$0xff]
        %v3802 = vld [vmem:[#allocation10 + $0x1e0] sm:$0xff]
        %v3803 = vld [vmem:[#allocation10 + $0x1e8] sm:$0xff]
        %v3804 = vld [vmem:[#allocation10 + $0x1f0] sm:$0xff]
        %v3805 = vld [vmem:[#allocation10 + $0x1f8] sm:$0xff]
        %v3870 = vunpack.c.l.b16 %v3742
        %v3871 = vunpack.c.h.b16 %v3742
        %v3872 = vunpack.c.l.b16 %v3743
        %v3873 = vunpack.c.h.b16 %v3743
        %v3874 = vunpack.c.l.b16 %v3744
        %v3875 = vunpack.c.h.b16 %v3744
        %v3876 = vunpack.c.l.b16 %v3745
        %v3877 = vunpack.c.h.b16 %v3745
        %v3878 = vunpack.c.l.b16 %v3746
        %v3879 = vunpack.c.h.b16 %v3746
        %v3880 = vunpack.c.l.b16 %v3747
        %v3881 = vunpack.c.h.b16 %v3747
        %v3882 = vunpack.c.l.b16 %v3748
        %v3883 = vunpack.c.h.b16 %v3748
        %v3884 = vunpack.c.l.b16 %v3749
        %v3885 = vunpack.c.h.b16 %v3749
        %v3886 = vunpack.c.l.b16 %v3750
        %v3887 = vunpack.c.h.b16 %v3750
        %v3888 = vunpack.c.l.b16 %v3751
        %v3889 = vunpack.c.h.b16 %v3751
        %v3890 = vunpack.c.l.b16 %v3752
        %v3891 = vunpack.c.h.b16 %v3752
        %v3892 = vunpack.c.l.b16 %v3753
        %v3893 = vunpack.c.h.b16 %v3753
        %v3894 = vunpack.c.l.b16 %v3754
        %v3895 = vunpack.c.h.b16 %v3754
        %v3896 = vunpack.c.l.b16 %v3755
        %v3897 = vunpack.c.h.b16 %v3755
        %v3898 = vunpack.c.l.b16 %v3756
        %v3899 = vunpack.c.h.b16 %v3756
        %v3900 = vunpack.c.l.b16 %v3757
        %v3901 = vunpack.c.h.b16 %v3757
        %v3902 = vunpack.c.l.b16 %v3758
        %v3903 = vunpack.c.h.b16 %v3758
        %v3904 = vunpack.c.l.b16 %v3759
        %v3905 = vunpack.c.h.b16 %v3759
        %v3906 = vunpack.c.l.b16 %v3760
        %v3907 = vunpack.c.h.b16 %v3760
        %v3908 = vunpack.c.l.b16 %v3761
        %v3909 = vunpack.c.h.b16 %v3761
        %v3910 = vunpack.c.l.b16 %v3762
        %v3911 = vunpack.c.h.b16 %v3762
        %v3912 = vunpack.c.l.b16 %v3763
        %v3913 = vunpack.c.h.b16 %v3763
        %v3914 = vunpack.c.l.b16 %v3764
        %v3915 = vunpack.c.h.b16 %v3764
        %v3916 = vunpack.c.l.b16 %v3765
        %v3917 = vunpack.c.h.b16 %v3765
        %v3918 = vunpack.c.l.b16 %v3766
        %v3919 = vunpack.c.h.b16 %v3766
        %v3920 = vunpack.c.l.b16 %v3767
        %v3921 = vunpack.c.h.b16 %v3767
        %v3922 = vunpack.c.l.b16 %v3768
        %v3923 = vunpack.c.h.b16 %v3768
        %v3924 = vunpack.c.l.b16 %v3769
        %v3925 = vunpack.c.h.b16 %v3769
        %v3926 = vunpack.c.l.b16 %v3770
        %v3927 = vunpack.c.h.b16 %v3770
        %v3928 = vunpack.c.l.b16 %v3771
        %v3929 = vunpack.c.h.b16 %v3771
        %v3930 = vunpack.c.l.b16 %v3772
        %v3931 = vunpack.c.h.b16 %v3772
        %v3932 = vunpack.c.l.b16 %v3773
        %v3933 = vunpack.c.h.b16 %v3773
        %v3934 = vunpack.c.l.b16 %v3774
        %v3935 = vunpack.c.h.b16 %v3774
        %v3936 = vunpack.c.l.b16 %v3775
        %v3937 = vunpack.c.h.b16 %v3775
        %v3938 = vunpack.c.l.b16 %v3776
        %v3939 = vunpack.c.h.b16 %v3776
        %v3940 = vunpack.c.l.b16 %v3777
        %v3941 = vunpack.c.h.b16 %v3777
        %v3942 = vunpack.c.l.b16 %v3778
        %v3943 = vunpack.c.h.b16 %v3778
        %v3944 = vunpack.c.l.b16 %v3779
        %v3945 = vunpack.c.h.b16 %v3779
        %v3946 = vunpack.c.l.b16 %v3780
        %v3947 = vunpack.c.h.b16 %v3780
        %v3948 = vunpack.c.l.b16 %v3781
        %v3949 = vunpack.c.h.b16 %v3781
        %v3950 = vunpack.c.l.b16 %v3782
        %v3951 = vunpack.c.h.b16 %v3782
        %v3952 = vunpack.c.l.b16 %v3783
        %v3953 = vunpack.c.h.b16 %v3783
        %v3954 = vunpack.c.l.b16 %v3784
        %v3955 = vunpack.c.h.b16 %v3784
        %v3956 = vunpack.c.l.b16 %v3785
        %v3957 = vunpack.c.h.b16 %v3785
        %v3958 = vunpack.c.l.b16 %v3786
        %v3959 = vunpack.c.h.b16 %v3786
        %v3960 = vunpack.c.l.b16 %v3787
        %v3961 = vunpack.c.h.b16 %v3787
        %v3962 = vunpack.c.l.b16 %v3788
        %v3963 = vunpack.c.h.b16 %v3788
        %v3964 = vunpack.c.l.b16 %v3789
        %v3965 = vunpack.c.h.b16 %v3789
        %v3966 = vunpack.c.l.b16 %v3790
        %v3967 = vunpack.c.h.b16 %v3790
        %v3968 = vunpack.c.l.b16 %v3791
        %v3969 = vunpack.c.h.b16 %v3791
        %v3970 = vunpack.c.l.b16 %v3792
        %v3971 = vunpack.c.h.b16 %v3792
        %v3972 = vunpack.c.l.b16 %v3793
        %v3973 = vunpack.c.h.b16 %v3793
        %v3974 = vunpack.c.l.b16 %v3794
        %v3975 = vunpack.c.h.b16 %v3794
        %v3976 = vunpack.c.l.b16 %v3795
        %v3977 = vunpack.c.h.b16 %v3795
        %v3978 = vunpack.c.l.b16 %v3796
        %v3979 = vunpack.c.h.b16 %v3796
        %v3980 = vunpack.c.l.b16 %v3797
        %v3981 = vunpack.c.h.b16 %v3797
        %v3982 = vunpack.c.l.b16 %v3798
        %v3983 = vunpack.c.h.b16 %v3798
        %v3984 = vunpack.c.l.b16 %v3799
        %v3985 = vunpack.c.h.b16 %v3799
        %v3986 = vunpack.c.l.b16 %v3800
        %v3987 = vunpack.c.h.b16 %v3800
        %v3988 = vunpack.c.l.b16 %v3801
        %v3989 = vunpack.c.h.b16 %v3801
        %v3990 = vunpack.c.l.b16 %v3802
        %v3991 = vunpack.c.h.b16 %v3802
        %v3992 = vunpack.c.l.b16 %v3803
        %v3993 = vunpack.c.h.b16 %v3803
        %v3994 = vunpack.c.l.b16 %v3804
        %v3995 = vunpack.c.h.b16 %v3804
        %v3996 = vunpack.c.l.b16 %v3805
        %v3997 = vunpack.c.h.b16 %v3805
        %v3998 = vpack.c.b16 %v3872, %v3870
        %v3999 = vpack.c.b16 %v3873, %v3871
        %v4000 = vpack.c.b16 %v3876, %v3874
        %v4001 = vpack.c.b16 %v3877, %v3875
        %v4002 = vpack.c.b16 %v3880, %v3878
        %v4003 = vpack.c.b16 %v3881, %v3879
        %v4004 = vpack.c.b16 %v3884, %v3882
        %v4005 = vpack.c.b16 %v3885, %v3883
        %v4006 = vpack.c.b16 %v3888, %v3886
        %v4007 = vpack.c.b16 %v3889, %v3887
        %v4008 = vpack.c.b16 %v3892, %v3890
        %v4009 = vpack.c.b16 %v3893, %v3891
        %v4010 = vpack.c.b16 %v3896, %v3894
        %v4011 = vpack.c.b16 %v3897, %v3895
        %v4012 = vpack.c.b16 %v3900, %v3898
        %v4013 = vpack.c.b16 %v3901, %v3899
        %v4014 = vpack.c.b16 %v3904, %v3902
        %v4015 = vpack.c.b16 %v3905, %v3903
        %v4016 = vpack.c.b16 %v3908, %v3906
        %v4017 = vpack.c.b16 %v3909, %v3907
        %v4018 = vpack.c.b16 %v3912, %v3910
        %v4019 = vpack.c.b16 %v3913, %v3911
        %v4020 = vpack.c.b16 %v3916, %v3914
        %v4021 = vpack.c.b16 %v3917, %v3915
        %v4022 = vpack.c.b16 %v3920, %v3918
        %v4023 = vpack.c.b16 %v3921, %v3919
        %v4024 = vpack.c.b16 %v3924, %v3922
        %v4025 = vpack.c.b16 %v3925, %v3923
        %v4026 = vpack.c.b16 %v3928, %v3926
        %v4027 = vpack.c.b16 %v3929, %v3927
        %v4028 = vpack.c.b16 %v3932, %v3930
        %v4029 = vpack.c.b16 %v3933, %v3931
        %v4030 = vpack.c.b16 %v3936, %v3934
        %v4031 = vpack.c.b16 %v3937, %v3935
        %v4032 = vpack.c.b16 %v3940, %v3938
        %v4033 = vpack.c.b16 %v3941, %v3939
        %v4034 = vpack.c.b16 %v3944, %v3942
        %v4035 = vpack.c.b16 %v3945, %v3943
        %v4036 = vpack.c.b16 %v3948, %v3946
        %v4037 = vpack.c.b16 %v3949, %v3947
        %v4038 = vpack.c.b16 %v3952, %v3950
        %v4039 = vpack.c.b16 %v3953, %v3951
        %v4040 = vpack.c.b16 %v3956, %v3954
        %v4041 = vpack.c.b16 %v3957, %v3955
        %v4042 = vpack.c.b16 %v3960, %v3958
        %v4043 = vpack.c.b16 %v3961, %v3959
        %v4044 = vpack.c.b16 %v3964, %v3962
        %v4045 = vpack.c.b16 %v3965, %v3963
        %v4046 = vpack.c.b16 %v3968, %v3966
        %v4047 = vpack.c.b16 %v3969, %v3967
        %v4048 = vpack.c.b16 %v3972, %v3970
        %v4049 = vpack.c.b16 %v3973, %v3971
        %v4050 = vpack.c.b16 %v3976, %v3974
        %v4051 = vpack.c.b16 %v3977, %v3975
        %v4052 = vpack.c.b16 %v3980, %v3978
        %v4053 = vpack.c.b16 %v3981, %v3979
        %v4054 = vpack.c.b16 %v3984, %v3982
        %v4055 = vpack.c.b16 %v3985, %v3983
        %v4056 = vpack.c.b16 %v3988, %v3986
        %v4057 = vpack.c.b16 %v3989, %v3987
        %v4058 = vpack.c.b16 %v3992, %v3990
        %v4059 = vpack.c.b16 %v3993, %v3991
        %v4060 = vpack.c.b16 %v3996, %v3994
        %v4061 = vpack.c.b16 %v3997, %v3995
        %4126 = vmatprep.subr.bf16.mxu0 %v3999
        %4127 = vmatpush1.bf16.msra.mxu0 %v3998
        %4128 = vmatprep.subr.bf16.mxu0 %v4001
        %4129 = vmatpush1.bf16.msra.mxu0 %v4000
        %4130 = vmatprep.subr.bf16.mxu0 %v4003
        %4131 = vmatpush1.bf16.msra.mxu0 %v4002
        %4132 = vmatprep.subr.bf16.mxu0 %v4005
        %4133 = vmatpush1.bf16.msra.mxu0 %v4004
        %4134 = vmatprep.subr.bf16.mxu0 %v4007
        %4135 = vmatpush1.bf16.msra.mxu0 %v4006
        %4136 = vmatprep.subr.bf16.mxu0 %v4009
        %4137 = vmatpush1.bf16.msra.mxu0 %v4008
        %4138 = vmatprep.subr.bf16.mxu0 %v4011
        %4139 = vmatpush1.bf16.msra.mxu0 %v4010
        %4140 = vmatprep.subr.bf16.mxu0 %v4013
        %4141 = vmatpush1.bf16.msra.mxu0 %v4012
        %4142 = vmatprep.subr.bf16.mxu0 %v4015
        %4143 = vmatpush1.bf16.msra.mxu0 %v4014
        %4144 = vmatprep.subr.bf16.mxu0 %v4017
        %4145 = vmatpush1.bf16.msra.mxu0 %v4016
        %4146 = vmatprep.subr.bf16.mxu0 %v4019
        %4147 = vmatpush1.bf16.msra.mxu0 %v4018
        %4148 = vmatprep.subr.bf16.mxu0 %v4021
        %4149 = vmatpush1.bf16.msra.mxu0 %v4020
        %4150 = vmatprep.subr.bf16.mxu0 %v4023
        %4151 = vmatpush1.bf16.msra.mxu0 %v4022
        %4152 = vmatprep.subr.bf16.mxu0 %v4025
        %4153 = vmatpush1.bf16.msra.mxu0 %v4024
        %4154 = vmatprep.subr.bf16.mxu0 %v4027
        %4155 = vmatpush1.bf16.msra.mxu0 %v4026
        %4156 = vmatprep.subr.bf16.mxu0 %v4029
        %4157 = vmatpush1.bf16.msra.mxu0 %v4028
        %4158 = vmatprep.mubr.bf16.mxu0 %v1369
        %4159 = vmatmul.mubr.bf16.gmra.mrb[0].mxu0 %v1368
        %v4160 = vpop.f32.mrb[0].mxu0
        %v4161 = vadd.f32 0.0, %v4160
        %v4162 = vpop.f32.mrb[0].mxu0
        %v4163 = vadd.f32 0.0, %v4162
        %v4164 = vpop.f32.mrb[0].mxu0
        %v4165 = vadd.f32 0.0, %v4164
        %v4166 = vpop.f32.mrb[0].mxu0
        %v4167 = vadd.f32 0.0, %v4166
        %4168 = vmatprep.mubr.bf16.mxu0 %v1373
        %4169 = vmatmul.mubr.bf16.gmra.mrb[0].mxu0 %v1372
        %v4170 = vpop.f32.mrb[0].mxu0
        %v4171 = vadd.f32 0.0, %v4170
        %v4172 = vpop.f32.mrb[0].mxu0
        %v4173 = vadd.f32 0.0, %v4172
        %v4174 = vpop.f32.mrb[0].mxu0
        %v4175 = vadd.f32 0.0, %v4174
        %v4176 = vpop.f32.mrb[0].mxu0
        %v4177 = vadd.f32 0.0, %v4176
        %4178 = vmatprep.mubr.bf16.mxu0 %v1377
        %4179 = vmatmul.mubr.bf16.gmra.mrb[0].mxu0 %v1376
        %v4180 = vpop.f32.mrb[0].mxu0
        %v4181 = vadd.f32 0.0, %v4180
        %v4182 = vpop.f32.mrb[0].mxu0
        %v4183 = vadd.f32 0.0, %v4182
        %v4184 = vpop.f32.mrb[0].mxu0
        %v4185 = vadd.f32 0.0, %v4184
        %v4186 = vpop.f32.mrb[0].mxu0
        %v4187 = vadd.f32 0.0, %v4186
        %4188 = vmatprep.mubr.bf16.mxu0 %v1381
        %4189 = vmatmul.mubr.bf16.gmra.mrb[0].mxu0 %v1380
        %v4190 = vpop.f32.mrb[0].mxu0
        %v4191 = vadd.f32 0.0, %v4190
        %v4192 = vpop.f32.mrb[0].mxu0
        %v4193 = vadd.f32 0.0, %v4192
        %v4194 = vpop.f32.mrb[0].mxu0
        %v4195 = vadd.f32 0.0, %v4194
        %v4196 = vpop.f32.mrb[0].mxu0
        %v4197 = vadd.f32 0.0, %v4196
        %4198 = vmatprep.mubr.bf16.mxu0 %v1385
        %4199 = vmatmul.mubr.bf16.gmra.mrb[0].mxu0 %v1384
        %v4200 = vpop.f32.mrb[0].mxu0
        %v4201 = vadd.f32 0.0, %v4200
        %v4202 = vpop.f32.mrb[0].mxu0
        %v4203 = vadd.f32 0.0, %v4202
        %v4204 = vpop.f32.mrb[0].mxu0
        %v4205 = vadd.f32 0.0, %v4204
        %v4206 = vpop.f32.mrb[0].mxu0
        %v4207 = vadd.f32 0.0, %v4206
        %4208 = vmatprep.mubr.bf16.mxu0 %v1389
        %4209 = vmatmul.mubr.bf16.gmra.mrb[0].mxu0 %v1388
        %v4210 = vpop.f32.mrb[0].mxu0
        %v4211 = vadd.f32 0.0, %v4210
        %v4212 = vpop.f32.mrb[0].mxu0
        %v4213 = vadd.f32 0.0, %v4212
        %v4214 = vpop.f32.mrb[0].mxu0
        %v4215 = vadd.f32 0.0, %v4214
        %v4216 = vpop.f32.mrb[0].mxu0
        %v4217 = vadd.f32 0.0, %v4216
        %4218 = vmatprep.mubr.bf16.mxu0 %v1393
        %4219 = vmatmul.mubr.bf16.gmra.mrb[0].mxu0 %v1392
        %v4220 = vpop.f32.mrb[0].mxu0
        %v4221 = vadd.f32 0.0, %v4220
        %v4222 = vpop.f32.mrb[0].mxu0
        %v4223 = vadd.f32 0.0, %v4222
        %v4224 = vpop.f32.mrb[0].mxu0
        %v4225 = vadd.f32 0.0, %v4224
        %v4226 = vpop.f32.mrb[0].mxu0
        %v4227 = vadd.f32 0.0, %v4226
        %4228 = vmatprep.mubr.bf16.mxu0 %v1397
        %4229 = vmatmul.mubr.bf16.gmra.mrb[0].mxu0 %v1396
        %v4230 = vpop.f32.mrb[0].mxu0
        %v4231 = vadd.f32 0.0, %v4230
        %v4232 = vpop.f32.mrb[0].mxu0
        %v4233 = vadd.f32 0.0, %v4232
        %v4234 = vpop.f32.mrb[0].mxu0
        %v4235 = vadd.f32 0.0, %v4234
        %v4236 = vpop.f32.mrb[0].mxu0
        %v4237 = vadd.f32 0.0, %v4236
        %4238 = vmatprep.mubr.bf16.mxu0 %v1401
        %4239 = vmatmul.mubr.bf16.gmra.mrb[0].mxu0 %v1400
        %v4240 = vpop.f32.mrb[0].mxu0
        %v4241 = vadd.f32 0.0, %v4240
        %v4242 = vpop.f32.mrb[0].mxu0
        %v4243 = vadd.f32 0.0, %v4242
        %v4244 = vpop.f32.mrb[0].mxu0
        %v4245 = vadd.f32 0.0, %v4244
        %v4246 = vpop.f32.mrb[0].mxu0
        %v4247 = vadd.f32 0.0, %v4246
        %4248 = vmatprep.mubr.bf16.mxu0 %v1405
        %4249 = vmatmul.mubr.bf16.gmra.mrb[0].mxu0 %v1404
        %v4250 = vpop.f32.mrb[0].mxu0
        %v4251 = vadd.f32 0.0, %v4250
        %v4252 = vpop.f32.mrb[0].mxu0
        %v4253 = vadd.f32 0.0, %v4252
        %v4254 = vpop.f32.mrb[0].mxu0
        %v4255 = vadd.f32 0.0, %v4254
        %v4256 = vpop.f32.mrb[0].mxu0
        %v4257 = vadd.f32 0.0, %v4256
        %4258 = vmatprep.mubr.bf16.mxu0 %v1409
        %4259 = vmatmul.mubr.bf16.gmra.mrb[0].mxu0 %v1408
        %v4260 = vpop.f32.mrb[0].mxu0
        %v4261 = vadd.f32 0.0, %v4260
        %v4262 = vpop.f32.mrb[0].mxu0
        %v4263 = vadd.f32 0.0, %v4262
        %v4264 = vpop.f32.mrb[0].mxu0
        %v4265 = vadd.f32 0.0, %v4264
        %v4266 = vpop.f32.mrb[0].mxu0
        %v4267 = vadd.f32 0.0, %v4266
        %4268 = vmatprep.mubr.bf16.mxu0 %v1413
        %4269 = vmatmul.mubr.bf16.gmra.mrb[0].mxu0 %v1412
        %v4270 = vpop.f32.mrb[0].mxu0
        %v4271 = vadd.f32 0.0, %v4270
        %v4272 = vpop.f32.mrb[0].mxu0
        %v4273 = vadd.f32 0.0, %v4272
        %v4274 = vpop.f32.mrb[0].mxu0
        %v4275 = vadd.f32 0.0, %v4274
        %v4276 = vpop.f32.mrb[0].mxu0
        %v4277 = vadd.f32 0.0, %v4276
        %4278 = vmatprep.mubr.bf16.mxu0 %v1417
        %4279 = vmatmul.mubr.bf16.gmra.mrb[0].mxu0 %v1416
        %v4280 = vpop.f32.mrb[0].mxu0
        %v4281 = vadd.f32 0.0, %v4280
        %v4282 = vpop.f32.mrb[0].mxu0
        %v4283 = vadd.f32 0.0, %v4282
        %v4284 = vpop.f32.mrb[0].mxu0
        %v4285 = vadd.f32 0.0, %v4284
        %v4286 = vpop.f32.mrb[0].mxu0
        %v4287 = vadd.f32 0.0, %v4286
        %4288 = vmatprep.mubr.bf16.mxu0 %v1421
        %4289 = vmatmul.mubr.bf16.gmra.mrb[0].mxu0 %v1420
        %v4290 = vpop.f32.mrb[0].mxu0
        %v4291 = vadd.f32 0.0, %v4290
        %v4292 = vpop.f32.mrb[0].mxu0
        %v4293 = vadd.f32 0.0, %v4292
        %v4294 = vpop.f32.mrb[0].mxu0
        %v4295 = vadd.f32 0.0, %v4294
        %v4296 = vpop.f32.mrb[0].mxu0
        %v4297 = vadd.f32 0.0, %v4296
        %4298 = vmatprep.mubr.bf16.mxu0 %v1425
        %4299 = vmatmul.mubr.bf16.gmra.mrb[0].mxu0 %v1424
        %v4300 = vpop.f32.mrb[0].mxu0
        %v4301 = vadd.f32 0.0, %v4300
        %v4302 = vpop.f32.mrb[0].mxu0
        %v4303 = vadd.f32 0.0, %v4302
        %v4304 = vpop.f32.mrb[0].mxu0
        %v4305 = vadd.f32 0.0, %v4304
        %v4306 = vpop.f32.mrb[0].mxu0
        %v4307 = vadd.f32 0.0, %v4306
        %4308 = vmatprep.mubr.bf16.mxu0 %v1429
        %4309 = vmatmul.mubr.bf16.gmra.mrb[0].mxu0 %v1428
        %v4310 = vpop.f32.mrb[0].mxu0
        %v4311 = vadd.f32 0.0, %v4310
        %v4312 = vpop.f32.mrb[0].mxu0
        %v4313 = vadd.f32 0.0, %v4312
        %v4314 = vpop.f32.mrb[0].mxu0
        %v4315 = vadd.f32 0.0, %v4314
        %v4316 = vpop.f32.mrb[0].mxu0
        %v4317 = vadd.f32 0.0, %v4316
        %4318 = vdwg.mxu0
        %4319 = vmatprep.subr.bf16.mxu0 %v4031
        %4320 = vmatpush1.bf16.msra.mxu0 %v4030
        %4321 = vmatprep.subr.bf16.mxu0 %v4033
        %4322 = vmatpush1.bf16.msra.mxu0 %v4032
        %4323 = vmatprep.subr.bf16.mxu0 %v4035
        %4324 = vmatpush1.bf16.msra.mxu0 %v4034
        %4325 = vmatprep.subr.bf16.mxu0 %v4037
        %4326 = vmatpush1.bf16.msra.mxu0 %v4036
        %4327 = vmatprep.subr.bf16.mxu0 %v4039
        %4328 = vmatpush1.bf16.msra.mxu0 %v4038
        %4329 = vmatprep.subr.bf16.mxu0 %v4041
        %4330 = vmatpush1.bf16.msra.mxu0 %v4040
        %4331 = vmatprep.subr.bf16.mxu0 %v4043
        %4332 = vmatpush1.bf16.msra.mxu0 %v4042
        %4333 = vmatprep.subr.bf16.mxu0 %v4045
        %4334 = vmatpush1.bf16.msra.mxu0 %v4044
        %4335 = vmatprep.subr.bf16.mxu0 %v4047
        %4336 = vmatpush1.bf16.msra.mxu0 %v4046
        %4337 = vmatprep.subr.bf16.mxu0 %v4049
        %4338 = vmatpush1.bf16.msra.mxu0 %v4048
        %4339 = vmatprep.subr.bf16.mxu0 %v4051
        %4340 = vmatpush1.bf16.msra.mxu0 %v4050
        %4341 = vmatprep.subr.bf16.mxu0 %v4053
        %4342 = vmatpush1.bf16.msra.mxu0 %v4052
        %4343 = vmatprep.subr.bf16.mxu0 %v4055
        %4344 = vmatpush1.bf16.msra.mxu0 %v4054
        %4345 = vmatprep.subr.bf16.mxu0 %v4057
        %4346 = vmatpush1.bf16.msra.mxu0 %v4056
        %4347 = vmatprep.subr.bf16.mxu0 %v4059
        %4348 = vmatpush1.bf16.msra.mxu0 %v4058
        %4349 = vmatprep.subr.bf16.mxu0 %v4061
        %4350 = vmatpush1.bf16.msra.mxu0 %v4060
        %4351 = vmatprep.mubr.bf16.mxu0 %v1371
        %4352 = vmatmul.mubr.bf16.gmra.mrb[0].mxu0 %v1370
        %v4353 = vpop.f32.mrb[0].mxu0
        %v4354 = vadd.f32 %v4161, %v4353
        %v4355 = vpop.f32.mrb[0].mxu0
        %v4356 = vadd.f32 %v4163, %v4355
        %v4357 = vpop.f32.mrb[0].mxu0
        %v4358 = vadd.f32 %v4165, %v4357
        %v4359 = vpop.f32.mrb[0].mxu0
        %v4360 = vadd.f32 %v4167, %v4359
        %4361 = vmatprep.mubr.bf16.mxu0 %v1375
        %4362 = vmatmul.mubr.bf16.gmra.mrb[0].mxu0 %v1374
        %v4363 = vpop.f32.mrb[0].mxu0
        %v4364 = vadd.f32 %v4171, %v4363
        %v4365 = vpop.f32.mrb[0].mxu0
        %v4366 = vadd.f32 %v4173, %v4365
        %v4367 = vpop.f32.mrb[0].mxu0
        %v4368 = vadd.f32 %v4175, %v4367
        %v4369 = vpop.f32.mrb[0].mxu0
        %v4370 = vadd.f32 %v4177, %v4369
        %4371 = vmatprep.mubr.bf16.mxu0 %v1379
        %4372 = vmatmul.mubr.bf16.gmra.mrb[0].mxu0 %v1378
        %v4373 = vpop.f32.mrb[0].mxu0
        %v4374 = vadd.f32 %v4181, %v4373
        %v4375 = vpop.f32.mrb[0].mxu0
        %v4376 = vadd.f32 %v4183, %v4375
        %v4377 = vpop.f32.mrb[0].mxu0
        %v4378 = vadd.f32 %v4185, %v4377
        %v4379 = vpop.f32.mrb[0].mxu0
        %v4380 = vadd.f32 %v4187, %v4379
        %4381 = vmatprep.mubr.bf16.mxu0 %v1383
        %4382 = vmatmul.mubr.bf16.gmra.mrb[0].mxu0 %v1382
        %v4383 = vpop.f32.mrb[0].mxu0
        %v4384 = vadd.f32 %v4191, %v4383
        %v4385 = vpop.f32.mrb[0].mxu0
        %v4386 = vadd.f32 %v4193, %v4385
        %v4387 = vpop.f32.mrb[0].mxu0
        %v4388 = vadd.f32 %v4195, %v4387
        %v4389 = vpop.f32.mrb[0].mxu0
        %v4390 = vadd.f32 %v4197, %v4389
        %4391 = vmatprep.mubr.bf16.mxu0 %v1387
        %4392 = vmatmul.mubr.bf16.gmra.mrb[0].mxu0 %v1386
        %v4393 = vpop.f32.mrb[0].mxu0
        %v4394 = vadd.f32 %v4201, %v4393
        %v4395 = vpop.f32.mrb[0].mxu0
        %v4396 = vadd.f32 %v4203, %v4395
        %v4397 = vpop.f32.mrb[0].mxu0
        %v4398 = vadd.f32 %v4205, %v4397
        %v4399 = vpop.f32.mrb[0].mxu0
        %v4400 = vadd.f32 %v4207, %v4399
        %4401 = vmatprep.mubr.bf16.mxu0 %v1391
        %4402 = vmatmul.mubr.bf16.gmra.mrb[0].mxu0 %v1390
        %v4403 = vpop.f32.mrb[0].mxu0
        %v4404 = vadd.f32 %v4211, %v4403
        %v4405 = vpop.f32.mrb[0].mxu0
        %v4406 = vadd.f32 %v4213, %v4405
        %v4407 = vpop.f32.mrb[0].mxu0
        %v4408 = vadd.f32 %v4215, %v4407
        %v4409 = vpop.f32.mrb[0].mxu0
        %v4410 = vadd.f32 %v4217, %v4409
        %4411 = vmatprep.mubr.bf16.mxu0 %v1395
        %4412 = vmatmul.mubr.bf16.gmra.mrb[0].mxu0 %v1394
        %v4413 = vpop.f32.mrb[0].mxu0
        %v4414 = vadd.f32 %v4221, %v4413
        %v4415 = vpop.f32.mrb[0].mxu0
        %v4416 = vadd.f32 %v4223, %v4415
        %v4417 = vpop.f32.mrb[0].mxu0
        %v4418 = vadd.f32 %v4225, %v4417
        %v4419 = vpop.f32.mrb[0].mxu0
        %v4420 = vadd.f32 %v4227, %v4419
        %4421 = vmatprep.mubr.bf16.mxu0 %v1399
        %4422 = vmatmul.mubr.bf16.gmra.mrb[0].mxu0 %v1398
        %v4423 = vpop.f32.mrb[0].mxu0
        %v4424 = vadd.f32 %v4231, %v4423
        %v4425 = vpop.f32.mrb[0].mxu0
        %v4426 = vadd.f32 %v4233, %v4425
        %v4427 = vpop.f32.mrb[0].mxu0
        %v4428 = vadd.f32 %v4235, %v4427
        %v4429 = vpop.f32.mrb[0].mxu0
        %v4430 = vadd.f32 %v4237, %v4429
        %4431 = vmatprep.mubr.bf16.mxu0 %v1403
        %4432 = vmatmul.mubr.bf16.gmra.mrb[0].mxu0 %v1402
        %v4433 = vpop.f32.mrb[0].mxu0
        %v4434 = vadd.f32 %v4241, %v4433
        %v4435 = vpop.f32.mrb[0].mxu0
        %v4436 = vadd.f32 %v4243, %v4435
        %v4437 = vpop.f32.mrb[0].mxu0
        %v4438 = vadd.f32 %v4245, %v4437
        %v4439 = vpop.f32.mrb[0].mxu0
        %v4440 = vadd.f32 %v4247, %v4439
        %4441 = vmatprep.mubr.bf16.mxu0 %v1407
        %4442 = vmatmul.mubr.bf16.gmra.mrb[0].mxu0 %v1406
        %v4443 = vpop.f32.mrb[0].mxu0
        %v4444 = vadd.f32 %v4251, %v4443
        %v4445 = vpop.f32.mrb[0].mxu0
        %v4446 = vadd.f32 %v4253, %v4445
        %v4447 = vpop.f32.mrb[0].mxu0
        %v4448 = vadd.f32 %v4255, %v4447
        %v4449 = vpop.f32.mrb[0].mxu0
        %v4450 = vadd.f32 %v4257, %v4449
        %4451 = vmatprep.mubr.bf16.mxu0 %v1411
        %4452 = vmatmul.mubr.bf16.gmra.mrb[0].mxu0 %v1410
        %v4453 = vpop.f32.mrb[0].mxu0
        %v4454 = vadd.f32 %v4261, %v4453
        %v4455 = vpop.f32.mrb[0].mxu0
        %v4456 = vadd.f32 %v4263, %v4455
        %v4457 = vpop.f32.mrb[0].mxu0
        %v4458 = vadd.f32 %v4265, %v4457
        %v4459 = vpop.f32.mrb[0].mxu0
        %v4460 = vadd.f32 %v4267, %v4459
        %4461 = vmatprep.mubr.bf16.mxu0 %v1415
        %4462 = vmatmul.mubr.bf16.gmra.mrb[0].mxu0 %v1414
        %v4463 = vpop.f32.mrb[0].mxu0
        %v4464 = vadd.f32 %v4271, %v4463
        %v4465 = vpop.f32.mrb[0].mxu0
        %v4466 = vadd.f32 %v4273, %v4465
        %v4467 = vpop.f32.mrb[0].mxu0
        %v4468 = vadd.f32 %v4275, %v4467
        %v4469 = vpop.f32.mrb[0].mxu0
        %v4470 = vadd.f32 %v4277, %v4469
        %4471 = vmatprep.mubr.bf16.mxu0 %v1419
        %4472 = vmatmul.mubr.bf16.gmra.mrb[0].mxu0 %v1418
        %v4473 = vpop.f32.mrb[0].mxu0
        %v4474 = vadd.f32 %v4281, %v4473
        %v4475 = vpop.f32.mrb[0].mxu0
        %v4476 = vadd.f32 %v4283, %v4475
        %v4477 = vpop.f32.mrb[0].mxu0
        %v4478 = vadd.f32 %v4285, %v4477
        %v4479 = vpop.f32.mrb[0].mxu0
        %v4480 = vadd.f32 %v4287, %v4479
        %4481 = vmatprep.mubr.bf16.mxu0 %v1423
        %4482 = vmatmul.mubr.bf16.gmra.mrb[0].mxu0 %v1422
        %v4483 = vpop.f32.mrb[0].mxu0
        %v4484 = vadd.f32 %v4291, %v4483
        %v4485 = vpop.f32.mrb[0].mxu0
        %v4486 = vadd.f32 %v4293, %v4485
        %v4487 = vpop.f32.mrb[0].mxu0
        %v4488 = vadd.f32 %v4295, %v4487
        %v4489 = vpop.f32.mrb[0].mxu0
        %v4490 = vadd.f32 %v4297, %v4489
        %4491 = vmatprep.mubr.bf16.mxu0 %v1427
        %4492 = vmatmul.mubr.bf16.gmra.mrb[0].mxu0 %v1426
        %v4493 = vpop.f32.mrb[0].mxu0
        %v4494 = vadd.f32 %v4301, %v4493
        %v4495 = vpop.f32.mrb[0].mxu0
        %v4496 = vadd.f32 %v4303, %v4495
        %v4497 = vpop.f32.mrb[0].mxu0
        %v4498 = vadd.f32 %v4305, %v4497
        %v4499 = vpop.f32.mrb[0].mxu0
        %v4500 = vadd.f32 %v4307, %v4499
        %4501 = vmatprep.mubr.bf16.mxu0 %v1431
        %4502 = vmatmul.mubr.bf16.gmra.mrb[0].mxu0 %v1430
        %v4503 = vpop.f32.mrb[0].mxu0
        %v4504 = vadd.f32 %v4311, %v4503
        %v4505 = vpop.f32.mrb[0].mxu0
        %v4506 = vadd.f32 %v4313, %v4505
        %v4507 = vpop.f32.mrb[0].mxu0
        %v4508 = vadd.f32 %v4315, %v4507
        %v4509 = vpop.f32.mrb[0].mxu0
        %v4510 = vadd.f32 %v4317, %v4509
        %4511 = vdwg.mxu0
        %v4512 = vld [vmem:[%s490] sm:$0xff]
        %v4513 = vld [vmem:[%s490 + $0x8] sm:$0xff]
        %v4514 = vld [vmem:[%s490 + $0x10] sm:$0xff]
        %v4515 = vld [vmem:[%s490 + $0x18] sm:$0xff]
        %v4516 = vld [vmem:[%s490 + $0x20] sm:$0xff]
        %v4517 = vld [vmem:[%s490 + $0x28] sm:$0xff]
        %v4518 = vld [vmem:[%s490 + $0x30] sm:$0xff]
        %v4519 = vld [vmem:[%s490 + $0x38] sm:$0xff]
        %v4520 = vld [vmem:[%s490 + $0x40] sm:$0xff]
        %v4521 = vld [vmem:[%s490 + $0x48] sm:$0xff]
        %v4522 = vld [vmem:[%s490 + $0x50] sm:$0xff]
        %v4523 = vld [vmem:[%s490 + $0x58] sm:$0xff]
        %v4524 = vld [vmem:[%s490 + $0x60] sm:$0xff]
        %v4525 = vld [vmem:[%s490 + $0x68] sm:$0xff]
        %v4526 = vld [vmem:[%s490 + $0x70] sm:$0xff]
        %v4527 = vld [vmem:[%s490 + $0x78] sm:$0xff]
        %v4528 = vld [vmem:[%s490 + $0x80] sm:$0xff]
        %v4529 = vld [vmem:[%s490 + $0x88] sm:$0xff]
        %v4530 = vld [vmem:[%s490 + $0x90] sm:$0xff]
        %v4531 = vld [vmem:[%s490 + $0x98] sm:$0xff]
        %v4532 = vld [vmem:[%s490 + $0xa0] sm:$0xff]
        %v4533 = vld [vmem:[%s490 + $0xa8] sm:$0xff]
        %v4534 = vld [vmem:[%s490 + $0xb0] sm:$0xff]
        %v4535 = vld [vmem:[%s490 + $0xb8] sm:$0xff]
        %v4536 = vld [vmem:[%s490 + $0xc0] sm:$0xff]
        %v4537 = vld [vmem:[%s490 + $0xc8] sm:$0xff]
        %v4538 = vld [vmem:[%s490 + $0xd0] sm:$0xff]
        %v4539 = vld [vmem:[%s490 + $0xd8] sm:$0xff]
        %v4540 = vld [vmem:[%s490 + $0xe0] sm:$0xff]
        %v4541 = vld [vmem:[%s490 + $0xe8] sm:$0xff]
        %v4542 = vld [vmem:[%s490 + $0xf0] sm:$0xff]
        %v4543 = vld [vmem:[%s490 + $0xf8] sm:$0xff]
        %v4544 = vld [vmem:[%s499] sm:$0xff]
        %v4545 = vld [vmem:[%s499 + $0x8] sm:$0xff]
        %v4546 = vld [vmem:[%s499 + $0x10] sm:$0xff]
        %v4547 = vld [vmem:[%s499 + $0x18] sm:$0xff]
        %v4548 = vld [vmem:[%s499 + $0x20] sm:$0xff]
        %v4549 = vld [vmem:[%s499 + $0x28] sm:$0xff]
        %v4550 = vld [vmem:[%s499 + $0x30] sm:$0xff]
        %v4551 = vld [vmem:[%s499 + $0x38] sm:$0xff]
        %v4552 = vld [vmem:[%s499 + $0x40] sm:$0xff]
        %v4553 = vld [vmem:[%s499 + $0x48] sm:$0xff]
        %v4554 = vld [vmem:[%s499 + $0x50] sm:$0xff]
        %v4555 = vld [vmem:[%s499 + $0x58] sm:$0xff]
        %v4556 = vld [vmem:[%s499 + $0x60] sm:$0xff]
        %v4557 = vld [vmem:[%s499 + $0x68] sm:$0xff]
        %v4558 = vld [vmem:[%s499 + $0x70] sm:$0xff]
        %v4559 = vld [vmem:[%s499 + $0x78] sm:$0xff]
        %v4560 = vld [vmem:[%s499 + $0x80] sm:$0xff]
        %v4561 = vld [vmem:[%s499 + $0x88] sm:$0xff]
        %v4562 = vld [vmem:[%s499 + $0x90] sm:$0xff]
        %v4563 = vld [vmem:[%s499 + $0x98] sm:$0xff]
        %v4564 = vld [vmem:[%s499 + $0xa0] sm:$0xff]
        %v4565 = vld [vmem:[%s499 + $0xa8] sm:$0xff]
        %v4566 = vld [vmem:[%s499 + $0xb0] sm:$0xff]
        %v4567 = vld [vmem:[%s499 + $0xb8] sm:$0xff]
        %v4568 = vld [vmem:[%s499 + $0xc0] sm:$0xff]
        %v4569 = vld [vmem:[%s499 + $0xc8] sm:$0xff]
        %v4570 = vld [vmem:[%s499 + $0xd0] sm:$0xff]
        %v4571 = vld [vmem:[%s499 + $0xd8] sm:$0xff]
        %v4572 = vld [vmem:[%s499 + $0xe0] sm:$0xff]
        %v4573 = vld [vmem:[%s499 + $0xe8] sm:$0xff]
        %v4574 = vld [vmem:[%s499 + $0xf0] sm:$0xff]
        %v4575 = vld [vmem:[%s499 + $0xf8] sm:$0xff]
        %v4576 = vld [vmem:[%s508] sm:$0xff]
        %v4577 = vld [vmem:[%s508 + $0x8] sm:$0xff]
        %v4578 = vld [vmem:[%s508 + $0x10] sm:$0xff]
        %v4579 = vld [vmem:[%s508 + $0x18] sm:$0xff]
        %v4580 = vld [vmem:[%s508 + $0x20] sm:$0xff]
        %v4581 = vld [vmem:[%s508 + $0x28] sm:$0xff]
        %v4582 = vld [vmem:[%s508 + $0x30] sm:$0xff]
        %v4583 = vld [vmem:[%s508 + $0x38] sm:$0xff]
        %v4584 = vld [vmem:[%s508 + $0x40] sm:$0xff]
        %v4585 = vld [vmem:[%s508 + $0x48] sm:$0xff]
        %v4586 = vld [vmem:[%s508 + $0x50] sm:$0xff]
        %v4587 = vld [vmem:[%s508 + $0x58] sm:$0xff]
        %v4588 = vld [vmem:[%s508 + $0x60] sm:$0xff]
        %v4589 = vld [vmem:[%s508 + $0x68] sm:$0xff]
        %v4590 = vld [vmem:[%s508 + $0x70] sm:$0xff]
        %v4591 = vld [vmem:[%s508 + $0x78] sm:$0xff]
        %v4592 = vld [vmem:[%s508 + $0x80] sm:$0xff]
        %v4593 = vld [vmem:[%s508 + $0x88] sm:$0xff]
        %v4594 = vld [vmem:[%s508 + $0x90] sm:$0xff]
        %v4595 = vld [vmem:[%s508 + $0x98] sm:$0xff]
        %v4596 = vld [vmem:[%s508 + $0xa0] sm:$0xff]
        %v4597 = vld [vmem:[%s508 + $0xa8] sm:$0xff]
        %v4598 = vld [vmem:[%s508 + $0xb0] sm:$0xff]
        %v4599 = vld [vmem:[%s508 + $0xb8] sm:$0xff]
        %v4600 = vld [vmem:[%s508 + $0xc0] sm:$0xff]
        %v4601 = vld [vmem:[%s508 + $0xc8] sm:$0xff]
        %v4602 = vld [vmem:[%s508 + $0xd0] sm:$0xff]
        %v4603 = vld [vmem:[%s508 + $0xd8] sm:$0xff]
        %v4604 = vld [vmem:[%s508 + $0xe0] sm:$0xff]
        %v4605 = vld [vmem:[%s508 + $0xe8] sm:$0xff]
        %v4606 = vld [vmem:[%s508 + $0xf0] sm:$0xff]
        %v4607 = vld [vmem:[%s508 + $0xf8] sm:$0xff]
        %4608 = vrot.lane.b32.xlu0 %v2428, 127
        %v4609 = vpop.permute.xlu0 %4608
        %4610 = vrot.lane.b32.xlu0 %v2432, 127
        %v4611 = vpop.permute.xlu0 %4610
        %4612 = vrot.lane.b32.xlu0 %v2438, 127
        %v4613 = vpop.permute.xlu0 %4612
        %4614 = vrot.lane.b32.xlu0 %v2442, 127
        %v4615 = vpop.permute.xlu0 %4614
        %4616 = vrot.lane.b32.xlu0 %v2448, 127
        %v4617 = vpop.permute.xlu0 %4616
        %4618 = vrot.lane.b32.xlu0 %v2452, 127
        %v4619 = vpop.permute.xlu0 %4618
        %4620 = vrot.lane.b32.xlu0 %v2458, 127
        %v4621 = vpop.permute.xlu0 %4620
        %4622 = vrot.lane.b32.xlu0 %v2462, 127
        %v4623 = vpop.permute.xlu0 %4622
        %4624 = vrot.lane.b32.xlu0 %v2468, 127
        %v4625 = vpop.permute.xlu0 %4624
        %4626 = vrot.lane.b32.xlu0 %v2472, 127
        %v4627 = vpop.permute.xlu0 %4626
        %4628 = vrot.lane.b32.xlu0 %v2478, 127
        %v4629 = vpop.permute.xlu0 %4628
        %4630 = vrot.lane.b32.xlu0 %v2482, 127
        %v4631 = vpop.permute.xlu0 %4630
        %4632 = vrot.lane.b32.xlu0 %v2488, 127
        %v4633 = vpop.permute.xlu0 %4632
        %4634 = vrot.lane.b32.xlu0 %v2492, 127
        %v4635 = vpop.permute.xlu0 %4634
        %4636 = vrot.lane.b32.xlu0 %v2498, 127
        %v4637 = vpop.permute.xlu0 %4636
        %4638 = vrot.lane.b32.xlu0 %v2502, 127
        %v4639 = vpop.permute.xlu0 %4638
        %4640 = vrot.lane.b32.xlu0 %v2508, 127
        %v4641 = vpop.permute.xlu0 %4640
        %4642 = vrot.lane.b32.xlu0 %v2512, 127
        %v4643 = vpop.permute.xlu0 %4642
        %4644 = vrot.lane.b32.xlu0 %v2518, 127
        %v4645 = vpop.permute.xlu0 %4644
        %4646 = vrot.lane.b32.xlu0 %v2522, 127
        %v4647 = vpop.permute.xlu0 %4646
        %4648 = vrot.lane.b32.xlu0 %v2528, 127
        %v4649 = vpop.permute.xlu0 %4648
        %4650 = vrot.lane.b32.xlu0 %v2532, 127
        %v4651 = vpop.permute.xlu0 %4650
        %4652 = vrot.lane.b32.xlu0 %v2538, 127
        %v4653 = vpop.permute.xlu0 %4652
        %4654 = vrot.lane.b32.xlu0 %v2542, 127
        %v4655 = vpop.permute.xlu0 %4654
        %4656 = vrot.lane.b32.xlu0 %v2548, 127
        %v4657 = vpop.permute.xlu0 %4656
        %4658 = vrot.lane.b32.xlu0 %v2552, 127
        %v4659 = vpop.permute.xlu0 %4658
        %4660 = vrot.lane.b32.xlu0 %v2558, 127
        %v4661 = vpop.permute.xlu0 %4660
        %4662 = vrot.lane.b32.xlu0 %v2562, 127
        %v4663 = vpop.permute.xlu0 %4662
        %4664 = vrot.lane.b32.xlu0 %v2568, 127
        %v4665 = vpop.permute.xlu0 %4664
        %4666 = vrot.lane.b32.xlu0 %v2572, 127
        %v4667 = vpop.permute.xlu0 %4666
        %4668 = vrot.lane.b32.xlu0 %v2578, 127
        %v4669 = vpop.permute.xlu0 %4668
        %4670 = vrot.lane.b32.xlu0 %v2582, 127
        %v4671 = vpop.permute.xlu0 %4670
        %4672 = vrot.lane.b32.xlu0 %v2428, 1
        %v4673 = vpop.permute.xlu0 %4672
        %4674 = vrot.lane.b32.xlu0 %v2432, 1
        %v4675 = vpop.permute.xlu0 %4674
        %4676 = vrot.lane.b32.xlu0 %v2438, 1
        %v4677 = vpop.permute.xlu0 %4676
        %4678 = vrot.lane.b32.xlu0 %v2442, 1
        %v4679 = vpop.permute.xlu0 %4678
        %4680 = vrot.lane.b32.xlu0 %v2448, 1
        %v4681 = vpop.permute.xlu0 %4680
        %4682 = vrot.lane.b32.xlu0 %v2452, 1
        %v4683 = vpop.permute.xlu0 %4682
        %4684 = vrot.lane.b32.xlu0 %v2458, 1
        %v4685 = vpop.permute.xlu0 %4684
        %4686 = vrot.lane.b32.xlu0 %v2462, 1
        %v4687 = vpop.permute.xlu0 %4686
        %4688 = vrot.lane.b32.xlu0 %v2468, 1
        %v4689 = vpop.permute.xlu0 %4688
        %4690 = vrot.lane.b32.xlu0 %v2472, 1
        %v4691 = vpop.permute.xlu0 %4690
        %4692 = vrot.lane.b32.xlu0 %v2478, 1
        %v4693 = vpop.permute.xlu0 %4692
        %4694 = vrot.lane.b32.xlu0 %v2482, 1
        %v4695 = vpop.permute.xlu0 %4694
        %4696 = vrot.lane.b32.xlu0 %v2488, 1
        %v4697 = vpop.permute.xlu0 %4696
        %4698 = vrot.lane.b32.xlu0 %v2492, 1
        %v4699 = vpop.permute.xlu0 %4698
        %4700 = vrot.lane.b32.xlu0 %v2498, 1
        %v4701 = vpop.permute.xlu0 %4700
        %4702 = vrot.lane.b32.xlu0 %v2502, 1
        %v4703 = vpop.permute.xlu0 %4702
        %4704 = vrot.lane.b32.xlu0 %v2508, 1
        %v4705 = vpop.permute.xlu0 %4704
        %4706 = vrot.lane.b32.xlu0 %v2512, 1
        %v4707 = vpop.permute.xlu0 %4706
        %4708 = vrot.lane.b32.xlu0 %v2518, 1
        %v4709 = vpop.permute.xlu0 %4708
        %4710 = vrot.lane.b32.xlu0 %v2522, 1
        %v4711 = vpop.permute.xlu0 %4710
        %4712 = vrot.lane.b32.xlu0 %v2528, 1
        %v4713 = vpop.permute.xlu0 %4712
        %4714 = vrot.lane.b32.xlu0 %v2532, 1
        %v4715 = vpop.permute.xlu0 %4714
        %4716 = vrot.lane.b32.xlu0 %v2538, 1
        %v4717 = vpop.permute.xlu0 %4716
        %4718 = vrot.lane.b32.xlu0 %v2542, 1
        %v4719 = vpop.permute.xlu0 %4718
        %4720 = vrot.lane.b32.xlu0 %v2548, 1
        %v4721 = vpop.permute.xlu0 %4720
        %4722 = vrot.lane.b32.xlu0 %v2552, 1
        %v4723 = vpop.permute.xlu0 %4722
        %4724 = vrot.lane.b32.xlu0 %v2558, 1
        %v4725 = vpop.permute.xlu0 %4724
        %4726 = vrot.lane.b32.xlu0 %v2562, 1
        %v4727 = vpop.permute.xlu0 %4726
        %4728 = vrot.lane.b32.xlu0 %v2568, 1
        %v4729 = vpop.permute.xlu0 %4728
        %4730 = vrot.lane.b32.xlu0 %v2572, 1
        %v4731 = vpop.permute.xlu0 %4730
        %4732 = vrot.lane.b32.xlu0 %v2578, 1
        %v4733 = vpop.permute.xlu0 %4732
        %4734 = vrot.lane.b32.xlu0 %v2582, 1
        %v4735 = vpop.permute.xlu0 %4734
        %v4736 = vmul.f32 %v2428, %v4512
        %v4737 = vmul.f32 %v2432, %v4513
        %v4738 = vmul.f32 %v2438, %v4514
        %v4739 = vmul.f32 %v2442, %v4515
        %v4740 = vmul.f32 %v2448, %v4516
        %v4741 = vmul.f32 %v2452, %v4517
        %v4742 = vmul.f32 %v2458, %v4518
        %v4743 = vmul.f32 %v2462, %v4519
        %v4744 = vmul.f32 %v2468, %v4520
        %v4745 = vmul.f32 %v2472, %v4521
        %v4746 = vmul.f32 %v2478, %v4522
        %v4747 = vmul.f32 %v2482, %v4523
        %v4748 = vmul.f32 %v2488, %v4524
        %v4749 = vmul.f32 %v2492, %v4525
        %v4750 = vmul.f32 %v2498, %v4526
        %v4751 = vmul.f32 %v2502, %v4527
        %v4752 = vmul.f32 %v2508, %v4528
        %v4753 = vmul.f32 %v2512, %v4529
        %v4754 = vmul.f32 %v2518, %v4530
        %v4755 = vmul.f32 %v2522, %v4531
        %v4756 = vmul.f32 %v2528, %v4532
        %v4757 = vmul.f32 %v2532, %v4533
        %v4758 = vmul.f32 %v2538, %v4534
        %v4759 = vmul.f32 %v2542, %v4535
        %v4760 = vmul.f32 %v2548, %v4536
        %v4761 = vmul.f32 %v2552, %v4537
        %v4762 = vmul.f32 %v2558, %v4538
        %v4763 = vmul.f32 %v2562, %v4539
        %v4764 = vmul.f32 %v2568, %v4540
        %v4765 = vmul.f32 %v2572, %v4541
        %v4766 = vmul.f32 %v2578, %v4542
        %v4767 = vmul.f32 %v2582, %v4543
        %v4768 = vmul.f32 %v4609, %v4544
        %v4769 = vmul.f32 %v4611, %v4545
        %v4770 = vmul.f32 %v4613, %v4546
        %v4771 = vmul.f32 %v4615, %v4547
        %v4772 = vmul.f32 %v4617, %v4548
        %v4773 = vmul.f32 %v4619, %v4549
        %v4774 = vmul.f32 %v4621, %v4550
        %v4775 = vmul.f32 %v4623, %v4551
        %v4776 = vmul.f32 %v4625, %v4552
        %v4777 = vmul.f32 %v4627, %v4553
        %v4778 = vmul.f32 %v4629, %v4554
        %v4779 = vmul.f32 %v4631, %v4555
        %v4780 = vmul.f32 %v4633, %v4556
        %v4781 = vmul.f32 %v4635, %v4557
        %v4782 = vmul.f32 %v4637, %v4558
        %v4783 = vmul.f32 %v4639, %v4559
        %v4784 = vmul.f32 %v4641, %v4560
        %v4785 = vmul.f32 %v4643, %v4561
        %v4786 = vmul.f32 %v4645, %v4562
        %v4787 = vmul.f32 %v4647, %v4563
        %v4788 = vmul.f32 %v4649, %v4564
        %v4789 = vmul.f32 %v4651, %v4565
        %v4790 = vmul.f32 %v4653, %v4566
        %v4791 = vmul.f32 %v4655, %v4567
        %v4792 = vmul.f32 %v4657, %v4568
        %v4793 = vmul.f32 %v4659, %v4569
        %v4794 = vmul.f32 %v4661, %v4570
        %v4795 = vmul.f32 %v4663, %v4571
        %v4796 = vmul.f32 %v4665, %v4572
        %v4797 = vmul.f32 %v4667, %v4573
        %v4798 = vmul.f32 %v4669, %v4574
        %v4799 = vmul.f32 %v4671, %v4575
        %v4800 = vsub.f32 %v4736, %v4768
        %v4801 = vsub.f32 %v4737, %v4769
        %v4802 = vsub.f32 %v4738, %v4770
        %v4803 = vsub.f32 %v4739, %v4771
        %v4804 = vsub.f32 %v4740, %v4772
        %v4805 = vsub.f32 %v4741, %v4773
        %v4806 = vsub.f32 %v4742, %v4774
        %v4807 = vsub.f32 %v4743, %v4775
        %v4808 = vsub.f32 %v4744, %v4776
        %v4809 = vsub.f32 %v4745, %v4777
        %v4810 = vsub.f32 %v4746, %v4778
        %v4811 = vsub.f32 %v4747, %v4779
        %v4812 = vsub.f32 %v4748, %v4780
        %v4813 = vsub.f32 %v4749, %v4781
        %v4814 = vsub.f32 %v4750, %v4782
        %v4815 = vsub.f32 %v4751, %v4783
        %v4816 = vsub.f32 %v4752, %v4784
        %v4817 = vsub.f32 %v4753, %v4785
        %v4818 = vsub.f32 %v4754, %v4786
        %v4819 = vsub.f32 %v4755, %v4787
        %v4820 = vsub.f32 %v4756, %v4788
        %v4821 = vsub.f32 %v4757, %v4789
        %v4822 = vsub.f32 %v4758, %v4790
        %v4823 = vsub.f32 %v4759, %v4791
        %v4824 = vsub.f32 %v4760, %v4792
        %v4825 = vsub.f32 %v4761, %v4793
        %v4826 = vsub.f32 %v4762, %v4794
        %v4827 = vsub.f32 %v4763, %v4795
        %v4828 = vsub.f32 %v4764, %v4796
        %v4829 = vsub.f32 %v4765, %v4797
        %v4830 = vsub.f32 %v4766, %v4798
        %v4831 = vsub.f32 %v4767, %v4799
        %v4832 = vmul.f32 %v4673, %v4576
        %v4833 = vmul.f32 %v4675, %v4577
        %v4834 = vmul.f32 %v4677, %v4578
        %v4835 = vmul.f32 %v4679, %v4579
        %v4836 = vmul.f32 %v4681, %v4580
        %v4837 = vmul.f32 %v4683, %v4581
        %v4838 = vmul.f32 %v4685, %v4582
        %v4839 = vmul.f32 %v4687, %v4583
        %v4840 = vmul.f32 %v4689, %v4584
        %v4841 = vmul.f32 %v4691, %v4585
        %v4842 = vmul.f32 %v4693, %v4586
        %v4843 = vmul.f32 %v4695, %v4587
        %v4844 = vmul.f32 %v4697, %v4588
        %v4845 = vmul.f32 %v4699, %v4589
        %v4846 = vmul.f32 %v4701, %v4590
        %v4847 = vmul.f32 %v4703, %v4591
        %v4848 = vmul.f32 %v4705, %v4592
        %v4849 = vmul.f32 %v4707, %v4593
        %v4850 = vmul.f32 %v4709, %v4594
        %v4851 = vmul.f32 %v4711, %v4595
        %v4852 = vmul.f32 %v4713, %v4596
        %v4853 = vmul.f32 %v4715, %v4597
        %v4854 = vmul.f32 %v4717, %v4598
        %v4855 = vmul.f32 %v4719, %v4599
        %v4856 = vmul.f32 %v4721, %v4600
        %v4857 = vmul.f32 %v4723, %v4601
        %v4858 = vmul.f32 %v4725, %v4602
        %v4859 = vmul.f32 %v4727, %v4603
        %v4860 = vmul.f32 %v4729, %v4604
        %v4861 = vmul.f32 %v4731, %v4605
        %v4862 = vmul.f32 %v4733, %v4606
        %v4863 = vmul.f32 %v4735, %v4607
        %v4864 = vadd.f32 %v4800, %v4832
        %v4865 = vadd.f32 %v4801, %v4833
        %v4866 = vadd.f32 %v4802, %v4834
        %v4867 = vadd.f32 %v4803, %v4835
        %v4868 = vadd.f32 %v4804, %v4836
        %v4869 = vadd.f32 %v4805, %v4837
        %v4870 = vadd.f32 %v4806, %v4838
        %v4871 = vadd.f32 %v4807, %v4839
        %v4872 = vadd.f32 %v4808, %v4840
        %v4873 = vadd.f32 %v4809, %v4841
        %v4874 = vadd.f32 %v4810, %v4842
        %v4875 = vadd.f32 %v4811, %v4843
        %v4876 = vadd.f32 %v4812, %v4844
        %v4877 = vadd.f32 %v4813, %v4845
        %v4878 = vadd.f32 %v4814, %v4846
        %v4879 = vadd.f32 %v4815, %v4847
        %v4880 = vadd.f32 %v4816, %v4848
        %v4881 = vadd.f32 %v4817, %v4849
        %v4882 = vadd.f32 %v4818, %v4850
        %v4883 = vadd.f32 %v4819, %v4851
        %v4884 = vadd.f32 %v4820, %v4852
        %v4885 = vadd.f32 %v4821, %v4853
        %v4886 = vadd.f32 %v4822, %v4854
        %v4887 = vadd.f32 %v4823, %v4855
        %v4888 = vadd.f32 %v4824, %v4856
        %v4889 = vadd.f32 %v4825, %v4857
        %v4890 = vadd.f32 %v4826, %v4858
        %v4891 = vadd.f32 %v4827, %v4859
        %v4892 = vadd.f32 %v4828, %v4860
        %v4893 = vadd.f32 %v4829, %v4861
        %v4894 = vadd.f32 %v4830, %v4862
        %v4895 = vadd.f32 %v4831, %v4863
        %v4896 = vpack.c.bf16 %v4865, %v4864
        %v4897 = vpack.c.bf16 %v4867, %v4866
        %v4898 = vpack.c.bf16 %v4869, %v4868
        %v4899 = vpack.c.bf16 %v4871, %v4870
        %v4900 = vpack.c.bf16 %v4873, %v4872
        %v4901 = vpack.c.bf16 %v4875, %v4874
        %v4902 = vpack.c.bf16 %v4877, %v4876
        %v4903 = vpack.c.bf16 %v4879, %v4878
        %v4904 = vpack.c.bf16 %v4881, %v4880
        %v4905 = vpack.c.bf16 %v4883, %v4882
        %v4906 = vpack.c.bf16 %v4885, %v4884
        %v4907 = vpack.c.bf16 %v4887, %v4886
        %v4908 = vpack.c.bf16 %v4889, %v4888
        %v4909 = vpack.c.bf16 %v4891, %v4890
        %v4910 = vpack.c.bf16 %v4893, %v4892
        %v4911 = vpack.c.bf16 %v4895, %v4894
        %v4928 = vunpack.c.l.b16 %v4896
        %v4929 = vunpack.c.h.b16 %v4896
        %v4930 = vunpack.c.l.b16 %v4897
        %v4931 = vunpack.c.h.b16 %v4897
        %v4932 = vunpack.c.l.b16 %v4898
        %v4933 = vunpack.c.h.b16 %v4898
        %v4934 = vunpack.c.l.b16 %v4899
        %v4935 = vunpack.c.h.b16 %v4899
        %v4936 = vunpack.c.l.b16 %v4900
        %v4937 = vunpack.c.h.b16 %v4900
        %v4938 = vunpack.c.l.b16 %v4901
        %v4939 = vunpack.c.h.b16 %v4901
        %v4940 = vunpack.c.l.b16 %v4902
        %v4941 = vunpack.c.h.b16 %v4902
        %v4942 = vunpack.c.l.b16 %v4903
        %v4943 = vunpack.c.h.b16 %v4903
        %v4944 = vunpack.c.l.b16 %v4904
        %v4945 = vunpack.c.h.b16 %v4904
        %v4946 = vunpack.c.l.b16 %v4905
        %v4947 = vunpack.c.h.b16 %v4905
        %v4948 = vunpack.c.l.b16 %v4906
        %v4949 = vunpack.c.h.b16 %v4906
        %v4950 = vunpack.c.l.b16 %v4907
        %v4951 = vunpack.c.h.b16 %v4907
        %v4952 = vunpack.c.l.b16 %v4908
        %v4953 = vunpack.c.h.b16 %v4908
        %v4954 = vunpack.c.l.b16 %v4909
        %v4955 = vunpack.c.h.b16 %v4909
        %v4956 = vunpack.c.l.b16 %v4910
        %v4957 = vunpack.c.h.b16 %v4910
        %v4958 = vunpack.c.l.b16 %v4911
        %v4959 = vunpack.c.h.b16 %v4911
        %v4960 = vpack.c.b16 %v4928, %v4928
        %v4961 = vpack.c.b16 %v4929, %v4929
        %v4962 = vpack.c.b16 %v4930, %v4930
        %v4963 = vpack.c.b16 %v4931, %v4931
        %v4964 = vpack.c.b16 %v4932, %v4932
        %v4965 = vpack.c.b16 %v4933, %v4933
        %v4966 = vpack.c.b16 %v4934, %v4934
        %v4967 = vpack.c.b16 %v4935, %v4935
        %v4968 = vpack.c.b16 %v4936, %v4936
        %v4969 = vpack.c.b16 %v4937, %v4937
        %v4970 = vpack.c.b16 %v4938, %v4938
        %v4971 = vpack.c.b16 %v4939, %v4939
        %v4972 = vpack.c.b16 %v4940, %v4940
        %v4973 = vpack.c.b16 %v4941, %v4941
        %v4974 = vpack.c.b16 %v4942, %v4942
        %v4975 = vpack.c.b16 %v4943, %v4943
        %v4976 = vpack.c.b16 %v4944, %v4944
        %v4977 = vpack.c.b16 %v4945, %v4945
        %v4978 = vpack.c.b16 %v4946, %v4946
        %v4979 = vpack.c.b16 %v4947, %v4947
        %v4980 = vpack.c.b16 %v4948, %v4948
        %v4981 = vpack.c.b16 %v4949, %v4949
        %v4982 = vpack.c.b16 %v4950, %v4950
        %v4983 = vpack.c.b16 %v4951, %v4951
        %v4984 = vpack.c.b16 %v4952, %v4952
        %v4985 = vpack.c.b16 %v4953, %v4953
        %v4986 = vpack.c.b16 %v4954, %v4954
        %v4987 = vpack.c.b16 %v4955, %v4955
        %v4988 = vpack.c.b16 %v4956, %v4956
        %v4989 = vpack.c.b16 %v4957, %v4957
        %v4990 = vpack.c.b16 %v4958, %v4958
        %v4991 = vpack.c.b16 %v4959, %v4959
        %5024 = vst [vmem:[%s555] sm:$0xf] %v4960
        %5025 = vst [vmem:[%s555 + $0x4] sm:$0xf] %v4961
        %5026 = vst [vmem:[%s555 + $0x8] sm:$0xf] %v4962
        %5027 = vst [vmem:[%s555 + $0xc] sm:$0xf] %v4963
        %5028 = vst [vmem:[%s555 + $0x10] sm:$0xf] %v4964
        %5029 = vst [vmem:[%s555 + $0x14] sm:$0xf] %v4965
        %5030 = vst [vmem:[%s555 + $0x18] sm:$0xf] %v4966
        %5031 = vst [vmem:[%s555 + $0x1c] sm:$0xf] %v4967
        %5032 = vst [vmem:[%s555 + $0x20] sm:$0xf] %v4968
        %5033 = vst [vmem:[%s555 + $0x24] sm:$0xf] %v4969
        %5034 = vst [vmem:[%s555 + $0x28] sm:$0xf] %v4970
        %5035 = vst [vmem:[%s555 + $0x2c] sm:$0xf] %v4971
        %5036 = vst [vmem:[%s555 + $0x30] sm:$0xf] %v4972
        %5037 = vst [vmem:[%s555 + $0x34] sm:$0xf] %v4973
        %5038 = vst [vmem:[%s555 + $0x38] sm:$0xf] %v4974
        %5039 = vst [vmem:[%s555 + $0x3c] sm:$0xf] %v4975
        %5040 = vst [vmem:[%s555 + $0x40] sm:$0xf] %v4976
        %5041 = vst [vmem:[%s555 + $0x44] sm:$0xf] %v4977
        %5042 = vst [vmem:[%s555 + $0x48] sm:$0xf] %v4978
        %5043 = vst [vmem:[%s555 + $0x4c] sm:$0xf] %v4979
        %5044 = vst [vmem:[%s555 + $0x50] sm:$0xf] %v4980
        %5045 = vst [vmem:[%s555 + $0x54] sm:$0xf] %v4981
        %5046 = vst [vmem:[%s555 + $0x58] sm:$0xf] %v4982
        %5047 = vst [vmem:[%s555 + $0x5c] sm:$0xf] %v4983
        %5048 = vst [vmem:[%s555 + $0x60] sm:$0xf] %v4984
        %5049 = vst [vmem:[%s555 + $0x64] sm:$0xf] %v4985
        %5050 = vst [vmem:[%s555 + $0x68] sm:$0xf] %v4986
        %5051 = vst [vmem:[%s555 + $0x6c] sm:$0xf] %v4987
        %5052 = vst [vmem:[%s555 + $0x70] sm:$0xf] %v4988
        %5053 = vst [vmem:[%s555 + $0x74] sm:$0xf] %v4989
        %5054 = vst [vmem:[%s555 + $0x78] sm:$0xf] %v4990
        %5055 = vst [vmem:[%s555 + $0x7c] sm:$0xf] %v4991
        %5056 = vrot.lane.b32.xlu0 %v2430, 127
        %v5057 = vpop.permute.xlu0 %5056
        %5058 = vrot.lane.b32.xlu0 %v2434, 127
        %v5059 = vpop.permute.xlu0 %5058
        %5060 = vrot.lane.b32.xlu0 %v2440, 127
        %v5061 = vpop.permute.xlu0 %5060
        %5062 = vrot.lane.b32.xlu0 %v2444, 127
        %v5063 = vpop.permute.xlu0 %5062
        %5064 = vrot.lane.b32.xlu0 %v2450, 127
        %v5065 = vpop.permute.xlu0 %5064
        %5066 = vrot.lane.b32.xlu0 %v2454, 127
        %v5067 = vpop.permute.xlu0 %5066
        %5068 = vrot.lane.b32.xlu0 %v2460, 127
        %v5069 = vpop.permute.xlu0 %5068
        %5070 = vrot.lane.b32.xlu0 %v2464, 127
        %v5071 = vpop.permute.xlu0 %5070
        %5072 = vrot.lane.b32.xlu0 %v2470, 127
        %v5073 = vpop.permute.xlu0 %5072
        %5074 = vrot.lane.b32.xlu0 %v2474, 127
        %v5075 = vpop.permute.xlu0 %5074
        %5076 = vrot.lane.b32.xlu0 %v2480, 127
        %v5077 = vpop.permute.xlu0 %5076
        %5078 = vrot.lane.b32.xlu0 %v2484, 127
        %v5079 = vpop.permute.xlu0 %5078
        %5080 = vrot.lane.b32.xlu0 %v2490, 127
        %v5081 = vpop.permute.xlu0 %5080
        %5082 = vrot.lane.b32.xlu0 %v2494, 127
        %v5083 = vpop.permute.xlu0 %5082
        %5084 = vrot.lane.b32.xlu0 %v2500, 127
        %v5085 = vpop.permute.xlu0 %5084
        %5086 = vrot.lane.b32.xlu0 %v2504, 127
        %v5087 = vpop.permute.xlu0 %5086
        %5088 = vrot.lane.b32.xlu0 %v2510, 127
        %v5089 = vpop.permute.xlu0 %5088
        %5090 = vrot.lane.b32.xlu0 %v2514, 127
        %v5091 = vpop.permute.xlu0 %5090
        %5092 = vrot.lane.b32.xlu0 %v2520, 127
        %v5093 = vpop.permute.xlu0 %5092
        %5094 = vrot.lane.b32.xlu0 %v2524, 127
        %v5095 = vpop.permute.xlu0 %5094
        %5096 = vrot.lane.b32.xlu0 %v2530, 127
        %v5097 = vpop.permute.xlu0 %5096
        %5098 = vrot.lane.b32.xlu0 %v2534, 127
        %v5099 = vpop.permute.xlu0 %5098
        %5100 = vrot.lane.b32.xlu0 %v2540, 127
        %v5101 = vpop.permute.xlu0 %5100
        %5102 = vrot.lane.b32.xlu0 %v2544, 127
        %v5103 = vpop.permute.xlu0 %5102
        %5104 = vrot.lane.b32.xlu0 %v2550, 127
        %v5105 = vpop.permute.xlu0 %5104
        %5106 = vrot.lane.b32.xlu0 %v2554, 127
        %v5107 = vpop.permute.xlu0 %5106
        %5108 = vrot.lane.b32.xlu0 %v2560, 127
        %v5109 = vpop.permute.xlu0 %5108
        %5110 = vrot.lane.b32.xlu0 %v2564, 127
        %v5111 = vpop.permute.xlu0 %5110
        %5112 = vrot.lane.b32.xlu0 %v2570, 127
        %v5113 = vpop.permute.xlu0 %5112
        %5114 = vrot.lane.b32.xlu0 %v2574, 127
        %v5115 = vpop.permute.xlu0 %5114
        %5116 = vrot.lane.b32.xlu0 %v2580, 127
        %v5117 = vpop.permute.xlu0 %5116
        %5118 = vrot.lane.b32.xlu0 %v2584, 127
        %v5119 = vpop.permute.xlu0 %5118
        %5120 = vrot.lane.b32.xlu0 %v2430, 1
        %v5121 = vpop.permute.xlu0 %5120
        %5122 = vrot.lane.b32.xlu0 %v2434, 1
        %v5123 = vpop.permute.xlu0 %5122
        %5124 = vrot.lane.b32.xlu0 %v2440, 1
        %v5125 = vpop.permute.xlu0 %5124
        %5126 = vrot.lane.b32.xlu0 %v2444, 1
        %v5127 = vpop.permute.xlu0 %5126
        %5128 = vrot.lane.b32.xlu0 %v2450, 1
        %v5129 = vpop.permute.xlu0 %5128
        %5130 = vrot.lane.b32.xlu0 %v2454, 1
        %v5131 = vpop.permute.xlu0 %5130
        %5132 = vrot.lane.b32.xlu0 %v2460, 1
        %v5133 = vpop.permute.xlu0 %5132
        %5134 = vrot.lane.b32.xlu0 %v2464, 1
        %v5135 = vpop.permute.xlu0 %5134
        %5136 = vrot.lane.b32.xlu0 %v2470, 1
        %v5137 = vpop.permute.xlu0 %5136
        %5138 = vrot.lane.b32.xlu0 %v2474, 1
        %v5139 = vpop.permute.xlu0 %5138
        %5140 = vrot.lane.b32.xlu0 %v2480, 1
        %v5141 = vpop.permute.xlu0 %5140
        %5142 = vrot.lane.b32.xlu0 %v2484, 1
        %v5143 = vpop.permute.xlu0 %5142
        %5144 = vrot.lane.b32.xlu0 %v2490, 1
        %v5145 = vpop.permute.xlu0 %5144
        %5146 = vrot.lane.b32.xlu0 %v2494, 1
        %v5147 = vpop.permute.xlu0 %5146
        %5148 = vrot.lane.b32.xlu0 %v2500, 1
        %v5149 = vpop.permute.xlu0 %5148
        %5150 = vrot.lane.b32.xlu0 %v2504, 1
        %v5151 = vpop.permute.xlu0 %5150
        %5152 = vrot.lane.b32.xlu0 %v2510, 1
        %v5153 = vpop.permute.xlu0 %5152
        %5154 = vrot.lane.b32.xlu0 %v2514, 1
        %v5155 = vpop.permute.xlu0 %5154
        %5156 = vrot.lane.b32.xlu0 %v2520, 1
        %v5157 = vpop.permute.xlu0 %5156
        %5158 = vrot.lane.b32.xlu0 %v2524, 1
        %v5159 = vpop.permute.xlu0 %5158
        %5160 = vrot.lane.b32.xlu0 %v2530, 1
        %v5161 = vpop.permute.xlu0 %5160
        %5162 = vrot.lane.b32.xlu0 %v2534, 1
        %v5163 = vpop.permute.xlu0 %5162
        %5164 = vrot.lane.b32.xlu0 %v2540, 1
        %v5165 = vpop.permute.xlu0 %5164
        %5166 = vrot.lane.b32.xlu0 %v2544, 1
        %v5167 = vpop.permute.xlu0 %5166
        %5168 = vrot.lane.b32.xlu0 %v2550, 1
        %v5169 = vpop.permute.xlu0 %5168
        %5170 = vrot.lane.b32.xlu0 %v2554, 1
        %v5171 = vpop.permute.xlu0 %5170
        %5172 = vrot.lane.b32.xlu0 %v2560, 1
        %v5173 = vpop.permute.xlu0 %5172
        %5174 = vrot.lane.b32.xlu0 %v2564, 1
        %v5175 = vpop.permute.xlu0 %5174
        %5176 = vrot.lane.b32.xlu0 %v2570, 1
        %v5177 = vpop.permute.xlu0 %5176
        %5178 = vrot.lane.b32.xlu0 %v2574, 1
        %v5179 = vpop.permute.xlu0 %5178
        %5180 = vrot.lane.b32.xlu0 %v2580, 1
        %v5181 = vpop.permute.xlu0 %5180
        %5182 = vrot.lane.b32.xlu0 %v2584, 1
        %v5183 = vpop.permute.xlu0 %5182
        %v5184 = vmul.f32 %v2430, %v4512
        %v5185 = vmul.f32 %v2434, %v4513
        %v5186 = vmul.f32 %v2440, %v4514
        %v5187 = vmul.f32 %v2444, %v4515
        %v5188 = vmul.f32 %v2450, %v4516
        %v5189 = vmul.f32 %v2454, %v4517
        %v5190 = vmul.f32 %v2460, %v4518
        %v5191 = vmul.f32 %v2464, %v4519
        %v5192 = vmul.f32 %v2470, %v4520
        %v5193 = vmul.f32 %v2474, %v4521
        %v5194 = vmul.f32 %v2480, %v4522
        %v5195 = vmul.f32 %v2484, %v4523
        %v5196 = vmul.f32 %v2490, %v4524
        %v5197 = vmul.f32 %v2494, %v4525
        %v5198 = vmul.f32 %v2500, %v4526
        %v5199 = vmul.f32 %v2504, %v4527
        %v5200 = vmul.f32 %v2510, %v4528
        %v5201 = vmul.f32 %v2514, %v4529
        %v5202 = vmul.f32 %v2520, %v4530
        %v5203 = vmul.f32 %v2524, %v4531
        %v5204 = vmul.f32 %v2530, %v4532
        %v5205 = vmul.f32 %v2534, %v4533
        %v5206 = vmul.f32 %v2540, %v4534
        %v5207 = vmul.f32 %v2544, %v4535
        %v5208 = vmul.f32 %v2550, %v4536
        %v5209 = vmul.f32 %v2554, %v4537
        %v5210 = vmul.f32 %v2560, %v4538
        %v5211 = vmul.f32 %v2564, %v4539
        %v5212 = vmul.f32 %v2570, %v4540
        %v5213 = vmul.f32 %v2574, %v4541
        %v5214 = vmul.f32 %v2580, %v4542
        %v5215 = vmul.f32 %v2584, %v4543
        %v5216 = vmul.f32 %v5057, %v4544
        %v5217 = vmul.f32 %v5059, %v4545
        %v5218 = vmul.f32 %v5061, %v4546
        %v5219 = vmul.f32 %v5063, %v4547
        %v5220 = vmul.f32 %v5065, %v4548
        %v5221 = vmul.f32 %v5067, %v4549
        %v5222 = vmul.f32 %v5069, %v4550
        %v5223 = vmul.f32 %v5071, %v4551
        %v5224 = vmul.f32 %v5073, %v4552
        %v5225 = vmul.f32 %v5075, %v4553
        %v5226 = vmul.f32 %v5077, %v4554
        %v5227 = vmul.f32 %v5079, %v4555
        %v5228 = vmul.f32 %v5081, %v4556
        %v5229 = vmul.f32 %v5083, %v4557
        %v5230 = vmul.f32 %v5085, %v4558
        %v5231 = vmul.f32 %v5087, %v4559
        %v5232 = vmul.f32 %v5089, %v4560
        %v5233 = vmul.f32 %v5091, %v4561
        %v5234 = vmul.f32 %v5093, %v4562
        %v5235 = vmul.f32 %v5095, %v4563
        %v5236 = vmul.f32 %v5097, %v4564
        %v5237 = vmul.f32 %v5099, %v4565
        %v5238 = vmul.f32 %v5101, %v4566
        %v5239 = vmul.f32 %v5103, %v4567
        %v5240 = vmul.f32 %v5105, %v4568
        %v5241 = vmul.f32 %v5107, %v4569
        %v5242 = vmul.f32 %v5109, %v4570
        %v5243 = vmul.f32 %v5111, %v4571
        %v5244 = vmul.f32 %v5113, %v4572
        %v5245 = vmul.f32 %v5115, %v4573
        %v5246 = vmul.f32 %v5117, %v4574
        %v5247 = vmul.f32 %v5119, %v4575
        %v5248 = vsub.f32 %v5184, %v5216
        %v5249 = vsub.f32 %v5185, %v5217
        %v5250 = vsub.f32 %v5186, %v5218
        %v5251 = vsub.f32 %v5187, %v5219
        %v5252 = vsub.f32 %v5188, %v5220
        %v5253 = vsub.f32 %v5189, %v5221
        %v5254 = vsub.f32 %v5190, %v5222
        %v5255 = vsub.f32 %v5191, %v5223
        %v5256 = vsub.f32 %v5192, %v5224
        %v5257 = vsub.f32 %v5193, %v5225
        %v5258 = vsub.f32 %v5194, %v5226
        %v5259 = vsub.f32 %v5195, %v5227
        %v5260 = vsub.f32 %v5196, %v5228
        %v5261 = vsub.f32 %v5197, %v5229
        %v5262 = vsub.f32 %v5198, %v5230
        %v5263 = vsub.f32 %v5199, %v5231
        %v5264 = vsub.f32 %v5200, %v5232
        %v5265 = vsub.f32 %v5201, %v5233
        %v5266 = vsub.f32 %v5202, %v5234
        %v5267 = vsub.f32 %v5203, %v5235
        %v5268 = vsub.f32 %v5204, %v5236
        %v5269 = vsub.f32 %v5205, %v5237
        %v5270 = vsub.f32 %v5206, %v5238
        %v5271 = vsub.f32 %v5207, %v5239
        %v5272 = vsub.f32 %v5208, %v5240
        %v5273 = vsub.f32 %v5209, %v5241
        %v5274 = vsub.f32 %v5210, %v5242
        %v5275 = vsub.f32 %v5211, %v5243
        %v5276 = vsub.f32 %v5212, %v5244
        %v5277 = vsub.f32 %v5213, %v5245
        %v5278 = vsub.f32 %v5214, %v5246
        %v5279 = vsub.f32 %v5215, %v5247
        %v5280 = vmul.f32 %v5121, %v4576
        %v5281 = vmul.f32 %v5123, %v4577
        %v5282 = vmul.f32 %v5125, %v4578
        %v5283 = vmul.f32 %v5127, %v4579
        %v5284 = vmul.f32 %v5129, %v4580
        %v5285 = vmul.f32 %v5131, %v4581
        %v5286 = vmul.f32 %v5133, %v4582
        %v5287 = vmul.f32 %v5135, %v4583
        %v5288 = vmul.f32 %v5137, %v4584
        %v5289 = vmul.f32 %v5139, %v4585
        %v5290 = vmul.f32 %v5141, %v4586
        %v5291 = vmul.f32 %v5143, %v4587
        %v5292 = vmul.f32 %v5145, %v4588
        %v5293 = vmul.f32 %v5147, %v4589
        %v5294 = vmul.f32 %v5149, %v4590
        %v5295 = vmul.f32 %v5151, %v4591
        %v5296 = vmul.f32 %v5153, %v4592
        %v5297 = vmul.f32 %v5155, %v4593
        %v5298 = vmul.f32 %v5157, %v4594
        %v5299 = vmul.f32 %v5159, %v4595
        %v5300 = vmul.f32 %v5161, %v4596
        %v5301 = vmul.f32 %v5163, %v4597
        %v5302 = vmul.f32 %v5165, %v4598
        %v5303 = vmul.f32 %v5167, %v4599
        %v5304 = vmul.f32 %v5169, %v4600
        %v5305 = vmul.f32 %v5171, %v4601
        %v5306 = vmul.f32 %v5173, %v4602
        %v5307 = vmul.f32 %v5175, %v4603
        %v5308 = vmul.f32 %v5177, %v4604
        %v5309 = vmul.f32 %v5179, %v4605
        %v5310 = vmul.f32 %v5181, %v4606
        %v5311 = vmul.f32 %v5183, %v4607
        %v5312 = vadd.f32 %v5248, %v5280
        %v5313 = vadd.f32 %v5249, %v5281
        %v5314 = vadd.f32 %v5250, %v5282
        %v5315 = vadd.f32 %v5251, %v5283
        %v5316 = vadd.f32 %v5252, %v5284
        %v5317 = vadd.f32 %v5253, %v5285
        %v5318 = vadd.f32 %v5254, %v5286
        %v5319 = vadd.f32 %v5255, %v5287
        %v5320 = vadd.f32 %v5256, %v5288
        %v5321 = vadd.f32 %v5257, %v5289
        %v5322 = vadd.f32 %v5258, %v5290
        %v5323 = vadd.f32 %v5259, %v5291
        %v5324 = vadd.f32 %v5260, %v5292
        %v5325 = vadd.f32 %v5261, %v5293
        %v5326 = vadd.f32 %v5262, %v5294
        %v5327 = vadd.f32 %v5263, %v5295
        %v5328 = vadd.f32 %v5264, %v5296
        %v5329 = vadd.f32 %v5265, %v5297
        %v5330 = vadd.f32 %v5266, %v5298
        %v5331 = vadd.f32 %v5267, %v5299
        %v5332 = vadd.f32 %v5268, %v5300
        %v5333 = vadd.f32 %v5269, %v5301
        %v5334 = vadd.f32 %v5270, %v5302
        %v5335 = vadd.f32 %v5271, %v5303
        %v5336 = vadd.f32 %v5272, %v5304
        %v5337 = vadd.f32 %v5273, %v5305
        %v5338 = vadd.f32 %v5274, %v5306
        %v5339 = vadd.f32 %v5275, %v5307
        %v5340 = vadd.f32 %v5276, %v5308
        %v5341 = vadd.f32 %v5277, %v5309
        %v5342 = vadd.f32 %v5278, %v5310
        %v5343 = vadd.f32 %v5279, %v5311
        %v5344 = vpack.c.bf16 %v5313, %v5312
        %v5345 = vpack.c.bf16 %v5315, %v5314
        %v5346 = vpack.c.bf16 %v5317, %v5316
        %v5347 = vpack.c.bf16 %v5319, %v5318
        %v5348 = vpack.c.bf16 %v5321, %v5320
        %v5349 = vpack.c.bf16 %v5323, %v5322
        %v5350 = vpack.c.bf16 %v5325, %v5324
        %v5351 = vpack.c.bf16 %v5327, %v5326
        %v5352 = vpack.c.bf16 %v5329, %v5328
        %v5353 = vpack.c.bf16 %v5331, %v5330
        %v5354 = vpack.c.bf16 %v5333, %v5332
        %v5355 = vpack.c.bf16 %v5335, %v5334
        %v5356 = vpack.c.bf16 %v5337, %v5336
        %v5357 = vpack.c.bf16 %v5339, %v5338
        %v5358 = vpack.c.bf16 %v5341, %v5340
        %v5359 = vpack.c.bf16 %v5343, %v5342
        %v5376 = vunpack.c.l.b16 %v5344
        %v5377 = vunpack.c.h.b16 %v5344
        %v5378 = vunpack.c.l.b16 %v5345
        %v5379 = vunpack.c.h.b16 %v5345
        %v5380 = vunpack.c.l.b16 %v5346
        %v5381 = vunpack.c.h.b16 %v5346
        %v5382 = vunpack.c.l.b16 %v5347
        %v5383 = vunpack.c.h.b16 %v5347
        %v5384 = vunpack.c.l.b16 %v5348
        %v5385 = vunpack.c.h.b16 %v5348
        %v5386 = vunpack.c.l.b16 %v5349
        %v5387 = vunpack.c.h.b16 %v5349
        %v5388 = vunpack.c.l.b16 %v5350
        %v5389 = vunpack.c.h.b16 %v5350
        %v5390 = vunpack.c.l.b16 %v5351
        %v5391 = vunpack.c.h.b16 %v5351
        %v5392 = vunpack.c.l.b16 %v5352
        %v5393 = vunpack.c.h.b16 %v5352
        %v5394 = vunpack.c.l.b16 %v5353
        %v5395 = vunpack.c.h.b16 %v5353
        %v5396 = vunpack.c.l.b16 %v5354
        %v5397 = vunpack.c.h.b16 %v5354
        %v5398 = vunpack.c.l.b16 %v5355
        %v5399 = vunpack.c.h.b16 %v5355
        %v5400 = vunpack.c.l.b16 %v5356
        %v5401 = vunpack.c.h.b16 %v5356
        %v5402 = vunpack.c.l.b16 %v5357
        %v5403 = vunpack.c.h.b16 %v5357
        %v5404 = vunpack.c.l.b16 %v5358
        %v5405 = vunpack.c.h.b16 %v5358
        %v5406 = vunpack.c.l.b16 %v5359
        %v5407 = vunpack.c.h.b16 %v5359
        %v5408 = vpack.c.b16 %v5376, %v5376
        %v5409 = vpack.c.b16 %v5377, %v5377
        %v5410 = vpack.c.b16 %v5378, %v5378
        %v5411 = vpack.c.b16 %v5379, %v5379
        %v5412 = vpack.c.b16 %v5380, %v5380
        %v5413 = vpack.c.b16 %v5381, %v5381
        %v5414 = vpack.c.b16 %v5382, %v5382
        %v5415 = vpack.c.b16 %v5383, %v5383
        %v5416 = vpack.c.b16 %v5384, %v5384
        %v5417 = vpack.c.b16 %v5385, %v5385
        %v5418 = vpack.c.b16 %v5386, %v5386
        %v5419 = vpack.c.b16 %v5387, %v5387
        %v5420 = vpack.c.b16 %v5388, %v5388
        %v5421 = vpack.c.b16 %v5389, %v5389
        %v5422 = vpack.c.b16 %v5390, %v5390
        %v5423 = vpack.c.b16 %v5391, %v5391
        %v5424 = vpack.c.b16 %v5392, %v5392
        %v5425 = vpack.c.b16 %v5393, %v5393
        %v5426 = vpack.c.b16 %v5394, %v5394
        %v5427 = vpack.c.b16 %v5395, %v5395
        %v5428 = vpack.c.b16 %v5396, %v5396
        %v5429 = vpack.c.b16 %v5397, %v5397
        %v5430 = vpack.c.b16 %v5398, %v5398
        %v5431 = vpack.c.b16 %v5399, %v5399
        %v5432 = vpack.c.b16 %v5400, %v5400
        %v5433 = vpack.c.b16 %v5401, %v5401
        %v5434 = vpack.c.b16 %v5402, %v5402
        %v5435 = vpack.c.b16 %v5403, %v5403
        %v5436 = vpack.c.b16 %v5404, %v5404
        %v5437 = vpack.c.b16 %v5405, %v5405
        %v5438 = vpack.c.b16 %v5406, %v5406
        %v5439 = vpack.c.b16 %v5407, %v5407
        %s5472 = scalar_lea.vmem %s555, 128 [#allocation16]
        %5473 = vst [vmem:[%s5472] sm:$0xf] %v5408
        %5474 = vst [vmem:[%s5472 + $0x4] sm:$0xf] %v5409
        %5475 = vst [vmem:[%s5472 + $0x8] sm:$0xf] %v5410
        %5476 = vst [vmem:[%s5472 + $0xc] sm:$0xf] %v5411
        %5477 = vst [vmem:[%s5472 + $0x10] sm:$0xf] %v5412
        %5478 = vst [vmem:[%s5472 + $0x14] sm:$0xf] %v5413
        %5479 = vst [vmem:[%s5472 + $0x18] sm:$0xf] %v5414
        %5480 = vst [vmem:[%s5472 + $0x1c] sm:$0xf] %v5415
        %5481 = vst [vmem:[%s5472 + $0x20] sm:$0xf] %v5416
        %5482 = vst [vmem:[%s5472 + $0x24] sm:$0xf] %v5417
        %5483 = vst [vmem:[%s5472 + $0x28] sm:$0xf] %v5418
        %5484 = vst [vmem:[%s5472 + $0x2c] sm:$0xf] %v5419
        %5485 = vst [vmem:[%s5472 + $0x30] sm:$0xf] %v5420
        %5486 = vst [vmem:[%s5472 + $0x34] sm:$0xf] %v5421
        %5487 = vst [vmem:[%s5472 + $0x38] sm:$0xf] %v5422
        %5488 = vst [vmem:[%s5472 + $0x3c] sm:$0xf] %v5423
        %5489 = vst [vmem:[%s5472 + $0x40] sm:$0xf] %v5424
        %5490 = vst [vmem:[%s5472 + $0x44] sm:$0xf] %v5425
        %5491 = vst [vmem:[%s5472 + $0x48] sm:$0xf] %v5426
        %5492 = vst [vmem:[%s5472 + $0x4c] sm:$0xf] %v5427
        %5493 = vst [vmem:[%s5472 + $0x50] sm:$0xf] %v5428
        %5494 = vst [vmem:[%s5472 + $0x54] sm:$0xf] %v5429
        %5495 = vst [vmem:[%s5472 + $0x58] sm:$0xf] %v5430
        %5496 = vst [vmem:[%s5472 + $0x5c] sm:$0xf] %v5431
        %5497 = vst [vmem:[%s5472 + $0x60] sm:$0xf] %v5432
        %5498 = vst [vmem:[%s5472 + $0x64] sm:$0xf] %v5433
        %5499 = vst [vmem:[%s5472 + $0x68] sm:$0xf] %v5434
        %5500 = vst [vmem:[%s5472 + $0x6c] sm:$0xf] %v5435
        %5501 = vst [vmem:[%s5472 + $0x70] sm:$0xf] %v5436
        %5502 = vst [vmem:[%s5472 + $0x74] sm:$0xf] %v5437
        %5503 = vst [vmem:[%s5472 + $0x78] sm:$0xf] %v5438
        %5504 = vst [vmem:[%s5472 + $0x7c] sm:$0xf] %v5439
        %5505 = vrot.lane.b32.xlu0 %v2814, 127
        %v5506 = vpop.permute.xlu0 %5505
        %5507 = vrot.lane.b32.xlu0 %v2818, 127
        %v5508 = vpop.permute.xlu0 %5507
        %5509 = vrot.lane.b32.xlu0 %v2824, 127
        %v5510 = vpop.permute.xlu0 %5509
        %5511 = vrot.lane.b32.xlu0 %v2828, 127
        %v5512 = vpop.permute.xlu0 %5511
        %5513 = vrot.lane.b32.xlu0 %v2834, 127
        %v5514 = vpop.permute.xlu0 %5513
        %5515 = vrot.lane.b32.xlu0 %v2838, 127
        %v5516 = vpop.permute.xlu0 %5515
        %5517 = vrot.lane.b32.xlu0 %v2844, 127
        %v5518 = vpop.permute.xlu0 %5517
        %5519 = vrot.lane.b32.xlu0 %v2848, 127
        %v5520 = vpop.permute.xlu0 %5519
        %5521 = vrot.lane.b32.xlu0 %v2854, 127
        %v5522 = vpop.permute.xlu0 %5521
        %5523 = vrot.lane.b32.xlu0 %v2858, 127
        %v5524 = vpop.permute.xlu0 %5523
        %5525 = vrot.lane.b32.xlu0 %v2864, 127
        %v5526 = vpop.permute.xlu0 %5525
        %5527 = vrot.lane.b32.xlu0 %v2868, 127
        %v5528 = vpop.permute.xlu0 %5527
        %5529 = vrot.lane.b32.xlu0 %v2874, 127
        %v5530 = vpop.permute.xlu0 %5529
        %5531 = vrot.lane.b32.xlu0 %v2878, 127
        %v5532 = vpop.permute.xlu0 %5531
        %5533 = vrot.lane.b32.xlu0 %v2884, 127
        %v5534 = vpop.permute.xlu0 %5533
        %5535 = vrot.lane.b32.xlu0 %v2888, 127
        %v5536 = vpop.permute.xlu0 %5535
        %5537 = vrot.lane.b32.xlu0 %v2894, 127
        %v5538 = vpop.permute.xlu0 %5537
        %5539 = vrot.lane.b32.xlu0 %v2898, 127
        %v5540 = vpop.permute.xlu0 %5539
        %5541 = vrot.lane.b32.xlu0 %v2904, 127
        %v5542 = vpop.permute.xlu0 %5541
        %5543 = vrot.lane.b32.xlu0 %v2908, 127
        %v5544 = vpop.permute.xlu0 %5543
        %5545 = vrot.lane.b32.xlu0 %v2914, 127
        %v5546 = vpop.permute.xlu0 %5545
        %5547 = vrot.lane.b32.xlu0 %v2918, 127
        %v5548 = vpop.permute.xlu0 %5547
        %5549 = vrot.lane.b32.xlu0 %v2924, 127
        %v5550 = vpop.permute.xlu0 %5549
        %5551 = vrot.lane.b32.xlu0 %v2928, 127
        %v5552 = vpop.permute.xlu0 %5551
        %5553 = vrot.lane.b32.xlu0 %v2934, 127
        %v5554 = vpop.permute.xlu0 %5553
        %5555 = vrot.lane.b32.xlu0 %v2938, 127
        %v5556 = vpop.permute.xlu0 %5555
        %5557 = vrot.lane.b32.xlu0 %v2944, 127
        %v5558 = vpop.permute.xlu0 %5557
        %5559 = vrot.lane.b32.xlu0 %v2948, 127
        %v5560 = vpop.permute.xlu0 %5559
        %5561 = vrot.lane.b32.xlu0 %v2954, 127
        %v5562 = vpop.permute.xlu0 %5561
        %5563 = vrot.lane.b32.xlu0 %v2958, 127
        %v5564 = vpop.permute.xlu0 %5563
        %5565 = vrot.lane.b32.xlu0 %v2964, 127
        %v5566 = vpop.permute.xlu0 %5565
        %5567 = vrot.lane.b32.xlu0 %v2968, 127
        %v5568 = vpop.permute.xlu0 %5567
        %5569 = vrot.lane.b32.xlu0 %v2814, 1
        %v5570 = vpop.permute.xlu0 %5569
        %5571 = vrot.lane.b32.xlu0 %v2818, 1
        %v5572 = vpop.permute.xlu0 %5571
        %5573 = vrot.lane.b32.xlu0 %v2824, 1
        %v5574 = vpop.permute.xlu0 %5573
        %5575 = vrot.lane.b32.xlu0 %v2828, 1
        %v5576 = vpop.permute.xlu0 %5575
        %5577 = vrot.lane.b32.xlu0 %v2834, 1
        %v5578 = vpop.permute.xlu0 %5577
        %5579 = vrot.lane.b32.xlu0 %v2838, 1
        %v5580 = vpop.permute.xlu0 %5579
        %5581 = vrot.lane.b32.xlu0 %v2844, 1
        %v5582 = vpop.permute.xlu0 %5581
        %5583 = vrot.lane.b32.xlu0 %v2848, 1
        %v5584 = vpop.permute.xlu0 %5583
        %5585 = vrot.lane.b32.xlu0 %v2854, 1
        %v5586 = vpop.permute.xlu0 %5585
        %5587 = vrot.lane.b32.xlu0 %v2858, 1
        %v5588 = vpop.permute.xlu0 %5587
        %5589 = vrot.lane.b32.xlu0 %v2864, 1
        %v5590 = vpop.permute.xlu0 %5589
        %5591 = vrot.lane.b32.xlu0 %v2868, 1
        %v5592 = vpop.permute.xlu0 %5591
        %5593 = vrot.lane.b32.xlu0 %v2874, 1
        %v5594 = vpop.permute.xlu0 %5593
        %5595 = vrot.lane.b32.xlu0 %v2878, 1
        %v5596 = vpop.permute.xlu0 %5595
        %5597 = vrot.lane.b32.xlu0 %v2884, 1
        %v5598 = vpop.permute.xlu0 %5597
        %5599 = vrot.lane.b32.xlu0 %v2888, 1
        %v5600 = vpop.permute.xlu0 %5599
        %5601 = vrot.lane.b32.xlu0 %v2894, 1
        %v5602 = vpop.permute.xlu0 %5601
        %5603 = vrot.lane.b32.xlu0 %v2898, 1
        %v5604 = vpop.permute.xlu0 %5603
        %5605 = vrot.lane.b32.xlu0 %v2904, 1
        %v5606 = vpop.permute.xlu0 %5605
        %5607 = vrot.lane.b32.xlu0 %v2908, 1
        %v5608 = vpop.permute.xlu0 %5607
        %5609 = vrot.lane.b32.xlu0 %v2914, 1
        %v5610 = vpop.permute.xlu0 %5609
        %5611 = vrot.lane.b32.xlu0 %v2918, 1
        %v5612 = vpop.permute.xlu0 %5611
        %5613 = vrot.lane.b32.xlu0 %v2924, 1
        %v5614 = vpop.permute.xlu0 %5613
        %5615 = vrot.lane.b32.xlu0 %v2928, 1
        %v5616 = vpop.permute.xlu0 %5615
        %5617 = vrot.lane.b32.xlu0 %v2934, 1
        %v5618 = vpop.permute.xlu0 %5617
        %5619 = vrot.lane.b32.xlu0 %v2938, 1
        %v5620 = vpop.permute.xlu0 %5619
        %5621 = vrot.lane.b32.xlu0 %v2944, 1
        %v5622 = vpop.permute.xlu0 %5621
        %5623 = vrot.lane.b32.xlu0 %v2948, 1
        %v5624 = vpop.permute.xlu0 %5623
        %5625 = vrot.lane.b32.xlu0 %v2954, 1
        %v5626 = vpop.permute.xlu0 %5625
        %5627 = vrot.lane.b32.xlu0 %v2958, 1
        %v5628 = vpop.permute.xlu0 %5627
        %5629 = vrot.lane.b32.xlu0 %v2964, 1
        %v5630 = vpop.permute.xlu0 %5629
        %5631 = vrot.lane.b32.xlu0 %v2968, 1
        %v5632 = vpop.permute.xlu0 %5631
        %v5633 = vmul.f32 %v2814, %v4512
        %v5634 = vmul.f32 %v2818, %v4513
        %v5635 = vmul.f32 %v2824, %v4514
        %v5636 = vmul.f32 %v2828, %v4515
        %v5637 = vmul.f32 %v2834, %v4516
        %v5638 = vmul.f32 %v2838, %v4517
        %v5639 = vmul.f32 %v2844, %v4518
        %v5640 = vmul.f32 %v2848, %v4519
        %v5641 = vmul.f32 %v2854, %v4520
        %v5642 = vmul.f32 %v2858, %v4521
        %v5643 = vmul.f32 %v2864, %v4522
        %v5644 = vmul.f32 %v2868, %v4523
        %v5645 = vmul.f32 %v2874, %v4524
        %v5646 = vmul.f32 %v2878, %v4525
        %v5647 = vmul.f32 %v2884, %v4526
        %v5648 = vmul.f32 %v2888, %v4527
        %v5649 = vmul.f32 %v2894, %v4528
        %v5650 = vmul.f32 %v2898, %v4529
        %v5651 = vmul.f32 %v2904, %v4530
        %v5652 = vmul.f32 %v2908, %v4531
        %v5653 = vmul.f32 %v2914, %v4532
        %v5654 = vmul.f32 %v2918, %v4533
        %v5655 = vmul.f32 %v2924, %v4534
        %v5656 = vmul.f32 %v2928, %v4535
        %v5657 = vmul.f32 %v2934, %v4536
        %v5658 = vmul.f32 %v2938, %v4537
        %v5659 = vmul.f32 %v2944, %v4538
        %v5660 = vmul.f32 %v2948, %v4539
        %v5661 = vmul.f32 %v2954, %v4540
        %v5662 = vmul.f32 %v2958, %v4541
        %v5663 = vmul.f32 %v2964, %v4542
        %v5664 = vmul.f32 %v2968, %v4543
        %v5665 = vmul.f32 %v5506, %v4544
        %v5666 = vmul.f32 %v5508, %v4545
        %v5667 = vmul.f32 %v5510, %v4546
        %v5668 = vmul.f32 %v5512, %v4547
        %v5669 = vmul.f32 %v5514, %v4548
        %v5670 = vmul.f32 %v5516, %v4549
        %v5671 = vmul.f32 %v5518, %v4550
        %v5672 = vmul.f32 %v5520, %v4551
        %v5673 = vmul.f32 %v5522, %v4552
        %v5674 = vmul.f32 %v5524, %v4553
        %v5675 = vmul.f32 %v5526, %v4554
        %v5676 = vmul.f32 %v5528, %v4555
        %v5677 = vmul.f32 %v5530, %v4556
        %v5678 = vmul.f32 %v5532, %v4557
        %v5679 = vmul.f32 %v5534, %v4558
        %v5680 = vmul.f32 %v5536, %v4559
        %v5681 = vmul.f32 %v5538, %v4560
        %v5682 = vmul.f32 %v5540, %v4561
        %v5683 = vmul.f32 %v5542, %v4562
        %v5684 = vmul.f32 %v5544, %v4563
        %v5685 = vmul.f32 %v5546, %v4564
        %v5686 = vmul.f32 %v5548, %v4565
        %v5687 = vmul.f32 %v5550, %v4566
        %v5688 = vmul.f32 %v5552, %v4567
        %v5689 = vmul.f32 %v5554, %v4568
        %v5690 = vmul.f32 %v5556, %v4569
        %v5691 = vmul.f32 %v5558, %v4570
        %v5692 = vmul.f32 %v5560, %v4571
        %v5693 = vmul.f32 %v5562, %v4572
        %v5694 = vmul.f32 %v5564, %v4573
        %v5695 = vmul.f32 %v5566, %v4574
        %v5696 = vmul.f32 %v5568, %v4575
        %v5697 = vsub.f32 %v5633, %v5665
        %v5698 = vsub.f32 %v5634, %v5666
        %v5699 = vsub.f32 %v5635, %v5667
        %v5700 = vsub.f32 %v5636, %v5668
        %v5701 = vsub.f32 %v5637, %v5669
        %v5702 = vsub.f32 %v5638, %v5670
        %v5703 = vsub.f32 %v5639, %v5671
        %v5704 = vsub.f32 %v5640, %v5672
        %v5705 = vsub.f32 %v5641, %v5673
        %v5706 = vsub.f32 %v5642, %v5674
        %v5707 = vsub.f32 %v5643, %v5675
        %v5708 = vsub.f32 %v5644, %v5676
        %v5709 = vsub.f32 %v5645, %v5677
        %v5710 = vsub.f32 %v5646, %v5678
        %v5711 = vsub.f32 %v5647, %v5679
        %v5712 = vsub.f32 %v5648, %v5680
        %v5713 = vsub.f32 %v5649, %v5681
        %v5714 = vsub.f32 %v5650, %v5682
        %v5715 = vsub.f32 %v5651, %v5683
        %v5716 = vsub.f32 %v5652, %v5684
        %v5717 = vsub.f32 %v5653, %v5685
        %v5718 = vsub.f32 %v5654, %v5686
        %v5719 = vsub.f32 %v5655, %v5687
        %v5720 = vsub.f32 %v5656, %v5688
        %v5721 = vsub.f32 %v5657, %v5689
        %v5722 = vsub.f32 %v5658, %v5690
        %v5723 = vsub.f32 %v5659, %v5691
        %v5724 = vsub.f32 %v5660, %v5692
        %v5725 = vsub.f32 %v5661, %v5693
        %v5726 = vsub.f32 %v5662, %v5694
        %v5727 = vsub.f32 %v5663, %v5695
        %v5728 = vsub.f32 %v5664, %v5696
        %v5729 = vmul.f32 %v5570, %v4576
        %v5730 = vmul.f32 %v5572, %v4577
        %v5731 = vmul.f32 %v5574, %v4578
        %v5732 = vmul.f32 %v5576, %v4579
        %v5733 = vmul.f32 %v5578, %v4580
        %v5734 = vmul.f32 %v5580, %v4581
        %v5735 = vmul.f32 %v5582, %v4582
        %v5736 = vmul.f32 %v5584, %v4583
        %v5737 = vmul.f32 %v5586, %v4584
        %v5738 = vmul.f32 %v5588, %v4585
        %v5739 = vmul.f32 %v5590, %v4586
        %v5740 = vmul.f32 %v5592, %v4587
        %v5741 = vmul.f32 %v5594, %v4588
        %v5742 = vmul.f32 %v5596, %v4589
        %v5743 = vmul.f32 %v5598, %v4590
        %v5744 = vmul.f32 %v5600, %v4591
        %v5745 = vmul.f32 %v5602, %v4592
        %v5746 = vmul.f32 %v5604, %v4593
        %v5747 = vmul.f32 %v5606, %v4594
        %v5748 = vmul.f32 %v5608, %v4595
        %v5749 = vmul.f32 %v5610, %v4596
        %v5750 = vmul.f32 %v5612, %v4597
        %v5751 = vmul.f32 %v5614, %v4598
        %v5752 = vmul.f32 %v5616, %v4599
        %v5753 = vmul.f32 %v5618, %v4600
        %v5754 = vmul.f32 %v5620, %v4601
        %v5755 = vmul.f32 %v5622, %v4602
        %v5756 = vmul.f32 %v5624, %v4603
        %v5757 = vmul.f32 %v5626, %v4604
        %v5758 = vmul.f32 %v5628, %v4605
        %v5759 = vmul.f32 %v5630, %v4606
        %v5760 = vmul.f32 %v5632, %v4607
        %v5761 = vadd.f32 %v5697, %v5729
        %v5762 = vadd.f32 %v5698, %v5730
        %v5763 = vadd.f32 %v5699, %v5731
        %v5764 = vadd.f32 %v5700, %v5732
        %v5765 = vadd.f32 %v5701, %v5733
        %v5766 = vadd.f32 %v5702, %v5734
        %v5767 = vadd.f32 %v5703, %v5735
        %v5768 = vadd.f32 %v5704, %v5736
        %v5769 = vadd.f32 %v5705, %v5737
        %v5770 = vadd.f32 %v5706, %v5738
        %v5771 = vadd.f32 %v5707, %v5739
        %v5772 = vadd.f32 %v5708, %v5740
        %v5773 = vadd.f32 %v5709, %v5741
        %v5774 = vadd.f32 %v5710, %v5742
        %v5775 = vadd.f32 %v5711, %v5743
        %v5776 = vadd.f32 %v5712, %v5744
        %v5777 = vadd.f32 %v5713, %v5745
        %v5778 = vadd.f32 %v5714, %v5746
        %v5779 = vadd.f32 %v5715, %v5747
        %v5780 = vadd.f32 %v5716, %v5748
        %v5781 = vadd.f32 %v5717, %v5749
        %v5782 = vadd.f32 %v5718, %v5750
        %v5783 = vadd.f32 %v5719, %v5751
        %v5784 = vadd.f32 %v5720, %v5752
        %v5785 = vadd.f32 %v5721, %v5753
        %v5786 = vadd.f32 %v5722, %v5754
        %v5787 = vadd.f32 %v5723, %v5755
        %v5788 = vadd.f32 %v5724, %v5756
        %v5789 = vadd.f32 %v5725, %v5757
        %v5790 = vadd.f32 %v5726, %v5758
        %v5791 = vadd.f32 %v5727, %v5759
        %v5792 = vadd.f32 %v5728, %v5760
        %v5793 = vpack.c.bf16 %v5762, %v5761
        %v5794 = vpack.c.bf16 %v5764, %v5763
        %v5795 = vpack.c.bf16 %v5766, %v5765
        %v5796 = vpack.c.bf16 %v5768, %v5767
        %v5797 = vpack.c.bf16 %v5770, %v5769
        %v5798 = vpack.c.bf16 %v5772, %v5771
        %v5799 = vpack.c.bf16 %v5774, %v5773
        %v5800 = vpack.c.bf16 %v5776, %v5775
        %v5801 = vpack.c.bf16 %v5778, %v5777
        %v5802 = vpack.c.bf16 %v5780, %v5779
        %v5803 = vpack.c.bf16 %v5782, %v5781
        %v5804 = vpack.c.bf16 %v5784, %v5783
        %v5805 = vpack.c.bf16 %v5786, %v5785
        %v5806 = vpack.c.bf16 %v5788, %v5787
        %v5807 = vpack.c.bf16 %v5790, %v5789
        %v5808 = vpack.c.bf16 %v5792, %v5791
        %v5825 = vunpack.c.l.b16 %v5793
        %v5826 = vunpack.c.h.b16 %v5793
        %v5827 = vunpack.c.l.b16 %v5794
        %v5828 = vunpack.c.h.b16 %v5794
        %v5829 = vunpack.c.l.b16 %v5795
        %v5830 = vunpack.c.h.b16 %v5795
        %v5831 = vunpack.c.l.b16 %v5796
        %v5832 = vunpack.c.h.b16 %v5796
        %v5833 = vunpack.c.l.b16 %v5797
        %v5834 = vunpack.c.h.b16 %v5797
        %v5835 = vunpack.c.l.b16 %v5798
        %v5836 = vunpack.c.h.b16 %v5798
        %v5837 = vunpack.c.l.b16 %v5799
        %v5838 = vunpack.c.h.b16 %v5799
        %v5839 = vunpack.c.l.b16 %v5800
        %v5840 = vunpack.c.h.b16 %v5800
        %v5841 = vunpack.c.l.b16 %v5801
        %v5842 = vunpack.c.h.b16 %v5801
        %v5843 = vunpack.c.l.b16 %v5802
        %v5844 = vunpack.c.h.b16 %v5802
        %v5845 = vunpack.c.l.b16 %v5803
        %v5846 = vunpack.c.h.b16 %v5803
        %v5847 = vunpack.c.l.b16 %v5804
        %v5848 = vunpack.c.h.b16 %v5804
        %v5849 = vunpack.c.l.b16 %v5805
        %v5850 = vunpack.c.h.b16 %v5805
        %v5851 = vunpack.c.l.b16 %v5806
        %v5852 = vunpack.c.h.b16 %v5806
        %v5853 = vunpack.c.l.b16 %v5807
        %v5854 = vunpack.c.h.b16 %v5807
        %v5855 = vunpack.c.l.b16 %v5808
        %v5856 = vunpack.c.h.b16 %v5808
        %v5857 = vpack.c.b16 %v5825, %v5825
        %v5858 = vpack.c.b16 %v5826, %v5826
        %v5859 = vpack.c.b16 %v5827, %v5827
        %v5860 = vpack.c.b16 %v5828, %v5828
        %v5861 = vpack.c.b16 %v5829, %v5829
        %v5862 = vpack.c.b16 %v5830, %v5830
        %v5863 = vpack.c.b16 %v5831, %v5831
        %v5864 = vpack.c.b16 %v5832, %v5832
        %v5865 = vpack.c.b16 %v5833, %v5833
        %v5866 = vpack.c.b16 %v5834, %v5834
        %v5867 = vpack.c.b16 %v5835, %v5835
        %v5868 = vpack.c.b16 %v5836, %v5836
        %v5869 = vpack.c.b16 %v5837, %v5837
        %v5870 = vpack.c.b16 %v5838, %v5838
        %v5871 = vpack.c.b16 %v5839, %v5839
        %v5872 = vpack.c.b16 %v5840, %v5840
        %v5873 = vpack.c.b16 %v5841, %v5841
        %v5874 = vpack.c.b16 %v5842, %v5842
        %v5875 = vpack.c.b16 %v5843, %v5843
        %v5876 = vpack.c.b16 %v5844, %v5844
        %v5877 = vpack.c.b16 %v5845, %v5845
        %v5878 = vpack.c.b16 %v5846, %v5846
        %v5879 = vpack.c.b16 %v5847, %v5847
        %v5880 = vpack.c.b16 %v5848, %v5848
        %v5881 = vpack.c.b16 %v5849, %v5849
        %v5882 = vpack.c.b16 %v5850, %v5850
        %v5883 = vpack.c.b16 %v5851, %v5851
        %v5884 = vpack.c.b16 %v5852, %v5852
        %v5885 = vpack.c.b16 %v5853, %v5853
        %v5886 = vpack.c.b16 %v5854, %v5854
        %v5887 = vpack.c.b16 %v5855, %v5855
        %v5888 = vpack.c.b16 %v5856, %v5856
        %s5921 = scalar_lea.vmem %s555, 256 [#allocation16]
        %5922 = vst [vmem:[%s5921] sm:$0xf] %v5857
        %5923 = vst [vmem:[%s5921 + $0x4] sm:$0xf] %v5858
        %5924 = vst [vmem:[%s5921 + $0x8] sm:$0xf] %v5859
        %5925 = vst [vmem:[%s5921 + $0xc] sm:$0xf] %v5860
        %5926 = vst [vmem:[%s5921 + $0x10] sm:$0xf] %v5861
        %5927 = vst [vmem:[%s5921 + $0x14] sm:$0xf] %v5862
        %5928 = vst [vmem:[%s5921 + $0x18] sm:$0xf] %v5863
        %5929 = vst [vmem:[%s5921 + $0x1c] sm:$0xf] %v5864
        %5930 = vst [vmem:[%s5921 + $0x20] sm:$0xf] %v5865
        %5931 = vst [vmem:[%s5921 + $0x24] sm:$0xf] %v5866
        %5932 = vst [vmem:[%s5921 + $0x28] sm:$0xf] %v5867
        %5933 = vst [vmem:[%s5921 + $0x2c] sm:$0xf] %v5868
        %5934 = vst [vmem:[%s5921 + $0x30] sm:$0xf] %v5869
        %5935 = vst [vmem:[%s5921 + $0x34] sm:$0xf] %v5870
        %5936 = vst [vmem:[%s5921 + $0x38] sm:$0xf] %v5871
        %5937 = vst [vmem:[%s5921 + $0x3c] sm:$0xf] %v5872
        %5938 = vst [vmem:[%s5921 + $0x40] sm:$0xf] %v5873
        %5939 = vst [vmem:[%s5921 + $0x44] sm:$0xf] %v5874
        %5940 = vst [vmem:[%s5921 + $0x48] sm:$0xf] %v5875
        %5941 = vst [vmem:[%s5921 + $0x4c] sm:$0xf] %v5876
        %5942 = vst [vmem:[%s5921 + $0x50] sm:$0xf] %v5877
        %5943 = vst [vmem:[%s5921 + $0x54] sm:$0xf] %v5878
        %5944 = vst [vmem:[%s5921 + $0x58] sm:$0xf] %v5879
        %5945 = vst [vmem:[%s5921 + $0x5c] sm:$0xf] %v5880
        %5946 = vst [vmem:[%s5921 + $0x60] sm:$0xf] %v5881
        %5947 = vst [vmem:[%s5921 + $0x64] sm:$0xf] %v5882
        %5948 = vst [vmem:[%s5921 + $0x68] sm:$0xf] %v5883
        %5949 = vst [vmem:[%s5921 + $0x6c] sm:$0xf] %v5884
        %5950 = vst [vmem:[%s5921 + $0x70] sm:$0xf] %v5885
        %5951 = vst [vmem:[%s5921 + $0x74] sm:$0xf] %v5886
        %5952 = vst [vmem:[%s5921 + $0x78] sm:$0xf] %v5887
        %5953 = vst [vmem:[%s5921 + $0x7c] sm:$0xf] %v5888
        %5954 = vrot.lane.b32.xlu0 %v2816, 127
        %v5955 = vpop.permute.xlu0 %5954
        %5956 = vrot.lane.b32.xlu0 %v2820, 127
        %v5957 = vpop.permute.xlu0 %5956
        %5958 = vrot.lane.b32.xlu0 %v2826, 127
        %v5959 = vpop.permute.xlu0 %5958
        %5960 = vrot.lane.b32.xlu0 %v2830, 127
        %v5961 = vpop.permute.xlu0 %5960
        %5962 = vrot.lane.b32.xlu0 %v2836, 127
        %v5963 = vpop.permute.xlu0 %5962
        %5964 = vrot.lane.b32.xlu0 %v2840, 127
        %v5965 = vpop.permute.xlu0 %5964
        %5966 = vrot.lane.b32.xlu0 %v2846, 127
        %v5967 = vpop.permute.xlu0 %5966
        %5968 = vrot.lane.b32.xlu0 %v2850, 127
        %v5969 = vpop.permute.xlu0 %5968
        %5970 = vrot.lane.b32.xlu0 %v2856, 127
        %v5971 = vpop.permute.xlu0 %5970
        %5972 = vrot.lane.b32.xlu0 %v2860, 127
        %v5973 = vpop.permute.xlu0 %5972
        %5974 = vrot.lane.b32.xlu0 %v2866, 127
        %v5975 = vpop.permute.xlu0 %5974
        %5976 = vrot.lane.b32.xlu0 %v2870, 127
        %v5977 = vpop.permute.xlu0 %5976
        %5978 = vrot.lane.b32.xlu0 %v2876, 127
        %v5979 = vpop.permute.xlu0 %5978
        %5980 = vrot.lane.b32.xlu0 %v2880, 127
        %v5981 = vpop.permute.xlu0 %5980
        %5982 = vrot.lane.b32.xlu0 %v2886, 127
        %v5983 = vpop.permute.xlu0 %5982
        %5984 = vrot.lane.b32.xlu0 %v2890, 127
        %v5985 = vpop.permute.xlu0 %5984
        %5986 = vrot.lane.b32.xlu0 %v2896, 127
        %v5987 = vpop.permute.xlu0 %5986
        %5988 = vrot.lane.b32.xlu0 %v2900, 127
        %v5989 = vpop.permute.xlu0 %5988
        %5990 = vrot.lane.b32.xlu0 %v2906, 127
        %v5991 = vpop.permute.xlu0 %5990
        %5992 = vrot.lane.b32.xlu0 %v2910, 127
        %v5993 = vpop.permute.xlu0 %5992
        %5994 = vrot.lane.b32.xlu0 %v2916, 127
        %v5995 = vpop.permute.xlu0 %5994
        %5996 = vrot.lane.b32.xlu0 %v2920, 127
        %v5997 = vpop.permute.xlu0 %5996
        %5998 = vrot.lane.b32.xlu0 %v2926, 127
        %v5999 = vpop.permute.xlu0 %5998
        %6000 = vrot.lane.b32.xlu0 %v2930, 127
        %v6001 = vpop.permute.xlu0 %6000
        %6002 = vrot.lane.b32.xlu0 %v2936, 127
        %v6003 = vpop.permute.xlu0 %6002
        %6004 = vrot.lane.b32.xlu0 %v2940, 127
        %v6005 = vpop.permute.xlu0 %6004
        %6006 = vrot.lane.b32.xlu0 %v2946, 127
        %v6007 = vpop.permute.xlu0 %6006
        %6008 = vrot.lane.b32.xlu0 %v2950, 127
        %v6009 = vpop.permute.xlu0 %6008
        %6010 = vrot.lane.b32.xlu0 %v2956, 127
        %v6011 = vpop.permute.xlu0 %6010
        %6012 = vrot.lane.b32.xlu0 %v2960, 127
        %v6013 = vpop.permute.xlu0 %6012
        %6014 = vrot.lane.b32.xlu0 %v2966, 127
        %v6015 = vpop.permute.xlu0 %6014
        %6016 = vrot.lane.b32.xlu0 %v2970, 127
        %v6017 = vpop.permute.xlu0 %6016
        %6018 = vrot.lane.b32.xlu0 %v2816, 1
        %v6019 = vpop.permute.xlu0 %6018
        %6020 = vrot.lane.b32.xlu0 %v2820, 1
        %v6021 = vpop.permute.xlu0 %6020
        %6022 = vrot.lane.b32.xlu0 %v2826, 1
        %v6023 = vpop.permute.xlu0 %6022
        %6024 = vrot.lane.b32.xlu0 %v2830, 1
        %v6025 = vpop.permute.xlu0 %6024
        %6026 = vrot.lane.b32.xlu0 %v2836, 1
        %v6027 = vpop.permute.xlu0 %6026
        %6028 = vrot.lane.b32.xlu0 %v2840, 1
        %v6029 = vpop.permute.xlu0 %6028
        %6030 = vrot.lane.b32.xlu0 %v2846, 1
        %v6031 = vpop.permute.xlu0 %6030
        %6032 = vrot.lane.b32.xlu0 %v2850, 1
        %v6033 = vpop.permute.xlu0 %6032
        %6034 = vrot.lane.b32.xlu0 %v2856, 1
        %v6035 = vpop.permute.xlu0 %6034
        %6036 = vrot.lane.b32.xlu0 %v2860, 1
        %v6037 = vpop.permute.xlu0 %6036
        %6038 = vrot.lane.b32.xlu0 %v2866, 1
        %v6039 = vpop.permute.xlu0 %6038
        %6040 = vrot.lane.b32.xlu0 %v2870, 1
        %v6041 = vpop.permute.xlu0 %6040
        %6042 = vrot.lane.b32.xlu0 %v2876, 1
        %v6043 = vpop.permute.xlu0 %6042
        %6044 = vrot.lane.b32.xlu0 %v2880, 1
        %v6045 = vpop.permute.xlu0 %6044
        %6046 = vrot.lane.b32.xlu0 %v2886, 1
        %v6047 = vpop.permute.xlu0 %6046
        %6048 = vrot.lane.b32.xlu0 %v2890, 1
        %v6049 = vpop.permute.xlu0 %6048
        %6050 = vrot.lane.b32.xlu0 %v2896, 1
        %v6051 = vpop.permute.xlu0 %6050
        %6052 = vrot.lane.b32.xlu0 %v2900, 1
        %v6053 = vpop.permute.xlu0 %6052
        %6054 = vrot.lane.b32.xlu0 %v2906, 1
        %v6055 = vpop.permute.xlu0 %6054
        %6056 = vrot.lane.b32.xlu0 %v2910, 1
        %v6057 = vpop.permute.xlu0 %6056
        %6058 = vrot.lane.b32.xlu0 %v2916, 1
        %v6059 = vpop.permute.xlu0 %6058
        %6060 = vrot.lane.b32.xlu0 %v2920, 1
        %v6061 = vpop.permute.xlu0 %6060
        %6062 = vrot.lane.b32.xlu0 %v2926, 1
        %v6063 = vpop.permute.xlu0 %6062
        %6064 = vrot.lane.b32.xlu0 %v2930, 1
        %v6065 = vpop.permute.xlu0 %6064
        %6066 = vrot.lane.b32.xlu0 %v2936, 1
        %v6067 = vpop.permute.xlu0 %6066
        %6068 = vrot.lane.b32.xlu0 %v2940, 1
        %v6069 = vpop.permute.xlu0 %6068
        %6070 = vrot.lane.b32.xlu0 %v2946, 1
        %v6071 = vpop.permute.xlu0 %6070
        %6072 = vrot.lane.b32.xlu0 %v2950, 1
        %v6073 = vpop.permute.xlu0 %6072
        %6074 = vrot.lane.b32.xlu0 %v2956, 1
        %v6075 = vpop.permute.xlu0 %6074
        %6076 = vrot.lane.b32.xlu0 %v2960, 1
        %v6077 = vpop.permute.xlu0 %6076
        %6078 = vrot.lane.b32.xlu0 %v2966, 1
        %v6079 = vpop.permute.xlu0 %6078
        %6080 = vrot.lane.b32.xlu0 %v2970, 1
        %v6081 = vpop.permute.xlu0 %6080
        %v6082 = vmul.f32 %v2816, %v4512
        %v6083 = vmul.f32 %v2820, %v4513
        %v6084 = vmul.f32 %v2826, %v4514
        %v6085 = vmul.f32 %v2830, %v4515
        %v6086 = vmul.f32 %v2836, %v4516
        %v6087 = vmul.f32 %v2840, %v4517
        %v6088 = vmul.f32 %v2846, %v4518
        %v6089 = vmul.f32 %v2850, %v4519
        %v6090 = vmul.f32 %v2856, %v4520
        %v6091 = vmul.f32 %v2860, %v4521
        %v6092 = vmul.f32 %v2866, %v4522
        %v6093 = vmul.f32 %v2870, %v4523
        %v6094 = vmul.f32 %v2876, %v4524
        %v6095 = vmul.f32 %v2880, %v4525
        %v6096 = vmul.f32 %v2886, %v4526
        %v6097 = vmul.f32 %v2890, %v4527
        %v6098 = vmul.f32 %v2896, %v4528
        %v6099 = vmul.f32 %v2900, %v4529
        %v6100 = vmul.f32 %v2906, %v4530
        %v6101 = vmul.f32 %v2910, %v4531
        %v6102 = vmul.f32 %v2916, %v4532
        %v6103 = vmul.f32 %v2920, %v4533
        %v6104 = vmul.f32 %v2926, %v4534
        %v6105 = vmul.f32 %v2930, %v4535
        %v6106 = vmul.f32 %v2936, %v4536
        %v6107 = vmul.f32 %v2940, %v4537
        %v6108 = vmul.f32 %v2946, %v4538
        %v6109 = vmul.f32 %v2950, %v4539
        %v6110 = vmul.f32 %v2956, %v4540
        %v6111 = vmul.f32 %v2960, %v4541
        %v6112 = vmul.f32 %v2966, %v4542
        %v6113 = vmul.f32 %v2970, %v4543
        %v6114 = vmul.f32 %v5955, %v4544
        %v6115 = vmul.f32 %v5957, %v4545
        %v6116 = vmul.f32 %v5959, %v4546
        %v6117 = vmul.f32 %v5961, %v4547
        %v6118 = vmul.f32 %v5963, %v4548
        %v6119 = vmul.f32 %v5965, %v4549
        %v6120 = vmul.f32 %v5967, %v4550
        %v6121 = vmul.f32 %v5969, %v4551
        %v6122 = vmul.f32 %v5971, %v4552
        %v6123 = vmul.f32 %v5973, %v4553
        %v6124 = vmul.f32 %v5975, %v4554
        %v6125 = vmul.f32 %v5977, %v4555
        %v6126 = vmul.f32 %v5979, %v4556
        %v6127 = vmul.f32 %v5981, %v4557
        %v6128 = vmul.f32 %v5983, %v4558
        %v6129 = vmul.f32 %v5985, %v4559
        %v6130 = vmul.f32 %v5987, %v4560
        %v6131 = vmul.f32 %v5989, %v4561
        %v6132 = vmul.f32 %v5991, %v4562
        %v6133 = vmul.f32 %v5993, %v4563
        %v6134 = vmul.f32 %v5995, %v4564
        %v6135 = vmul.f32 %v5997, %v4565
        %v6136 = vmul.f32 %v5999, %v4566
        %v6137 = vmul.f32 %v6001, %v4567
        %v6138 = vmul.f32 %v6003, %v4568
        %v6139 = vmul.f32 %v6005, %v4569
        %v6140 = vmul.f32 %v6007, %v4570
        %v6141 = vmul.f32 %v6009, %v4571
        %v6142 = vmul.f32 %v6011, %v4572
        %v6143 = vmul.f32 %v6013, %v4573
        %v6144 = vmul.f32 %v6015, %v4574
        %v6145 = vmul.f32 %v6017, %v4575
        %v6146 = vsub.f32 %v6082, %v6114
        %v6147 = vsub.f32 %v6083, %v6115
        %v6148 = vsub.f32 %v6084, %v6116
        %v6149 = vsub.f32 %v6085, %v6117
        %v6150 = vsub.f32 %v6086, %v6118
        %v6151 = vsub.f32 %v6087, %v6119
        %v6152 = vsub.f32 %v6088, %v6120
        %v6153 = vsub.f32 %v6089, %v6121
        %v6154 = vsub.f32 %v6090, %v6122
        %v6155 = vsub.f32 %v6091, %v6123
        %v6156 = vsub.f32 %v6092, %v6124
        %v6157 = vsub.f32 %v6093, %v6125
        %v6158 = vsub.f32 %v6094, %v6126
        %v6159 = vsub.f32 %v6095, %v6127
        %v6160 = vsub.f32 %v6096, %v6128
        %v6161 = vsub.f32 %v6097, %v6129
        %v6162 = vsub.f32 %v6098, %v6130
        %v6163 = vsub.f32 %v6099, %v6131
        %v6164 = vsub.f32 %v6100, %v6132
        %v6165 = vsub.f32 %v6101, %v6133
        %v6166 = vsub.f32 %v6102, %v6134
        %v6167 = vsub.f32 %v6103, %v6135
        %v6168 = vsub.f32 %v6104, %v6136
        %v6169 = vsub.f32 %v6105, %v6137
        %v6170 = vsub.f32 %v6106, %v6138
        %v6171 = vsub.f32 %v6107, %v6139
        %v6172 = vsub.f32 %v6108, %v6140
        %v6173 = vsub.f32 %v6109, %v6141
        %v6174 = vsub.f32 %v6110, %v6142
        %v6175 = vsub.f32 %v6111, %v6143
        %v6176 = vsub.f32 %v6112, %v6144
        %v6177 = vsub.f32 %v6113, %v6145
        %v6178 = vmul.f32 %v6019, %v4576
        %v6179 = vmul.f32 %v6021, %v4577
        %v6180 = vmul.f32 %v6023, %v4578
        %v6181 = vmul.f32 %v6025, %v4579
        %v6182 = vmul.f32 %v6027, %v4580
        %v6183 = vmul.f32 %v6029, %v4581
        %v6184 = vmul.f32 %v6031, %v4582
        %v6185 = vmul.f32 %v6033, %v4583
        %v6186 = vmul.f32 %v6035, %v4584
        %v6187 = vmul.f32 %v6037, %v4585
        %v6188 = vmul.f32 %v6039, %v4586
        %v6189 = vmul.f32 %v6041, %v4587
        %v6190 = vmul.f32 %v6043, %v4588
        %v6191 = vmul.f32 %v6045, %v4589
        %v6192 = vmul.f32 %v6047, %v4590
        %v6193 = vmul.f32 %v6049, %v4591
        %v6194 = vmul.f32 %v6051, %v4592
        %v6195 = vmul.f32 %v6053, %v4593
        %v6196 = vmul.f32 %v6055, %v4594
        %v6197 = vmul.f32 %v6057, %v4595
        %v6198 = vmul.f32 %v6059, %v4596
        %v6199 = vmul.f32 %v6061, %v4597
        %v6200 = vmul.f32 %v6063, %v4598
        %v6201 = vmul.f32 %v6065, %v4599
        %v6202 = vmul.f32 %v6067, %v4600
        %v6203 = vmul.f32 %v6069, %v4601
        %v6204 = vmul.f32 %v6071, %v4602
        %v6205 = vmul.f32 %v6073, %v4603
        %v6206 = vmul.f32 %v6075, %v4604
        %v6207 = vmul.f32 %v6077, %v4605
        %v6208 = vmul.f32 %v6079, %v4606
        %v6209 = vmul.f32 %v6081, %v4607
        %v6210 = vadd.f32 %v6146, %v6178
        %v6211 = vadd.f32 %v6147, %v6179
        %v6212 = vadd.f32 %v6148, %v6180
        %v6213 = vadd.f32 %v6149, %v6181
        %v6214 = vadd.f32 %v6150, %v6182
        %v6215 = vadd.f32 %v6151, %v6183
        %v6216 = vadd.f32 %v6152, %v6184
        %v6217 = vadd.f32 %v6153, %v6185
        %v6218 = vadd.f32 %v6154, %v6186
        %v6219 = vadd.f32 %v6155, %v6187
        %v6220 = vadd.f32 %v6156, %v6188
        %v6221 = vadd.f32 %v6157, %v6189
        %v6222 = vadd.f32 %v6158, %v6190
        %v6223 = vadd.f32 %v6159, %v6191
        %v6224 = vadd.f32 %v6160, %v6192
        %v6225 = vadd.f32 %v6161, %v6193
        %v6226 = vadd.f32 %v6162, %v6194
        %v6227 = vadd.f32 %v6163, %v6195
        %v6228 = vadd.f32 %v6164, %v6196
        %v6229 = vadd.f32 %v6165, %v6197
        %v6230 = vadd.f32 %v6166, %v6198
        %v6231 = vadd.f32 %v6167, %v6199
        %v6232 = vadd.f32 %v6168, %v6200
        %v6233 = vadd.f32 %v6169, %v6201
        %v6234 = vadd.f32 %v6170, %v6202
        %v6235 = vadd.f32 %v6171, %v6203
        %v6236 = vadd.f32 %v6172, %v6204
        %v6237 = vadd.f32 %v6173, %v6205
        %v6238 = vadd.f32 %v6174, %v6206
        %v6239 = vadd.f32 %v6175, %v6207
        %v6240 = vadd.f32 %v6176, %v6208
        %v6241 = vadd.f32 %v6177, %v6209
        %v6242 = vpack.c.bf16 %v6211, %v6210
        %v6243 = vpack.c.bf16 %v6213, %v6212
        %v6244 = vpack.c.bf16 %v6215, %v6214
        %v6245 = vpack.c.bf16 %v6217, %v6216
        %v6246 = vpack.c.bf16 %v6219, %v6218
        %v6247 = vpack.c.bf16 %v6221, %v6220
        %v6248 = vpack.c.bf16 %v6223, %v6222
        %v6249 = vpack.c.bf16 %v6225, %v6224
        %v6250 = vpack.c.bf16 %v6227, %v6226
        %v6251 = vpack.c.bf16 %v6229, %v6228
        %v6252 = vpack.c.bf16 %v6231, %v6230
        %v6253 = vpack.c.bf16 %v6233, %v6232
        %v6254 = vpack.c.bf16 %v6235, %v6234
        %v6255 = vpack.c.bf16 %v6237, %v6236
        %v6256 = vpack.c.bf16 %v6239, %v6238
        %v6257 = vpack.c.bf16 %v6241, %v6240
        %v6274 = vunpack.c.l.b16 %v6242
        %v6275 = vunpack.c.h.b16 %v6242
        %v6276 = vunpack.c.l.b16 %v6243
        %v6277 = vunpack.c.h.b16 %v6243
        %v6278 = vunpack.c.l.b16 %v6244
        %v6279 = vunpack.c.h.b16 %v6244
        %v6280 = vunpack.c.l.b16 %v6245
        %v6281 = vunpack.c.h.b16 %v6245
        %v6282 = vunpack.c.l.b16 %v6246
        %v6283 = vunpack.c.h.b16 %v6246
        %v6284 = vunpack.c.l.b16 %v6247
        %v6285 = vunpack.c.h.b16 %v6247
        %v6286 = vunpack.c.l.b16 %v6248
        %v6287 = vunpack.c.h.b16 %v6248
        %v6288 = vunpack.c.l.b16 %v6249
        %v6289 = vunpack.c.h.b16 %v6249
        %v6290 = vunpack.c.l.b16 %v6250
        %v6291 = vunpack.c.h.b16 %v6250
        %v6292 = vunpack.c.l.b16 %v6251
        %v6293 = vunpack.c.h.b16 %v6251
        %v6294 = vunpack.c.l.b16 %v6252
        %v6295 = vunpack.c.h.b16 %v6252
        %v6296 = vunpack.c.l.b16 %v6253
        %v6297 = vunpack.c.h.b16 %v6253
        %v6298 = vunpack.c.l.b16 %v6254
        %v6299 = vunpack.c.h.b16 %v6254
        %v6300 = vunpack.c.l.b16 %v6255
        %v6301 = vunpack.c.h.b16 %v6255
        %v6302 = vunpack.c.l.b16 %v6256
        %v6303 = vunpack.c.h.b16 %v6256
        %v6304 = vunpack.c.l.b16 %v6257
        %v6305 = vunpack.c.h.b16 %v6257
        %v6306 = vpack.c.b16 %v6274, %v6274
        %v6307 = vpack.c.b16 %v6275, %v6275
        %v6308 = vpack.c.b16 %v6276, %v6276
        %v6309 = vpack.c.b16 %v6277, %v6277
        %v6310 = vpack.c.b16 %v6278, %v6278
        %v6311 = vpack.c.b16 %v6279, %v6279
        %v6312 = vpack.c.b16 %v6280, %v6280
        %v6313 = vpack.c.b16 %v6281, %v6281
        %v6314 = vpack.c.b16 %v6282, %v6282
        %v6315 = vpack.c.b16 %v6283, %v6283
        %v6316 = vpack.c.b16 %v6284, %v6284
        %v6317 = vpack.c.b16 %v6285, %v6285
        %v6318 = vpack.c.b16 %v6286, %v6286
        %v6319 = vpack.c.b16 %v6287, %v6287
        %v6320 = vpack.c.b16 %v6288, %v6288
        %v6321 = vpack.c.b16 %v6289, %v6289
        %v6322 = vpack.c.b16 %v6290, %v6290
        %v6323 = vpack.c.b16 %v6291, %v6291
        %v6324 = vpack.c.b16 %v6292, %v6292
        %v6325 = vpack.c.b16 %v6293, %v6293
        %v6326 = vpack.c.b16 %v6294, %v6294
        %v6327 = vpack.c.b16 %v6295, %v6295
        %v6328 = vpack.c.b16 %v6296, %v6296
        %v6329 = vpack.c.b16 %v6297, %v6297
        %v6330 = vpack.c.b16 %v6298, %v6298
        %v6331 = vpack.c.b16 %v6299, %v6299
        %v6332 = vpack.c.b16 %v6300, %v6300
        %v6333 = vpack.c.b16 %v6301, %v6301
        %v6334 = vpack.c.b16 %v6302, %v6302
        %v6335 = vpack.c.b16 %v6303, %v6303
        %v6336 = vpack.c.b16 %v6304, %v6304
        %v6337 = vpack.c.b16 %v6305, %v6305
        %s6370 = scalar_lea.vmem %s555, 384 [#allocation16]
        %6371 = vst [vmem:[%s6370] sm:$0xf] %v6306
        %6372 = vst [vmem:[%s6370 + $0x4] sm:$0xf] %v6307
        %6373 = vst [vmem:[%s6370 + $0x8] sm:$0xf] %v6308
        %6374 = vst [vmem:[%s6370 + $0xc] sm:$0xf] %v6309
        %6375 = vst [vmem:[%s6370 + $0x10] sm:$0xf] %v6310
        %6376 = vst [vmem:[%s6370 + $0x14] sm:$0xf] %v6311
        %6377 = vst [vmem:[%s6370 + $0x18] sm:$0xf] %v6312
        %6378 = vst [vmem:[%s6370 + $0x1c] sm:$0xf] %v6313
        %6379 = vst [vmem:[%s6370 + $0x20] sm:$0xf] %v6314
        %6380 = vst [vmem:[%s6370 + $0x24] sm:$0xf] %v6315
        %6381 = vst [vmem:[%s6370 + $0x28] sm:$0xf] %v6316
        %6382 = vst [vmem:[%s6370 + $0x2c] sm:$0xf] %v6317
        %6383 = vst [vmem:[%s6370 + $0x30] sm:$0xf] %v6318
        %6384 = vst [vmem:[%s6370 + $0x34] sm:$0xf] %v6319
        %6385 = vst [vmem:[%s6370 + $0x38] sm:$0xf] %v6320
        %6386 = vst [vmem:[%s6370 + $0x3c] sm:$0xf] %v6321
        %6387 = vst [vmem:[%s6370 + $0x40] sm:$0xf] %v6322
        %6388 = vst [vmem:[%s6370 + $0x44] sm:$0xf] %v6323
        %6389 = vst [vmem:[%s6370 + $0x48] sm:$0xf] %v6324
        %6390 = vst [vmem:[%s6370 + $0x4c] sm:$0xf] %v6325
        %6391 = vst [vmem:[%s6370 + $0x50] sm:$0xf] %v6326
        %6392 = vst [vmem:[%s6370 + $0x54] sm:$0xf] %v6327
        %6393 = vst [vmem:[%s6370 + $0x58] sm:$0xf] %v6328
        %6394 = vst [vmem:[%s6370 + $0x5c] sm:$0xf] %v6329
        %6395 = vst [vmem:[%s6370 + $0x60] sm:$0xf] %v6330
        %6396 = vst [vmem:[%s6370 + $0x64] sm:$0xf] %v6331
        %6397 = vst [vmem:[%s6370 + $0x68] sm:$0xf] %v6332
        %6398 = vst [vmem:[%s6370 + $0x6c] sm:$0xf] %v6333
        %6399 = vst [vmem:[%s6370 + $0x70] sm:$0xf] %v6334
        %6400 = vst [vmem:[%s6370 + $0x74] sm:$0xf] %v6335
        %6401 = vst [vmem:[%s6370 + $0x78] sm:$0xf] %v6336
        %6402 = vst [vmem:[%s6370 + $0x7c] sm:$0xf] %v6337
        %6403 = vrot.lane.b32.xlu0 %v3584, 127
        %v6404 = vpop.permute.xlu0 %6403
        %6405 = vrot.lane.b32.xlu0 %v3588, 127
        %v6406 = vpop.permute.xlu0 %6405
        %6407 = vrot.lane.b32.xlu0 %v3594, 127
        %v6408 = vpop.permute.xlu0 %6407
        %6409 = vrot.lane.b32.xlu0 %v3598, 127
        %v6410 = vpop.permute.xlu0 %6409
        %6411 = vrot.lane.b32.xlu0 %v3604, 127
        %v6412 = vpop.permute.xlu0 %6411
        %6413 = vrot.lane.b32.xlu0 %v3608, 127
        %v6414 = vpop.permute.xlu0 %6413
        %6415 = vrot.lane.b32.xlu0 %v3614, 127
        %v6416 = vpop.permute.xlu0 %6415
        %6417 = vrot.lane.b32.xlu0 %v3618, 127
        %v6418 = vpop.permute.xlu0 %6417
        %6419 = vrot.lane.b32.xlu0 %v3624, 127
        %v6420 = vpop.permute.xlu0 %6419
        %6421 = vrot.lane.b32.xlu0 %v3628, 127
        %v6422 = vpop.permute.xlu0 %6421
        %6423 = vrot.lane.b32.xlu0 %v3634, 127
        %v6424 = vpop.permute.xlu0 %6423
        %6425 = vrot.lane.b32.xlu0 %v3638, 127
        %v6426 = vpop.permute.xlu0 %6425
        %6427 = vrot.lane.b32.xlu0 %v3644, 127
        %v6428 = vpop.permute.xlu0 %6427
        %6429 = vrot.lane.b32.xlu0 %v3648, 127
        %v6430 = vpop.permute.xlu0 %6429
        %6431 = vrot.lane.b32.xlu0 %v3654, 127
        %v6432 = vpop.permute.xlu0 %6431
        %6433 = vrot.lane.b32.xlu0 %v3658, 127
        %v6434 = vpop.permute.xlu0 %6433
        %6435 = vrot.lane.b32.xlu0 %v3664, 127
        %v6436 = vpop.permute.xlu0 %6435
        %6437 = vrot.lane.b32.xlu0 %v3668, 127
        %v6438 = vpop.permute.xlu0 %6437
        %6439 = vrot.lane.b32.xlu0 %v3674, 127
        %v6440 = vpop.permute.xlu0 %6439
        %6441 = vrot.lane.b32.xlu0 %v3678, 127
        %v6442 = vpop.permute.xlu0 %6441
        %6443 = vrot.lane.b32.xlu0 %v3684, 127
        %v6444 = vpop.permute.xlu0 %6443
        %6445 = vrot.lane.b32.xlu0 %v3688, 127
        %v6446 = vpop.permute.xlu0 %6445
        %6447 = vrot.lane.b32.xlu0 %v3694, 127
        %v6448 = vpop.permute.xlu0 %6447
        %6449 = vrot.lane.b32.xlu0 %v3698, 127
        %v6450 = vpop.permute.xlu0 %6449
        %6451 = vrot.lane.b32.xlu0 %v3704, 127
        %v6452 = vpop.permute.xlu0 %6451
        %6453 = vrot.lane.b32.xlu0 %v3708, 127
        %v6454 = vpop.permute.xlu0 %6453
        %6455 = vrot.lane.b32.xlu0 %v3714, 127
        %v6456 = vpop.permute.xlu0 %6455
        %6457 = vrot.lane.b32.xlu0 %v3718, 127
        %v6458 = vpop.permute.xlu0 %6457
        %6459 = vrot.lane.b32.xlu0 %v3724, 127
        %v6460 = vpop.permute.xlu0 %6459
        %6461 = vrot.lane.b32.xlu0 %v3728, 127
        %v6462 = vpop.permute.xlu0 %6461
        %6463 = vrot.lane.b32.xlu0 %v3734, 127
        %v6464 = vpop.permute.xlu0 %6463
        %6465 = vrot.lane.b32.xlu0 %v3738, 127
        %v6466 = vpop.permute.xlu0 %6465
        %6467 = vrot.lane.b32.xlu0 %v3584, 1
        %v6468 = vpop.permute.xlu0 %6467
        %6469 = vrot.lane.b32.xlu0 %v3588, 1
        %v6470 = vpop.permute.xlu0 %6469
        %6471 = vrot.lane.b32.xlu0 %v3594, 1
        %v6472 = vpop.permute.xlu0 %6471
        %6473 = vrot.lane.b32.xlu0 %v3598, 1
        %v6474 = vpop.permute.xlu0 %6473
        %6475 = vrot.lane.b32.xlu0 %v3604, 1
        %v6476 = vpop.permute.xlu0 %6475
        %6477 = vrot.lane.b32.xlu0 %v3608, 1
        %v6478 = vpop.permute.xlu0 %6477
        %6479 = vrot.lane.b32.xlu0 %v3614, 1
        %v6480 = vpop.permute.xlu0 %6479
        %6481 = vrot.lane.b32.xlu0 %v3618, 1
        %v6482 = vpop.permute.xlu0 %6481
        %6483 = vrot.lane.b32.xlu0 %v3624, 1
        %v6484 = vpop.permute.xlu0 %6483
        %6485 = vrot.lane.b32.xlu0 %v3628, 1
        %v6486 = vpop.permute.xlu0 %6485
        %6487 = vrot.lane.b32.xlu0 %v3634, 1
        %v6488 = vpop.permute.xlu0 %6487
        %6489 = vrot.lane.b32.xlu0 %v3638, 1
        %v6490 = vpop.permute.xlu0 %6489
        %6491 = vrot.lane.b32.xlu0 %v3644, 1
        %v6492 = vpop.permute.xlu0 %6491
        %6493 = vrot.lane.b32.xlu0 %v3648, 1
        %v6494 = vpop.permute.xlu0 %6493
        %6495 = vrot.lane.b32.xlu0 %v3654, 1
        %v6496 = vpop.permute.xlu0 %6495
        %6497 = vrot.lane.b32.xlu0 %v3658, 1
        %v6498 = vpop.permute.xlu0 %6497
        %6499 = vrot.lane.b32.xlu0 %v3664, 1
        %v6500 = vpop.permute.xlu0 %6499
        %6501 = vrot.lane.b32.xlu0 %v3668, 1
        %v6502 = vpop.permute.xlu0 %6501
        %6503 = vrot.lane.b32.xlu0 %v3674, 1
        %v6504 = vpop.permute.xlu0 %6503
        %6505 = vrot.lane.b32.xlu0 %v3678, 1
        %v6506 = vpop.permute.xlu0 %6505
        %6507 = vrot.lane.b32.xlu0 %v3684, 1
        %v6508 = vpop.permute.xlu0 %6507
        %6509 = vrot.lane.b32.xlu0 %v3688, 1
        %v6510 = vpop.permute.xlu0 %6509
        %6511 = vrot.lane.b32.xlu0 %v3694, 1
        %v6512 = vpop.permute.xlu0 %6511
        %6513 = vrot.lane.b32.xlu0 %v3698, 1
        %v6514 = vpop.permute.xlu0 %6513
        %6515 = vrot.lane.b32.xlu0 %v3704, 1
        %v6516 = vpop.permute.xlu0 %6515
        %6517 = vrot.lane.b32.xlu0 %v3708, 1
        %v6518 = vpop.permute.xlu0 %6517
        %6519 = vrot.lane.b32.xlu0 %v3714, 1
        %v6520 = vpop.permute.xlu0 %6519
        %6521 = vrot.lane.b32.xlu0 %v3718, 1
        %v6522 = vpop.permute.xlu0 %6521
        %6523 = vrot.lane.b32.xlu0 %v3724, 1
        %v6524 = vpop.permute.xlu0 %6523
        %6525 = vrot.lane.b32.xlu0 %v3728, 1
        %v6526 = vpop.permute.xlu0 %6525
        %6527 = vrot.lane.b32.xlu0 %v3734, 1
        %v6528 = vpop.permute.xlu0 %6527
        %6529 = vrot.lane.b32.xlu0 %v3738, 1
        %v6530 = vpop.permute.xlu0 %6529
        %v6531 = vmul.f32 %v3584, %v4512
        %v6532 = vmul.f32 %v3588, %v4513
        %v6533 = vmul.f32 %v3594, %v4514
        %v6534 = vmul.f32 %v3598, %v4515
        %v6535 = vmul.f32 %v3604, %v4516
        %v6536 = vmul.f32 %v3608, %v4517
        %v6537 = vmul.f32 %v3614, %v4518
        %v6538 = vmul.f32 %v3618, %v4519
        %v6539 = vmul.f32 %v3624, %v4520
        %v6540 = vmul.f32 %v3628, %v4521
        %v6541 = vmul.f32 %v3634, %v4522
        %v6542 = vmul.f32 %v3638, %v4523
        %v6543 = vmul.f32 %v3644, %v4524
        %v6544 = vmul.f32 %v3648, %v4525
        %v6545 = vmul.f32 %v3654, %v4526
        %v6546 = vmul.f32 %v3658, %v4527
        %v6547 = vmul.f32 %v3664, %v4528
        %v6548 = vmul.f32 %v3668, %v4529
        %v6549 = vmul.f32 %v3674, %v4530
        %v6550 = vmul.f32 %v3678, %v4531
        %v6551 = vmul.f32 %v3684, %v4532
        %v6552 = vmul.f32 %v3688, %v4533
        %v6553 = vmul.f32 %v3694, %v4534
        %v6554 = vmul.f32 %v3698, %v4535
        %v6555 = vmul.f32 %v3704, %v4536
        %v6556 = vmul.f32 %v3708, %v4537
        %v6557 = vmul.f32 %v3714, %v4538
        %v6558 = vmul.f32 %v3718, %v4539
        %v6559 = vmul.f32 %v3724, %v4540
        %v6560 = vmul.f32 %v3728, %v4541
        %v6561 = vmul.f32 %v3734, %v4542
        %v6562 = vmul.f32 %v3738, %v4543
        %v6563 = vmul.f32 %v6404, %v4544
        %v6564 = vmul.f32 %v6406, %v4545
        %v6565 = vmul.f32 %v6408, %v4546
        %v6566 = vmul.f32 %v6410, %v4547
        %v6567 = vmul.f32 %v6412, %v4548
        %v6568 = vmul.f32 %v6414, %v4549
        %v6569 = vmul.f32 %v6416, %v4550
        %v6570 = vmul.f32 %v6418, %v4551
        %v6571 = vmul.f32 %v6420, %v4552
        %v6572 = vmul.f32 %v6422, %v4553
        %v6573 = vmul.f32 %v6424, %v4554
        %v6574 = vmul.f32 %v6426, %v4555
        %v6575 = vmul.f32 %v6428, %v4556
        %v6576 = vmul.f32 %v6430, %v4557
        %v6577 = vmul.f32 %v6432, %v4558
        %v6578 = vmul.f32 %v6434, %v4559
        %v6579 = vmul.f32 %v6436, %v4560
        %v6580 = vmul.f32 %v6438, %v4561
        %v6581 = vmul.f32 %v6440, %v4562
        %v6582 = vmul.f32 %v6442, %v4563
        %v6583 = vmul.f32 %v6444, %v4564
        %v6584 = vmul.f32 %v6446, %v4565
        %v6585 = vmul.f32 %v6448, %v4566
        %v6586 = vmul.f32 %v6450, %v4567
        %v6587 = vmul.f32 %v6452, %v4568
        %v6588 = vmul.f32 %v6454, %v4569
        %v6589 = vmul.f32 %v6456, %v4570
        %v6590 = vmul.f32 %v6458, %v4571
        %v6591 = vmul.f32 %v6460, %v4572
        %v6592 = vmul.f32 %v6462, %v4573
        %v6593 = vmul.f32 %v6464, %v4574
        %v6594 = vmul.f32 %v6466, %v4575
        %v6595 = vsub.f32 %v6531, %v6563
        %v6596 = vsub.f32 %v6532, %v6564
        %v6597 = vsub.f32 %v6533, %v6565
        %v6598 = vsub.f32 %v6534, %v6566
        %v6599 = vsub.f32 %v6535, %v6567
        %v6600 = vsub.f32 %v6536, %v6568
        %v6601 = vsub.f32 %v6537, %v6569
        %v6602 = vsub.f32 %v6538, %v6570
        %v6603 = vsub.f32 %v6539, %v6571
        %v6604 = vsub.f32 %v6540, %v6572
        %v6605 = vsub.f32 %v6541, %v6573
        %v6606 = vsub.f32 %v6542, %v6574
        %v6607 = vsub.f32 %v6543, %v6575
        %v6608 = vsub.f32 %v6544, %v6576
        %v6609 = vsub.f32 %v6545, %v6577
        %v6610 = vsub.f32 %v6546, %v6578
        %v6611 = vsub.f32 %v6547, %v6579
        %v6612 = vsub.f32 %v6548, %v6580
        %v6613 = vsub.f32 %v6549, %v6581
        %v6614 = vsub.f32 %v6550, %v6582
        %v6615 = vsub.f32 %v6551, %v6583
        %v6616 = vsub.f32 %v6552, %v6584
        %v6617 = vsub.f32 %v6553, %v6585
        %v6618 = vsub.f32 %v6554, %v6586
        %v6619 = vsub.f32 %v6555, %v6587
        %v6620 = vsub.f32 %v6556, %v6588
        %v6621 = vsub.f32 %v6557, %v6589
        %v6622 = vsub.f32 %v6558, %v6590
        %v6623 = vsub.f32 %v6559, %v6591
        %v6624 = vsub.f32 %v6560, %v6592
        %v6625 = vsub.f32 %v6561, %v6593
        %v6626 = vsub.f32 %v6562, %v6594
        %v6627 = vmul.f32 %v6468, %v4576
        %v6628 = vmul.f32 %v6470, %v4577
        %v6629 = vmul.f32 %v6472, %v4578
        %v6630 = vmul.f32 %v6474, %v4579
        %v6631 = vmul.f32 %v6476, %v4580
        %v6632 = vmul.f32 %v6478, %v4581
        %v6633 = vmul.f32 %v6480, %v4582
        %v6634 = vmul.f32 %v6482, %v4583
        %v6635 = vmul.f32 %v6484, %v4584
        %v6636 = vmul.f32 %v6486, %v4585
        %v6637 = vmul.f32 %v6488, %v4586
        %v6638 = vmul.f32 %v6490, %v4587
        %v6639 = vmul.f32 %v6492, %v4588
        %v6640 = vmul.f32 %v6494, %v4589
        %v6641 = vmul.f32 %v6496, %v4590
        %v6642 = vmul.f32 %v6498, %v4591
        %v6643 = vmul.f32 %v6500, %v4592
        %v6644 = vmul.f32 %v6502, %v4593
        %v6645 = vmul.f32 %v6504, %v4594
        %v6646 = vmul.f32 %v6506, %v4595
        %v6647 = vmul.f32 %v6508, %v4596
        %v6648 = vmul.f32 %v6510, %v4597
        %v6649 = vmul.f32 %v6512, %v4598
        %v6650 = vmul.f32 %v6514, %v4599
        %v6651 = vmul.f32 %v6516, %v4600
        %v6652 = vmul.f32 %v6518, %v4601
        %v6653 = vmul.f32 %v6520, %v4602
        %v6654 = vmul.f32 %v6522, %v4603
        %v6655 = vmul.f32 %v6524, %v4604
        %v6656 = vmul.f32 %v6526, %v4605
        %v6657 = vmul.f32 %v6528, %v4606
        %v6658 = vmul.f32 %v6530, %v4607
        %v6659 = vadd.f32 %v6595, %v6627
        %v6660 = vadd.f32 %v6596, %v6628
        %v6661 = vadd.f32 %v6597, %v6629
        %v6662 = vadd.f32 %v6598, %v6630
        %v6663 = vadd.f32 %v6599, %v6631
        %v6664 = vadd.f32 %v6600, %v6632
        %v6665 = vadd.f32 %v6601, %v6633
        %v6666 = vadd.f32 %v6602, %v6634
        %v6667 = vadd.f32 %v6603, %v6635
        %v6668 = vadd.f32 %v6604, %v6636
        %v6669 = vadd.f32 %v6605, %v6637
        %v6670 = vadd.f32 %v6606, %v6638
        %v6671 = vadd.f32 %v6607, %v6639
        %v6672 = vadd.f32 %v6608, %v6640
        %v6673 = vadd.f32 %v6609, %v6641
        %v6674 = vadd.f32 %v6610, %v6642
        %v6675 = vadd.f32 %v6611, %v6643
        %v6676 = vadd.f32 %v6612, %v6644
        %v6677 = vadd.f32 %v6613, %v6645
        %v6678 = vadd.f32 %v6614, %v6646
        %v6679 = vadd.f32 %v6615, %v6647
        %v6680 = vadd.f32 %v6616, %v6648
        %v6681 = vadd.f32 %v6617, %v6649
        %v6682 = vadd.f32 %v6618, %v6650
        %v6683 = vadd.f32 %v6619, %v6651
        %v6684 = vadd.f32 %v6620, %v6652
        %v6685 = vadd.f32 %v6621, %v6653
        %v6686 = vadd.f32 %v6622, %v6654
        %v6687 = vadd.f32 %v6623, %v6655
        %v6688 = vadd.f32 %v6624, %v6656
        %v6689 = vadd.f32 %v6625, %v6657
        %v6690 = vadd.f32 %v6626, %v6658
        %v6691 = vpack.c.bf16 %v6660, %v6659
        %v6692 = vpack.c.bf16 %v6662, %v6661
        %v6693 = vpack.c.bf16 %v6664, %v6663
        %v6694 = vpack.c.bf16 %v6666, %v6665
        %v6695 = vpack.c.bf16 %v6668, %v6667
        %v6696 = vpack.c.bf16 %v6670, %v6669
        %v6697 = vpack.c.bf16 %v6672, %v6671
        %v6698 = vpack.c.bf16 %v6674, %v6673
        %v6699 = vpack.c.bf16 %v6676, %v6675
        %v6700 = vpack.c.bf16 %v6678, %v6677
        %v6701 = vpack.c.bf16 %v6680, %v6679
        %v6702 = vpack.c.bf16 %v6682, %v6681
        %v6703 = vpack.c.bf16 %v6684, %v6683
        %v6704 = vpack.c.bf16 %v6686, %v6685
        %v6705 = vpack.c.bf16 %v6688, %v6687
        %v6706 = vpack.c.bf16 %v6690, %v6689
        %v6723 = vunpack.c.l.b16 %v6691
        %v6724 = vunpack.c.h.b16 %v6691
        %v6725 = vunpack.c.l.b16 %v6692
        %v6726 = vunpack.c.h.b16 %v6692
        %v6727 = vunpack.c.l.b16 %v6693
        %v6728 = vunpack.c.h.b16 %v6693
        %v6729 = vunpack.c.l.b16 %v6694
        %v6730 = vunpack.c.h.b16 %v6694
        %v6731 = vunpack.c.l.b16 %v6695
        %v6732 = vunpack.c.h.b16 %v6695
        %v6733 = vunpack.c.l.b16 %v6696
        %v6734 = vunpack.c.h.b16 %v6696
        %v6735 = vunpack.c.l.b16 %v6697
        %v6736 = vunpack.c.h.b16 %v6697
        %v6737 = vunpack.c.l.b16 %v6698
        %v6738 = vunpack.c.h.b16 %v6698
        %v6739 = vunpack.c.l.b16 %v6699
        %v6740 = vunpack.c.h.b16 %v6699
        %v6741 = vunpack.c.l.b16 %v6700
        %v6742 = vunpack.c.h.b16 %v6700
        %v6743 = vunpack.c.l.b16 %v6701
        %v6744 = vunpack.c.h.b16 %v6701
        %v6745 = vunpack.c.l.b16 %v6702
        %v6746 = vunpack.c.h.b16 %v6702
        %v6747 = vunpack.c.l.b16 %v6703
        %v6748 = vunpack.c.h.b16 %v6703
        %v6749 = vunpack.c.l.b16 %v6704
        %v6750 = vunpack.c.h.b16 %v6704
        %v6751 = vunpack.c.l.b16 %v6705
        %v6752 = vunpack.c.h.b16 %v6705
        %v6753 = vunpack.c.l.b16 %v6706
        %v6754 = vunpack.c.h.b16 %v6706
        %v6755 = vpack.c.b16 %v6723, %v6723
        %v6756 = vpack.c.b16 %v6724, %v6724
        %v6757 = vpack.c.b16 %v6725, %v6725
        %v6758 = vpack.c.b16 %v6726, %v6726
        %v6759 = vpack.c.b16 %v6727, %v6727
        %v6760 = vpack.c.b16 %v6728, %v6728
        %v6761 = vpack.c.b16 %v6729, %v6729
        %v6762 = vpack.c.b16 %v6730, %v6730
        %v6763 = vpack.c.b16 %v6731, %v6731
        %v6764 = vpack.c.b16 %v6732, %v6732
        %v6765 = vpack.c.b16 %v6733, %v6733
        %v6766 = vpack.c.b16 %v6734, %v6734
        %v6767 = vpack.c.b16 %v6735, %v6735
        %v6768 = vpack.c.b16 %v6736, %v6736
        %v6769 = vpack.c.b16 %v6737, %v6737
        %v6770 = vpack.c.b16 %v6738, %v6738
        %v6771 = vpack.c.b16 %v6739, %v6739
        %v6772 = vpack.c.b16 %v6740, %v6740
        %v6773 = vpack.c.b16 %v6741, %v6741
        %v6774 = vpack.c.b16 %v6742, %v6742
        %v6775 = vpack.c.b16 %v6743, %v6743
        %v6776 = vpack.c.b16 %v6744, %v6744
        %v6777 = vpack.c.b16 %v6745, %v6745
        %v6778 = vpack.c.b16 %v6746, %v6746
        %v6779 = vpack.c.b16 %v6747, %v6747
        %v6780 = vpack.c.b16 %v6748, %v6748
        %v6781 = vpack.c.b16 %v6749, %v6749
        %v6782 = vpack.c.b16 %v6750, %v6750
        %v6783 = vpack.c.b16 %v6751, %v6751
        %v6784 = vpack.c.b16 %v6752, %v6752
        %v6785 = vpack.c.b16 %v6753, %v6753
        %v6786 = vpack.c.b16 %v6754, %v6754
        %6819 = vst [vmem:[%s562] sm:$0xf] %v6755
        %6820 = vst [vmem:[%s562 + $0x4] sm:$0xf] %v6756
        %6821 = vst [vmem:[%s562 + $0x8] sm:$0xf] %v6757
        %6822 = vst [vmem:[%s562 + $0xc] sm:$0xf] %v6758
        %6823 = vst [vmem:[%s562 + $0x10] sm:$0xf] %v6759
        %6824 = vst [vmem:[%s562 + $0x14] sm:$0xf] %v6760
        %6825 = vst [vmem:[%s562 + $0x18] sm:$0xf] %v6761
        %6826 = vst [vmem:[%s562 + $0x1c] sm:$0xf] %v6762
        %6827 = vst [vmem:[%s562 + $0x20] sm:$0xf] %v6763
        %6828 = vst [vmem:[%s562 + $0x24] sm:$0xf] %v6764
        %6829 = vst [vmem:[%s562 + $0x28] sm:$0xf] %v6765
        %6830 = vst [vmem:[%s562 + $0x2c] sm:$0xf] %v6766
        %6831 = vst [vmem:[%s562 + $0x30] sm:$0xf] %v6767
        %6832 = vst [vmem:[%s562 + $0x34] sm:$0xf] %v6768
        %6833 = vst [vmem:[%s562 + $0x38] sm:$0xf] %v6769
        %6834 = vst [vmem:[%s562 + $0x3c] sm:$0xf] %v6770
        %6835 = vst [vmem:[%s562 + $0x40] sm:$0xf] %v6771
        %6836 = vst [vmem:[%s562 + $0x44] sm:$0xf] %v6772
        %6837 = vst [vmem:[%s562 + $0x48] sm:$0xf] %v6773
        %6838 = vst [vmem:[%s562 + $0x4c] sm:$0xf] %v6774
        %6839 = vst [vmem:[%s562 + $0x50] sm:$0xf] %v6775
        %6840 = vst [vmem:[%s562 + $0x54] sm:$0xf] %v6776
        %6841 = vst [vmem:[%s562 + $0x58] sm:$0xf] %v6777
        %6842 = vst [vmem:[%s562 + $0x5c] sm:$0xf] %v6778
        %6843 = vst [vmem:[%s562 + $0x60] sm:$0xf] %v6779
        %6844 = vst [vmem:[%s562 + $0x64] sm:$0xf] %v6780
        %6845 = vst [vmem:[%s562 + $0x68] sm:$0xf] %v6781
        %6846 = vst [vmem:[%s562 + $0x6c] sm:$0xf] %v6782
        %6847 = vst [vmem:[%s562 + $0x70] sm:$0xf] %v6783
        %6848 = vst [vmem:[%s562 + $0x74] sm:$0xf] %v6784
        %6849 = vst [vmem:[%s562 + $0x78] sm:$0xf] %v6785
        %6850 = vst [vmem:[%s562 + $0x7c] sm:$0xf] %v6786
        %v6851 = vpack.c.bf16 %v4358, %v4354
        %v6852 = vpack.c.bf16 %v4368, %v4364
        %v6853 = vpack.c.bf16 %v4378, %v4374
        %v6854 = vpack.c.bf16 %v4388, %v4384
        %v6855 = vpack.c.bf16 %v4398, %v4394
        %v6856 = vpack.c.bf16 %v4408, %v4404
        %v6857 = vpack.c.bf16 %v4418, %v4414
        %v6858 = vpack.c.bf16 %v4428, %v4424
        %v6859 = vpack.c.bf16 %v4438, %v4434
        %v6860 = vpack.c.bf16 %v4448, %v4444
        %v6861 = vpack.c.bf16 %v4458, %v4454
        %v6862 = vpack.c.bf16 %v4468, %v4464
        %v6863 = vpack.c.bf16 %v4478, %v4474
        %v6864 = vpack.c.bf16 %v4488, %v4484
        %v6865 = vpack.c.bf16 %v4498, %v4494
        %v6866 = vpack.c.bf16 %v4508, %v4504
        %v6883 = vunpack.c.l.b16 %v6851
        %v6884 = vunpack.c.h.b16 %v6851
        %v6885 = vunpack.c.l.b16 %v6852
        %v6886 = vunpack.c.h.b16 %v6852
        %v6887 = vunpack.c.l.b16 %v6853
        %v6888 = vunpack.c.h.b16 %v6853
        %v6889 = vunpack.c.l.b16 %v6854
        %v6890 = vunpack.c.h.b16 %v6854
        %v6891 = vunpack.c.l.b16 %v6855
        %v6892 = vunpack.c.h.b16 %v6855
        %v6893 = vunpack.c.l.b16 %v6856
        %v6894 = vunpack.c.h.b16 %v6856
        %v6895 = vunpack.c.l.b16 %v6857
        %v6896 = vunpack.c.h.b16 %v6857
        %v6897 = vunpack.c.l.b16 %v6858
        %v6898 = vunpack.c.h.b16 %v6858
        %v6899 = vunpack.c.l.b16 %v6859
        %v6900 = vunpack.c.h.b16 %v6859
        %v6901 = vunpack.c.l.b16 %v6860
        %v6902 = vunpack.c.h.b16 %v6860
        %v6903 = vunpack.c.l.b16 %v6861
        %v6904 = vunpack.c.h.b16 %v6861
        %v6905 = vunpack.c.l.b16 %v6862
        %v6906 = vunpack.c.h.b16 %v6862
        %v6907 = vunpack.c.l.b16 %v6863
        %v6908 = vunpack.c.h.b16 %v6863
        %v6909 = vunpack.c.l.b16 %v6864
        %v6910 = vunpack.c.h.b16 %v6864
        %v6911 = vunpack.c.l.b16 %v6865
        %v6912 = vunpack.c.h.b16 %v6865
        %v6913 = vunpack.c.l.b16 %v6866
        %v6914 = vunpack.c.h.b16 %v6866
        %v6915 = vpack.c.b16 %v6883, %v6883
        %v6916 = vpack.c.b16 %v6884, %v6884
        %v6917 = vpack.c.b16 %v6885, %v6885
        %v6918 = vpack.c.b16 %v6886, %v6886
        %v6919 = vpack.c.b16 %v6887, %v6887
        %v6920 = vpack.c.b16 %v6888, %v6888
        %v6921 = vpack.c.b16 %v6889, %v6889
        %v6922 = vpack.c.b16 %v6890, %v6890
        %v6923 = vpack.c.b16 %v6891, %v6891
        %v6924 = vpack.c.b16 %v6892, %v6892
        %v6925 = vpack.c.b16 %v6893, %v6893
        %v6926 = vpack.c.b16 %v6894, %v6894
        %v6927 = vpack.c.b16 %v6895, %v6895
        %v6928 = vpack.c.b16 %v6896, %v6896
        %v6929 = vpack.c.b16 %v6897, %v6897
        %v6930 = vpack.c.b16 %v6898, %v6898
        %v6931 = vpack.c.b16 %v6899, %v6899
        %v6932 = vpack.c.b16 %v6900, %v6900
        %v6933 = vpack.c.b16 %v6901, %v6901
        %v6934 = vpack.c.b16 %v6902, %v6902
        %v6935 = vpack.c.b16 %v6903, %v6903
        %v6936 = vpack.c.b16 %v6904, %v6904
        %v6937 = vpack.c.b16 %v6905, %v6905
        %v6938 = vpack.c.b16 %v6906, %v6906
        %v6939 = vpack.c.b16 %v6907, %v6907
        %v6940 = vpack.c.b16 %v6908, %v6908
        %v6941 = vpack.c.b16 %v6909, %v6909
        %v6942 = vpack.c.b16 %v6910, %v6910
        %v6943 = vpack.c.b16 %v6911, %v6911
        %v6944 = vpack.c.b16 %v6912, %v6912
        %v6945 = vpack.c.b16 %v6913, %v6913
        %v6946 = vpack.c.b16 %v6914, %v6914
        %6979 = vst [vmem:[%s569] sm:$0xf] %v6915
        %6980 = vst [vmem:[%s569 + $0x4] sm:$0xf] %v6916
        %6981 = vst [vmem:[%s569 + $0x8] sm:$0xf] %v6917
        %6982 = vst [vmem:[%s569 + $0xc] sm:$0xf] %v6918
        %6983 = vst [vmem:[%s569 + $0x10] sm:$0xf] %v6919
        %6984 = vst [vmem:[%s569 + $0x14] sm:$0xf] %v6920
        %6985 = vst [vmem:[%s569 + $0x18] sm:$0xf] %v6921
        %6986 = vst [vmem:[%s569 + $0x1c] sm:$0xf] %v6922
        %6987 = vst [vmem:[%s569 + $0x20] sm:$0xf] %v6923
        %6988 = vst [vmem:[%s569 + $0x24] sm:$0xf] %v6924
        %6989 = vst [vmem:[%s569 + $0x28] sm:$0xf] %v6925
        %6990 = vst [vmem:[%s569 + $0x2c] sm:$0xf] %v6926
        %6991 = vst [vmem:[%s569 + $0x30] sm:$0xf] %v6927
        %6992 = vst [vmem:[%s569 + $0x34] sm:$0xf] %v6928
        %6993 = vst [vmem:[%s569 + $0x38] sm:$0xf] %v6929
        %6994 = vst [vmem:[%s569 + $0x3c] sm:$0xf] %v6930
        %6995 = vst [vmem:[%s569 + $0x40] sm:$0xf] %v6931
        %6996 = vst [vmem:[%s569 + $0x44] sm:$0xf] %v6932
        %6997 = vst [vmem:[%s569 + $0x48] sm:$0xf] %v6933
        %6998 = vst [vmem:[%s569 + $0x4c] sm:$0xf] %v6934
        %6999 = vst [vmem:[%s569 + $0x50] sm:$0xf] %v6935
        %7000 = vst [vmem:[%s569 + $0x54] sm:$0xf] %v6936
        %7001 = vst [vmem:[%s569 + $0x58] sm:$0xf] %v6937
        %7002 = vst [vmem:[%s569 + $0x5c] sm:$0xf] %v6938
        %7003 = vst [vmem:[%s569 + $0x60] sm:$0xf] %v6939
        %7004 = vst [vmem:[%s569 + $0x64] sm:$0xf] %v6940
        %7005 = vst [vmem:[%s569 + $0x68] sm:$0xf] %v6941
        %7006 = vst [vmem:[%s569 + $0x6c] sm:$0xf] %v6942
        %7007 = vst [vmem:[%s569 + $0x70] sm:$0xf] %v6943
        %7008 = vst [vmem:[%s569 + $0x74] sm:$0xf] %v6944
        %7009 = vst [vmem:[%s569 + $0x78] sm:$0xf] %v6945
        %7010 = vst [vmem:[%s569 + $0x7c] sm:$0xf] %v6946
        %7011 = vrot.lane.b32.xlu0 %v3586, 127
        %v7012 = vpop.permute.xlu0 %7011
        %7013 = vrot.lane.b32.xlu0 %v3590, 127
        %v7014 = vpop.permute.xlu0 %7013
        %7015 = vrot.lane.b32.xlu0 %v3596, 127
        %v7016 = vpop.permute.xlu0 %7015
        %7017 = vrot.lane.b32.xlu0 %v3600, 127
        %v7018 = vpop.permute.xlu0 %7017
        %7019 = vrot.lane.b32.xlu0 %v3606, 127
        %v7020 = vpop.permute.xlu0 %7019
        %7021 = vrot.lane.b32.xlu0 %v3610, 127
        %v7022 = vpop.permute.xlu0 %7021
        %7023 = vrot.lane.b32.xlu0 %v3616, 127
        %v7024 = vpop.permute.xlu0 %7023
        %7025 = vrot.lane.b32.xlu0 %v3620, 127
        %v7026 = vpop.permute.xlu0 %7025
        %7027 = vrot.lane.b32.xlu0 %v3626, 127
        %v7028 = vpop.permute.xlu0 %7027
        %7029 = vrot.lane.b32.xlu0 %v3630, 127
        %v7030 = vpop.permute.xlu0 %7029
        %7031 = vrot.lane.b32.xlu0 %v3636, 127
        %v7032 = vpop.permute.xlu0 %7031
        %7033 = vrot.lane.b32.xlu0 %v3640, 127
        %v7034 = vpop.permute.xlu0 %7033
        %7035 = vrot.lane.b32.xlu0 %v3646, 127
        %v7036 = vpop.permute.xlu0 %7035
        %7037 = vrot.lane.b32.xlu0 %v3650, 127
        %v7038 = vpop.permute.xlu0 %7037
        %7039 = vrot.lane.b32.xlu0 %v3656, 127
        %v7040 = vpop.permute.xlu0 %7039
        %7041 = vrot.lane.b32.xlu0 %v3660, 127
        %v7042 = vpop.permute.xlu0 %7041
        %7043 = vrot.lane.b32.xlu0 %v3666, 127
        %v7044 = vpop.permute.xlu0 %7043
        %7045 = vrot.lane.b32.xlu0 %v3670, 127
        %v7046 = vpop.permute.xlu0 %7045
        %7047 = vrot.lane.b32.xlu0 %v3676, 127
        %v7048 = vpop.permute.xlu0 %7047
        %7049 = vrot.lane.b32.xlu0 %v3680, 127
        %v7050 = vpop.permute.xlu0 %7049
        %7051 = vrot.lane.b32.xlu0 %v3686, 127
        %v7052 = vpop.permute.xlu0 %7051
        %7053 = vrot.lane.b32.xlu0 %v3690, 127
        %v7054 = vpop.permute.xlu0 %7053
        %7055 = vrot.lane.b32.xlu0 %v3696, 127
        %v7056 = vpop.permute.xlu0 %7055
        %7057 = vrot.lane.b32.xlu0 %v3700, 127
        %v7058 = vpop.permute.xlu0 %7057
        %7059 = vrot.lane.b32.xlu0 %v3706, 127
        %v7060 = vpop.permute.xlu0 %7059
        %7061 = vrot.lane.b32.xlu0 %v3710, 127
        %v7062 = vpop.permute.xlu0 %7061
        %7063 = vrot.lane.b32.xlu0 %v3716, 127
        %v7064 = vpop.permute.xlu0 %7063
        %7065 = vrot.lane.b32.xlu0 %v3720, 127
        %v7066 = vpop.permute.xlu0 %7065
        %7067 = vrot.lane.b32.xlu0 %v3726, 127
        %v7068 = vpop.permute.xlu0 %7067
        %7069 = vrot.lane.b32.xlu0 %v3730, 127
        %v7070 = vpop.permute.xlu0 %7069
        %7071 = vrot.lane.b32.xlu0 %v3736, 127
        %v7072 = vpop.permute.xlu0 %7071
        %7073 = vrot.lane.b32.xlu0 %v3740, 127
        %v7074 = vpop.permute.xlu0 %7073
        %7075 = vrot.lane.b32.xlu0 %v3586, 1
        %v7076 = vpop.permute.xlu0 %7075
        %7077 = vrot.lane.b32.xlu0 %v3590, 1
        %v7078 = vpop.permute.xlu0 %7077
        %7079 = vrot.lane.b32.xlu0 %v3596, 1
        %v7080 = vpop.permute.xlu0 %7079
        %7081 = vrot.lane.b32.xlu0 %v3600, 1
        %v7082 = vpop.permute.xlu0 %7081
        %7083 = vrot.lane.b32.xlu0 %v3606, 1
        %v7084 = vpop.permute.xlu0 %7083
        %7085 = vrot.lane.b32.xlu0 %v3610, 1
        %v7086 = vpop.permute.xlu0 %7085
        %7087 = vrot.lane.b32.xlu0 %v3616, 1
        %v7088 = vpop.permute.xlu0 %7087
        %7089 = vrot.lane.b32.xlu0 %v3620, 1
        %v7090 = vpop.permute.xlu0 %7089
        %7091 = vrot.lane.b32.xlu0 %v3626, 1
        %v7092 = vpop.permute.xlu0 %7091
        %7093 = vrot.lane.b32.xlu0 %v3630, 1
        %v7094 = vpop.permute.xlu0 %7093
        %7095 = vrot.lane.b32.xlu0 %v3636, 1
        %v7096 = vpop.permute.xlu0 %7095
        %7097 = vrot.lane.b32.xlu0 %v3640, 1
        %v7098 = vpop.permute.xlu0 %7097
        %7099 = vrot.lane.b32.xlu0 %v3646, 1
        %v7100 = vpop.permute.xlu0 %7099
        %7101 = vrot.lane.b32.xlu0 %v3650, 1
        %v7102 = vpop.permute.xlu0 %7101
        %7103 = vrot.lane.b32.xlu0 %v3656, 1
        %v7104 = vpop.permute.xlu0 %7103
        %7105 = vrot.lane.b32.xlu0 %v3660, 1
        %v7106 = vpop.permute.xlu0 %7105
        %7107 = vrot.lane.b32.xlu0 %v3666, 1
        %v7108 = vpop.permute.xlu0 %7107
        %7109 = vrot.lane.b32.xlu0 %v3670, 1
        %v7110 = vpop.permute.xlu0 %7109
        %7111 = vrot.lane.b32.xlu0 %v3676, 1
        %v7112 = vpop.permute.xlu0 %7111
        %7113 = vrot.lane.b32.xlu0 %v3680, 1
        %v7114 = vpop.permute.xlu0 %7113
        %7115 = vrot.lane.b32.xlu0 %v3686, 1
        %v7116 = vpop.permute.xlu0 %7115
        %7117 = vrot.lane.b32.xlu0 %v3690, 1
        %v7118 = vpop.permute.xlu0 %7117
        %7119 = vrot.lane.b32.xlu0 %v3696, 1
        %v7120 = vpop.permute.xlu0 %7119
        %7121 = vrot.lane.b32.xlu0 %v3700, 1
        %v7122 = vpop.permute.xlu0 %7121
        %7123 = vrot.lane.b32.xlu0 %v3706, 1
        %v7124 = vpop.permute.xlu0 %7123
        %7125 = vrot.lane.b32.xlu0 %v3710, 1
        %v7126 = vpop.permute.xlu0 %7125
        %7127 = vrot.lane.b32.xlu0 %v3716, 1
        %v7128 = vpop.permute.xlu0 %7127
        %7129 = vrot.lane.b32.xlu0 %v3720, 1
        %v7130 = vpop.permute.xlu0 %7129
        %7131 = vrot.lane.b32.xlu0 %v3726, 1
        %v7132 = vpop.permute.xlu0 %7131
        %7133 = vrot.lane.b32.xlu0 %v3730, 1
        %v7134 = vpop.permute.xlu0 %7133
        %7135 = vrot.lane.b32.xlu0 %v3736, 1
        %v7136 = vpop.permute.xlu0 %7135
        %7137 = vrot.lane.b32.xlu0 %v3740, 1
        %v7138 = vpop.permute.xlu0 %7137
        %v7139 = vmul.f32 %v3586, %v4512
        %v7140 = vmul.f32 %v3590, %v4513
        %v7141 = vmul.f32 %v3596, %v4514
        %v7142 = vmul.f32 %v3600, %v4515
        %v7143 = vmul.f32 %v3606, %v4516
        %v7144 = vmul.f32 %v3610, %v4517
        %v7145 = vmul.f32 %v3616, %v4518
        %v7146 = vmul.f32 %v3620, %v4519
        %v7147 = vmul.f32 %v3626, %v4520
        %v7148 = vmul.f32 %v3630, %v4521
        %v7149 = vmul.f32 %v3636, %v4522
        %v7150 = vmul.f32 %v3640, %v4523
        %v7151 = vmul.f32 %v3646, %v4524
        %v7152 = vmul.f32 %v3650, %v4525
        %v7153 = vmul.f32 %v3656, %v4526
        %v7154 = vmul.f32 %v3660, %v4527
        %v7155 = vmul.f32 %v3666, %v4528
        %v7156 = vmul.f32 %v3670, %v4529
        %v7157 = vmul.f32 %v3676, %v4530
        %v7158 = vmul.f32 %v3680, %v4531
        %v7159 = vmul.f32 %v3686, %v4532
        %v7160 = vmul.f32 %v3690, %v4533
        %v7161 = vmul.f32 %v3696, %v4534
        %v7162 = vmul.f32 %v3700, %v4535
        %v7163 = vmul.f32 %v3706, %v4536
        %v7164 = vmul.f32 %v3710, %v4537
        %v7165 = vmul.f32 %v3716, %v4538
        %v7166 = vmul.f32 %v3720, %v4539
        %v7167 = vmul.f32 %v3726, %v4540
        %v7168 = vmul.f32 %v3730, %v4541
        %v7169 = vmul.f32 %v3736, %v4542
        %v7170 = vmul.f32 %v3740, %v4543
        %v7171 = vmul.f32 %v7012, %v4544
        %v7172 = vmul.f32 %v7014, %v4545
        %v7173 = vmul.f32 %v7016, %v4546
        %v7174 = vmul.f32 %v7018, %v4547
        %v7175 = vmul.f32 %v7020, %v4548
        %v7176 = vmul.f32 %v7022, %v4549
        %v7177 = vmul.f32 %v7024, %v4550
        %v7178 = vmul.f32 %v7026, %v4551
        %v7179 = vmul.f32 %v7028, %v4552
        %v7180 = vmul.f32 %v7030, %v4553
        %v7181 = vmul.f32 %v7032, %v4554
        %v7182 = vmul.f32 %v7034, %v4555
        %v7183 = vmul.f32 %v7036, %v4556
        %v7184 = vmul.f32 %v7038, %v4557
        %v7185 = vmul.f32 %v7040, %v4558
        %v7186 = vmul.f32 %v7042, %v4559
        %v7187 = vmul.f32 %v7044, %v4560
        %v7188 = vmul.f32 %v7046, %v4561
        %v7189 = vmul.f32 %v7048, %v4562
        %v7190 = vmul.f32 %v7050, %v4563
        %v7191 = vmul.f32 %v7052, %v4564
        %v7192 = vmul.f32 %v7054, %v4565
        %v7193 = vmul.f32 %v7056, %v4566
        %v7194 = vmul.f32 %v7058, %v4567
        %v7195 = vmul.f32 %v7060, %v4568
        %v7196 = vmul.f32 %v7062, %v4569
        %v7197 = vmul.f32 %v7064, %v4570
        %v7198 = vmul.f32 %v7066, %v4571
        %v7199 = vmul.f32 %v7068, %v4572
        %v7200 = vmul.f32 %v7070, %v4573
        %v7201 = vmul.f32 %v7072, %v4574
        %v7202 = vmul.f32 %v7074, %v4575
        %v7203 = vsub.f32 %v7139, %v7171
        %v7204 = vsub.f32 %v7140, %v7172
        %v7205 = vsub.f32 %v7141, %v7173
        %v7206 = vsub.f32 %v7142, %v7174
        %v7207 = vsub.f32 %v7143, %v7175
        %v7208 = vsub.f32 %v7144, %v7176
        %v7209 = vsub.f32 %v7145, %v7177
        %v7210 = vsub.f32 %v7146, %v7178
        %v7211 = vsub.f32 %v7147, %v7179
        %v7212 = vsub.f32 %v7148, %v7180
        %v7213 = vsub.f32 %v7149, %v7181
        %v7214 = vsub.f32 %v7150, %v7182
        %v7215 = vsub.f32 %v7151, %v7183
        %v7216 = vsub.f32 %v7152, %v7184
        %v7217 = vsub.f32 %v7153, %v7185
        %v7218 = vsub.f32 %v7154, %v7186
        %v7219 = vsub.f32 %v7155, %v7187
        %v7220 = vsub.f32 %v7156, %v7188
        %v7221 = vsub.f32 %v7157, %v7189
        %v7222 = vsub.f32 %v7158, %v7190
        %v7223 = vsub.f32 %v7159, %v7191
        %v7224 = vsub.f32 %v7160, %v7192
        %v7225 = vsub.f32 %v7161, %v7193
        %v7226 = vsub.f32 %v7162, %v7194
        %v7227 = vsub.f32 %v7163, %v7195
        %v7228 = vsub.f32 %v7164, %v7196
        %v7229 = vsub.f32 %v7165, %v7197
        %v7230 = vsub.f32 %v7166, %v7198
        %v7231 = vsub.f32 %v7167, %v7199
        %v7232 = vsub.f32 %v7168, %v7200
        %v7233 = vsub.f32 %v7169, %v7201
        %v7234 = vsub.f32 %v7170, %v7202
        %v7235 = vmul.f32 %v7076, %v4576
        %v7236 = vmul.f32 %v7078, %v4577
        %v7237 = vmul.f32 %v7080, %v4578
        %v7238 = vmul.f32 %v7082, %v4579
        %v7239 = vmul.f32 %v7084, %v4580
        %v7240 = vmul.f32 %v7086, %v4581
        %v7241 = vmul.f32 %v7088, %v4582
        %v7242 = vmul.f32 %v7090, %v4583
        %v7243 = vmul.f32 %v7092, %v4584
        %v7244 = vmul.f32 %v7094, %v4585
        %v7245 = vmul.f32 %v7096, %v4586
        %v7246 = vmul.f32 %v7098, %v4587
        %v7247 = vmul.f32 %v7100, %v4588
        %v7248 = vmul.f32 %v7102, %v4589
        %v7249 = vmul.f32 %v7104, %v4590
        %v7250 = vmul.f32 %v7106, %v4591
        %v7251 = vmul.f32 %v7108, %v4592
        %v7252 = vmul.f32 %v7110, %v4593
        %v7253 = vmul.f32 %v7112, %v4594
        %v7254 = vmul.f32 %v7114, %v4595
        %v7255 = vmul.f32 %v7116, %v4596
        %v7256 = vmul.f32 %v7118, %v4597
        %v7257 = vmul.f32 %v7120, %v4598
        %v7258 = vmul.f32 %v7122, %v4599
        %v7259 = vmul.f32 %v7124, %v4600
        %v7260 = vmul.f32 %v7126, %v4601
        %v7261 = vmul.f32 %v7128, %v4602
        %v7262 = vmul.f32 %v7130, %v4603
        %v7263 = vmul.f32 %v7132, %v4604
        %v7264 = vmul.f32 %v7134, %v4605
        %v7265 = vmul.f32 %v7136, %v4606
        %v7266 = vmul.f32 %v7138, %v4607
        %v7267 = vadd.f32 %v7203, %v7235
        %v7268 = vadd.f32 %v7204, %v7236
        %v7269 = vadd.f32 %v7205, %v7237
        %v7270 = vadd.f32 %v7206, %v7238
        %v7271 = vadd.f32 %v7207, %v7239
        %v7272 = vadd.f32 %v7208, %v7240
        %v7273 = vadd.f32 %v7209, %v7241
        %v7274 = vadd.f32 %v7210, %v7242
        %v7275 = vadd.f32 %v7211, %v7243
        %v7276 = vadd.f32 %v7212, %v7244
        %v7277 = vadd.f32 %v7213, %v7245
        %v7278 = vadd.f32 %v7214, %v7246
        %v7279 = vadd.f32 %v7215, %v7247
        %v7280 = vadd.f32 %v7216, %v7248
        %v7281 = vadd.f32 %v7217, %v7249
        %v7282 = vadd.f32 %v7218, %v7250
        %v7283 = vadd.f32 %v7219, %v7251
        %v7284 = vadd.f32 %v7220, %v7252
        %v7285 = vadd.f32 %v7221, %v7253
        %v7286 = vadd.f32 %v7222, %v7254
        %v7287 = vadd.f32 %v7223, %v7255
        %v7288 = vadd.f32 %v7224, %v7256
        %v7289 = vadd.f32 %v7225, %v7257
        %v7290 = vadd.f32 %v7226, %v7258
        %v7291 = vadd.f32 %v7227, %v7259
        %v7292 = vadd.f32 %v7228, %v7260
        %v7293 = vadd.f32 %v7229, %v7261
        %v7294 = vadd.f32 %v7230, %v7262
        %v7295 = vadd.f32 %v7231, %v7263
        %v7296 = vadd.f32 %v7232, %v7264
        %v7297 = vadd.f32 %v7233, %v7265
        %v7298 = vadd.f32 %v7234, %v7266
        %v7299 = vpack.c.bf16 %v7268, %v7267
        %v7300 = vpack.c.bf16 %v7270, %v7269
        %v7301 = vpack.c.bf16 %v7272, %v7271
        %v7302 = vpack.c.bf16 %v7274, %v7273
        %v7303 = vpack.c.bf16 %v7276, %v7275
        %v7304 = vpack.c.bf16 %v7278, %v7277
        %v7305 = vpack.c.bf16 %v7280, %v7279
        %v7306 = vpack.c.bf16 %v7282, %v7281
        %v7307 = vpack.c.bf16 %v7284, %v7283
        %v7308 = vpack.c.bf16 %v7286, %v7285
        %v7309 = vpack.c.bf16 %v7288, %v7287
        %v7310 = vpack.c.bf16 %v7290, %v7289
        %v7311 = vpack.c.bf16 %v7292, %v7291
        %v7312 = vpack.c.bf16 %v7294, %v7293
        %v7313 = vpack.c.bf16 %v7296, %v7295
        %v7314 = vpack.c.bf16 %v7298, %v7297
        %v7331 = vunpack.c.l.b16 %v7299
        %v7332 = vunpack.c.h.b16 %v7299
        %v7333 = vunpack.c.l.b16 %v7300
        %v7334 = vunpack.c.h.b16 %v7300
        %v7335 = vunpack.c.l.b16 %v7301
        %v7336 = vunpack.c.h.b16 %v7301
        %v7337 = vunpack.c.l.b16 %v7302
        %v7338 = vunpack.c.h.b16 %v7302
        %v7339 = vunpack.c.l.b16 %v7303
        %v7340 = vunpack.c.h.b16 %v7303
        %v7341 = vunpack.c.l.b16 %v7304
        %v7342 = vunpack.c.h.b16 %v7304
        %v7343 = vunpack.c.l.b16 %v7305
        %v7344 = vunpack.c.h.b16 %v7305
        %v7345 = vunpack.c.l.b16 %v7306
        %v7346 = vunpack.c.h.b16 %v7306
        %v7347 = vunpack.c.l.b16 %v7307
        %v7348 = vunpack.c.h.b16 %v7307
        %v7349 = vunpack.c.l.b16 %v7308
        %v7350 = vunpack.c.h.b16 %v7308
        %v7351 = vunpack.c.l.b16 %v7309
        %v7352 = vunpack.c.h.b16 %v7309
        %v7353 = vunpack.c.l.b16 %v7310
        %v7354 = vunpack.c.h.b16 %v7310
        %v7355 = vunpack.c.l.b16 %v7311
        %v7356 = vunpack.c.h.b16 %v7311
        %v7357 = vunpack.c.l.b16 %v7312
        %v7358 = vunpack.c.h.b16 %v7312
        %v7359 = vunpack.c.l.b16 %v7313
        %v7360 = vunpack.c.h.b16 %v7313
        %v7361 = vunpack.c.l.b16 %v7314
        %v7362 = vunpack.c.h.b16 %v7314
        %v7363 = vpack.c.b16 %v7331, %v7331
        %v7364 = vpack.c.b16 %v7332, %v7332
        %v7365 = vpack.c.b16 %v7333, %v7333
        %v7366 = vpack.c.b16 %v7334, %v7334
        %v7367 = vpack.c.b16 %v7335, %v7335
        %v7368 = vpack.c.b16 %v7336, %v7336
        %v7369 = vpack.c.b16 %v7337, %v7337
        %v7370 = vpack.c.b16 %v7338, %v7338
        %v7371 = vpack.c.b16 %v7339, %v7339
        %v7372 = vpack.c.b16 %v7340, %v7340
        %v7373 = vpack.c.b16 %v7341, %v7341
        %v7374 = vpack.c.b16 %v7342, %v7342
        %v7375 = vpack.c.b16 %v7343, %v7343
        %v7376 = vpack.c.b16 %v7344, %v7344
        %v7377 = vpack.c.b16 %v7345, %v7345
        %v7378 = vpack.c.b16 %v7346, %v7346
        %v7379 = vpack.c.b16 %v7347, %v7347
        %v7380 = vpack.c.b16 %v7348, %v7348
        %v7381 = vpack.c.b16 %v7349, %v7349
        %v7382 = vpack.c.b16 %v7350, %v7350
        %v7383 = vpack.c.b16 %v7351, %v7351
        %v7384 = vpack.c.b16 %v7352, %v7352
        %v7385 = vpack.c.b16 %v7353, %v7353
        %v7386 = vpack.c.b16 %v7354, %v7354
        %v7387 = vpack.c.b16 %v7355, %v7355
        %v7388 = vpack.c.b16 %v7356, %v7356
        %v7389 = vpack.c.b16 %v7357, %v7357
        %v7390 = vpack.c.b16 %v7358, %v7358
        %v7391 = vpack.c.b16 %v7359, %v7359
        %v7392 = vpack.c.b16 %v7360, %v7360
        %v7393 = vpack.c.b16 %v7361, %v7361
        %v7394 = vpack.c.b16 %v7362, %v7362
        %s7427 = scalar_lea.vmem %s562, 128 [#allocation17]
        %7428 = vst [vmem:[%s7427] sm:$0xf] %v7363
        %7429 = vst [vmem:[%s7427 + $0x4] sm:$0xf] %v7364
        %7430 = vst [vmem:[%s7427 + $0x8] sm:$0xf] %v7365
        %7431 = vst [vmem:[%s7427 + $0xc] sm:$0xf] %v7366
        %7432 = vst [vmem:[%s7427 + $0x10] sm:$0xf] %v7367
        %7433 = vst [vmem:[%s7427 + $0x14] sm:$0xf] %v7368
        %7434 = vst [vmem:[%s7427 + $0x18] sm:$0xf] %v7369
        %7435 = vst [vmem:[%s7427 + $0x1c] sm:$0xf] %v7370
        %7436 = vst [vmem:[%s7427 + $0x20] sm:$0xf] %v7371
        %7437 = vst [vmem:[%s7427 + $0x24] sm:$0xf] %v7372
        %7438 = vst [vmem:[%s7427 + $0x28] sm:$0xf] %v7373
        %7439 = vst [vmem:[%s7427 + $0x2c] sm:$0xf] %v7374
        %7440 = vst [vmem:[%s7427 + $0x30] sm:$0xf] %v7375
        %7441 = vst [vmem:[%s7427 + $0x34] sm:$0xf] %v7376
        %7442 = vst [vmem:[%s7427 + $0x38] sm:$0xf] %v7377
        %7443 = vst [vmem:[%s7427 + $0x3c] sm:$0xf] %v7378
        %7444 = vst [vmem:[%s7427 + $0x40] sm:$0xf] %v7379
        %7445 = vst [vmem:[%s7427 + $0x44] sm:$0xf] %v7380
        %7446 = vst [vmem:[%s7427 + $0x48] sm:$0xf] %v7381
        %7447 = vst [vmem:[%s7427 + $0x4c] sm:$0xf] %v7382
        %7448 = vst [vmem:[%s7427 + $0x50] sm:$0xf] %v7383
        %7449 = vst [vmem:[%s7427 + $0x54] sm:$0xf] %v7384
        %7450 = vst [vmem:[%s7427 + $0x58] sm:$0xf] %v7385
        %7451 = vst [vmem:[%s7427 + $0x5c] sm:$0xf] %v7386
        %7452 = vst [vmem:[%s7427 + $0x60] sm:$0xf] %v7387
        %7453 = vst [vmem:[%s7427 + $0x64] sm:$0xf] %v7388
        %7454 = vst [vmem:[%s7427 + $0x68] sm:$0xf] %v7389
        %7455 = vst [vmem:[%s7427 + $0x6c] sm:$0xf] %v7390
        %7456 = vst [vmem:[%s7427 + $0x70] sm:$0xf] %v7391
        %7457 = vst [vmem:[%s7427 + $0x74] sm:$0xf] %v7392
        %7458 = vst [vmem:[%s7427 + $0x78] sm:$0xf] %v7393
        %7459 = vst [vmem:[%s7427 + $0x7c] sm:$0xf] %v7394
        %v7460 = vpack.c.bf16 %v4360, %v4356
        %v7461 = vpack.c.bf16 %v4370, %v4366
        %v7462 = vpack.c.bf16 %v4380, %v4376
        %v7463 = vpack.c.bf16 %v4390, %v4386
        %v7464 = vpack.c.bf16 %v4400, %v4396
        %v7465 = vpack.c.bf16 %v4410, %v4406
        %v7466 = vpack.c.bf16 %v4420, %v4416
        %v7467 = vpack.c.bf16 %v4430, %v4426
        %v7468 = vpack.c.bf16 %v4440, %v4436
        %v7469 = vpack.c.bf16 %v4450, %v4446
        %v7470 = vpack.c.bf16 %v4460, %v4456
        %v7471 = vpack.c.bf16 %v4470, %v4466
        %v7472 = vpack.c.bf16 %v4480, %v4476
        %v7473 = vpack.c.bf16 %v4490, %v4486
        %v7474 = vpack.c.bf16 %v4500, %v4496
        %v7475 = vpack.c.bf16 %v4510, %v4506
        %v7492 = vunpack.c.l.b16 %v7460
        %v7493 = vunpack.c.h.b16 %v7460
        %v7494 = vunpack.c.l.b16 %v7461
        %v7495 = vunpack.c.h.b16 %v7461
        %v7496 = vunpack.c.l.b16 %v7462
        %v7497 = vunpack.c.h.b16 %v7462
        %v7498 = vunpack.c.l.b16 %v7463
        %v7499 = vunpack.c.h.b16 %v7463
        %v7500 = vunpack.c.l.b16 %v7464
        %v7501 = vunpack.c.h.b16 %v7464
        %v7502 = vunpack.c.l.b16 %v7465
        %v7503 = vunpack.c.h.b16 %v7465
        %v7504 = vunpack.c.l.b16 %v7466
        %v7505 = vunpack.c.h.b16 %v7466
        %v7506 = vunpack.c.l.b16 %v7467
        %v7507 = vunpack.c.h.b16 %v7467
        %v7508 = vunpack.c.l.b16 %v7468
        %v7509 = vunpack.c.h.b16 %v7468
        %v7510 = vunpack.c.l.b16 %v7469
        %v7511 = vunpack.c.h.b16 %v7469
        %v7512 = vunpack.c.l.b16 %v7470
        %v7513 = vunpack.c.h.b16 %v7470
        %v7514 = vunpack.c.l.b16 %v7471
        %v7515 = vunpack.c.h.b16 %v7471
        %v7516 = vunpack.c.l.b16 %v7472
        %v7517 = vunpack.c.h.b16 %v7472
        %v7518 = vunpack.c.l.b16 %v7473
        %v7519 = vunpack.c.h.b16 %v7473
        %v7520 = vunpack.c.l.b16 %v7474
        %v7521 = vunpack.c.h.b16 %v7474
        %v7522 = vunpack.c.l.b16 %v7475
        %v7523 = vunpack.c.h.b16 %v7475
        %v7524 = vpack.c.b16 %v7492, %v7492
        %v7525 = vpack.c.b16 %v7493, %v7493
        %v7526 = vpack.c.b16 %v7494, %v7494
        %v7527 = vpack.c.b16 %v7495, %v7495
        %v7528 = vpack.c.b16 %v7496, %v7496
        %v7529 = vpack.c.b16 %v7497, %v7497
        %v7530 = vpack.c.b16 %v7498, %v7498
        %v7531 = vpack.c.b16 %v7499, %v7499
        %v7532 = vpack.c.b16 %v7500, %v7500
        %v7533 = vpack.c.b16 %v7501, %v7501
        %v7534 = vpack.c.b16 %v7502, %v7502
        %v7535 = vpack.c.b16 %v7503, %v7503
        %v7536 = vpack.c.b16 %v7504, %v7504
        %v7537 = vpack.c.b16 %v7505, %v7505
        %v7538 = vpack.c.b16 %v7506, %v7506
        %v7539 = vpack.c.b16 %v7507, %v7507
        %v7540 = vpack.c.b16 %v7508, %v7508
        %v7541 = vpack.c.b16 %v7509, %v7509
        %v7542 = vpack.c.b16 %v7510, %v7510
        %v7543 = vpack.c.b16 %v7511, %v7511
        %v7544 = vpack.c.b16 %v7512, %v7512
        %v7545 = vpack.c.b16 %v7513, %v7513
        %v7546 = vpack.c.b16 %v7514, %v7514
        %v7547 = vpack.c.b16 %v7515, %v7515
        %v7548 = vpack.c.b16 %v7516, %v7516
        %v7549 = vpack.c.b16 %v7517, %v7517
        %v7550 = vpack.c.b16 %v7518, %v7518
        %v7551 = vpack.c.b16 %v7519, %v7519
        %v7552 = vpack.c.b16 %v7520, %v7520
        %v7553 = vpack.c.b16 %v7521, %v7521
        %v7554 = vpack.c.b16 %v7522, %v7522
        %v7555 = vpack.c.b16 %v7523, %v7523
        %s7588 = scalar_lea.vmem %s569, 128 [#allocation19]
        %7589 = vst [vmem:[%s7588] sm:$0xf] %v7524
        %7590 = vst [vmem:[%s7588 + $0x4] sm:$0xf] %v7525
        %7591 = vst [vmem:[%s7588 + $0x8] sm:$0xf] %v7526
        %7592 = vst [vmem:[%s7588 + $0xc] sm:$0xf] %v7527
        %7593 = vst [vmem:[%s7588 + $0x10] sm:$0xf] %v7528
        %7594 = vst [vmem:[%s7588 + $0x14] sm:$0xf] %v7529
        %7595 = vst [vmem:[%s7588 + $0x18] sm:$0xf] %v7530
        %7596 = vst [vmem:[%s7588 + $0x1c] sm:$0xf] %v7531
        %7597 = vst [vmem:[%s7588 + $0x20] sm:$0xf] %v7532
        %7598 = vst [vmem:[%s7588 + $0x24] sm:$0xf] %v7533
        %7599 = vst [vmem:[%s7588 + $0x28] sm:$0xf] %v7534
        %7600 = vst [vmem:[%s7588 + $0x2c] sm:$0xf] %v7535
        %7601 = vst [vmem:[%s7588 + $0x30] sm:$0xf] %v7536
        %7602 = vst [vmem:[%s7588 + $0x34] sm:$0xf] %v7537
        %7603 = vst [vmem:[%s7588 + $0x38] sm:$0xf] %v7538
        %7604 = vst [vmem:[%s7588 + $0x3c] sm:$0xf] %v7539
        %7605 = vst [vmem:[%s7588 + $0x40] sm:$0xf] %v7540
        %7606 = vst [vmem:[%s7588 + $0x44] sm:$0xf] %v7541
        %7607 = vst [vmem:[%s7588 + $0x48] sm:$0xf] %v7542
        %7608 = vst [vmem:[%s7588 + $0x4c] sm:$0xf] %v7543
        %7609 = vst [vmem:[%s7588 + $0x50] sm:$0xf] %v7544
        %7610 = vst [vmem:[%s7588 + $0x54] sm:$0xf] %v7545
        %7611 = vst [vmem:[%s7588 + $0x58] sm:$0xf] %v7546
        %7612 = vst [vmem:[%s7588 + $0x5c] sm:$0xf] %v7547
        %7613 = vst [vmem:[%s7588 + $0x60] sm:$0xf] %v7548
        %7614 = vst [vmem:[%s7588 + $0x64] sm:$0xf] %v7549
        %7615 = vst [vmem:[%s7588 + $0x68] sm:$0xf] %v7550
        %7616 = vst [vmem:[%s7588 + $0x6c] sm:$0xf] %v7551
        %7617 = vst [vmem:[%s7588 + $0x70] sm:$0xf] %v7552
        %7618 = vst [vmem:[%s7588 + $0x74] sm:$0xf] %v7553
        %7619 = vst [vmem:[%s7588 + $0x78] sm:$0xf] %v7554
        %7620 = vst [vmem:[%s7588 + $0x7c] sm:$0xf] %v7555
        %s7621 = sand.u32 %s235, 1
        %s7622 = scalar_lea.sflag [#allocation4], %s7621
        %s7623 = sand.u32 %s235, 1
        %s7624 = smul.addr %s7623, 512
        %s7625 = scalar_lea.vmem [#allocation16], %s7624
        %s7626 = sand.u32 %s39, 1
        %s7627 = scalar_lea.sflag [#allocation18], %s7626
        %s7628 = sand.u32 %s261, 1
        %s7629 = smul.addr %s7628, 256
        %s7630 = scalar_lea.vmem [#allocation17], %s7629
        %s7631 = sand.u32 %s39, 1
        %s7632 = scalar_lea.sflag [#allocation18], %s7631
        %s7633 = sand.u32 %s287, 1
        %s7634 = smul.addr %s7633, 256
        %s7635 = scalar_lea.vmem [#allocation19], %s7634
        // Predicated region
        $region85: #{tpu_custom_call.1} parent=51 // pred_check
          %p7636 = pneg %p245
        $region86: #{tpu_custom_call.1} parent=51 // pred_check_branch
          %7638 = sbr.rel (%p7636) target = $region88
        $region87: #{tpu_custom_call.1} parent=51 // pred_region
          #allocation21 [shape = 'u32[6]{0}', space=smem, size = 0x18, scoped, tag = 'DMA stride descriptor']
          %s7639 = smul.u32 32, %s39
          %s7641 = ssub.s32 8192, 8192
          %7642 = vsyncadd %s7622, %s7641
          %s7643 = smul.addr %s7639, 64
          %s7644 = scalar_lea.hbm %s8, %s7643
          %s7646 = sshll.u32 1, 14
          %s7647 = sxor.u32 4294967295, %s7646
          %s7650 = sshll.u32 7, 18
          %s7651 = sxor.u32 4294967295, %s7650
          %s7652 = sand.u32 0, %s7651
          %s7654 = sor.u32 %s7652, 0
          %s7656 = sshll.u32 3, 24
          %s7657 = sxor.u32 4294967295, %s7656
          %s7658 = sand.u32 %s7654, %s7657
          %s7660 = sor.u32 %s7658, 0
          %s7661 = sshll.u32 %s7625, 4
          %s7662 = int_to_ptr.vmem [resolvable:$true] %s7661
          %7668 = sst [smem:[#allocation21]] 2048
          %s7669 = scalar_lea.smem [#allocation21], 1
          %7670 = sst [smem:[%s7669]] 4096
          %s7671 = scalar_lea.smem [#allocation21], 2
          %7672 = sst [smem:[%s7671]] 32
          %s7673 = scalar_lea.smem [#allocation21], 3
          %7674 = sst [smem:[%s7673]] 64
          %s7675 = scalar_lea.smem [#allocation21], 4
          %7676 = sst [smem:[%s7675]] 64
          %s7677 = scalar_lea.smem [#allocation21], 5
          %7678 = sst [smem:[%s7677]] 4
          %7680 = dma.general %s7662, 8192, %s7644, %s7622, [#allocation20], [#allocation21], %s7660, 0
        $region88: #{tpu_custom_call.1} parent=51 // pred_fallthru
          _
        // Predicated region
        $region89: #{tpu_custom_call.1} parent=51 // pred_check
          %p7681 = pneg %p271
        $region90: #{tpu_custom_call.1} parent=51 // pred_check_branch
          %7683 = sbr.rel (%p7681) target = $region92
        $region91: #{tpu_custom_call.1} parent=51 // pred_region
          #allocation23 [shape = 'u32[6]{0}', space=smem, size = 0x18, scoped, tag = 'DMA stride descriptor']
          %s7684 = smul.u32 32, %s39
          %s7686 = ssub.s32 4096, 4096
          %7687 = vsyncadd %s7627, %s7686
          %s7688 = smul.addr %s7684, 64
          %s7689 = scalar_lea.hbm %s9, %s7688
          %s7691 = sshll.u32 1, 14
          %s7692 = sxor.u32 4294967295, %s7691
          %s7695 = sshll.u32 7, 18
          %s7696 = sxor.u32 4294967295, %s7695
          %s7697 = sand.u32 0, %s7696
          %s7699 = sor.u32 %s7697, 0
          %s7701 = sshll.u32 3, 24
          %s7702 = sxor.u32 4294967295, %s7701
          %s7703 = sand.u32 %s7699, %s7702
          %s7705 = sor.u32 %s7703, 0
          %s7706 = sshll.u32 %s7630, 4
          %s7707 = int_to_ptr.vmem [resolvable:$true] %s7706
          %7713 = sst [smem:[#allocation23]] 2048
          %s7714 = scalar_lea.smem [#allocation23], 1
          %7715 = sst [smem:[%s7714]] 4096
          %s7716 = scalar_lea.smem [#allocation23], 2
          %7717 = sst [smem:[%s7716]] 32
          %s7718 = scalar_lea.smem [#allocation23], 3
          %7719 = sst [smem:[%s7718]] 64
          %s7720 = scalar_lea.smem [#allocation23], 4
          %7721 = sst [smem:[%s7720]] 64
          %s7722 = scalar_lea.smem [#allocation23], 5
          %7723 = sst [smem:[%s7722]] 4
          %7725 = dma.general %s7707, 4096, %s7689, %s7627, [#allocation22], [#allocation23], %s7705, 0
        $region92: #{tpu_custom_call.1} parent=51 // pred_fallthru
          _
        // Predicated region
        $region93: #{tpu_custom_call.1} parent=51 // pred_check
          %p7726 = pneg %p297
        $region94: #{tpu_custom_call.1} parent=51 // pred_check_branch
          %7728 = sbr.rel (%p7726) target = $region96
        $region95: #{tpu_custom_call.1} parent=51 // pred_region
          #allocation25 [shape = 'u32[6]{0}', space=smem, size = 0x18, scoped, tag = 'DMA stride descriptor']
          %s7729 = smul.u32 32, %s39
          %s7731 = ssub.s32 4096, 4096
          %7732 = vsyncadd %s7632, %s7731
          %s7733 = smul.addr %s7729, 64
          %s7734 = scalar_lea.hbm %s10, %s7733
          %s7736 = sshll.u32 1, 14
          %s7737 = sxor.u32 4294967295, %s7736
          %s7740 = sshll.u32 7, 18
          %s7741 = sxor.u32 4294967295, %s7740
          %s7742 = sand.u32 0, %s7741
          %s7744 = sor.u32 %s7742, 0
          %s7746 = sshll.u32 3, 24
          %s7747 = sxor.u32 4294967295, %s7746
          %s7748 = sand.u32 %s7744, %s7747
          %s7750 = sor.u32 %s7748, 0
          %s7751 = sshll.u32 %s7635, 4
          %s7752 = int_to_ptr.vmem [resolvable:$true] %s7751
          %7758 = sst [smem:[#allocation25]] 2048
          %s7759 = scalar_lea.smem [#allocation25], 1
          %7760 = sst [smem:[%s7759]] 4096
          %s7761 = scalar_lea.smem [#allocation25], 2
          %7762 = sst [smem:[%s7761]] 32
          %s7763 = scalar_lea.smem [#allocation25], 3
          %7764 = sst [smem:[%s7763]] 64
          %s7765 = scalar_lea.smem [#allocation25], 4
          %7766 = sst [smem:[%s7765]] 64
          %s7767 = scalar_lea.smem [#allocation25], 5
          %7768 = sst [smem:[%s7767]] 4
          %7770 = dma.general %s7752, 4096, %s7734, %s7632, [#allocation24], [#allocation25], %s7750, 0
        $region96: #{tpu_custom_call.1} parent=51 // pred_fallthru
          _
      $region52: #{tpu_custom_call.1} parent=5 // pred_fallthru
        _
      %p7771 = scmp.le.s32.totalorder 2, %s34
      // Predicated region
      $region97: #{tpu_custom_call.1} parent=5 // pred_check
        %p7772 = pneg %p7771
      $region98: #{tpu_custom_call.1} parent=5 // pred_check_branch
        %7774 = sbr.rel (%p7772) target = $region100
      $region99: #{tpu_custom_call.1} parent=5 // pred_region
        %s7775 = ssub.s32 %s34, 2
        // Predicated region
        $region101: #{tpu_custom_call.1} parent=99 // pred_check
          %p7776 = pneg %p251
        $region102: #{tpu_custom_call.1} parent=99 // pred_check_branch
          %7778 = sbr.rel (%p7776) target = $region104
        $region103: #{tpu_custom_call.1} parent=99 // pred_region
          %s7779 = sand.u32 %s236, 1
          %s7780 = scalar_lea.sflag [#allocation4], %s7779
          %s7781 = sand.u32 %s236, 1
          %s7782 = smul.addr %s7781, 512
          %s7783 = scalar_lea.vmem [#allocation16], %s7782
          %7784 = dma.done %s7780, 8192
        $region104: #{tpu_custom_call.1} parent=99 // pred_fallthru
          _
        // Predicated region
        $region105: #{tpu_custom_call.1} parent=99 // pred_check
          %p7785 = pneg %p277
        $region106: #{tpu_custom_call.1} parent=99 // pred_check_branch
          %7787 = sbr.rel (%p7785) target = $region108
        $region107: #{tpu_custom_call.1} parent=99 // pred_region
          %s7788 = sand.u32 %s40, 1
          %s7789 = scalar_lea.sflag [#allocation18], %s7788
          %s7790 = sand.u32 %s262, 1
          %s7791 = smul.addr %s7790, 256
          %s7792 = scalar_lea.vmem [#allocation17], %s7791
          %7793 = dma.done %s7789, 4096
        $region108: #{tpu_custom_call.1} parent=99 // pred_fallthru
          _
        // Predicated region
        $region109: #{tpu_custom_call.1} parent=99 // pred_check
          %p7794 = pneg %p303
        $region110: #{tpu_custom_call.1} parent=99 // pred_check_branch
          %7796 = sbr.rel (%p7794) target = $region112
        $region111: #{tpu_custom_call.1} parent=99 // pred_region
          %s7797 = sand.u32 %s40, 1
          %s7798 = scalar_lea.sflag [#allocation18], %s7797
          %s7799 = sand.u32 %s288, 1
          %s7800 = smul.addr %s7799, 256
          %s7801 = scalar_lea.vmem [#allocation19], %s7800
          %7802 = dma.done %s7798, 4096
        $region112: #{tpu_custom_call.1} parent=99 // pred_fallthru
          _
      $region100: #{tpu_custom_call.1} parent=5 // pred_fallthru
        _
    $region6: #{tpu_custom_call.1} parent=1 // loop_footer
      %s38 = sadd.s32 1, %s34
    $region7: #{tpu_custom_call.1} parent=1 // loop_footer_branch
      %33 = sbr.rel target = $region3
    $region8: #{tpu_custom_call.1} parent=1 // loop_exit
      _
    %7803 = vsyncpa [#allocation3], 1
    %s7804 = scalar_lea.sflag [#allocation3], 1
    %7805 = vsyncpa %s7804, 1
    %7806 = vsyncpa [#allocation6], 1
    %7807 = vsyncpa [#allocation9], 1
    %7808 = vsyncpa [#allocation12], 1
    %s7809 = scalar_lea.sflag [#allocation12], 1
    %7810 = vsyncpa %s7809, 1
    %7811 = vsyncpa [#allocation15], 1
    %s7812 = scalar_lea.sflag [#allocation15], 1
    %7813 = vsyncpa %s7812, 1
    %7814 = vsyncpa [#allocation4], 1
    %s7815 = scalar_lea.sflag [#allocation4], 1
    %7816 = vsyncpa %s7815, 1
    %7817 = vsyncpa [#allocation18], 1
    %s7818 = scalar_lea.sflag [#allocation18], 1
    %7819 = vsyncpa %s7818, 1

</llo_original>
